<compile_context>
chip_gen: v7x
topology: tpu7x:2x2x1
jax: 0.10.0
libtpu: 0.0.40
codegen_flags: <defaults>
</compile_context>

<pallas_src>
import functools

import jax
import jax.numpy as jnp
from jax import lax
from jax.experimental import pallas as pl
from jax.experimental.pallas import tpu as pltpu


# ----------------------------------------------------------------------------
# Fused kernel: dwconv 7x7 -> LayerNorm -> Linear -> GELU -> Linear -> residual
# ----------------------------------------------------------------------------
def block_kernel(x_ref, dww_ref, dwb_ref, w1_ref, b1_ref, w2_ref, b2_ref,
                 o_ref, xpad_ref, cols_ref, dwf_ref, *, H, W, eps):
    # x_ref   : (1, H*W, C) f32   input tokens (NHWC flattened); also residual
    # dww_ref : (7, 7, C)   f32   depthwise weights [kh, kw, c]
    # dwb_ref : (1, C)      f32   depthwise bias
    # w1_ref  : (C, 4C)     bf16  pwconv1 weight (LayerNorm scale folded in)
    # b1_ref  : (1, 4C)     f32   pwconv1 bias   (LayerNorm shift folded in)
    # w2_ref  : (4C, C)     bf16  pwconv2 weight (gamma folded in)
    # b2_ref  : (1, C)      f32   pwconv2 bias   (gamma folded in)
    # o_ref   : (1, H*W, C) f32
    # xpad_ref: (H+6, W+16, C) f32 scratch — zero-padded image (halo in VMEM)
    # cols_ref: (7, H+6, W, C) f32 scratch — the 7 kw-shifted column slabs
    # dwf_ref : (H*W, C)    f32 scratch — conv output in token layout
    C = o_ref.shape[2]
    PADL = 8  # left pad on the W axis; multiple of 8 so the interior store is tile-aligned

    # ---- zero-pad the image into VMEM (no wrapper-side jnp.pad HBM traffic) ----
    xpad_ref[...] = jnp.zeros_like(xpad_ref)
    for h in range(H):
        xpad_ref[3 + h, PADL:PADL + W, :] = x_ref[0, h * W:(h + 1) * W, :]

    # ---- pre-build the 7 kw-shifted column slabs (7 sublane shifts, not 49) ----
    for kw in range(7):
        off = PADL - 3 + kw
        cols_ref[kw] = xpad_ref[:, off:off + W, :]

    # ---- depthwise 7x7 conv: 49 shift-free multiply-accumulates ----
    acc = jnp.zeros((H, W, C), jnp.float32)
    for kh in range(7):
        for kw in range(7):
            acc = acc + cols_ref[kw, kh:kh + H, :, :] * dww_ref[kh, kw, :]
    acc = acc + dwb_ref[0, :]

    # ---- flatten (H, W, C) -> (H*W, C) through VMEM (tile-aligned row blocks) ----
    for h in range(H):
        dwf_ref[h * W:(h + 1) * W, :] = acc[h]
    t = dwf_ref[...]

    # ---- LayerNorm over channels (affine folded into w1/b1) ----
    u = jnp.mean(t, axis=-1, keepdims=True)
    tc = t - u
    var = jnp.mean(tc * tc, axis=-1, keepdims=True)
    xn = tc * lax.rsqrt(var + eps)

    # ---- pwconv1 -> exact-erf GELU (torch default) -> pwconv2 ----
    # bf16 MXU operands, f32 accumulation.
    hdn = jnp.dot(xn.astype(jnp.bfloat16), w1_ref[...],
                  preferred_element_type=jnp.float32) + b1_ref[0, :]
    hdn = 0.5 * hdn * (1.0 + lax.erf(hdn * 0.7071067811865476))
    y = jnp.dot(hdn.astype(jnp.bfloat16), w2_ref[...],
                preferred_element_type=jnp.float32) + b2_ref[0, :]

    # ---- residual add + store ----
    o_ref[0] = x_ref[0] + y


# ----------------------------------------------------------------------------
# Wrapper
# ----------------------------------------------------------------------------
def convnext_block(x_nchw, params, *, eps=1e-6):
    """Forward pass of the ConvNeXt Block. x_nchw: (B, C, H, W) float32."""
    x = jnp.transpose(x_nchw, (0, 2, 3, 1))  # -> NHWC
    B, H, W, C = x.shape
    C4 = 4 * C
    x_tok = x.reshape(B, H * W, C)           # contiguous view of NHWC

    # Fold LayerNorm affine into pwconv1, and gamma (layer scale) into pwconv2.
    w1f = (params["ln_w"][:, None] * params["w1"]).astype(jnp.bfloat16)   # (C, 4C)
    b1f = (params["ln_b"] @ params["w1"] + params["b1"]).reshape(1, C4)   # (1, 4C)
    w2f = (params["w2"] * params["gamma"][None, :]).astype(jnp.bfloat16)  # (4C, C)
    b2f = (params["b2"] * params["gamma"]).reshape(1, C)                  # (1, C)

    kernel = functools.partial(block_kernel, H=H, W=W, eps=eps)

    out_tok = pl.pallas_call(
        kernel,
        out_shape=jax.ShapeDtypeStruct((B, H * W, C), jnp.float32),
        grid=(B,),
        in_specs=[
            pl.BlockSpec((1, H * W, C), lambda b: (b, 0, 0)),   # x (conv in + residual)
            pl.BlockSpec((7, 7, C), lambda b: (0, 0, 0)),       # depthwise weight
            pl.BlockSpec((1, C), lambda b: (0, 0)),             # depthwise bias
            pl.BlockSpec((C, C4), lambda b: (0, 0)),            # w1 (bf16, LN folded)
            pl.BlockSpec((1, C4), lambda b: (0, 0)),            # b1
            pl.BlockSpec((C4, C), lambda b: (0, 0)),            # w2 (bf16, gamma folded)
            pl.BlockSpec((1, C), lambda b: (0, 0)),             # b2
        ],
        out_specs=pl.BlockSpec((1, H * W, C), lambda b: (b, 0, 0)),
        scratch_shapes=[
            pltpu.VMEM((H + 6, W + 16, C), jnp.float32),        # zero-padded image
            pltpu.VMEM((7, H + 6, W, C), jnp.float32),          # kw-shifted column slabs
            pltpu.VMEM((H * W, C), jnp.float32),                # conv output, token layout
        ],
        compiler_params=pltpu.CompilerParams(
            dimension_semantics=("parallel",)),
    )(x_tok, params["dw_w"], params["dw_b"].reshape(1, C), w1f, b1f, w2f, b2f)

    out = out_tok.reshape(B, H, W, C)
    return jnp.transpose(out, (0, 3, 1, 2))  # -> NCHW


# ----------------------------------------------------------------------------
# Pure-JAX f32 reference (mirrors the PyTorch forward)
# ----------------------------------------------------------------------------
def ref_block(x_nchw, params, eps=1e-6):
    B, C, H, W = x_nchw.shape
    rhs = jnp.transpose(params["dw_w"], (2, 0, 1))[:, None, :, :]  # (C,1,7,7)
    dw = lax.conv_general_dilated(
        x_nchw, rhs, window_strides=(1, 1), padding=((3, 3), (3, 3)),
        dimension_numbers=("NCHW", "OIHW", "NCHW"), feature_group_count=C)
    dw = dw + params["dw_b"][None, :, None, None]
    y = jnp.transpose(dw, (0, 2, 3, 1))                            # NHWC
    u = y.mean(-1, keepdims=True)
    v = ((y - u) ** 2).mean(-1, keepdims=True)
    yn = (y - u) / jnp.sqrt(v + eps) * params["ln_w"] + params["ln_b"]
    h = yn @ params["w1"] + params["b1"]
    h = 0.5 * h * (1.0 + lax.erf(h / jnp.sqrt(2.0)))
    z = h @ params["w2"] + params["b2"]
    z = z * params["gamma"]
    return x_nchw + jnp.transpose(z, (0, 3, 1, 2))


# ----------------------------------------------------------------------------
# Main
# ----------------------------------------------------------------------------
if __name__ == "__main__":
    B, C, H, W = 2, 32, 16, 16        # dim = 32, 4*dim = 128
    layer_scale_init_value = 1e-6

    key = jax.random.PRNGKey(0)
    ks = jax.random.split(key, 8)
    params = {
        "dw_w": jax.random.normal(ks[0], (7, 7, C), jnp.float32) * 0.05,
        "dw_b": jax.random.normal(ks[1], (C,), jnp.float32) * 0.05,
        "ln_w": jnp.ones((C,), jnp.float32),
        "ln_b": jnp.zeros((C,), jnp.float32),
        "w1": jax.random.normal(ks[2], (C, 4 * C), jnp.float32) * 0.05,
        "b1": jax.random.normal(ks[3], (4 * C,), jnp.float32) * 0.05,
        "w2": jax.random.normal(ks[4], (4 * C, C), jnp.float32) * 0.05,
        "b2": jax.random.normal(ks[5], (C,), jnp.float32) * 0.05,
        "gamma": layer_scale_init_value * jnp.ones((C,), jnp.float32),
    }
    # drop_path = 0.0 -> Identity, so no stochastic depth branch is needed.

    x = jax.random.normal(ks[6], (B, C, H, W), jnp.float32)

    out = jax.block_until_ready(convnext_block(x, params))
    ref = jax.block_until_ready(ref_block(x, params))

    assert out.shape == x.shape and out.dtype == x.dtype
    assert bool(jnp.allclose(out, ref, atol=1e-4, rtol=1e-4)), "mismatch vs reference"

    print("KERNEL_OK")
</pallas_src>

<mosaic_0001>
module attributes {stable_mosaic.version = 11 : i64} {
  func.func @block_kernel(%arg0: i32, %arg1: memref<1x256x32xf32, #tpu.memory_space<vmem>>, %arg2: memref<7x7x32xf32, #tpu.memory_space<vmem>>, %arg3: memref<1x32xf32, #tpu.memory_space<vmem>>, %arg4: memref<32x128xbf16, #tpu.memory_space<vmem>>, %arg5: memref<1x128xf32, #tpu.memory_space<vmem>>, %arg6: memref<128x32xbf16, #tpu.memory_space<vmem>>, %arg7: memref<1x32xf32, #tpu.memory_space<vmem>>, %arg8: memref<1x256x32xf32, #tpu.memory_space<vmem>>, %arg9: memref<22x32x32xf32, #tpu.memory_space<vmem>>, %arg10: memref<7x22x16x32xf32, #tpu.memory_space<vmem>>, %arg11: memref<256x32xf32, #tpu.memory_space<vmem>>) attributes {dimension_semantics = [#tpu.dimension_semantics<parallel>], iteration_bounds = array<i64: 2>, scalar_prefetch = 0 : i64, scratch_operands = 3 : i64, tpu.core_type = #tpu.core_type<tc>, window_params = [{transform_indices = @transform_0, window_bounds = array<i64: 1, 256, 32>}, {pipeline_mode = #tpu.pipeline_mode<synchronous>, transform_indices = @transform_1, window_bounds = array<i64: 7, 7, 32>}, {pipeline_mode = #tpu.pipeline_mode<synchronous>, transform_indices = @transform_2, window_bounds = array<i64: 1, 32>}, {pipeline_mode = #tpu.pipeline_mode<synchronous>, transform_indices = @transform_3, window_bounds = array<i64: 32, 128>}, {pipeline_mode = #tpu.pipeline_mode<synchronous>, transform_indices = @transform_4, window_bounds = array<i64: 1, 128>}, {pipeline_mode = #tpu.pipeline_mode<synchronous>, transform_indices = @transform_5, window_bounds = array<i64: 128, 32>}, {pipeline_mode = #tpu.pipeline_mode<synchronous>, transform_indices = @transform_6, window_bounds = array<i64: 1, 32>}, {transform_indices = @transform_7, window_bounds = array<i64: 1, 256, 32>}]} {
    %cst = arith.constant 0.000000e+00 : f32
    %0 = vector.broadcast %cst : f32 to vector<22x32x32xf32>
    %c0 = arith.constant 0 : index
    %c0_0 = arith.constant 0 : index
    %c0_1 = arith.constant 0 : index
    %1 = vector.load %arg9[%c0, %c0_0, %c0_1] : memref<22x32x32xf32, #tpu.memory_space<vmem>>, vector<22x32x32xf32>
    tpu.vector_store %arg9[%c0, %c0_0, %c0_1], %0 {strides = array<i32>} : memref<22x32x32xf32, #tpu.memory_space<vmem>>, vector<22x32x32xf32>,
    %c0_2 = arith.constant 0 : index
    %c0_3 = arith.constant 0 : index
    %c0_4 = arith.constant 0 : index
    %2 = vector.load %arg1[%c0_2, %c0_3, %c0_4] : memref<1x256x32xf32, #tpu.memory_space<vmem>>, vector<1x16x32xf32>
    %3 = vector.shape_cast %2 : vector<1x16x32xf32> to vector<16x32xf32>
    %c3 = arith.constant 3 : index
    %c8 = arith.constant 8 : index
    %c0_5 = arith.constant 0 : index
    %4 = vector.load %arg9[%c3, %c8, %c0_5] : memref<22x32x32xf32, #tpu.memory_space<vmem>>, vector<1x16x32xf32>
    %5 = vector.shape_cast %4 : vector<1x16x32xf32> to vector<16x32xf32>
    %6 = vector.shape_cast %3 : vector<16x32xf32> to vector<1x16x32xf32>
    tpu.vector_store %arg9[%c3, %c8, %c0_5], %6 {strides = array<i32>} : memref<22x32x32xf32, #tpu.memory_space<vmem>>, vector<1x16x32xf32>,
    %c0_6 = arith.constant 0 : index
    %c16 = arith.constant 16 : index
    %c0_7 = arith.constant 0 : index
    %7 = vector.load %arg1[%c0_6, %c16, %c0_7] : memref<1x256x32xf32, #tpu.memory_space<vmem>>, vector<1x16x32xf32>
    %8 = vector.shape_cast %7 : vector<1x16x32xf32> to vector<16x32xf32>
    %c4 = arith.constant 4 : index
    %c8_8 = arith.constant 8 : index
    %c0_9 = arith.constant 0 : index
    %9 = vector.load %arg9[%c4, %c8_8, %c0_9] : memref<22x32x32xf32, #tpu.memory_space<vmem>>, vector<1x16x32xf32>
    %10 = vector.shape_cast %9 : vector<1x16x32xf32> to vector<16x32xf32>
    %11 = vector.shape_cast %8 : vector<16x32xf32> to vector<1x16x32xf32>
    tpu.vector_store %arg9[%c4, %c8_8, %c0_9], %11 {strides = array<i32>} : memref<22x32x32xf32, #tpu.memory_space<vmem>>, vector<1x16x32xf32>,
    %c0_10 = arith.constant 0 : index
    %c32 = arith.constant 32 : index
    %c0_11 = arith.constant 0 : index
    %12 = vector.load %arg1[%c0_10, %c32, %c0_11] : memref<1x256x32xf32, #tpu.memory_space<vmem>>, vector<1x16x32xf32>
    %13 = vector.shape_cast %12 : vector<1x16x32xf32> to vector<16x32xf32>
    %c5 = arith.constant 5 : index
    %c8_12 = arith.constant 8 : index
    %c0_13 = arith.constant 0 : index
    %14 = vector.load %arg9[%c5, %c8_12, %c0_13] : memref<22x32x32xf32, #tpu.memory_space<vmem>>, vector<1x16x32xf32>
    %15 = vector.shape_cast %14 : vector<1x16x32xf32> to vector<16x32xf32>
    %16 = vector.shape_cast %13 : vector<16x32xf32> to vector<1x16x32xf32>
    tpu.vector_store %arg9[%c5, %c8_12, %c0_13], %16 {strides = array<i32>} : memref<22x32x32xf32, #tpu.memory_space<vmem>>, vector<1x16x32xf32>,
    %c0_14 = arith.constant 0 : index
    %c48 = arith.constant 48 : index
    %c0_15 = arith.constant 0 : index
    %17 = vector.load %arg1[%c0_14, %c48, %c0_15] : memref<1x256x32xf32, #tpu.memory_space<vmem>>, vector<1x16x32xf32>
    %18 = vector.shape_cast %17 : vector<1x16x32xf32> to vector<16x32xf32>
    %c6 = arith.constant 6 : index
    %c8_16 = arith.constant 8 : index
    %c0_17 = arith.constant 0 : index
    %19 = vector.load %arg9[%c6, %c8_16, %c0_17] : memref<22x32x32xf32, #tpu.memory_space<vmem>>, vector<1x16x32xf32>
    %20 = vector.shape_cast %19 : vector<1x16x32xf32> to vector<16x32xf32>
    %21 = vector.shape_cast %18 : vector<16x32xf32> to vector<1x16x32xf32>
    tpu.vector_store %arg9[%c6, %c8_16, %c0_17], %21 {strides = array<i32>} : memref<22x32x32xf32, #tpu.memory_space<vmem>>, vector<1x16x32xf32>,
    %c0_18 = arith.constant 0 : index
    %c64 = arith.constant 64 : index
    %c0_19 = arith.constant 0 : index
    %22 = vector.load %arg1[%c0_18, %c64, %c0_19] : memref<1x256x32xf32, #tpu.memory_space<vmem>>, vector<1x16x32xf32>
    %23 = vector.shape_cast %22 : vector<1x16x32xf32> to vector<16x32xf32>
    %c7 = arith.constant 7 : index
    %c8_20 = arith.constant 8 : index
    %c0_21 = arith.constant 0 : index
    %24 = vector.load %arg9[%c7, %c8_20, %c0_21] : memref<22x32x32xf32, #tpu.memory_space<vmem>>, vector<1x16x32xf32>
    %25 = vector.shape_cast %24 : vector<1x16x32xf32> to vector<16x32xf32>
    %26 = vector.shape_cast %23 : vector<16x32xf32> to vector<1x16x32xf32>
    tpu.vector_store %arg9[%c7, %c8_20, %c0_21], %26 {strides = array<i32>} : memref<22x32x32xf32, #tpu.memory_space<vmem>>, vector<1x16x32xf32>,
    %c0_22 = arith.constant 0 : index
    %c80 = arith.constant 80 : index
    %c0_23 = arith.constant 0 : index
    %27 = vector.load %arg1[%c0_22, %c80, %c0_23] : memref<1x256x32xf32, #tpu.memory_space<vmem>>, vector<1x16x32xf32>
    %28 = vector.shape_cast %27 : vector<1x16x32xf32> to vector<16x32xf32>
    %c8_24 = arith.constant 8 : index
    %c8_25 = arith.constant 8 : index
    %c0_26 = arith.constant 0 : index
    %29 = vector.load %arg9[%c8_24, %c8_25, %c0_26] : memref<22x32x32xf32, #tpu.memory_space<vmem>>, vector<1x16x32xf32>
    %30 = vector.shape_cast %29 : vector<1x16x32xf32> to vector<16x32xf32>
    %31 = vector.shape_cast %28 : vector<16x32xf32> to vector<1x16x32xf32>
    tpu.vector_store %arg9[%c8_24, %c8_25, %c0_26], %31 {strides = array<i32>} : memref<22x32x32xf32, #tpu.memory_space<vmem>>, vector<1x16x32xf32>,
    %c0_27 = arith.constant 0 : index
    %c96 = arith.constant 96 : index
    %c0_28 = arith.constant 0 : index
    %32 = vector.load %arg1[%c0_27, %c96, %c0_28] : memref<1x256x32xf32, #tpu.memory_space<vmem>>, vector<1x16x32xf32>
    %33 = vector.shape_cast %32 : vector<1x16x32xf32> to vector<16x32xf32>
    %c9 = arith.constant 9 : index
    %c8_29 = arith.constant 8 : index
    %c0_30 = arith.constant 0 : index
    %34 = vector.load %arg9[%c9, %c8_29, %c0_30] : memref<22x32x32xf32, #tpu.memory_space<vmem>>, vector<1x16x32xf32>
    %35 = vector.shape_cast %34 : vector<1x16x32xf32> to vector<16x32xf32>
    %36 = vector.shape_cast %33 : vector<16x32xf32> to vector<1x16x32xf32>
    tpu.vector_store %arg9[%c9, %c8_29, %c0_30], %36 {strides = array<i32>} : memref<22x32x32xf32, #tpu.memory_space<vmem>>, vector<1x16x32xf32>,
    %c0_31 = arith.constant 0 : index
    %c112 = arith.constant 112 : index
    %c0_32 = arith.constant 0 : index
    %37 = vector.load %arg1[%c0_31, %c112, %c0_32] : memref<1x256x32xf32, #tpu.memory_space<vmem>>, vector<1x16x32xf32>
    %38 = vector.shape_cast %37 : vector<1x16x32xf32> to vector<16x32xf32>
    %c10 = arith.constant 10 : index
    %c8_33 = arith.constant 8 : index
    %c0_34 = arith.constant 0 : index
    %39 = vector.load %arg9[%c10, %c8_33, %c0_34] : memref<22x32x32xf32, #tpu.memory_space<vmem>>, vector<1x16x32xf32>
    %40 = vector.shape_cast %39 : vector<1x16x32xf32> to vector<16x32xf32>
    %41 = vector.shape_cast %38 : vector<16x32xf32> to vector<1x16x32xf32>
    tpu.vector_store %arg9[%c10, %c8_33, %c0_34], %41 {strides = array<i32>} : memref<22x32x32xf32, #tpu.memory_space<vmem>>, vector<1x16x32xf32>,
    %c0_35 = arith.constant 0 : index
    %c128 = arith.constant 128 : index
    %c0_36 = arith.constant 0 : index
    %42 = vector.load %arg1[%c0_35, %c128, %c0_36] : memref<1x256x32xf32, #tpu.memory_space<vmem>>, vector<1x16x32xf32>
    %43 = vector.shape_cast %42 : vector<1x16x32xf32> to vector<16x32xf32>
    %c11 = arith.constant 11 : index
    %c8_37 = arith.constant 8 : index
    %c0_38 = arith.constant 0 : index
    %44 = vector.load %arg9[%c11, %c8_37, %c0_38] : memref<22x32x32xf32, #tpu.memory_space<vmem>>, vector<1x16x32xf32>
    %45 = vector.shape_cast %44 : vector<1x16x32xf32> to vector<16x32xf32>
    %46 = vector.shape_cast %43 : vector<16x32xf32> to vector<1x16x32xf32>
    tpu.vector_store %arg9[%c11, %c8_37, %c0_38], %46 {strides = array<i32>} : memref<22x32x32xf32, #tpu.memory_space<vmem>>, vector<1x16x32xf32>,
    %c0_39 = arith.constant 0 : index
    %c144 = arith.constant 144 : index
    %c0_40 = arith.constant 0 : index
    %47 = vector.load %arg1[%c0_39, %c144, %c0_40] : memref<1x256x32xf32, #tpu.memory_space<vmem>>, vector<1x16x32xf32>
    %48 = vector.shape_cast %47 : vector<1x16x32xf32> to vector<16x32xf32>
    %c12 = arith.constant 12 : index
    %c8_41 = arith.constant 8 : index
    %c0_42 = arith.constant 0 : index
    %49 = vector.load %arg9[%c12, %c8_41, %c0_42] : memref<22x32x32xf32, #tpu.memory_space<vmem>>, vector<1x16x32xf32>
    %50 = vector.shape_cast %49 : vector<1x16x32xf32> to vector<16x32xf32>
    %51 = vector.shape_cast %48 : vector<16x32xf32> to vector<1x16x32xf32>
    tpu.vector_store %arg9[%c12, %c8_41, %c0_42], %51 {strides = array<i32>} : memref<22x32x32xf32, #tpu.memory_space<vmem>>, vector<1x16x32xf32>,
    %c0_43 = arith.constant 0 : index
    %c160 = arith.constant 160 : index
    %c0_44 = arith.constant 0 : index
    %52 = vector.load %arg1[%c0_43, %c160, %c0_44] : memref<1x256x32xf32, #tpu.memory_space<vmem>>, vector<1x16x32xf32>
    %53 = vector.shape_cast %52 : vector<1x16x32xf32> to vector<16x32xf32>
    %c13 = arith.constant 13 : index
    %c8_45 = arith.constant 8 : index
    %c0_46 = arith.constant 0 : index
    %54 = vector.load %arg9[%c13, %c8_45, %c0_46] : memref<22x32x32xf32, #tpu.memory_space<vmem>>, vector<1x16x32xf32>
    %55 = vector.shape_cast %54 : vector<1x16x32xf32> to vector<16x32xf32>
    %56 = vector.shape_cast %53 : vector<16x32xf32> to vector<1x16x32xf32>
    tpu.vector_store %arg9[%c13, %c8_45, %c0_46], %56 {strides = array<i32>} : memref<22x32x32xf32, #tpu.memory_space<vmem>>, vector<1x16x32xf32>,
    %c0_47 = arith.constant 0 : index
    %c176 = arith.constant 176 : index
    %c0_48 = arith.constant 0 : index
    %57 = vector.load %arg1[%c0_47, %c176, %c0_48] : memref<1x256x32xf32, #tpu.memory_space<vmem>>, vector<1x16x32xf32>
    %58 = vector.shape_cast %57 : vector<1x16x32xf32> to vector<16x32xf32>
    %c14 = arith.constant 14 : index
    %c8_49 = arith.constant 8 : index
    %c0_50 = arith.constant 0 : index
    %59 = vector.load %arg9[%c14, %c8_49, %c0_50] : memref<22x32x32xf32, #tpu.memory_space<vmem>>, vector<1x16x32xf32>
    %60 = vector.shape_cast %59 : vector<1x16x32xf32> to vector<16x32xf32>
    %61 = vector.shape_cast %58 : vector<16x32xf32> to vector<1x16x32xf32>
    tpu.vector_store %arg9[%c14, %c8_49, %c0_50], %61 {strides = array<i32>} : memref<22x32x32xf32, #tpu.memory_space<vmem>>, vector<1x16x32xf32>,
    %c0_51 = arith.constant 0 : index
    %c192 = arith.constant 192 : index
    %c0_52 = arith.constant 0 : index
    %62 = vector.load %arg1[%c0_51, %c192, %c0_52] : memref<1x256x32xf32, #tpu.memory_space<vmem>>, vector<1x16x32xf32>
    %63 = vector.shape_cast %62 : vector<1x16x32xf32> to vector<16x32xf32>
    %c15 = arith.constant 15 : index
    %c8_53 = arith.constant 8 : index
    %c0_54 = arith.constant 0 : index
    %64 = vector.load %arg9[%c15, %c8_53, %c0_54] : memref<22x32x32xf32, #tpu.memory_space<vmem>>, vector<1x16x32xf32>
    %65 = vector.shape_cast %64 : vector<1x16x32xf32> to vector<16x32xf32>
    %66 = vector.shape_cast %63 : vector<16x32xf32> to vector<1x16x32xf32>
    tpu.vector_store %arg9[%c15, %c8_53, %c0_54], %66 {strides = array<i32>} : memref<22x32x32xf32, #tpu.memory_space<vmem>>, vector<1x16x32xf32>,
    %c0_55 = arith.constant 0 : index
    %c208 = arith.constant 208 : index
    %c0_56 = arith.constant 0 : index
    %67 = vector.load %arg1[%c0_55, %c208, %c0_56] : memref<1x256x32xf32, #tpu.memory_space<vmem>>, vector<1x16x32xf32>
    %68 = vector.shape_cast %67 : vector<1x16x32xf32> to vector<16x32xf32>
    %c16_57 = arith.constant 16 : index
    %c8_58 = arith.constant 8 : index
    %c0_59 = arith.constant 0 : index
    %69 = vector.load %arg9[%c16_57, %c8_58, %c0_59] : memref<22x32x32xf32, #tpu.memory_space<vmem>>, vector<1x16x32xf32>
    %70 = vector.shape_cast %69 : vector<1x16x32xf32> to vector<16x32xf32>
    %71 = vector.shape_cast %68 : vector<16x32xf32> to vector<1x16x32xf32>
    tpu.vector_store %arg9[%c16_57, %c8_58, %c0_59], %71 {strides = array<i32>} : memref<22x32x32xf32, #tpu.memory_space<vmem>>, vector<1x16x32xf32>,
    %c0_60 = arith.constant 0 : index
    %c224 = arith.constant 224 : index
    %c0_61 = arith.constant 0 : index
    %72 = vector.load %arg1[%c0_60, %c224, %c0_61] : memref<1x256x32xf32, #tpu.memory_space<vmem>>, vector<1x16x32xf32>
    %73 = vector.shape_cast %72 : vector<1x16x32xf32> to vector<16x32xf32>
    %c17 = arith.constant 17 : index
    %c8_62 = arith.constant 8 : index
    %c0_63 = arith.constant 0 : index
    %74 = vector.load %arg9[%c17, %c8_62, %c0_63] : memref<22x32x32xf32, #tpu.memory_space<vmem>>, vector<1x16x32xf32>
    %75 = vector.shape_cast %74 : vector<1x16x32xf32> to vector<16x32xf32>
    %76 = vector.shape_cast %73 : vector<16x32xf32> to vector<1x16x32xf32>
    tpu.vector_store %arg9[%c17, %c8_62, %c0_63], %76 {strides = array<i32>} : memref<22x32x32xf32, #tpu.memory_space<vmem>>, vector<1x16x32xf32>,
    %c0_64 = arith.constant 0 : index
    %c240 = arith.constant 240 : index
    %c0_65 = arith.constant 0 : index
    %77 = vector.load %arg1[%c0_64, %c240, %c0_65] : memref<1x256x32xf32, #tpu.memory_space<vmem>>, vector<1x16x32xf32>
    %78 = vector.shape_cast %77 : vector<1x16x32xf32> to vector<16x32xf32>
    %c18 = arith.constant 18 : index
    %c8_66 = arith.constant 8 : index
    %c0_67 = arith.constant 0 : index
    %79 = vector.load %arg9[%c18, %c8_66, %c0_67] : memref<22x32x32xf32, #tpu.memory_space<vmem>>, vector<1x16x32xf32>
    %80 = vector.shape_cast %79 : vector<1x16x32xf32> to vector<16x32xf32>
    %81 = vector.shape_cast %78 : vector<16x32xf32> to vector<1x16x32xf32>
    tpu.vector_store %arg9[%c18, %c8_66, %c0_67], %81 {strides = array<i32>} : memref<22x32x32xf32, #tpu.memory_space<vmem>>, vector<1x16x32xf32>,
    %c0_68 = arith.constant 0 : index
    %c5_69 = arith.constant 5 : index
    %c0_70 = arith.constant 0 : index
    %82 = vector.load %arg9[%c0_68, %c5_69, %c0_70] : memref<22x32x32xf32, #tpu.memory_space<vmem>>, vector<22x16x32xf32>
    %c0_71 = arith.constant 0 : index
    %c0_72 = arith.constant 0 : index
    %c0_73 = arith.constant 0 : index
    %c0_74 = arith.constant 0 : index
    %83 = vector.load %arg10[%c0_71, %c0_72, %c0_73, %c0_74] : memref<7x22x16x32xf32, #tpu.memory_space<vmem>>, vector<1x22x16x32xf32>
    %84 = vector.shape_cast %83 : vector<1x22x16x32xf32> to vector<22x16x32xf32>
    %85 = vector.shape_cast %82 : vector<22x16x32xf32> to vector<1x22x16x32xf32>
    tpu.vector_store %arg10[%c0_71, %c0_72, %c0_73, %c0_74], %85 {strides = array<i32>} : memref<7x22x16x32xf32, #tpu.memory_space<vmem>>, vector<1x22x16x32xf32>,
    %c0_75 = arith.constant 0 : index
    %c6_76 = arith.constant 6 : index
    %c0_77 = arith.constant 0 : index
    %86 = vector.load %arg9[%c0_75, %c6_76, %c0_77] : memref<22x32x32xf32, #tpu.memory_space<vmem>>, vector<22x16x32xf32>
    %c1 = arith.constant 1 : index
    %c0_78 = arith.constant 0 : index
    %c0_79 = arith.constant 0 : index
    %c0_80 = arith.constant 0 : index
    %87 = vector.load %arg10[%c1, %c0_78, %c0_79, %c0_80] : memref<7x22x16x32xf32, #tpu.memory_space<vmem>>, vector<1x22x16x32xf32>
    %88 = vector.shape_cast %87 : vector<1x22x16x32xf32> to vector<22x16x32xf32>
    %89 = vector.shape_cast %86 : vector<22x16x32xf32> to vector<1x22x16x32xf32>
    tpu.vector_store %arg10[%c1, %c0_78, %c0_79, %c0_80], %89 {strides = array<i32>} : memref<7x22x16x32xf32, #tpu.memory_space<vmem>>, vector<1x22x16x32xf32>,
    %c0_81 = arith.constant 0 : index
    %c7_82 = arith.constant 7 : index
    %c0_83 = arith.constant 0 : index
    %90 = vector.load %arg9[%c0_81, %c7_82, %c0_83] : memref<22x32x32xf32, #tpu.memory_space<vmem>>, vector<22x16x32xf32>
    %c2 = arith.constant 2 : index
    %c0_84 = arith.constant 0 : index
    %c0_85 = arith.constant 0 : index
    %c0_86 = arith.constant 0 : index
    %91 = vector.load %arg10[%c2, %c0_84, %c0_85, %c0_86] : memref<7x22x16x32xf32, #tpu.memory_space<vmem>>, vector<1x22x16x32xf32>
    %92 = vector.shape_cast %91 : vector<1x22x16x32xf32> to vector<22x16x32xf32>
    %93 = vector.shape_cast %90 : vector<22x16x32xf32> to vector<1x22x16x32xf32>
    tpu.vector_store %arg10[%c2, %c0_84, %c0_85, %c0_86], %93 {strides = array<i32>} : memref<7x22x16x32xf32, #tpu.memory_space<vmem>>, vector<1x22x16x32xf32>,
    %c0_87 = arith.constant 0 : index
    %c8_88 = arith.constant 8 : index
    %c0_89 = arith.constant 0 : index
    %94 = vector.load %arg9[%c0_87, %c8_88, %c0_89] : memref<22x32x32xf32, #tpu.memory_space<vmem>>, vector<22x16x32xf32>
    %c3_90 = arith.constant 3 : index
    %c0_91 = arith.constant 0 : index
    %c0_92 = arith.constant 0 : index
    %c0_93 = arith.constant 0 : index
    %95 = vector.load %arg10[%c3_90, %c0_91, %c0_92, %c0_93] : memref<7x22x16x32xf32, #tpu.memory_space<vmem>>, vector<1x22x16x32xf32>
    %96 = vector.shape_cast %95 : vector<1x22x16x32xf32> to vector<22x16x32xf32>
    %97 = vector.shape_cast %94 : vector<22x16x32xf32> to vector<1x22x16x32xf32>
    tpu.vector_store %arg10[%c3_90, %c0_91, %c0_92, %c0_93], %97 {strides = array<i32>} : memref<7x22x16x32xf32, #tpu.memory_space<vmem>>, vector<1x22x16x32xf32>,
    %c0_94 = arith.constant 0 : index
    %c9_95 = arith.constant 9 : index
    %c0_96 = arith.constant 0 : index
    %98 = vector.load %arg9[%c0_94, %c9_95, %c0_96] : memref<22x32x32xf32, #tpu.memory_space<vmem>>, vector<22x16x32xf32>
    %c4_97 = arith.constant 4 : index
    %c0_98 = arith.constant 0 : index
    %c0_99 = arith.constant 0 : index
    %c0_100 = arith.constant 0 : index
    %99 = vector.load %arg10[%c4_97, %c0_98, %c0_99, %c0_100] : memref<7x22x16x32xf32, #tpu.memory_space<vmem>>, vector<1x22x16x32xf32>
    %100 = vector.shape_cast %99 : vector<1x22x16x32xf32> to vector<22x16x32xf32>
    %101 = vector.shape_cast %98 : vector<22x16x32xf32> to vector<1x22x16x32xf32>
    tpu.vector_store %arg10[%c4_97, %c0_98, %c0_99, %c0_100], %101 {strides = array<i32>} : memref<7x22x16x32xf32, #tpu.memory_space<vmem>>, vector<1x22x16x32xf32>,
    %c0_101 = arith.constant 0 : index
    %c10_102 = arith.constant 10 : index
    %c0_103 = arith.constant 0 : index
    %102 = vector.load %arg9[%c0_101, %c10_102, %c0_103] : memref<22x32x32xf32, #tpu.memory_space<vmem>>, vector<22x16x32xf32>
    %c5_104 = arith.constant 5 : index
    %c0_105 = arith.constant 0 : index
    %c0_106 = arith.constant 0 : index
    %c0_107 = arith.constant 0 : index
    %103 = vector.load %arg10[%c5_104, %c0_105, %c0_106, %c0_107] : memref<7x22x16x32xf32, #tpu.memory_space<vmem>>, vector<1x22x16x32xf32>
    %104 = vector.shape_cast %103 : vector<1x22x16x32xf32> to vector<22x16x32xf32>
    %105 = vector.shape_cast %102 : vector<22x16x32xf32> to vector<1x22x16x32xf32>
    tpu.vector_store %arg10[%c5_104, %c0_105, %c0_106, %c0_107], %105 {strides = array<i32>} : memref<7x22x16x32xf32, #tpu.memory_space<vmem>>, vector<1x22x16x32xf32>,
    %c0_108 = arith.constant 0 : index
    %c11_109 = arith.constant 11 : index
    %c0_110 = arith.constant 0 : index
    %106 = vector.load %arg9[%c0_108, %c11_109, %c0_110] : memref<22x32x32xf32, #tpu.memory_space<vmem>>, vector<22x16x32xf32>
    %c6_111 = arith.constant 6 : index
    %c0_112 = arith.constant 0 : index
    %c0_113 = arith.constant 0 : index
    %c0_114 = arith.constant 0 : index
    %107 = vector.load %arg10[%c6_111, %c0_112, %c0_113, %c0_114] : memref<7x22x16x32xf32, #tpu.memory_space<vmem>>, vector<1x22x16x32xf32>
    %108 = vector.shape_cast %107 : vector<1x22x16x32xf32> to vector<22x16x32xf32>
    %109 = vector.shape_cast %106 : vector<22x16x32xf32> to vector<1x22x16x32xf32>
    tpu.vector_store %arg10[%c6_111, %c0_112, %c0_113, %c0_114], %109 {strides = array<i32>} : memref<7x22x16x32xf32, #tpu.memory_space<vmem>>, vector<1x22x16x32xf32>,
    %cst_115 = arith.constant 0.000000e+00 : f32
    %110 = vector.broadcast %cst_115 : f32 to vector<16x16x32xf32>
    %c0_116 = arith.constant 0 : index
    %c0_117 = arith.constant 0 : index
    %c0_118 = arith.constant 0 : index
    %c0_119 = arith.constant 0 : index
    %111 = vector.load %arg10[%c0_116, %c0_117, %c0_118, %c0_119] : memref<7x22x16x32xf32, #tpu.memory_space<vmem>>, vector<1x16x16x32xf32>
    %112 = vector.shape_cast %111 : vector<1x16x16x32xf32> to vector<16x16x32xf32>
    %c0_120 = arith.constant 0 : index
    %c0_121 = arith.constant 0 : index
    %c0_122 = arith.constant 0 : index
    %113 = vector.load %arg2[%c0_120, %c0_121, %c0_122] : memref<7x7x32xf32, #tpu.memory_space<vmem>>, vector<1x1x32xf32>
    %114 = vector.shape_cast %113 : vector<1x1x32xf32> to vector<32xf32>
    %115 = vector.shape_cast %114 : vector<32xf32> to vector<1x1x32xf32>
    %116 = vector.broadcast %115 : vector<1x1x32xf32> to vector<16x16x32xf32>
    %117 = arith.mulf %112, %116 : vector<16x16x32xf32>
    %118 = arith.addf %110, %117 : vector<16x16x32xf32>
    %c1_123 = arith.constant 1 : index
    %c0_124 = arith.constant 0 : index
    %c0_125 = arith.constant 0 : index
    %c0_126 = arith.constant 0 : index
    %119 = vector.load %arg10[%c1_123, %c0_124, %c0_125, %c0_126] : memref<7x22x16x32xf32, #tpu.memory_space<vmem>>, vector<1x16x16x32xf32>
    %120 = vector.shape_cast %119 : vector<1x16x16x32xf32> to vector<16x16x32xf32>
    %c0_127 = arith.constant 0 : index
    %c1_128 = arith.constant 1 : index
    %c0_129 = arith.constant 0 : index
    %121 = vector.load %arg2[%c0_127, %c1_128, %c0_129] : memref<7x7x32xf32, #tpu.memory_space<vmem>>, vector<1x1x32xf32>
    %122 = vector.shape_cast %121 : vector<1x1x32xf32> to vector<32xf32>
    %123 = vector.shape_cast %122 : vector<32xf32> to vector<1x1x32xf32>
    %124 = vector.broadcast %123 : vector<1x1x32xf32> to vector<16x16x32xf32>
    %125 = arith.mulf %120, %124 : vector<16x16x32xf32>
    %126 = arith.addf %118, %125 : vector<16x16x32xf32>
    %c2_130 = arith.constant 2 : index
    %c0_131 = arith.constant 0 : index
    %c0_132 = arith.constant 0 : index
    %c0_133 = arith.constant 0 : index
    %127 = vector.load %arg10[%c2_130, %c0_131, %c0_132, %c0_133] : memref<7x22x16x32xf32, #tpu.memory_space<vmem>>, vector<1x16x16x32xf32>
    %128 = vector.shape_cast %127 : vector<1x16x16x32xf32> to vector<16x16x32xf32>
    %c0_134 = arith.constant 0 : index
    %c2_135 = arith.constant 2 : index
    %c0_136 = arith.constant 0 : index
    %129 = vector.load %arg2[%c0_134, %c2_135, %c0_136] : memref<7x7x32xf32, #tpu.memory_space<vmem>>, vector<1x1x32xf32>
    %130 = vector.shape_cast %129 : vector<1x1x32xf32> to vector<32xf32>
    %131 = vector.shape_cast %130 : vector<32xf32> to vector<1x1x32xf32>
    %132 = vector.broadcast %131 : vector<1x1x32xf32> to vector<16x16x32xf32>
    %133 = arith.mulf %128, %132 : vector<16x16x32xf32>
    %134 = arith.addf %126, %133 : vector<16x16x32xf32>
    %c3_137 = arith.constant 3 : index
    %c0_138 = arith.constant 0 : index
    %c0_139 = arith.constant 0 : index
    %c0_140 = arith.constant 0 : index
    %135 = vector.load %arg10[%c3_137, %c0_138, %c0_139, %c0_140] : memref<7x22x16x32xf32, #tpu.memory_space<vmem>>, vector<1x16x16x32xf32>
    %136 = vector.shape_cast %135 : vector<1x16x16x32xf32> to vector<16x16x32xf32>
    %c0_141 = arith.constant 0 : index
    %c3_142 = arith.constant 3 : index
    %c0_143 = arith.constant 0 : index
    %137 = vector.load %arg2[%c0_141, %c3_142, %c0_143] : memref<7x7x32xf32, #tpu.memory_space<vmem>>, vector<1x1x32xf32>
    %138 = vector.shape_cast %137 : vector<1x1x32xf32> to vector<32xf32>
    %139 = vector.shape_cast %138 : vector<32xf32> to vector<1x1x32xf32>
    %140 = vector.broadcast %139 : vector<1x1x32xf32> to vector<16x16x32xf32>
    %141 = arith.mulf %136, %140 : vector<16x16x32xf32>
    %142 = arith.addf %134, %141 : vector<16x16x32xf32>
    %c4_144 = arith.constant 4 : index
    %c0_145 = arith.constant 0 : index
    %c0_146 = arith.constant 0 : index
    %c0_147 = arith.constant 0 : index
    %143 = vector.load %arg10[%c4_144, %c0_145, %c0_146, %c0_147] : memref<7x22x16x32xf32, #tpu.memory_space<vmem>>, vector<1x16x16x32xf32>
    %144 = vector.shape_cast %143 : vector<1x16x16x32xf32> to vector<16x16x32xf32>
    %c0_148 = arith.constant 0 : index
    %c4_149 = arith.constant 4 : index
    %c0_150 = arith.constant 0 : index
    %145 = vector.load %arg2[%c0_148, %c4_149, %c0_150] : memref<7x7x32xf32, #tpu.memory_space<vmem>>, vector<1x1x32xf32>
    %146 = vector.shape_cast %145 : vector<1x1x32xf32> to vector<32xf32>
    %147 = vector.shape_cast %146 : vector<32xf32> to vector<1x1x32xf32>
    %148 = vector.broadcast %147 : vector<1x1x32xf32> to vector<16x16x32xf32>
    %149 = arith.mulf %144, %148 : vector<16x16x32xf32>
    %150 = arith.addf %142, %149 : vector<16x16x32xf32>
    %c5_151 = arith.constant 5 : index
    %c0_152 = arith.constant 0 : index
    %c0_153 = arith.constant 0 : index
    %c0_154 = arith.constant 0 : index
    %151 = vector.load %arg10[%c5_151, %c0_152, %c0_153, %c0_154] : memref<7x22x16x32xf32, #tpu.memory_space<vmem>>, vector<1x16x16x32xf32>
    %152 = vector.shape_cast %151 : vector<1x16x16x32xf32> to vector<16x16x32xf32>
    %c0_155 = arith.constant 0 : index
    %c5_156 = arith.constant 5 : index
    %c0_157 = arith.constant 0 : index
    %153 = vector.load %arg2[%c0_155, %c5_156, %c0_157] : memref<7x7x32xf32, #tpu.memory_space<vmem>>, vector<1x1x32xf32>
    %154 = vector.shape_cast %153 : vector<1x1x32xf32> to vector<32xf32>
    %155 = vector.shape_cast %154 : vector<32xf32> to vector<1x1x32xf32>
    %156 = vector.broadcast %155 : vector<1x1x32xf32> to vector<16x16x32xf32>
    %157 = arith.mulf %152, %156 : vector<16x16x32xf32>
    %158 = arith.addf %150, %157 : vector<16x16x32xf32>
    %c6_158 = arith.constant 6 : index
    %c0_159 = arith.constant 0 : index
    %c0_160 = arith.constant 0 : index
    %c0_161 = arith.constant 0 : index
    %159 = vector.load %arg10[%c6_158, %c0_159, %c0_160, %c0_161] : memref<7x22x16x32xf32, #tpu.memory_space<vmem>>, vector<1x16x16x32xf32>
    %160 = vector.shape_cast %159 : vector<1x16x16x32xf32> to vector<16x16x32xf32>
    %c0_162 = arith.constant 0 : index
    %c6_163 = arith.constant 6 : index
    %c0_164 = arith.constant 0 : index
    %161 = vector.load %arg2[%c0_162, %c6_163, %c0_164] : memref<7x7x32xf32, #tpu.memory_space<vmem>>, vector<1x1x32xf32>
    %162 = vector.shape_cast %161 : vector<1x1x32xf32> to vector<32xf32>
    %163 = vector.shape_cast %162 : vector<32xf32> to vector<1x1x32xf32>
    %164 = vector.broadcast %163 : vector<1x1x32xf32> to vector<16x16x32xf32>
    %165 = arith.mulf %160, %164 : vector<16x16x32xf32>
    %166 = arith.addf %158, %165 : vector<16x16x32xf32>
    %c0_165 = arith.constant 0 : index
    %c1_166 = arith.constant 1 : index
    %c0_167 = arith.constant 0 : index
    %c0_168 = arith.constant 0 : index
    %167 = vector.load %arg10[%c0_165, %c1_166, %c0_167, %c0_168] : memref<7x22x16x32xf32, #tpu.memory_space<vmem>>, vector<1x16x16x32xf32>
    %168 = vector.shape_cast %167 : vector<1x16x16x32xf32> to vector<16x16x32xf32>
    %c1_169 = arith.constant 1 : index
    %c0_170 = arith.constant 0 : index
    %c0_171 = arith.constant 0 : index
    %169 = vector.load %arg2[%c1_169, %c0_170, %c0_171] : memref<7x7x32xf32, #tpu.memory_space<vmem>>, vector<1x1x32xf32>
    %170 = vector.shape_cast %169 : vector<1x1x32xf32> to vector<32xf32>
    %171 = vector.shape_cast %170 : vector<32xf32> to vector<1x1x32xf32>
    %172 = vector.broadcast %171 : vector<1x1x32xf32> to vector<16x16x32xf32>
    %173 = arith.mulf %168, %172 : vector<16x16x32xf32>
    %174 = arith.addf %166, %173 : vector<16x16x32xf32>
    %c1_172 = arith.constant 1 : index
    %c1_173 = arith.constant 1 : index
    %c0_174 = arith.constant 0 : index
    %c0_175 = arith.constant 0 : index
    %175 = vector.load %arg10[%c1_172, %c1_173, %c0_174, %c0_175] : memref<7x22x16x32xf32, #tpu.memory_space<vmem>>, vector<1x16x16x32xf32>
    %176 = vector.shape_cast %175 : vector<1x16x16x32xf32> to vector<16x16x32xf32>
    %c1_176 = arith.constant 1 : index
    %c1_177 = arith.constant 1 : index
    %c0_178 = arith.constant 0 : index
    %177 = vector.load %arg2[%c1_176, %c1_177, %c0_178] : memref<7x7x32xf32, #tpu.memory_space<vmem>>, vector<1x1x32xf32>
    %178 = vector.shape_cast %177 : vector<1x1x32xf32> to vector<32xf32>
    %179 = vector.shape_cast %178 : vector<32xf32> to vector<1x1x32xf32>
    %180 = vector.broadcast %179 : vector<1x1x32xf32> to vector<16x16x32xf32>
    %181 = arith.mulf %176, %180 : vector<16x16x32xf32>
    %182 = arith.addf %174, %181 : vector<16x16x32xf32>
    %c2_179 = arith.constant 2 : index
    %c1_180 = arith.constant 1 : index
    %c0_181 = arith.constant 0 : index
    %c0_182 = arith.constant 0 : index
    %183 = vector.load %arg10[%c2_179, %c1_180, %c0_181, %c0_182] : memref<7x22x16x32xf32, #tpu.memory_space<vmem>>, vector<1x16x16x32xf32>
    %184 = vector.shape_cast %183 : vector<1x16x16x32xf32> to vector<16x16x32xf32>
    %c1_183 = arith.constant 1 : index
    %c2_184 = arith.constant 2 : index
    %c0_185 = arith.constant 0 : index
    %185 = vector.load %arg2[%c1_183, %c2_184, %c0_185] : memref<7x7x32xf32, #tpu.memory_space<vmem>>, vector<1x1x32xf32>
    %186 = vector.shape_cast %185 : vector<1x1x32xf32> to vector<32xf32>
    %187 = vector.shape_cast %186 : vector<32xf32> to vector<1x1x32xf32>
    %188 = vector.broadcast %187 : vector<1x1x32xf32> to vector<16x16x32xf32>
    %189 = arith.mulf %184, %188 : vector<16x16x32xf32>
    %190 = arith.addf %182, %189 : vector<16x16x32xf32>
    %c3_186 = arith.constant 3 : index
    %c1_187 = arith.constant 1 : index
    %c0_188 = arith.constant 0 : index
    %c0_189 = arith.constant 0 : index
    %191 = vector.load %arg10[%c3_186, %c1_187, %c0_188, %c0_189] : memref<7x22x16x32xf32, #tpu.memory_space<vmem>>, vector<1x16x16x32xf32>
    %192 = vector.shape_cast %191 : vector<1x16x16x32xf32> to vector<16x16x32xf32>
    %c1_190 = arith.constant 1 : index
    %c3_191 = arith.constant 3 : index
    %c0_192 = arith.constant 0 : index
    %193 = vector.load %arg2[%c1_190, %c3_191, %c0_192] : memref<7x7x32xf32, #tpu.memory_space<vmem>>, vector<1x1x32xf32>
    %194 = vector.shape_cast %193 : vector<1x1x32xf32> to vector<32xf32>
    %195 = vector.shape_cast %194 : vector<32xf32> to vector<1x1x32xf32>
    %196 = vector.broadcast %195 : vector<1x1x32xf32> to vector<16x16x32xf32>
    %197 = arith.mulf %192, %196 : vector<16x16x32xf32>
    %198 = arith.addf %190, %197 : vector<16x16x32xf32>
    %c4_193 = arith.constant 4 : index
    %c1_194 = arith.constant 1 : index
    %c0_195 = arith.constant 0 : index
    %c0_196 = arith.constant 0 : index
    %199 = vector.load %arg10[%c4_193, %c1_194, %c0_195, %c0_196] : memref<7x22x16x32xf32, #tpu.memory_space<vmem>>, vector<1x16x16x32xf32>
    %200 = vector.shape_cast %199 : vector<1x16x16x32xf32> to vector<16x16x32xf32>
    %c1_197 = arith.constant 1 : index
    %c4_198 = arith.constant 4 : index
    %c0_199 = arith.constant 0 : index
    %201 = vector.load %arg2[%c1_197, %c4_198, %c0_199] : memref<7x7x32xf32, #tpu.memory_space<vmem>>, vector<1x1x32xf32>
    %202 = vector.shape_cast %201 : vector<1x1x32xf32> to vector<32xf32>
    %203 = vector.shape_cast %202 : vector<32xf32> to vector<1x1x32xf32>
    %204 = vector.broadcast %203 : vector<1x1x32xf32> to vector<16x16x32xf32>
    %205 = arith.mulf %200, %204 : vector<16x16x32xf32>
    %206 = arith.addf %198, %205 : vector<16x16x32xf32>
    %c5_200 = arith.constant 5 : index
    %c1_201 = arith.constant 1 : index
    %c0_202 = arith.constant 0 : index
    %c0_203 = arith.constant 0 : index
    %207 = vector.load %arg10[%c5_200, %c1_201, %c0_202, %c0_203] : memref<7x22x16x32xf32, #tpu.memory_space<vmem>>, vector<1x16x16x32xf32>
    %208 = vector.shape_cast %207 : vector<1x16x16x32xf32> to vector<16x16x32xf32>
    %c1_204 = arith.constant 1 : index
    %c5_205 = arith.constant 5 : index
    %c0_206 = arith.constant 0 : index
    %209 = vector.load %arg2[%c1_204, %c5_205, %c0_206] : memref<7x7x32xf32, #tpu.memory_space<vmem>>, vector<1x1x32xf32>
    %210 = vector.shape_cast %209 : vector<1x1x32xf32> to vector<32xf32>
    %211 = vector.shape_cast %210 : vector<32xf32> to vector<1x1x32xf32>
    %212 = vector.broadcast %211 : vector<1x1x32xf32> to vector<16x16x32xf32>
    %213 = arith.mulf %208, %212 : vector<16x16x32xf32>
    %214 = arith.addf %206, %213 : vector<16x16x32xf32>
    %c6_207 = arith.constant 6 : index
    %c1_208 = arith.constant 1 : index
    %c0_209 = arith.constant 0 : index
    %c0_210 = arith.constant 0 : index
    %215 = vector.load %arg10[%c6_207, %c1_208, %c0_209, %c0_210] : memref<7x22x16x32xf32, #tpu.memory_space<vmem>>, vector<1x16x16x32xf32>
    %216 = vector.shape_cast %215 : vector<1x16x16x32xf32> to vector<16x16x32xf32>
    %c1_211 = arith.constant 1 : index
    %c6_212 = arith.constant 6 : index
    %c0_213 = arith.constant 0 : index
    %217 = vector.load %arg2[%c1_211, %c6_212, %c0_213] : memref<7x7x32xf32, #tpu.memory_space<vmem>>, vector<1x1x32xf32>
    %218 = vector.shape_cast %217 : vector<1x1x32xf32> to vector<32xf32>
    %219 = vector.shape_cast %218 : vector<32xf32> to vector<1x1x32xf32>
    %220 = vector.broadcast %219 : vector<1x1x32xf32> to vector<16x16x32xf32>
    %221 = arith.mulf %216, %220 : vector<16x16x32xf32>
    %222 = arith.addf %214, %221 : vector<16x16x32xf32>
    %c0_214 = arith.constant 0 : index
    %c2_215 = arith.constant 2 : index
    %c0_216 = arith.constant 0 : index
    %c0_217 = arith.constant 0 : index
    %223 = vector.load %arg10[%c0_214, %c2_215, %c0_216, %c0_217] : memref<7x22x16x32xf32, #tpu.memory_space<vmem>>, vector<1x16x16x32xf32>
    %224 = vector.shape_cast %223 : vector<1x16x16x32xf32> to vector<16x16x32xf32>
    %c2_218 = arith.constant 2 : index
    %c0_219 = arith.constant 0 : index
    %c0_220 = arith.constant 0 : index
    %225 = vector.load %arg2[%c2_218, %c0_219, %c0_220] : memref<7x7x32xf32, #tpu.memory_space<vmem>>, vector<1x1x32xf32>
    %226 = vector.shape_cast %225 : vector<1x1x32xf32> to vector<32xf32>
    %227 = vector.shape_cast %226 : vector<32xf32> to vector<1x1x32xf32>
    %228 = vector.broadcast %227 : vector<1x1x32xf32> to vector<16x16x32xf32>
    %229 = arith.mulf %224, %228 : vector<16x16x32xf32>
    %230 = arith.addf %222, %229 : vector<16x16x32xf32>
    %c1_221 = arith.constant 1 : index
    %c2_222 = arith.constant 2 : index
    %c0_223 = arith.constant 0 : index
    %c0_224 = arith.constant 0 : index
    %231 = vector.load %arg10[%c1_221, %c2_222, %c0_223, %c0_224] : memref<7x22x16x32xf32, #tpu.memory_space<vmem>>, vector<1x16x16x32xf32>
    %232 = vector.shape_cast %231 : vector<1x16x16x32xf32> to vector<16x16x32xf32>
    %c2_225 = arith.constant 2 : index
    %c1_226 = arith.constant 1 : index
    %c0_227 = arith.constant 0 : index
    %233 = vector.load %arg2[%c2_225, %c1_226, %c0_227] : memref<7x7x32xf32, #tpu.memory_space<vmem>>, vector<1x1x32xf32>
    %234 = vector.shape_cast %233 : vector<1x1x32xf32> to vector<32xf32>
    %235 = vector.shape_cast %234 : vector<32xf32> to vector<1x1x32xf32>
    %236 = vector.broadcast %235 : vector<1x1x32xf32> to vector<16x16x32xf32>
    %237 = arith.mulf %232, %236 : vector<16x16x32xf32>
    %238 = arith.addf %230, %237 : vector<16x16x32xf32>
    %c2_228 = arith.constant 2 : index
    %c2_229 = arith.constant 2 : index
    %c0_230 = arith.constant 0 : index
    %c0_231 = arith.constant 0 : index
    %239 = vector.load %arg10[%c2_228, %c2_229, %c0_230, %c0_231] : memref<7x22x16x32xf32, #tpu.memory_space<vmem>>, vector<1x16x16x32xf32>
    %240 = vector.shape_cast %239 : vector<1x16x16x32xf32> to vector<16x16x32xf32>
    %c2_232 = arith.constant 2 : index
    %c2_233 = arith.constant 2 : index
    %c0_234 = arith.constant 0 : index
    %241 = vector.load %arg2[%c2_232, %c2_233, %c0_234] : memref<7x7x32xf32, #tpu.memory_space<vmem>>, vector<1x1x32xf32>
    %242 = vector.shape_cast %241 : vector<1x1x32xf32> to vector<32xf32>
    %243 = vector.shape_cast %242 : vector<32xf32> to vector<1x1x32xf32>
    %244 = vector.broadcast %243 : vector<1x1x32xf32> to vector<16x16x32xf32>
    %245 = arith.mulf %240, %244 : vector<16x16x32xf32>
    %246 = arith.addf %238, %245 : vector<16x16x32xf32>
    %c3_235 = arith.constant 3 : index
    %c2_236 = arith.constant 2 : index
    %c0_237 = arith.constant 0 : index
    %c0_238 = arith.constant 0 : index
    %247 = vector.load %arg10[%c3_235, %c2_236, %c0_237, %c0_238] : memref<7x22x16x32xf32, #tpu.memory_space<vmem>>, vector<1x16x16x32xf32>
    %248 = vector.shape_cast %247 : vector<1x16x16x32xf32> to vector<16x16x32xf32>
    %c2_239 = arith.constant 2 : index
    %c3_240 = arith.constant 3 : index
    %c0_241 = arith.constant 0 : index
    %249 = vector.load %arg2[%c2_239, %c3_240, %c0_241] : memref<7x7x32xf32, #tpu.memory_space<vmem>>, vector<1x1x32xf32>
    %250 = vector.shape_cast %249 : vector<1x1x32xf32> to vector<32xf32>
    %251 = vector.shape_cast %250 : vector<32xf32> to vector<1x1x32xf32>
    %252 = vector.broadcast %251 : vector<1x1x32xf32> to vector<16x16x32xf32>
    %253 = arith.mulf %248, %252 : vector<16x16x32xf32>
    %254 = arith.addf %246, %253 : vector<16x16x32xf32>
    %c4_242 = arith.constant 4 : index
    %c2_243 = arith.constant 2 : index
    %c0_244 = arith.constant 0 : index
    %c0_245 = arith.constant 0 : index
    %255 = vector.load %arg10[%c4_242, %c2_243, %c0_244, %c0_245] : memref<7x22x16x32xf32, #tpu.memory_space<vmem>>, vector<1x16x16x32xf32>
    %256 = vector.shape_cast %255 : vector<1x16x16x32xf32> to vector<16x16x32xf32>
    %c2_246 = arith.constant 2 : index
    %c4_247 = arith.constant 4 : index
    %c0_248 = arith.constant 0 : index
    %257 = vector.load %arg2[%c2_246, %c4_247, %c0_248] : memref<7x7x32xf32, #tpu.memory_space<vmem>>, vector<1x1x32xf32>
    %258 = vector.shape_cast %257 : vector<1x1x32xf32> to vector<32xf32>
    %259 = vector.shape_cast %258 : vector<32xf32> to vector<1x1x32xf32>
    %260 = vector.broadcast %259 : vector<1x1x32xf32> to vector<16x16x32xf32>
    %261 = arith.mulf %256, %260 : vector<16x16x32xf32>
    %262 = arith.addf %254, %261 : vector<16x16x32xf32>
    %c5_249 = arith.constant 5 : index
    %c2_250 = arith.constant 2 : index
    %c0_251 = arith.constant 0 : index
    %c0_252 = arith.constant 0 : index
    %263 = vector.load %arg10[%c5_249, %c2_250, %c0_251, %c0_252] : memref<7x22x16x32xf32, #tpu.memory_space<vmem>>, vector<1x16x16x32xf32>
    %264 = vector.shape_cast %263 : vector<1x16x16x32xf32> to vector<16x16x32xf32>
    %c2_253 = arith.constant 2 : index
    %c5_254 = arith.constant 5 : index
    %c0_255 = arith.constant 0 : index
    %265 = vector.load %arg2[%c2_253, %c5_254, %c0_255] : memref<7x7x32xf32, #tpu.memory_space<vmem>>, vector<1x1x32xf32>
    %266 = vector.shape_cast %265 : vector<1x1x32xf32> to vector<32xf32>
    %267 = vector.shape_cast %266 : vector<32xf32> to vector<1x1x32xf32>
    %268 = vector.broadcast %267 : vector<1x1x32xf32> to vector<16x16x32xf32>
    %269 = arith.mulf %264, %268 : vector<16x16x32xf32>
    %270 = arith.addf %262, %269 : vector<16x16x32xf32>
    %c6_256 = arith.constant 6 : index
    %c2_257 = arith.constant 2 : index
    %c0_258 = arith.constant 0 : index
    %c0_259 = arith.constant 0 : index
    %271 = vector.load %arg10[%c6_256, %c2_257, %c0_258, %c0_259] : memref<7x22x16x32xf32, #tpu.memory_space<vmem>>, vector<1x16x16x32xf32>
    %272 = vector.shape_cast %271 : vector<1x16x16x32xf32> to vector<16x16x32xf32>
    %c2_260 = arith.constant 2 : index
    %c6_261 = arith.constant 6 : index
    %c0_262 = arith.constant 0 : index
    %273 = vector.load %arg2[%c2_260, %c6_261, %c0_262] : memref<7x7x32xf32, #tpu.memory_space<vmem>>, vector<1x1x32xf32>
    %274 = vector.shape_cast %273 : vector<1x1x32xf32> to vector<32xf32>
    %275 = vector.shape_cast %274 : vector<32xf32> to vector<1x1x32xf32>
    %276 = vector.broadcast %275 : vector<1x1x32xf32> to vector<16x16x32xf32>
    %277 = arith.mulf %272, %276 : vector<16x16x32xf32>
    %278 = arith.addf %270, %277 : vector<16x16x32xf32>
    %c0_263 = arith.constant 0 : index
    %c3_264 = arith.constant 3 : index
    %c0_265 = arith.constant 0 : index
    %c0_266 = arith.constant 0 : index
    %279 = vector.load %arg10[%c0_263, %c3_264, %c0_265, %c0_266] : memref<7x22x16x32xf32, #tpu.memory_space<vmem>>, vector<1x16x16x32xf32>
    %280 = vector.shape_cast %279 : vector<1x16x16x32xf32> to vector<16x16x32xf32>
    %c3_267 = arith.constant 3 : index
    %c0_268 = arith.constant 0 : index
    %c0_269 = arith.constant 0 : index
    %281 = vector.load %arg2[%c3_267, %c0_268, %c0_269] : memref<7x7x32xf32, #tpu.memory_space<vmem>>, vector<1x1x32xf32>
    %282 = vector.shape_cast %281 : vector<1x1x32xf32> to vector<32xf32>
    %283 = vector.shape_cast %282 : vector<32xf32> to vector<1x1x32xf32>
    %284 = vector.broadcast %283 : vector<1x1x32xf32> to vector<16x16x32xf32>
    %285 = arith.mulf %280, %284 : vector<16x16x32xf32>
    %286 = arith.addf %278, %285 : vector<16x16x32xf32>
    %c1_270 = arith.constant 1 : index
    %c3_271 = arith.constant 3 : index
    %c0_272 = arith.constant 0 : index
    %c0_273 = arith.constant 0 : index
    %287 = vector.load %arg10[%c1_270, %c3_271, %c0_272, %c0_273] : memref<7x22x16x32xf32, #tpu.memory_space<vmem>>, vector<1x16x16x32xf32>
    %288 = vector.shape_cast %287 : vector<1x16x16x32xf32> to vector<16x16x32xf32>
    %c3_274 = arith.constant 3 : index
    %c1_275 = arith.constant 1 : index
    %c0_276 = arith.constant 0 : index
    %289 = vector.load %arg2[%c3_274, %c1_275, %c0_276] : memref<7x7x32xf32, #tpu.memory_space<vmem>>, vector<1x1x32xf32>
    %290 = vector.shape_cast %289 : vector<1x1x32xf32> to vector<32xf32>
    %291 = vector.shape_cast %290 : vector<32xf32> to vector<1x1x32xf32>
    %292 = vector.broadcast %291 : vector<1x1x32xf32> to vector<16x16x32xf32>
    %293 = arith.mulf %288, %292 : vector<16x16x32xf32>
    %294 = arith.addf %286, %293 : vector<16x16x32xf32>
    %c2_277 = arith.constant 2 : index
    %c3_278 = arith.constant 3 : index
    %c0_279 = arith.constant 0 : index
    %c0_280 = arith.constant 0 : index
    %295 = vector.load %arg10[%c2_277, %c3_278, %c0_279, %c0_280] : memref<7x22x16x32xf32, #tpu.memory_space<vmem>>, vector<1x16x16x32xf32>
    %296 = vector.shape_cast %295 : vector<1x16x16x32xf32> to vector<16x16x32xf32>
    %c3_281 = arith.constant 3 : index
    %c2_282 = arith.constant 2 : index
    %c0_283 = arith.constant 0 : index
    %297 = vector.load %arg2[%c3_281, %c2_282, %c0_283] : memref<7x7x32xf32, #tpu.memory_space<vmem>>, vector<1x1x32xf32>
    %298 = vector.shape_cast %297 : vector<1x1x32xf32> to vector<32xf32>
    %299 = vector.shape_cast %298 : vector<32xf32> to vector<1x1x32xf32>
    %300 = vector.broadcast %299 : vector<1x1x32xf32> to vector<16x16x32xf32>
    %301 = arith.mulf %296, %300 : vector<16x16x32xf32>
    %302 = arith.addf %294, %301 : vector<16x16x32xf32>
    %c3_284 = arith.constant 3 : index
    %c3_285 = arith.constant 3 : index
    %c0_286 = arith.constant 0 : index
    %c0_287 = arith.constant 0 : index
    %303 = vector.load %arg10[%c3_284, %c3_285, %c0_286, %c0_287] : memref<7x22x16x32xf32, #tpu.memory_space<vmem>>, vector<1x16x16x32xf32>
    %304 = vector.shape_cast %303 : vector<1x16x16x32xf32> to vector<16x16x32xf32>
    %c3_288 = arith.constant 3 : index
    %c3_289 = arith.constant 3 : index
    %c0_290 = arith.constant 0 : index
    %305 = vector.load %arg2[%c3_288, %c3_289, %c0_290] : memref<7x7x32xf32, #tpu.memory_space<vmem>>, vector<1x1x32xf32>
    %306 = vector.shape_cast %305 : vector<1x1x32xf32> to vector<32xf32>
    %307 = vector.shape_cast %306 : vector<32xf32> to vector<1x1x32xf32>
    %308 = vector.broadcast %307 : vector<1x1x32xf32> to vector<16x16x32xf32>
    %309 = arith.mulf %304, %308 : vector<16x16x32xf32>
    %310 = arith.addf %302, %309 : vector<16x16x32xf32>
    %c4_291 = arith.constant 4 : index
    %c3_292 = arith.constant 3 : index
    %c0_293 = arith.constant 0 : index
    %c0_294 = arith.constant 0 : index
    %311 = vector.load %arg10[%c4_291, %c3_292, %c0_293, %c0_294] : memref<7x22x16x32xf32, #tpu.memory_space<vmem>>, vector<1x16x16x32xf32>
    %312 = vector.shape_cast %311 : vector<1x16x16x32xf32> to vector<16x16x32xf32>
    %c3_295 = arith.constant 3 : index
    %c4_296 = arith.constant 4 : index
    %c0_297 = arith.constant 0 : index
    %313 = vector.load %arg2[%c3_295, %c4_296, %c0_297] : memref<7x7x32xf32, #tpu.memory_space<vmem>>, vector<1x1x32xf32>
    %314 = vector.shape_cast %313 : vector<1x1x32xf32> to vector<32xf32>
    %315 = vector.shape_cast %314 : vector<32xf32> to vector<1x1x32xf32>
    %316 = vector.broadcast %315 : vector<1x1x32xf32> to vector<16x16x32xf32>
    %317 = arith.mulf %312, %316 : vector<16x16x32xf32>
    %318 = arith.addf %310, %317 : vector<16x16x32xf32>
    %c5_298 = arith.constant 5 : index
    %c3_299 = arith.constant 3 : index
    %c0_300 = arith.constant 0 : index
    %c0_301 = arith.constant 0 : index
    %319 = vector.load %arg10[%c5_298, %c3_299, %c0_300, %c0_301] : memref<7x22x16x32xf32, #tpu.memory_space<vmem>>, vector<1x16x16x32xf32>
    %320 = vector.shape_cast %319 : vector<1x16x16x32xf32> to vector<16x16x32xf32>
    %c3_302 = arith.constant 3 : index
    %c5_303 = arith.constant 5 : index
    %c0_304 = arith.constant 0 : index
    %321 = vector.load %arg2[%c3_302, %c5_303, %c0_304] : memref<7x7x32xf32, #tpu.memory_space<vmem>>, vector<1x1x32xf32>
    %322 = vector.shape_cast %321 : vector<1x1x32xf32> to vector<32xf32>
    %323 = vector.shape_cast %322 : vector<32xf32> to vector<1x1x32xf32>
    %324 = vector.broadcast %323 : vector<1x1x32xf32> to vector<16x16x32xf32>
    %325 = arith.mulf %320, %324 : vector<16x16x32xf32>
    %326 = arith.addf %318, %325 : vector<16x16x32xf32>
    %c6_305 = arith.constant 6 : index
    %c3_306 = arith.constant 3 : index
    %c0_307 = arith.constant 0 : index
    %c0_308 = arith.constant 0 : index
    %327 = vector.load %arg10[%c6_305, %c3_306, %c0_307, %c0_308] : memref<7x22x16x32xf32, #tpu.memory_space<vmem>>, vector<1x16x16x32xf32>
    %328 = vector.shape_cast %327 : vector<1x16x16x32xf32> to vector<16x16x32xf32>
    %c3_309 = arith.constant 3 : index
    %c6_310 = arith.constant 6 : index
    %c0_311 = arith.constant 0 : index
    %329 = vector.load %arg2[%c3_309, %c6_310, %c0_311] : memref<7x7x32xf32, #tpu.memory_space<vmem>>, vector<1x1x32xf32>
    %330 = vector.shape_cast %329 : vector<1x1x32xf32> to vector<32xf32>
    %331 = vector.shape_cast %330 : vector<32xf32> to vector<1x1x32xf32>
    %332 = vector.broadcast %331 : vector<1x1x32xf32> to vector<16x16x32xf32>
    %333 = arith.mulf %328, %332 : vector<16x16x32xf32>
    %334 = arith.addf %326, %333 : vector<16x16x32xf32>
    %c0_312 = arith.constant 0 : index
    %c4_313 = arith.constant 4 : index
    %c0_314 = arith.constant 0 : index
    %c0_315 = arith.constant 0 : index
    %335 = vector.load %arg10[%c0_312, %c4_313, %c0_314, %c0_315] : memref<7x22x16x32xf32, #tpu.memory_space<vmem>>, vector<1x16x16x32xf32>
    %336 = vector.shape_cast %335 : vector<1x16x16x32xf32> to vector<16x16x32xf32>
    %c4_316 = arith.constant 4 : index
    %c0_317 = arith.constant 0 : index
    %c0_318 = arith.constant 0 : index
    %337 = vector.load %arg2[%c4_316, %c0_317, %c0_318] : memref<7x7x32xf32, #tpu.memory_space<vmem>>, vector<1x1x32xf32>
    %338 = vector.shape_cast %337 : vector<1x1x32xf32> to vector<32xf32>
    %339 = vector.shape_cast %338 : vector<32xf32> to vector<1x1x32xf32>
    %340 = vector.broadcast %339 : vector<1x1x32xf32> to vector<16x16x32xf32>
    %341 = arith.mulf %336, %340 : vector<16x16x32xf32>
    %342 = arith.addf %334, %341 : vector<16x16x32xf32>
    %c1_319 = arith.constant 1 : index
    %c4_320 = arith.constant 4 : index
    %c0_321 = arith.constant 0 : index
    %c0_322 = arith.constant 0 : index
    %343 = vector.load %arg10[%c1_319, %c4_320, %c0_321, %c0_322] : memref<7x22x16x32xf32, #tpu.memory_space<vmem>>, vector<1x16x16x32xf32>
    %344 = vector.shape_cast %343 : vector<1x16x16x32xf32> to vector<16x16x32xf32>
    %c4_323 = arith.constant 4 : index
    %c1_324 = arith.constant 1 : index
    %c0_325 = arith.constant 0 : index
    %345 = vector.load %arg2[%c4_323, %c1_324, %c0_325] : memref<7x7x32xf32, #tpu.memory_space<vmem>>, vector<1x1x32xf32>
    %346 = vector.shape_cast %345 : vector<1x1x32xf32> to vector<32xf32>
    %347 = vector.shape_cast %346 : vector<32xf32> to vector<1x1x32xf32>
    %348 = vector.broadcast %347 : vector<1x1x32xf32> to vector<16x16x32xf32>
    %349 = arith.mulf %344, %348 : vector<16x16x32xf32>
    %350 = arith.addf %342, %349 : vector<16x16x32xf32>
    %c2_326 = arith.constant 2 : index
    %c4_327 = arith.constant 4 : index
    %c0_328 = arith.constant 0 : index
    %c0_329 = arith.constant 0 : index
    %351 = vector.load %arg10[%c2_326, %c4_327, %c0_328, %c0_329] : memref<7x22x16x32xf32, #tpu.memory_space<vmem>>, vector<1x16x16x32xf32>
    %352 = vector.shape_cast %351 : vector<1x16x16x32xf32> to vector<16x16x32xf32>
    %c4_330 = arith.constant 4 : index
    %c2_331 = arith.constant 2 : index
    %c0_332 = arith.constant 0 : index
    %353 = vector.load %arg2[%c4_330, %c2_331, %c0_332] : memref<7x7x32xf32, #tpu.memory_space<vmem>>, vector<1x1x32xf32>
    %354 = vector.shape_cast %353 : vector<1x1x32xf32> to vector<32xf32>
    %355 = vector.shape_cast %354 : vector<32xf32> to vector<1x1x32xf32>
    %356 = vector.broadcast %355 : vector<1x1x32xf32> to vector<16x16x32xf32>
    %357 = arith.mulf %352, %356 : vector<16x16x32xf32>
    %358 = arith.addf %350, %357 : vector<16x16x32xf32>
    %c3_333 = arith.constant 3 : index
    %c4_334 = arith.constant 4 : index
    %c0_335 = arith.constant 0 : index
    %c0_336 = arith.constant 0 : index
    %359 = vector.load %arg10[%c3_333, %c4_334, %c0_335, %c0_336] : memref<7x22x16x32xf32, #tpu.memory_space<vmem>>, vector<1x16x16x32xf32>
    %360 = vector.shape_cast %359 : vector<1x16x16x32xf32> to vector<16x16x32xf32>
    %c4_337 = arith.constant 4 : index
    %c3_338 = arith.constant 3 : index
    %c0_339 = arith.constant 0 : index
    %361 = vector.load %arg2[%c4_337, %c3_338, %c0_339] : memref<7x7x32xf32, #tpu.memory_space<vmem>>, vector<1x1x32xf32>
    %362 = vector.shape_cast %361 : vector<1x1x32xf32> to vector<32xf32>
    %363 = vector.shape_cast %362 : vector<32xf32> to vector<1x1x32xf32>
    %364 = vector.broadcast %363 : vector<1x1x32xf32> to vector<16x16x32xf32>
    %365 = arith.mulf %360, %364 : vector<16x16x32xf32>
    %366 = arith.addf %358, %365 : vector<16x16x32xf32>
    %c4_340 = arith.constant 4 : index
    %c4_341 = arith.constant 4 : index
    %c0_342 = arith.constant 0 : index
    %c0_343 = arith.constant 0 : index
    %367 = vector.load %arg10[%c4_340, %c4_341, %c0_342, %c0_343] : memref<7x22x16x32xf32, #tpu.memory_space<vmem>>, vector<1x16x16x32xf32>
    %368 = vector.shape_cast %367 : vector<1x16x16x32xf32> to vector<16x16x32xf32>
    %c4_344 = arith.constant 4 : index
    %c4_345 = arith.constant 4 : index
    %c0_346 = arith.constant 0 : index
    %369 = vector.load %arg2[%c4_344, %c4_345, %c0_346] : memref<7x7x32xf32, #tpu.memory_space<vmem>>, vector<1x1x32xf32>
    %370 = vector.shape_cast %369 : vector<1x1x32xf32> to vector<32xf32>
    %371 = vector.shape_cast %370 : vector<32xf32> to vector<1x1x32xf32>
    %372 = vector.broadcast %371 : vector<1x1x32xf32> to vector<16x16x32xf32>
    %373 = arith.mulf %368, %372 : vector<16x16x32xf32>
    %374 = arith.addf %366, %373 : vector<16x16x32xf32>
    %c5_347 = arith.constant 5 : index
    %c4_348 = arith.constant 4 : index
    %c0_349 = arith.constant 0 : index
    %c0_350 = arith.constant 0 : index
    %375 = vector.load %arg10[%c5_347, %c4_348, %c0_349, %c0_350] : memref<7x22x16x32xf32, #tpu.memory_space<vmem>>, vector<1x16x16x32xf32>
    %376 = vector.shape_cast %375 : vector<1x16x16x32xf32> to vector<16x16x32xf32>
    %c4_351 = arith.constant 4 : index
    %c5_352 = arith.constant 5 : index
    %c0_353 = arith.constant 0 : index
    %377 = vector.load %arg2[%c4_351, %c5_352, %c0_353] : memref<7x7x32xf32, #tpu.memory_space<vmem>>, vector<1x1x32xf32>
    %378 = vector.shape_cast %377 : vector<1x1x32xf32> to vector<32xf32>
    %379 = vector.shape_cast %378 : vector<32xf32> to vector<1x1x32xf32>
    %380 = vector.broadcast %379 : vector<1x1x32xf32> to vector<16x16x32xf32>
    %381 = arith.mulf %376, %380 : vector<16x16x32xf32>
    %382 = arith.addf %374, %381 : vector<16x16x32xf32>
    %c6_354 = arith.constant 6 : index
    %c4_355 = arith.constant 4 : index
    %c0_356 = arith.constant 0 : index
    %c0_357 = arith.constant 0 : index
    %383 = vector.load %arg10[%c6_354, %c4_355, %c0_356, %c0_357] : memref<7x22x16x32xf32, #tpu.memory_space<vmem>>, vector<1x16x16x32xf32>
    %384 = vector.shape_cast %383 : vector<1x16x16x32xf32> to vector<16x16x32xf32>
    %c4_358 = arith.constant 4 : index
    %c6_359 = arith.constant 6 : index
    %c0_360 = arith.constant 0 : index
    %385 = vector.load %arg2[%c4_358, %c6_359, %c0_360] : memref<7x7x32xf32, #tpu.memory_space<vmem>>, vector<1x1x32xf32>
    %386 = vector.shape_cast %385 : vector<1x1x32xf32> to vector<32xf32>
    %387 = vector.shape_cast %386 : vector<32xf32> to vector<1x1x32xf32>
    %388 = vector.broadcast %387 : vector<1x1x32xf32> to vector<16x16x32xf32>
    %389 = arith.mulf %384, %388 : vector<16x16x32xf32>
    %390 = arith.addf %382, %389 : vector<16x16x32xf32>
    %c0_361 = arith.constant 0 : index
    %c5_362 = arith.constant 5 : index
    %c0_363 = arith.constant 0 : index
    %c0_364 = arith.constant 0 : index
    %391 = vector.load %arg10[%c0_361, %c5_362, %c0_363, %c0_364] : memref<7x22x16x32xf32, #tpu.memory_space<vmem>>, vector<1x16x16x32xf32>
    %392 = vector.shape_cast %391 : vector<1x16x16x32xf32> to vector<16x16x32xf32>
    %c5_365 = arith.constant 5 : index
    %c0_366 = arith.constant 0 : index
    %c0_367 = arith.constant 0 : index
    %393 = vector.load %arg2[%c5_365, %c0_366, %c0_367] : memref<7x7x32xf32, #tpu.memory_space<vmem>>, vector<1x1x32xf32>
    %394 = vector.shape_cast %393 : vector<1x1x32xf32> to vector<32xf32>
    %395 = vector.shape_cast %394 : vector<32xf32> to vector<1x1x32xf32>
    %396 = vector.broadcast %395 : vector<1x1x32xf32> to vector<16x16x32xf32>
    %397 = arith.mulf %392, %396 : vector<16x16x32xf32>
    %398 = arith.addf %390, %397 : vector<16x16x32xf32>
    %c1_368 = arith.constant 1 : index
    %c5_369 = arith.constant 5 : index
    %c0_370 = arith.constant 0 : index
    %c0_371 = arith.constant 0 : index
    %399 = vector.load %arg10[%c1_368, %c5_369, %c0_370, %c0_371] : memref<7x22x16x32xf32, #tpu.memory_space<vmem>>, vector<1x16x16x32xf32>
    %400 = vector.shape_cast %399 : vector<1x16x16x32xf32> to vector<16x16x32xf32>
    %c5_372 = arith.constant 5 : index
    %c1_373 = arith.constant 1 : index
    %c0_374 = arith.constant 0 : index
    %401 = vector.load %arg2[%c5_372, %c1_373, %c0_374] : memref<7x7x32xf32, #tpu.memory_space<vmem>>, vector<1x1x32xf32>
    %402 = vector.shape_cast %401 : vector<1x1x32xf32> to vector<32xf32>
    %403 = vector.shape_cast %402 : vector<32xf32> to vector<1x1x32xf32>
    %404 = vector.broadcast %403 : vector<1x1x32xf32> to vector<16x16x32xf32>
    %405 = arith.mulf %400, %404 : vector<16x16x32xf32>
    %406 = arith.addf %398, %405 : vector<16x16x32xf32>
    %c2_375 = arith.constant 2 : index
    %c5_376 = arith.constant 5 : index
    %c0_377 = arith.constant 0 : index
    %c0_378 = arith.constant 0 : index
    %407 = vector.load %arg10[%c2_375, %c5_376, %c0_377, %c0_378] : memref<7x22x16x32xf32, #tpu.memory_space<vmem>>, vector<1x16x16x32xf32>
    %408 = vector.shape_cast %407 : vector<1x16x16x32xf32> to vector<16x16x32xf32>
    %c5_379 = arith.constant 5 : index
    %c2_380 = arith.constant 2 : index
    %c0_381 = arith.constant 0 : index
    %409 = vector.load %arg2[%c5_379, %c2_380, %c0_381] : memref<7x7x32xf32, #tpu.memory_space<vmem>>, vector<1x1x32xf32>
    %410 = vector.shape_cast %409 : vector<1x1x32xf32> to vector<32xf32>
    %411 = vector.shape_cast %410 : vector<32xf32> to vector<1x1x32xf32>
    %412 = vector.broadcast %411 : vector<1x1x32xf32> to vector<16x16x32xf32>
    %413 = arith.mulf %408, %412 : vector<16x16x32xf32>
    %414 = arith.addf %406, %413 : vector<16x16x32xf32>
    %c3_382 = arith.constant 3 : index
    %c5_383 = arith.constant 5 : index
    %c0_384 = arith.constant 0 : index
    %c0_385 = arith.constant 0 : index
    %415 = vector.load %arg10[%c3_382, %c5_383, %c0_384, %c0_385] : memref<7x22x16x32xf32, #tpu.memory_space<vmem>>, vector<1x16x16x32xf32>
    %416 = vector.shape_cast %415 : vector<1x16x16x32xf32> to vector<16x16x32xf32>
    %c5_386 = arith.constant 5 : index
    %c3_387 = arith.constant 3 : index
    %c0_388 = arith.constant 0 : index
    %417 = vector.load %arg2[%c5_386, %c3_387, %c0_388] : memref<7x7x32xf32, #tpu.memory_space<vmem>>, vector<1x1x32xf32>
    %418 = vector.shape_cast %417 : vector<1x1x32xf32> to vector<32xf32>
    %419 = vector.shape_cast %418 : vector<32xf32> to vector<1x1x32xf32>
    %420 = vector.broadcast %419 : vector<1x1x32xf32> to vector<16x16x32xf32>
    %421 = arith.mulf %416, %420 : vector<16x16x32xf32>
    %422 = arith.addf %414, %421 : vector<16x16x32xf32>
    %c4_389 = arith.constant 4 : index
    %c5_390 = arith.constant 5 : index
    %c0_391 = arith.constant 0 : index
    %c0_392 = arith.constant 0 : index
    %423 = vector.load %arg10[%c4_389, %c5_390, %c0_391, %c0_392] : memref<7x22x16x32xf32, #tpu.memory_space<vmem>>, vector<1x16x16x32xf32>
    %424 = vector.shape_cast %423 : vector<1x16x16x32xf32> to vector<16x16x32xf32>
    %c5_393 = arith.constant 5 : index
    %c4_394 = arith.constant 4 : index
    %c0_395 = arith.constant 0 : index
    %425 = vector.load %arg2[%c5_393, %c4_394, %c0_395] : memref<7x7x32xf32, #tpu.memory_space<vmem>>, vector<1x1x32xf32>
    %426 = vector.shape_cast %425 : vector<1x1x32xf32> to vector<32xf32>
    %427 = vector.shape_cast %426 : vector<32xf32> to vector<1x1x32xf32>
    %428 = vector.broadcast %427 : vector<1x1x32xf32> to vector<16x16x32xf32>
    %429 = arith.mulf %424, %428 : vector<16x16x32xf32>
    %430 = arith.addf %422, %429 : vector<16x16x32xf32>
    %c5_396 = arith.constant 5 : index
    %c5_397 = arith.constant 5 : index
    %c0_398 = arith.constant 0 : index
    %c0_399 = arith.constant 0 : index
    %431 = vector.load %arg10[%c5_396, %c5_397, %c0_398, %c0_399] : memref<7x22x16x32xf32, #tpu.memory_space<vmem>>, vector<1x16x16x32xf32>
    %432 = vector.shape_cast %431 : vector<1x16x16x32xf32> to vector<16x16x32xf32>
    %c5_400 = arith.constant 5 : index
    %c5_401 = arith.constant 5 : index
    %c0_402 = arith.constant 0 : index
    %433 = vector.load %arg2[%c5_400, %c5_401, %c0_402] : memref<7x7x32xf32, #tpu.memory_space<vmem>>, vector<1x1x32xf32>
    %434 = vector.shape_cast %433 : vector<1x1x32xf32> to vector<32xf32>
    %435 = vector.shape_cast %434 : vector<32xf32> to vector<1x1x32xf32>
    %436 = vector.broadcast %435 : vector<1x1x32xf32> to vector<16x16x32xf32>
    %437 = arith.mulf %432, %436 : vector<16x16x32xf32>
    %438 = arith.addf %430, %437 : vector<16x16x32xf32>
    %c6_403 = arith.constant 6 : index
    %c5_404 = arith.constant 5 : index
    %c0_405 = arith.constant 0 : index
    %c0_406 = arith.constant 0 : index
    %439 = vector.load %arg10[%c6_403, %c5_404, %c0_405, %c0_406] : memref<7x22x16x32xf32, #tpu.memory_space<vmem>>, vector<1x16x16x32xf32>
    %440 = vector.shape_cast %439 : vector<1x16x16x32xf32> to vector<16x16x32xf32>
    %c5_407 = arith.constant 5 : index
    %c6_408 = arith.constant 6 : index
    %c0_409 = arith.constant 0 : index
    %441 = vector.load %arg2[%c5_407, %c6_408, %c0_409] : memref<7x7x32xf32, #tpu.memory_space<vmem>>, vector<1x1x32xf32>
    %442 = vector.shape_cast %441 : vector<1x1x32xf32> to vector<32xf32>
    %443 = vector.shape_cast %442 : vector<32xf32> to vector<1x1x32xf32>
    %444 = vector.broadcast %443 : vector<1x1x32xf32> to vector<16x16x32xf32>
    %445 = arith.mulf %440, %444 : vector<16x16x32xf32>
    %446 = arith.addf %438, %445 : vector<16x16x32xf32>
    %c0_410 = arith.constant 0 : index
    %c6_411 = arith.constant 6 : index
    %c0_412 = arith.constant 0 : index
    %c0_413 = arith.constant 0 : index
    %447 = vector.load %arg10[%c0_410, %c6_411, %c0_412, %c0_413] : memref<7x22x16x32xf32, #tpu.memory_space<vmem>>, vector<1x16x16x32xf32>
    %448 = vector.shape_cast %447 : vector<1x16x16x32xf32> to vector<16x16x32xf32>
    %c6_414 = arith.constant 6 : index
    %c0_415 = arith.constant 0 : index
    %c0_416 = arith.constant 0 : index
    %449 = vector.load %arg2[%c6_414, %c0_415, %c0_416] : memref<7x7x32xf32, #tpu.memory_space<vmem>>, vector<1x1x32xf32>
    %450 = vector.shape_cast %449 : vector<1x1x32xf32> to vector<32xf32>
    %451 = vector.shape_cast %450 : vector<32xf32> to vector<1x1x32xf32>
    %452 = vector.broadcast %451 : vector<1x1x32xf32> to vector<16x16x32xf32>
    %453 = arith.mulf %448, %452 : vector<16x16x32xf32>
    %454 = arith.addf %446, %453 : vector<16x16x32xf32>
    %c1_417 = arith.constant 1 : index
    %c6_418 = arith.constant 6 : index
    %c0_419 = arith.constant 0 : index
    %c0_420 = arith.constant 0 : index
    %455 = vector.load %arg10[%c1_417, %c6_418, %c0_419, %c0_420] : memref<7x22x16x32xf32, #tpu.memory_space<vmem>>, vector<1x16x16x32xf32>
    %456 = vector.shape_cast %455 : vector<1x16x16x32xf32> to vector<16x16x32xf32>
    %c6_421 = arith.constant 6 : index
    %c1_422 = arith.constant 1 : index
    %c0_423 = arith.constant 0 : index
    %457 = vector.load %arg2[%c6_421, %c1_422, %c0_423] : memref<7x7x32xf32, #tpu.memory_space<vmem>>, vector<1x1x32xf32>
    %458 = vector.shape_cast %457 : vector<1x1x32xf32> to vector<32xf32>
    %459 = vector.shape_cast %458 : vector<32xf32> to vector<1x1x32xf32>
    %460 = vector.broadcast %459 : vector<1x1x32xf32> to vector<16x16x32xf32>
    %461 = arith.mulf %456, %460 : vector<16x16x32xf32>
    %462 = arith.addf %454, %461 : vector<16x16x32xf32>
    %c2_424 = arith.constant 2 : index
    %c6_425 = arith.constant 6 : index
    %c0_426 = arith.constant 0 : index
    %c0_427 = arith.constant 0 : index
    %463 = vector.load %arg10[%c2_424, %c6_425, %c0_426, %c0_427] : memref<7x22x16x32xf32, #tpu.memory_space<vmem>>, vector<1x16x16x32xf32>
    %464 = vector.shape_cast %463 : vector<1x16x16x32xf32> to vector<16x16x32xf32>
    %c6_428 = arith.constant 6 : index
    %c2_429 = arith.constant 2 : index
    %c0_430 = arith.constant 0 : index
    %465 = vector.load %arg2[%c6_428, %c2_429, %c0_430] : memref<7x7x32xf32, #tpu.memory_space<vmem>>, vector<1x1x32xf32>
    %466 = vector.shape_cast %465 : vector<1x1x32xf32> to vector<32xf32>
    %467 = vector.shape_cast %466 : vector<32xf32> to vector<1x1x32xf32>
    %468 = vector.broadcast %467 : vector<1x1x32xf32> to vector<16x16x32xf32>
    %469 = arith.mulf %464, %468 : vector<16x16x32xf32>
    %470 = arith.addf %462, %469 : vector<16x16x32xf32>
    %c3_431 = arith.constant 3 : index
    %c6_432 = arith.constant 6 : index
    %c0_433 = arith.constant 0 : index
    %c0_434 = arith.constant 0 : index
    %471 = vector.load %arg10[%c3_431, %c6_432, %c0_433, %c0_434] : memref<7x22x16x32xf32, #tpu.memory_space<vmem>>, vector<1x16x16x32xf32>
    %472 = vector.shape_cast %471 : vector<1x16x16x32xf32> to vector<16x16x32xf32>
    %c6_435 = arith.constant 6 : index
    %c3_436 = arith.constant 3 : index
    %c0_437 = arith.constant 0 : index
    %473 = vector.load %arg2[%c6_435, %c3_436, %c0_437] : memref<7x7x32xf32, #tpu.memory_space<vmem>>, vector<1x1x32xf32>
    %474 = vector.shape_cast %473 : vector<1x1x32xf32> to vector<32xf32>
    %475 = vector.shape_cast %474 : vector<32xf32> to vector<1x1x32xf32>
    %476 = vector.broadcast %475 : vector<1x1x32xf32> to vector<16x16x32xf32>
    %477 = arith.mulf %472, %476 : vector<16x16x32xf32>
    %478 = arith.addf %470, %477 : vector<16x16x32xf32>
    %c4_438 = arith.constant 4 : index
    %c6_439 = arith.constant 6 : index
    %c0_440 = arith.constant 0 : index
    %c0_441 = arith.constant 0 : index
    %479 = vector.load %arg10[%c4_438, %c6_439, %c0_440, %c0_441] : memref<7x22x16x32xf32, #tpu.memory_space<vmem>>, vector<1x16x16x32xf32>
    %480 = vector.shape_cast %479 : vector<1x16x16x32xf32> to vector<16x16x32xf32>
    %c6_442 = arith.constant 6 : index
    %c4_443 = arith.constant 4 : index
    %c0_444 = arith.constant 0 : index
    %481 = vector.load %arg2[%c6_442, %c4_443, %c0_444] : memref<7x7x32xf32, #tpu.memory_space<vmem>>, vector<1x1x32xf32>
    %482 = vector.shape_cast %481 : vector<1x1x32xf32> to vector<32xf32>
    %483 = vector.shape_cast %482 : vector<32xf32> to vector<1x1x32xf32>
    %484 = vector.broadcast %483 : vector<1x1x32xf32> to vector<16x16x32xf32>
    %485 = arith.mulf %480, %484 : vector<16x16x32xf32>
    %486 = arith.addf %478, %485 : vector<16x16x32xf32>
    %c5_445 = arith.constant 5 : index
    %c6_446 = arith.constant 6 : index
    %c0_447 = arith.constant 0 : index
    %c0_448 = arith.constant 0 : index
    %487 = vector.load %arg10[%c5_445, %c6_446, %c0_447, %c0_448] : memref<7x22x16x32xf32, #tpu.memory_space<vmem>>, vector<1x16x16x32xf32>
    %488 = vector.shape_cast %487 : vector<1x16x16x32xf32> to vector<16x16x32xf32>
    %c6_449 = arith.constant 6 : index
    %c5_450 = arith.constant 5 : index
    %c0_451 = arith.constant 0 : index
    %489 = vector.load %arg2[%c6_449, %c5_450, %c0_451] : memref<7x7x32xf32, #tpu.memory_space<vmem>>, vector<1x1x32xf32>
    %490 = vector.shape_cast %489 : vector<1x1x32xf32> to vector<32xf32>
    %491 = vector.shape_cast %490 : vector<32xf32> to vector<1x1x32xf32>
    %492 = vector.broadcast %491 : vector<1x1x32xf32> to vector<16x16x32xf32>
    %493 = arith.mulf %488, %492 : vector<16x16x32xf32>
    %494 = arith.addf %486, %493 : vector<16x16x32xf32>
    %c6_452 = arith.constant 6 : index
    %c6_453 = arith.constant 6 : index
    %c0_454 = arith.constant 0 : index
    %c0_455 = arith.constant 0 : index
    %495 = vector.load %arg10[%c6_452, %c6_453, %c0_454, %c0_455] : memref<7x22x16x32xf32, #tpu.memory_space<vmem>>, vector<1x16x16x32xf32>
    %496 = vector.shape_cast %495 : vector<1x16x16x32xf32> to vector<16x16x32xf32>
    %c6_456 = arith.constant 6 : index
    %c6_457 = arith.constant 6 : index
    %c0_458 = arith.constant 0 : index
    %497 = vector.load %arg2[%c6_456, %c6_457, %c0_458] : memref<7x7x32xf32, #tpu.memory_space<vmem>>, vector<1x1x32xf32>
    %498 = vector.shape_cast %497 : vector<1x1x32xf32> to vector<32xf32>
    %499 = vector.shape_cast %498 : vector<32xf32> to vector<1x1x32xf32>
    %500 = vector.broadcast %499 : vector<1x1x32xf32> to vector<16x16x32xf32>
    %501 = arith.mulf %496, %500 : vector<16x16x32xf32>
    %502 = arith.addf %494, %501 : vector<16x16x32xf32>
    %c0_459 = arith.constant 0 : index
    %c0_460 = arith.constant 0 : index
    %503 = vector.load %arg3[%c0_459, %c0_460] : memref<1x32xf32, #tpu.memory_space<vmem>>, vector<1x32xf32>
    %504 = vector.shape_cast %503 : vector<1x32xf32> to vector<32xf32>
    %505 = vector.shape_cast %504 : vector<32xf32> to vector<1x1x32xf32>
    %506 = vector.broadcast %505 : vector<1x1x32xf32> to vector<16x16x32xf32>
    %507 = arith.addf %502, %506 : vector<16x16x32xf32>
    %508 = vector.extract_strided_slice %507 {offsets = [0, 0, 0], sizes = [1, 16, 32], strides = [1, 1, 1]} : vector<16x16x32xf32> to vector<1x16x32xf32>
    %509 = vector.shape_cast %508 : vector<1x16x32xf32> to vector<16x32xf32>
    %c0_461 = arith.constant 0 : index
    %c0_462 = arith.constant 0 : index
    %510 = vector.load %arg11[%c0_461, %c0_462] : memref<256x32xf32, #tpu.memory_space<vmem>>, vector<16x32xf32>
    tpu.vector_store %arg11[%c0_461, %c0_462], %509 {strides = array<i32>} : memref<256x32xf32, #tpu.memory_space<vmem>>, vector<16x32xf32>,
    %511 = vector.extract_strided_slice %507 {offsets = [1, 0, 0], sizes = [1, 16, 32], strides = [1, 1, 1]} : vector<16x16x32xf32> to vector<1x16x32xf32>
    %512 = vector.shape_cast %511 : vector<1x16x32xf32> to vector<16x32xf32>
    %c16_463 = arith.constant 16 : index
    %c0_464 = arith.constant 0 : index
    %513 = vector.load %arg11[%c16_463, %c0_464] : memref<256x32xf32, #tpu.memory_space<vmem>>, vector<16x32xf32>
    tpu.vector_store %arg11[%c16_463, %c0_464], %512 {strides = array<i32>} : memref<256x32xf32, #tpu.memory_space<vmem>>, vector<16x32xf32>,
    %514 = vector.extract_strided_slice %507 {offsets = [2, 0, 0], sizes = [1, 16, 32], strides = [1, 1, 1]} : vector<16x16x32xf32> to vector<1x16x32xf32>
    %515 = vector.shape_cast %514 : vector<1x16x32xf32> to vector<16x32xf32>
    %c32_465 = arith.constant 32 : index
    %c0_466 = arith.constant 0 : index
    %516 = vector.load %arg11[%c32_465, %c0_466] : memref<256x32xf32, #tpu.memory_space<vmem>>, vector<16x32xf32>
    tpu.vector_store %arg11[%c32_465, %c0_466], %515 {strides = array<i32>} : memref<256x32xf32, #tpu.memory_space<vmem>>, vector<16x32xf32>,
    %517 = vector.extract_strided_slice %507 {offsets = [3, 0, 0], sizes = [1, 16, 32], strides = [1, 1, 1]} : vector<16x16x32xf32> to vector<1x16x32xf32>
    %518 = vector.shape_cast %517 : vector<1x16x32xf32> to vector<16x32xf32>
    %c48_467 = arith.constant 48 : index
    %c0_468 = arith.constant 0 : index
    %519 = vector.load %arg11[%c48_467, %c0_468] : memref<256x32xf32, #tpu.memory_space<vmem>>, vector<16x32xf32>
    tpu.vector_store %arg11[%c48_467, %c0_468], %518 {strides = array<i32>} : memref<256x32xf32, #tpu.memory_space<vmem>>, vector<16x32xf32>,
    %520 = vector.extract_strided_slice %507 {offsets = [4, 0, 0], sizes = [1, 16, 32], strides = [1, 1, 1]} : vector<16x16x32xf32> to vector<1x16x32xf32>
    %521 = vector.shape_cast %520 : vector<1x16x32xf32> to vector<16x32xf32>
    %c64_469 = arith.constant 64 : index
    %c0_470 = arith.constant 0 : index
    %522 = vector.load %arg11[%c64_469, %c0_470] : memref<256x32xf32, #tpu.memory_space<vmem>>, vector<16x32xf32>
    tpu.vector_store %arg11[%c64_469, %c0_470], %521 {strides = array<i32>} : memref<256x32xf32, #tpu.memory_space<vmem>>, vector<16x32xf32>,
    %523 = vector.extract_strided_slice %507 {offsets = [5, 0, 0], sizes = [1, 16, 32], strides = [1, 1, 1]} : vector<16x16x32xf32> to vector<1x16x32xf32>
    %524 = vector.shape_cast %523 : vector<1x16x32xf32> to vector<16x32xf32>
    %c80_471 = arith.constant 80 : index
    %c0_472 = arith.constant 0 : index
    %525 = vector.load %arg11[%c80_471, %c0_472] : memref<256x32xf32, #tpu.memory_space<vmem>>, vector<16x32xf32>
    tpu.vector_store %arg11[%c80_471, %c0_472], %524 {strides = array<i32>} : memref<256x32xf32, #tpu.memory_space<vmem>>, vector<16x32xf32>,
    %526 = vector.extract_strided_slice %507 {offsets = [6, 0, 0], sizes = [1, 16, 32], strides = [1, 1, 1]} : vector<16x16x32xf32> to vector<1x16x32xf32>
    %527 = vector.shape_cast %526 : vector<1x16x32xf32> to vector<16x32xf32>
    %c96_473 = arith.constant 96 : index
    %c0_474 = arith.constant 0 : index
    %528 = vector.load %arg11[%c96_473, %c0_474] : memref<256x32xf32, #tpu.memory_space<vmem>>, vector<16x32xf32>
    tpu.vector_store %arg11[%c96_473, %c0_474], %527 {strides = array<i32>} : memref<256x32xf32, #tpu.memory_space<vmem>>, vector<16x32xf32>,
    %529 = vector.extract_strided_slice %507 {offsets = [7, 0, 0], sizes = [1, 16, 32], strides = [1, 1, 1]} : vector<16x16x32xf32> to vector<1x16x32xf32>
    %530 = vector.shape_cast %529 : vector<1x16x32xf32> to vector<16x32xf32>
    %c112_475 = arith.constant 112 : index
    %c0_476 = arith.constant 0 : index
    %531 = vector.load %arg11[%c112_475, %c0_476] : memref<256x32xf32, #tpu.memory_space<vmem>>, vector<16x32xf32>
    tpu.vector_store %arg11[%c112_475, %c0_476], %530 {strides = array<i32>} : memref<256x32xf32, #tpu.memory_space<vmem>>, vector<16x32xf32>,
    %532 = vector.extract_strided_slice %507 {offsets = [8, 0, 0], sizes = [1, 16, 32], strides = [1, 1, 1]} : vector<16x16x32xf32> to vector<1x16x32xf32>
    %533 = vector.shape_cast %532 : vector<1x16x32xf32> to vector<16x32xf32>
    %c128_477 = arith.constant 128 : index
    %c0_478 = arith.constant 0 : index
    %534 = vector.load %arg11[%c128_477, %c0_478] : memref<256x32xf32, #tpu.memory_space<vmem>>, vector<16x32xf32>
    tpu.vector_store %arg11[%c128_477, %c0_478], %533 {strides = array<i32>} : memref<256x32xf32, #tpu.memory_space<vmem>>, vector<16x32xf32>,
    %535 = vector.extract_strided_slice %507 {offsets = [9, 0, 0], sizes = [1, 16, 32], strides = [1, 1, 1]} : vector<16x16x32xf32> to vector<1x16x32xf32>
    %536 = vector.shape_cast %535 : vector<1x16x32xf32> to vector<16x32xf32>
    %c144_479 = arith.constant 144 : index
    %c0_480 = arith.constant 0 : index
    %537 = vector.load %arg11[%c144_479, %c0_480] : memref<256x32xf32, #tpu.memory_space<vmem>>, vector<16x32xf32>
    tpu.vector_store %arg11[%c144_479, %c0_480], %536 {strides = array<i32>} : memref<256x32xf32, #tpu.memory_space<vmem>>, vector<16x32xf32>,
    %538 = vector.extract_strided_slice %507 {offsets = [10, 0, 0], sizes = [1, 16, 32], strides = [1, 1, 1]} : vector<16x16x32xf32> to vector<1x16x32xf32>
    %539 = vector.shape_cast %538 : vector<1x16x32xf32> to vector<16x32xf32>
    %c160_481 = arith.constant 160 : index
    %c0_482 = arith.constant 0 : index
    %540 = vector.load %arg11[%c160_481, %c0_482] : memref<256x32xf32, #tpu.memory_space<vmem>>, vector<16x32xf32>
    tpu.vector_store %arg11[%c160_481, %c0_482], %539 {strides = array<i32>} : memref<256x32xf32, #tpu.memory_space<vmem>>, vector<16x32xf32>,
    %541 = vector.extract_strided_slice %507 {offsets = [11, 0, 0], sizes = [1, 16, 32], strides = [1, 1, 1]} : vector<16x16x32xf32> to vector<1x16x32xf32>
    %542 = vector.shape_cast %541 : vector<1x16x32xf32> to vector<16x32xf32>
    %c176_483 = arith.constant 176 : index
    %c0_484 = arith.constant 0 : index
    %543 = vector.load %arg11[%c176_483, %c0_484] : memref<256x32xf32, #tpu.memory_space<vmem>>, vector<16x32xf32>
    tpu.vector_store %arg11[%c176_483, %c0_484], %542 {strides = array<i32>} : memref<256x32xf32, #tpu.memory_space<vmem>>, vector<16x32xf32>,
    %544 = vector.extract_strided_slice %507 {offsets = [12, 0, 0], sizes = [1, 16, 32], strides = [1, 1, 1]} : vector<16x16x32xf32> to vector<1x16x32xf32>
    %545 = vector.shape_cast %544 : vector<1x16x32xf32> to vector<16x32xf32>
    %c192_485 = arith.constant 192 : index
    %c0_486 = arith.constant 0 : index
    %546 = vector.load %arg11[%c192_485, %c0_486] : memref<256x32xf32, #tpu.memory_space<vmem>>, vector<16x32xf32>
    tpu.vector_store %arg11[%c192_485, %c0_486], %545 {strides = array<i32>} : memref<256x32xf32, #tpu.memory_space<vmem>>, vector<16x32xf32>,
    %547 = vector.extract_strided_slice %507 {offsets = [13, 0, 0], sizes = [1, 16, 32], strides = [1, 1, 1]} : vector<16x16x32xf32> to vector<1x16x32xf32>
    %548 = vector.shape_cast %547 : vector<1x16x32xf32> to vector<16x32xf32>
    %c208_487 = arith.constant 208 : index
    %c0_488 = arith.constant 0 : index
    %549 = vector.load %arg11[%c208_487, %c0_488] : memref<256x32xf32, #tpu.memory_space<vmem>>, vector<16x32xf32>
    tpu.vector_store %arg11[%c208_487, %c0_488], %548 {strides = array<i32>} : memref<256x32xf32, #tpu.memory_space<vmem>>, vector<16x32xf32>,
    %550 = vector.extract_strided_slice %507 {offsets = [14, 0, 0], sizes = [1, 16, 32], strides = [1, 1, 1]} : vector<16x16x32xf32> to vector<1x16x32xf32>
    %551 = vector.shape_cast %550 : vector<1x16x32xf32> to vector<16x32xf32>
    %c224_489 = arith.constant 224 : index
    %c0_490 = arith.constant 0 : index
    %552 = vector.load %arg11[%c224_489, %c0_490] : memref<256x32xf32, #tpu.memory_space<vmem>>, vector<16x32xf32>
    tpu.vector_store %arg11[%c224_489, %c0_490], %551 {strides = array<i32>} : memref<256x32xf32, #tpu.memory_space<vmem>>, vector<16x32xf32>,
    %553 = vector.extract_strided_slice %507 {offsets = [15, 0, 0], sizes = [1, 16, 32], strides = [1, 1, 1]} : vector<16x16x32xf32> to vector<1x16x32xf32>
    %554 = vector.shape_cast %553 : vector<1x16x32xf32> to vector<16x32xf32>
    %c240_491 = arith.constant 240 : index
    %c0_492 = arith.constant 0 : index
    %555 = vector.load %arg11[%c240_491, %c0_492] : memref<256x32xf32, #tpu.memory_space<vmem>>, vector<16x32xf32>
    tpu.vector_store %arg11[%c240_491, %c0_492], %554 {strides = array<i32>} : memref<256x32xf32, #tpu.memory_space<vmem>>, vector<16x32xf32>,
    %c0_493 = arith.constant 0 : index
    %c0_494 = arith.constant 0 : index
    %556 = vector.load %arg11[%c0_493, %c0_494] : memref<256x32xf32, #tpu.memory_space<vmem>>, vector<256x32xf32>
    %cst_495 = arith.constant dense<0.000000e+00> : vector<256xf32>
    %557 = vector.multi_reduction <add>, %556, %cst_495 [1] : vector<256x32xf32> to vector<256xf32>
    %558 = vector.shape_cast %557 : vector<256xf32> to vector<256x1xf32>
    %cst_496 = arith.constant 3.200000e+01 : f32
    %559 = vector.broadcast %cst_496 : f32 to vector<256x1xf32>
    %560 = arith.divf %558, %559 : vector<256x1xf32>
    %561 = vector.broadcast %560 : vector<256x1xf32> to vector<256x32xf32>
    %562 = arith.subf %556, %561 : vector<256x32xf32>
    %563 = arith.mulf %562, %562 : vector<256x32xf32>
    %cst_497 = arith.constant dense<0.000000e+00> : vector<256xf32>
    %564 = vector.multi_reduction <add>, %563, %cst_497 [1] : vector<256x32xf32> to vector<256xf32>
    %565 = vector.shape_cast %564 : vector<256xf32> to vector<256x1xf32>
    %cst_498 = arith.constant 3.200000e+01 : f32
    %566 = vector.broadcast %cst_498 : f32 to vector<256x1xf32>
    %567 = arith.divf %565, %566 : vector<256x1xf32>
    %cst_499 = arith.constant 9.99999997E-7 : f32
    %568 = vector.broadcast %cst_499 : f32 to vector<256x1xf32>
    %569 = arith.addf %567, %568 : vector<256x1xf32>
    %570 = math.rsqrt %569 : vector<256x1xf32>
    %571 = vector.broadcast %570 : vector<256x1xf32> to vector<256x32xf32>
    %572 = arith.mulf %562, %571 : vector<256x32xf32>
    %573 = arith.truncf %572 : vector<256x32xf32> to vector<256x32xbf16>
    %c0_500 = arith.constant 0 : index
    %c0_501 = arith.constant 0 : index
    %574 = vector.load %arg4[%c0_500, %c0_501] : memref<32x128xbf16, #tpu.memory_space<vmem>>, vector<32x128xbf16>
    %cst_502 = arith.constant dense<0.000000e+00> : vector<256x128xf32>
    %575 = tpu.matmul %573, %574, %cst_502 {dimension_numbers = #tpu.dot_dimension_numbers<[1], [0], [0], [1], [0, 0, 1, 1], [], []>} : vector<256x32xbf16>, vector<32x128xbf16>, vector<256x128xf32> -> vector<256x128xf32>
    %c0_503 = arith.constant 0 : index
    %c0_504 = arith.constant 0 : index
    %576 = vector.load %arg5[%c0_503, %c0_504] : memref<1x128xf32, #tpu.memory_space<vmem>>, vector<1x128xf32>
    %577 = vector.shape_cast %576 : vector<1x128xf32> to vector<128xf32>
    %578 = vector.shape_cast %577 : vector<128xf32> to vector<1x128xf32>
    %579 = vector.broadcast %578 : vector<1x128xf32> to vector<256x128xf32>
    %580 = arith.addf %575, %579 : vector<256x128xf32>
    %cst_505 = arith.constant 5.000000e-01 : f32
    %581 = vector.broadcast %cst_505 : f32 to vector<256x128xf32>
    %582 = arith.mulf %581, %580 : vector<256x128xf32>
    %cst_506 = arith.constant 0.707106769 : f32
    %583 = vector.broadcast %cst_506 : f32 to vector<256x128xf32>
    %584 = arith.mulf %580, %583 : vector<256x128xf32>
    %585 = math.erf %584 : vector<256x128xf32>
    %cst_507 = arith.constant 1.000000e+00 : f32
    %586 = vector.broadcast %cst_507 : f32 to vector<256x128xf32>
    %587 = arith.addf %586, %585 : vector<256x128xf32>
    %588 = arith.mulf %582, %587 : vector<256x128xf32>
    %589 = arith.truncf %588 : vector<256x128xf32> to vector<256x128xbf16>
    %c0_508 = arith.constant 0 : index
    %c0_509 = arith.constant 0 : index
    %590 = vector.load %arg6[%c0_508, %c0_509] : memref<128x32xbf16, #tpu.memory_space<vmem>>, vector<128x32xbf16>
    %cst_510 = arith.constant dense<0.000000e+00> : vector<256x32xf32>
    %591 = tpu.matmul %589, %590, %cst_510 {dimension_numbers = #tpu.dot_dimension_numbers<[1], [0], [0], [1], [0, 0, 1, 1], [], []>} : vector<256x128xbf16>, vector<128x32xbf16>, vector<256x32xf32> -> vector<256x32xf32>
    %c0_511 = arith.constant 0 : index
    %c0_512 = arith.constant 0 : index
    %592 = vector.load %arg7[%c0_511, %c0_512] : memref<1x32xf32, #tpu.memory_space<vmem>>, vector<1x32xf32>
    %593 = vector.shape_cast %592 : vector<1x32xf32> to vector<32xf32>
    %594 = vector.shape_cast %593 : vector<32xf32> to vector<1x32xf32>
    %595 = vector.broadcast %594 : vector<1x32xf32> to vector<256x32xf32>
    %596 = arith.addf %591, %595 : vector<256x32xf32>
    %c0_513 = arith.constant 0 : index
    %c0_514 = arith.constant 0 : index
    %c0_515 = arith.constant 0 : index
    %597 = vector.load %arg1[%c0_513, %c0_514, %c0_515] : memref<1x256x32xf32, #tpu.memory_space<vmem>>, vector<1x256x32xf32>
    %598 = vector.shape_cast %597 : vector<1x256x32xf32> to vector<256x32xf32>
    %599 = arith.addf %598, %596 : vector<256x32xf32>
    %c0_516 = arith.constant 0 : index
    %c0_517 = arith.constant 0 : index
    %c0_518 = arith.constant 0 : index
    %600 = vector.load %arg8[%c0_516, %c0_517, %c0_518] : memref<1x256x32xf32, #tpu.memory_space<vmem>>, vector<1x256x32xf32>
    %601 = vector.shape_cast %600 : vector<1x256x32xf32> to vector<256x32xf32>
    %602 = vector.shape_cast %599 : vector<256x32xf32> to vector<1x256x32xf32>
    tpu.vector_store %arg8[%c0_516, %c0_517, %c0_518], %602 {strides = array<i32>} : memref<1x256x32xf32, #tpu.memory_space<vmem>>, vector<1x256x32xf32>,
    return
  }
  func.func @transform_0(%arg0: i32) -> (i32, i32, i32) {
    %c0_i32 = arith.constant 0 : i32
    %c0_i32_0 = arith.constant 0 : i32
    %c0_i32_1 = arith.constant 0 : i32
    return %arg0, %c0_i32, %c0_i32_0 : i32, i32, i32
  }
  func.func @transform_1(%arg0: i32) -> (i32, i32, i32) {
    %c0_i32 = arith.constant 0 : i32
    %c0_i32_0 = arith.constant 0 : i32
    %c0_i32_1 = arith.constant 0 : i32
    %c0_i32_2 = arith.constant 0 : i32
    return %c0_i32, %c0_i32_0, %c0_i32_1 : i32, i32, i32
  }
  func.func @transform_2(%arg0: i32) -> (i32, i32) {
    %c0_i32 = arith.constant 0 : i32
    %c0_i32_0 = arith.constant 0 : i32
    %c0_i32_1 = arith.constant 0 : i32
    return %c0_i32, %c0_i32_0 : i32, i32
  }
  func.func @transform_3(%arg0: i32) -> (i32, i32) {
    %c0_i32 = arith.constant 0 : i32
    %c0_i32_0 = arith.constant 0 : i32
    %c0_i32_1 = arith.constant 0 : i32
    return %c0_i32, %c0_i32_0 : i32, i32
  }
  func.func @transform_4(%arg0: i32) -> (i32, i32) {
    %c0_i32 = arith.constant 0 : i32
    %c0_i32_0 = arith.constant 0 : i32
    %c0_i32_1 = arith.constant 0 : i32
    return %c0_i32, %c0_i32_0 : i32, i32
  }
  func.func @transform_5(%arg0: i32) -> (i32, i32) {
    %c0_i32 = arith.constant 0 : i32
    %c0_i32_0 = arith.constant 0 : i32
    %c0_i32_1 = arith.constant 0 : i32
    return %c0_i32, %c0_i32_0 : i32, i32
  }
  func.func @transform_6(%arg0: i32) -> (i32, i32) {
    %c0_i32 = arith.constant 0 : i32
    %c0_i32_0 = arith.constant 0 : i32
    %c0_i32_1 = arith.constant 0 : i32
    return %c0_i32, %c0_i32_0 : i32, i32
  }
  func.func @transform_7(%arg0: i32) -> (i32, i32, i32) {
    %c0_i32 = arith.constant 0 : i32
    %c0_i32_0 = arith.constant 0 : i32
    %c0_i32_1 = arith.constant 0 : i32
    return %arg0, %c0_i32, %c0_i32_0 : i32, i32, i32
  }
}

</mosaic_0001>

<llo_original>
// kernel: tpu_custom_call.1
$region0: #{tpu_custom_call.1}
  #allocation0 [shape = 'u32[]', space=smem, size = 0x4, offset = 0x4, fixed_abs, tag = 'smem constant byte address 0x4 - core index']
  #allocation1 [shape = 'u32[144,128]{1,0:T(1,128)}', space=vmem, size = 0x12000, scoped, tag = 'internal scratch']
  #allocation2 [shape = 'f32[22,32,32]{2,1,0:T(8,128)}', space=vmem, size = 0x58000, scoped, tag = 'scratch operand']
  #allocation3 [shape = 'f32[7,22,16,32]{3,2,1,0:T(8,128)}', space=vmem, size = 0x134000, scoped, tag = 'scratch operand']
  #allocation4 [shape = 'f32[256,32]{1,0:T(8,128)}', space=vmem, size = 0x20000, scoped, tag = 'scratch operand']
  %s0 = inlined_call_operand.vmem [shape: f32[2,256,32], index: 0, kind: input, shape index: {}]
  %s1 = inlined_call_operand.vmem [shape: f32[7,7,32], index: 1, kind: input, shape index: {}]
  %s2 = inlined_call_operand.vmem [shape: f32[1,32], index: 2, kind: input, shape index: {}]
  %s3 = inlined_call_operand.vmem [shape: bf16[32,128], index: 3, kind: input, shape index: {}]
  %s4 = inlined_call_operand.vmem [shape: f32[1,128], index: 4, kind: input, shape index: {}]
  %s5 = inlined_call_operand.vmem [shape: bf16[128,32], index: 5, kind: input, shape index: {}]
  %s6 = inlined_call_operand.vmem [shape: f32[1,32], index: 6, kind: input, shape index: {}]
  %s7 = inlined_call_operand.vmem [shape: f32[2,256,32], index: 7, kind: output, shape index: {}]
  %s8 = sld [smem:[#allocation0]]
  $region61: #{tpu_custom_call.1} parent=0
    _
  %s10 = ssub.s32 1, %s8
  %s11 = scalar_select 0, %s10, %s8
  loop: start=0, step=1, limit=4
  $region2: #{tpu_custom_call.1} parent=0 // loop_pre_header
    _
  $region3: #{tpu_custom_call.1} parent=0 // loop_header
    %s13 = sphi 0, %s17
    %p14 = scmp.ge.s32.totalorder %s13, 4
    %s23 = sphi 0, %s25
    %s26 = sphi 0, %s23
    %s27 = sphi 0, %s26
    %s43 = sphi 0, %s27
    %s47 = sphi 0, %s47
    %s49 = sphi 0, %s47
    %s50 = sphi 0, %s49
    %s64 = sphi 0, %s50
    %s68 = sphi 0, %s68
    %s70 = sphi 0, %s68
    %s71 = sphi 0, %s70
    %s85 = sphi 0, %s71
    %s89 = sphi 0, %s89
    %s91 = sphi 0, %s89
    %s92 = sphi 0, %s91
    %s106 = sphi 0, %s92
    %s110 = sphi 0, %s110
    %s112 = sphi 0, %s110
    %s113 = sphi 0, %s112
    %s127 = sphi 0, %s113
    %s131 = sphi 0, %s131
    %s133 = sphi 0, %s131
    %s134 = sphi 0, %s133
    %s148 = sphi 0, %s134
    %s152 = sphi 0, %s152
    %s154 = sphi 0, %s152
    %s155 = sphi 0, %s154
    %s169 = sphi 0, %s155
    %s175 = sphi 0, %s177
    %s178 = sphi 0, %s175
    %s179 = sphi 0, %s178
    %s195 = sphi 0, %s179
  $region4: #{tpu_custom_call.1} parent=0 // loop_header_branch
    %16 = sbr.rel (%p14) target = $region8
  $region5: #{tpu_custom_call.1} parent=0 // loop_body
    %s18 = ssub.s32 %s13, 1
    %s19 = ssub.s32 %s13, 2
    %s20 = sadd.s32 %s13, 1
    %s21 = ssub.s32 %s13, %s20
    %p22 = scmp.eq.s32.totalorder %s21, 0
    %s24 = sadd.s32 %s23, 1
    %s25 = scalar_select %p22, %s23, %s24
    %p28 = pneg %p22
    %p29 = scmp.eq.s32.totalorder %s13, 1
    %p30 = por %p28, %p29
    %p31 = scmp.ne.s32.totalorder %s23, %s26
    %p32 = scmp.eq.s32.totalorder %s13, 0
    %p33 = por %p31, %p32
    %p34 = scmp.ne.s32.totalorder %s23, %s26
    %p35 = scmp.eq.s32.totalorder %s18, 1
    %p36 = por %p34, %p35
    %p37 = scmp.ne.s32.totalorder %s26, %s27
    %p38 = scmp.eq.s32.totalorder %s18, 0
    %p39 = por %p37, %p38
    %p40 = scmp.ne.s32.totalorder %s26, %s27
    %p41 = scmp.eq.s32.totalorder %s19, 1
    %p42 = por %p40, %p41
    %p44 = scmp.ne.s32.totalorder %s27, %s43
    %p45 = scmp.eq.s32.totalorder %s19, 0
    %p46 = por %p44, %p45
    %s48 = sadd.s32 %s47, 1
    %p51 = scmp.eq.s32.totalorder %s13, 1
    %p52 = scmp.ne.s32.totalorder %s47, %s49
    %p53 = scmp.eq.s32.totalorder %s13, 0
    %p54 = por %p52, %p53
    %p55 = scmp.ne.s32.totalorder %s47, %s49
    %p56 = scmp.eq.s32.totalorder %s18, 1
    %p57 = por %p55, %p56
    %p58 = scmp.ne.s32.totalorder %s49, %s50
    %p59 = scmp.eq.s32.totalorder %s18, 0
    %p60 = por %p58, %p59
    %p61 = scmp.ne.s32.totalorder %s49, %s50
    %p62 = scmp.eq.s32.totalorder %s19, 1
    %p63 = por %p61, %p62
    %p65 = scmp.ne.s32.totalorder %s50, %s64
    %p66 = scmp.eq.s32.totalorder %s19, 0
    %p67 = por %p65, %p66
    %s69 = sadd.s32 %s68, 1
    %p72 = scmp.eq.s32.totalorder %s13, 1
    %p73 = scmp.ne.s32.totalorder %s68, %s70
    %p74 = scmp.eq.s32.totalorder %s13, 0
    %p75 = por %p73, %p74
    %p76 = scmp.ne.s32.totalorder %s68, %s70
    %p77 = scmp.eq.s32.totalorder %s18, 1
    %p78 = por %p76, %p77
    %p79 = scmp.ne.s32.totalorder %s70, %s71
    %p80 = scmp.eq.s32.totalorder %s18, 0
    %p81 = por %p79, %p80
    %p82 = scmp.ne.s32.totalorder %s70, %s71
    %p83 = scmp.eq.s32.totalorder %s19, 1
    %p84 = por %p82, %p83
    %p86 = scmp.ne.s32.totalorder %s71, %s85
    %p87 = scmp.eq.s32.totalorder %s19, 0
    %p88 = por %p86, %p87
    %s90 = sadd.s32 %s89, 1
    %p93 = scmp.eq.s32.totalorder %s13, 1
    %p94 = scmp.ne.s32.totalorder %s89, %s91
    %p95 = scmp.eq.s32.totalorder %s13, 0
    %p96 = por %p94, %p95
    %p97 = scmp.ne.s32.totalorder %s89, %s91
    %p98 = scmp.eq.s32.totalorder %s18, 1
    %p99 = por %p97, %p98
    %p100 = scmp.ne.s32.totalorder %s91, %s92
    %p101 = scmp.eq.s32.totalorder %s18, 0
    %p102 = por %p100, %p101
    %p103 = scmp.ne.s32.totalorder %s91, %s92
    %p104 = scmp.eq.s32.totalorder %s19, 1
    %p105 = por %p103, %p104
    %p107 = scmp.ne.s32.totalorder %s92, %s106
    %p108 = scmp.eq.s32.totalorder %s19, 0
    %p109 = por %p107, %p108
    %s111 = sadd.s32 %s110, 1
    %p114 = scmp.eq.s32.totalorder %s13, 1
    %p115 = scmp.ne.s32.totalorder %s110, %s112
    %p116 = scmp.eq.s32.totalorder %s13, 0
    %p117 = por %p115, %p116
    %p118 = scmp.ne.s32.totalorder %s110, %s112
    %p119 = scmp.eq.s32.totalorder %s18, 1
    %p120 = por %p118, %p119
    %p121 = scmp.ne.s32.totalorder %s112, %s113
    %p122 = scmp.eq.s32.totalorder %s18, 0
    %p123 = por %p121, %p122
    %p124 = scmp.ne.s32.totalorder %s112, %s113
    %p125 = scmp.eq.s32.totalorder %s19, 1
    %p126 = por %p124, %p125
    %p128 = scmp.ne.s32.totalorder %s113, %s127
    %p129 = scmp.eq.s32.totalorder %s19, 0
    %p130 = por %p128, %p129
    %s132 = sadd.s32 %s131, 1
    %p135 = scmp.eq.s32.totalorder %s13, 1
    %p136 = scmp.ne.s32.totalorder %s131, %s133
    %p137 = scmp.eq.s32.totalorder %s13, 0
    %p138 = por %p136, %p137
    %p139 = scmp.ne.s32.totalorder %s131, %s133
    %p140 = scmp.eq.s32.totalorder %s18, 1
    %p141 = por %p139, %p140
    %p142 = scmp.ne.s32.totalorder %s133, %s134
    %p143 = scmp.eq.s32.totalorder %s18, 0
    %p144 = por %p142, %p143
    %p145 = scmp.ne.s32.totalorder %s133, %s134
    %p146 = scmp.eq.s32.totalorder %s19, 1
    %p147 = por %p145, %p146
    %p149 = scmp.ne.s32.totalorder %s134, %s148
    %p150 = scmp.eq.s32.totalorder %s19, 0
    %p151 = por %p149, %p150
    %s153 = sadd.s32 %s152, 1
    %p156 = scmp.eq.s32.totalorder %s13, 1
    %p157 = scmp.ne.s32.totalorder %s152, %s154
    %p158 = scmp.eq.s32.totalorder %s13, 0
    %p159 = por %p157, %p158
    %p160 = scmp.ne.s32.totalorder %s152, %s154
    %p161 = scmp.eq.s32.totalorder %s18, 1
    %p162 = por %p160, %p161
    %p163 = scmp.ne.s32.totalorder %s154, %s155
    %p164 = scmp.eq.s32.totalorder %s18, 0
    %p165 = por %p163, %p164
    %p166 = scmp.ne.s32.totalorder %s154, %s155
    %p167 = scmp.eq.s32.totalorder %s19, 1
    %p168 = por %p166, %p167
    %p170 = scmp.ne.s32.totalorder %s155, %s169
    %p171 = scmp.eq.s32.totalorder %s19, 0
    %p172 = por %p170, %p171
    %s173 = ssub.s32 %s13, %s20
    %p174 = scmp.eq.s32.totalorder %s173, 0
    %s176 = sadd.s32 %s175, 1
    %s177 = scalar_select %p174, %s175, %s176
    %p180 = pneg %p174
    %p181 = scmp.eq.s32.totalorder %s13, 1
    %p182 = por %p180, %p181
    %p183 = scmp.ne.s32.totalorder %s175, %s178
    %p184 = scmp.eq.s32.totalorder %s13, 0
    %p185 = por %p183, %p184
    %p186 = scmp.ne.s32.totalorder %s175, %s178
    %p187 = scmp.eq.s32.totalorder %s18, 1
    %p188 = por %p186, %p187
    %p189 = scmp.ne.s32.totalorder %s178, %s179
    %p190 = scmp.eq.s32.totalorder %s18, 0
    %p191 = por %p189, %p190
    %p192 = scmp.ne.s32.totalorder %s178, %s179
    %p193 = scmp.eq.s32.totalorder %s19, 1
    %p194 = por %p192, %p193
    %p196 = scmp.ne.s32.totalorder %s179, %s195
    %p197 = scmp.eq.s32.totalorder %s19, 0
    %p198 = por %p196, %p197
    %p199 = scmp.le.s32.totalorder 1, %s13
    %p200 = scmp.lt.s32.totalorder %s13, 3
    %p201 = pnand %p199, %p200
    %p202 = pneg %p201
    // Predicated region
    $region9: #{tpu_custom_call.1} parent=5 // pred_check
      _
    $region10: #{tpu_custom_call.1} parent=5 // pred_check_branch
      %204 = sbr.rel (%p201) target = $region12
    $region11: #{tpu_custom_call.1} parent=5 // pred_region
      %s205 = ssub.s32 %s13, 1
      // Predicated region
      $region13: #{tpu_custom_call.1} parent=11 // pred_check
        %p206 = pneg %p60
      $region14: #{tpu_custom_call.1} parent=11 // pred_check_branch
        %208 = sbr.rel (%p206) target = $region16
      $region15: #{tpu_custom_call.1} parent=11 // pred_region
        _
      $region16: #{tpu_custom_call.1} parent=11 // pred_fallthru
        _
      // Predicated region
      $region17: #{tpu_custom_call.1} parent=11 // pred_check
        %p209 = pneg %p81
      $region18: #{tpu_custom_call.1} parent=11 // pred_check_branch
        %211 = sbr.rel (%p209) target = $region20
      $region19: #{tpu_custom_call.1} parent=11 // pred_region
        _
      $region20: #{tpu_custom_call.1} parent=11 // pred_fallthru
        _
      // Predicated region
      $region21: #{tpu_custom_call.1} parent=11 // pred_check
        %p212 = pneg %p102
      $region22: #{tpu_custom_call.1} parent=11 // pred_check_branch
        %214 = sbr.rel (%p212) target = $region24
      $region23: #{tpu_custom_call.1} parent=11 // pred_region
        _
      $region24: #{tpu_custom_call.1} parent=11 // pred_fallthru
        _
      // Predicated region
      $region25: #{tpu_custom_call.1} parent=11 // pred_check
        %p215 = pneg %p123
      $region26: #{tpu_custom_call.1} parent=11 // pred_check_branch
        %217 = sbr.rel (%p215) target = $region28
      $region27: #{tpu_custom_call.1} parent=11 // pred_region
        _
      $region28: #{tpu_custom_call.1} parent=11 // pred_fallthru
        _
      // Predicated region
      $region29: #{tpu_custom_call.1} parent=11 // pred_check
        %p218 = pneg %p144
      $region30: #{tpu_custom_call.1} parent=11 // pred_check_branch
        %220 = sbr.rel (%p218) target = $region32
      $region31: #{tpu_custom_call.1} parent=11 // pred_region
        _
      $region32: #{tpu_custom_call.1} parent=11 // pred_fallthru
        _
      // Predicated region
      $region33: #{tpu_custom_call.1} parent=11 // pred_check
        %p221 = pneg %p165
      $region34: #{tpu_custom_call.1} parent=11 // pred_check_branch
        %223 = sbr.rel (%p221) target = $region36
      $region35: #{tpu_custom_call.1} parent=11 // pred_region
        _
      $region36: #{tpu_custom_call.1} parent=11 // pred_fallthru
        _
    $region12: #{tpu_custom_call.1} parent=5 // pred_fallthru
      _
    %p224 = scmp.lt.s32.totalorder %s13, 2
    // Predicated region
    $region37: #{tpu_custom_call.1} parent=5 // pred_check
      %p225 = pneg %p224
    $region38: #{tpu_custom_call.1} parent=5 // pred_check_branch
      %227 = sbr.rel (%p225) target = $region40
    $region39: #{tpu_custom_call.1} parent=5 // pred_region
      // Predicated region
      $region41: #{tpu_custom_call.1} parent=39 // pred_check
        %p228 = pneg %p33
      $region42: #{tpu_custom_call.1} parent=39 // pred_check_branch
        %230 = sbr.rel (%p228) target = $region44
      $region43: #{tpu_custom_call.1} parent=39 // pred_region
        %p231 = scmp.lt.s32.totalorder %s13, 1
        %s232 = scalar_select %p231, %s13, 1
        %s233 = smul.addr %s232, 32
        %s234 = smul.addr %s233, 8
        %s235 = scalar_lea.vmem %s0, %s234
      $region44: #{tpu_custom_call.1} parent=39 // pred_fallthru
        _
    $region40: #{tpu_custom_call.1} parent=5 // pred_fallthru
      _
    %p236 = scmp.le.s32.totalorder 1, %s13
    %p237 = scmp.lt.s32.totalorder %s13, 3
    %p238 = pnand %p236, %p237
    %p239 = pneg %p238
    // Predicated region
    $region45: #{tpu_custom_call.1} parent=5 // pred_check
      _
    $region46: #{tpu_custom_call.1} parent=5 // pred_check_branch
      %241 = sbr.rel (%p238) target = $region48
    $region47: #{tpu_custom_call.1} parent=5 // pred_region
      %s242 = ssub.s32 %s13, 1
      %p243 = scmp.lt.s32.totalorder %s18, 1
      %s244 = scalar_select %p243, %s18, 1
      %s245 = smul.addr %s244, 32
      %s246 = smul.addr %s245, 8
      %s247 = scalar_lea.vmem %s0, %s246
      %p248 = pneg %p39
      %p249 = pneg %p36
      %p250 = pneg %p60
      %p251 = pneg %p57
      %p252 = pneg %p81
      %p253 = pneg %p78
      %p254 = pneg %p102
      %p255 = pneg %p99
      %p256 = pneg %p123
      %p257 = pneg %p120
      %p258 = pneg %p144
      %p259 = pneg %p141
      %p260 = pneg %p165
      %p261 = pneg %p162
      %p262 = pneg %p191
      %p263 = pneg %p188
      %p264 = scmp.lt.s32.totalorder %s18, 1
      %s265 = scalar_select %p264, %s18, 1
      %s266 = smul.addr %s265, 32
      %s267 = smul.addr %s266, 8
      %s268 = scalar_lea.vmem %s7, %s267
      %p269 = scmp.lt.s32.totalorder %s18, 1
      %s270 = scalar_select %p269, %s18, 1
      %s271 = smul.addr %s270, 32
      %s272 = smul.addr %s271, 8
      %s273 = scalar_lea.vmem %s0, %s272
      %p274 = scmp.lt.s32.totalorder %s18, 1
      %s275 = scalar_select %p274, %s18, 1
      %s276 = smul.addr %s275, 32
      %s277 = smul.addr %s276, 8
      %s278 = scalar_lea.vmem %s7, %s277
      %vm280 = vcmask 261120
      %281 = vst.msk [vmem:[#allocation2] sm:$0xff] %vm280, 0.0
      %282 = vst.msk [vmem:[#allocation2 + $0x8] sm:$0xff] %vm280, 0.0
      %283 = vst.msk [vmem:[#allocation2 + $0x10] sm:$0xff] %vm280, 0.0
      %284 = vst.msk [vmem:[#allocation2 + $0x18] sm:$0xff] %vm280, 0.0
      %285 = vst.msk [vmem:[#allocation2 + $0x20] sm:$0xff] %vm280, 0.0
      %286 = vst.msk [vmem:[#allocation2 + $0x28] sm:$0xff] %vm280, 0.0
      %287 = vst.msk [vmem:[#allocation2 + $0x30] sm:$0xff] %vm280, 0.0
      %288 = vst.msk [vmem:[#allocation2 + $0x38] sm:$0xff] %vm280, 0.0
      %289 = vst.msk [vmem:[#allocation2 + $0x40] sm:$0xff] %vm280, 0.0
      %290 = vst.msk [vmem:[#allocation2 + $0x48] sm:$0xff] %vm280, 0.0
      %291 = vst.msk [vmem:[#allocation2 + $0x50] sm:$0xff] %vm280, 0.0
      %292 = vst.msk [vmem:[#allocation2 + $0x58] sm:$0xff] %vm280, 0.0
      %293 = vst.msk [vmem:[#allocation2 + $0x60] sm:$0xff] %vm280, 0.0
      %294 = vst.msk [vmem:[#allocation2 + $0x68] sm:$0xff] %vm280, 0.0
      %295 = vst.msk [vmem:[#allocation2 + $0x70] sm:$0xff] %vm280, 0.0
      %296 = vst.msk [vmem:[#allocation2 + $0x78] sm:$0xff] %vm280, 0.0
      %297 = vst.msk [vmem:[#allocation2 + $0x80] sm:$0xff] %vm280, 0.0
      %298 = vst.msk [vmem:[#allocation2 + $0x88] sm:$0xff] %vm280, 0.0
      %299 = vst.msk [vmem:[#allocation2 + $0x90] sm:$0xff] %vm280, 0.0
      %300 = vst.msk [vmem:[#allocation2 + $0x98] sm:$0xff] %vm280, 0.0
      %301 = vst.msk [vmem:[#allocation2 + $0xa0] sm:$0xff] %vm280, 0.0
      %302 = vst.msk [vmem:[#allocation2 + $0xa8] sm:$0xff] %vm280, 0.0
      %303 = vst.msk [vmem:[#allocation2 + $0xb0] sm:$0xff] %vm280, 0.0
      %304 = vst.msk [vmem:[#allocation2 + $0xb8] sm:$0xff] %vm280, 0.0
      %305 = vst.msk [vmem:[#allocation2 + $0xc0] sm:$0xff] %vm280, 0.0
      %306 = vst.msk [vmem:[#allocation2 + $0xc8] sm:$0xff] %vm280, 0.0
      %307 = vst.msk [vmem:[#allocation2 + $0xd0] sm:$0xff] %vm280, 0.0
      %308 = vst.msk [vmem:[#allocation2 + $0xd8] sm:$0xff] %vm280, 0.0
      %309 = vst.msk [vmem:[#allocation2 + $0xe0] sm:$0xff] %vm280, 0.0
      %310 = vst.msk [vmem:[#allocation2 + $0xe8] sm:$0xff] %vm280, 0.0
      %311 = vst.msk [vmem:[#allocation2 + $0xf0] sm:$0xff] %vm280, 0.0
      %312 = vst.msk [vmem:[#allocation2 + $0xf8] sm:$0xff] %vm280, 0.0
      %313 = vst.msk [vmem:[#allocation2 + $0x100] sm:$0xff] %vm280, 0.0
      %314 = vst.msk [vmem:[#allocation2 + $0x108] sm:$0xff] %vm280, 0.0
      %315 = vst.msk [vmem:[#allocation2 + $0x110] sm:$0xff] %vm280, 0.0
      %316 = vst.msk [vmem:[#allocation2 + $0x118] sm:$0xff] %vm280, 0.0
      %317 = vst.msk [vmem:[#allocation2 + $0x120] sm:$0xff] %vm280, 0.0
      %318 = vst.msk [vmem:[#allocation2 + $0x128] sm:$0xff] %vm280, 0.0
      %319 = vst.msk [vmem:[#allocation2 + $0x130] sm:$0xff] %vm280, 0.0
      %320 = vst.msk [vmem:[#allocation2 + $0x138] sm:$0xff] %vm280, 0.0
      %321 = vst.msk [vmem:[#allocation2 + $0x140] sm:$0xff] %vm280, 0.0
      %322 = vst.msk [vmem:[#allocation2 + $0x148] sm:$0xff] %vm280, 0.0
      %323 = vst.msk [vmem:[#allocation2 + $0x150] sm:$0xff] %vm280, 0.0
      %324 = vst.msk [vmem:[#allocation2 + $0x158] sm:$0xff] %vm280, 0.0
      %325 = vst.msk [vmem:[#allocation2 + $0x160] sm:$0xff] %vm280, 0.0
      %326 = vst.msk [vmem:[#allocation2 + $0x168] sm:$0xff] %vm280, 0.0
      %327 = vst.msk [vmem:[#allocation2 + $0x170] sm:$0xff] %vm280, 0.0
      %328 = vst.msk [vmem:[#allocation2 + $0x178] sm:$0xff] %vm280, 0.0
      %329 = vst.msk [vmem:[#allocation2 + $0x180] sm:$0xff] %vm280, 0.0
      %330 = vst.msk [vmem:[#allocation2 + $0x188] sm:$0xff] %vm280, 0.0
      %331 = vst.msk [vmem:[#allocation2 + $0x190] sm:$0xff] %vm280, 0.0
      %332 = vst.msk [vmem:[#allocation2 + $0x198] sm:$0xff] %vm280, 0.0
      %333 = vst.msk [vmem:[#allocation2 + $0x1a0] sm:$0xff] %vm280, 0.0
      %334 = vst.msk [vmem:[#allocation2 + $0x1a8] sm:$0xff] %vm280, 0.0
      %335 = vst.msk [vmem:[#allocation2 + $0x1b0] sm:$0xff] %vm280, 0.0
      %336 = vst.msk [vmem:[#allocation2 + $0x1b8] sm:$0xff] %vm280, 0.0
      %337 = vst.msk [vmem:[#allocation2 + $0x1c0] sm:$0xff] %vm280, 0.0
      %338 = vst.msk [vmem:[#allocation2 + $0x1c8] sm:$0xff] %vm280, 0.0
      %339 = vst.msk [vmem:[#allocation2 + $0x1d0] sm:$0xff] %vm280, 0.0
      %340 = vst.msk [vmem:[#allocation2 + $0x1d8] sm:$0xff] %vm280, 0.0
      %341 = vst.msk [vmem:[#allocation2 + $0x1e0] sm:$0xff] %vm280, 0.0
      %342 = vst.msk [vmem:[#allocation2 + $0x1e8] sm:$0xff] %vm280, 0.0
      %343 = vst.msk [vmem:[#allocation2 + $0x1f0] sm:$0xff] %vm280, 0.0
      %344 = vst.msk [vmem:[#allocation2 + $0x1f8] sm:$0xff] %vm280, 0.0
      %345 = vst.msk [vmem:[#allocation2 + $0x200] sm:$0xff] %vm280, 0.0
      %346 = vst.msk [vmem:[#allocation2 + $0x208] sm:$0xff] %vm280, 0.0
      %347 = vst.msk [vmem:[#allocation2 + $0x210] sm:$0xff] %vm280, 0.0
      %348 = vst.msk [vmem:[#allocation2 + $0x218] sm:$0xff] %vm280, 0.0
      %349 = vst.msk [vmem:[#allocation2 + $0x220] sm:$0xff] %vm280, 0.0
      %350 = vst.msk [vmem:[#allocation2 + $0x228] sm:$0xff] %vm280, 0.0
      %351 = vst.msk [vmem:[#allocation2 + $0x230] sm:$0xff] %vm280, 0.0
      %352 = vst.msk [vmem:[#allocation2 + $0x238] sm:$0xff] %vm280, 0.0
      %353 = vst.msk [vmem:[#allocation2 + $0x240] sm:$0xff] %vm280, 0.0
      %354 = vst.msk [vmem:[#allocation2 + $0x248] sm:$0xff] %vm280, 0.0
      %355 = vst.msk [vmem:[#allocation2 + $0x250] sm:$0xff] %vm280, 0.0
      %356 = vst.msk [vmem:[#allocation2 + $0x258] sm:$0xff] %vm280, 0.0
      %357 = vst.msk [vmem:[#allocation2 + $0x260] sm:$0xff] %vm280, 0.0
      %358 = vst.msk [vmem:[#allocation2 + $0x268] sm:$0xff] %vm280, 0.0
      %359 = vst.msk [vmem:[#allocation2 + $0x270] sm:$0xff] %vm280, 0.0
      %360 = vst.msk [vmem:[#allocation2 + $0x278] sm:$0xff] %vm280, 0.0
      %361 = vst.msk [vmem:[#allocation2 + $0x280] sm:$0xff] %vm280, 0.0
      %362 = vst.msk [vmem:[#allocation2 + $0x288] sm:$0xff] %vm280, 0.0
      %363 = vst.msk [vmem:[#allocation2 + $0x290] sm:$0xff] %vm280, 0.0
      %364 = vst.msk [vmem:[#allocation2 + $0x298] sm:$0xff] %vm280, 0.0
      %365 = vst.msk [vmem:[#allocation2 + $0x2a0] sm:$0xff] %vm280, 0.0
      %366 = vst.msk [vmem:[#allocation2 + $0x2a8] sm:$0xff] %vm280, 0.0
      %367 = vst.msk [vmem:[#allocation2 + $0x2b0] sm:$0xff] %vm280, 0.0
      %368 = vst.msk [vmem:[#allocation2 + $0x2b8] sm:$0xff] %vm280, 0.0
      %v369 = vld [vmem:[%s273] sm:$0xff]
      %v370 = vld [vmem:[%s273 + $0x8] sm:$0xff]
      %s371 = scalar_lea.vmem [#allocation2], 96
      %372 = vst.msk [vmem:[%s371 + $0x8] sm:$0xff] %vm280, %v369
      %373 = vst.msk [vmem:[%s371 + $0x10] sm:$0xff] %vm280, %v370
      %v374 = vld [vmem:[%s273 + $0x10] sm:$0xff]
      %v375 = vld [vmem:[%s273 + $0x18] sm:$0xff]
      %s376 = scalar_lea.vmem [#allocation2], 128
      %377 = vst.msk [vmem:[%s376 + $0x8] sm:$0xff] %vm280, %v374
      %378 = vst.msk [vmem:[%s376 + $0x10] sm:$0xff] %vm280, %v375
      %v379 = vld [vmem:[%s273 + $0x20] sm:$0xff]
      %v380 = vld [vmem:[%s273 + $0x28] sm:$0xff]
      %s381 = scalar_lea.vmem [#allocation2], 160
      %382 = vst.msk [vmem:[%s381 + $0x8] sm:$0xff] %vm280, %v379
      %383 = vst.msk [vmem:[%s381 + $0x10] sm:$0xff] %vm280, %v380
      %v384 = vld [vmem:[%s273 + $0x30] sm:$0xff]
      %v385 = vld [vmem:[%s273 + $0x38] sm:$0xff]
      %s386 = scalar_lea.vmem [#allocation2], 192
      %387 = vst.msk [vmem:[%s386 + $0x8] sm:$0xff] %vm280, %v384
      %388 = vst.msk [vmem:[%s386 + $0x10] sm:$0xff] %vm280, %v385
      %v389 = vld [vmem:[%s273 + $0x40] sm:$0xff]
      %v390 = vld [vmem:[%s273 + $0x48] sm:$0xff]
      %s391 = scalar_lea.vmem [#allocation2], 224
      %392 = vst.msk [vmem:[%s391 + $0x8] sm:$0xff] %vm280, %v389
      %393 = vst.msk [vmem:[%s391 + $0x10] sm:$0xff] %vm280, %v390
      %v394 = vld [vmem:[%s273 + $0x50] sm:$0xff]
      %v395 = vld [vmem:[%s273 + $0x58] sm:$0xff]
      %s396 = scalar_lea.vmem [#allocation2], 256
      %397 = vst.msk [vmem:[%s396 + $0x8] sm:$0xff] %vm280, %v394
      %398 = vst.msk [vmem:[%s396 + $0x10] sm:$0xff] %vm280, %v395
      %v399 = vld [vmem:[%s273 + $0x60] sm:$0xff]
      %v400 = vld [vmem:[%s273 + $0x68] sm:$0xff]
      %s401 = scalar_lea.vmem [#allocation2], 288
      %402 = vst.msk [vmem:[%s401 + $0x8] sm:$0xff] %vm280, %v399
      %403 = vst.msk [vmem:[%s401 + $0x10] sm:$0xff] %vm280, %v400
      %v404 = vld [vmem:[%s273 + $0x70] sm:$0xff]
      %v405 = vld [vmem:[%s273 + $0x78] sm:$0xff]
      %s406 = scalar_lea.vmem [#allocation2], 320
      %407 = vst.msk [vmem:[%s406 + $0x8] sm:$0xff] %vm280, %v404
      %408 = vst.msk [vmem:[%s406 + $0x10] sm:$0xff] %vm280, %v405
      %v409 = vld [vmem:[%s273 + $0x80] sm:$0xff]
      %v410 = vld [vmem:[%s273 + $0x88] sm:$0xff]
      %s411 = scalar_lea.vmem [#allocation2], 352
      %412 = vst.msk [vmem:[%s411 + $0x8] sm:$0xff] %vm280, %v409
      %413 = vst.msk [vmem:[%s411 + $0x10] sm:$0xff] %vm280, %v410
      %v414 = vld [vmem:[%s273 + $0x90] sm:$0xff]
      %v415 = vld [vmem:[%s273 + $0x98] sm:$0xff]
      %s416 = scalar_lea.vmem [#allocation2], 384
      %417 = vst.msk [vmem:[%s416 + $0x8] sm:$0xff] %vm280, %v414
      %418 = vst.msk [vmem:[%s416 + $0x10] sm:$0xff] %vm280, %v415
      %v419 = vld [vmem:[%s273 + $0xa0] sm:$0xff]
      %v420 = vld [vmem:[%s273 + $0xa8] sm:$0xff]
      %s421 = scalar_lea.vmem [#allocation2], 416
      %422 = vst.msk [vmem:[%s421 + $0x8] sm:$0xff] %vm280, %v419
      %423 = vst.msk [vmem:[%s421 + $0x10] sm:$0xff] %vm280, %v420
      %v424 = vld [vmem:[%s273 + $0xb0] sm:$0xff]
      %v425 = vld [vmem:[%s273 + $0xb8] sm:$0xff]
      %s426 = scalar_lea.vmem [#allocation2], 448
      %427 = vst.msk [vmem:[%s426 + $0x8] sm:$0xff] %vm280, %v424
      %428 = vst.msk [vmem:[%s426 + $0x10] sm:$0xff] %vm280, %v425
      %v429 = vld [vmem:[%s273 + $0xc0] sm:$0xff]
      %v430 = vld [vmem:[%s273 + $0xc8] sm:$0xff]
      %s431 = scalar_lea.vmem [#allocation2], 480
      %432 = vst.msk [vmem:[%s431 + $0x8] sm:$0xff] %vm280, %v429
      %433 = vst.msk [vmem:[%s431 + $0x10] sm:$0xff] %vm280, %v430
      %v434 = vld [vmem:[%s273 + $0xd0] sm:$0xff]
      %v435 = vld [vmem:[%s273 + $0xd8] sm:$0xff]
      %s436 = scalar_lea.vmem [#allocation2], 512
      %437 = vst.msk [vmem:[%s436 + $0x8] sm:$0xff] %vm280, %v434
      %438 = vst.msk [vmem:[%s436 + $0x10] sm:$0xff] %vm280, %v435
      %v439 = vld [vmem:[%s273 + $0xe0] sm:$0xff]
      %v440 = vld [vmem:[%s273 + $0xe8] sm:$0xff]
      %s441 = scalar_lea.vmem [#allocation2], 544
      %442 = vst.msk [vmem:[%s441 + $0x8] sm:$0xff] %vm280, %v439
      %443 = vst.msk [vmem:[%s441 + $0x10] sm:$0xff] %vm280, %v440
      %v444 = vld [vmem:[%s273 + $0xf0] sm:$0xff]
      %v445 = vld [vmem:[%s273 + $0xf8] sm:$0xff]
      %s446 = scalar_lea.vmem [#allocation2], 576
      %447 = vst.msk [vmem:[%s446 + $0x8] sm:$0xff] %vm280, %v444
      %448 = vst.msk [vmem:[%s446 + $0x10] sm:$0xff] %vm280, %v445
      %v449 = vld [vmem:[#allocation2 + $0x5] sm:$0xff]
      %v450 = vld [vmem:[#allocation2 + $0xd] sm:$0xff]
      %v451 = vld [vmem:[#allocation2 + $0x25] sm:$0xff]
      %v452 = vld [vmem:[#allocation2 + $0x2d] sm:$0xff]
      %v453 = vld [vmem:[#allocation2 + $0x45] sm:$0xff]
      %v454 = vld [vmem:[#allocation2 + $0x4d] sm:$0xff]
      %v455 = vld [vmem:[#allocation2 + $0x65] sm:$0xff]
      %v456 = vld [vmem:[#allocation2 + $0x6d] sm:$0xff]
      %v457 = vld [vmem:[#allocation2 + $0x85] sm:$0xff]
      %v458 = vld [vmem:[#allocation2 + $0x8d] sm:$0xff]
      %v459 = vld [vmem:[#allocation2 + $0xa5] sm:$0xff]
      %v460 = vld [vmem:[#allocation2 + $0xad] sm:$0xff]
      %v461 = vld [vmem:[#allocation2 + $0xc5] sm:$0xff]
      %v462 = vld [vmem:[#allocation2 + $0xcd] sm:$0xff]
      %v463 = vld [vmem:[#allocation2 + $0xe5] sm:$0xff]
      %v464 = vld [vmem:[#allocation2 + $0xed] sm:$0xff]
      %v465 = vld [vmem:[#allocation2 + $0x105] sm:$0xff]
      %v466 = vld [vmem:[#allocation2 + $0x10d] sm:$0xff]
      %v467 = vld [vmem:[#allocation2 + $0x125] sm:$0xff]
      %v468 = vld [vmem:[#allocation2 + $0x12d] sm:$0xff]
      %v469 = vld [vmem:[#allocation2 + $0x145] sm:$0xff]
      %v470 = vld [vmem:[#allocation2 + $0x14d] sm:$0xff]
      %v471 = vld [vmem:[#allocation2 + $0x165] sm:$0xff]
      %v472 = vld [vmem:[#allocation2 + $0x16d] sm:$0xff]
      %v473 = vld [vmem:[#allocation2 + $0x185] sm:$0xff]
      %v474 = vld [vmem:[#allocation2 + $0x18d] sm:$0xff]
      %v475 = vld [vmem:[#allocation2 + $0x1a5] sm:$0xff]
      %v476 = vld [vmem:[#allocation2 + $0x1ad] sm:$0xff]
      %v477 = vld [vmem:[#allocation2 + $0x1c5] sm:$0xff]
      %v478 = vld [vmem:[#allocation2 + $0x1cd] sm:$0xff]
      %v479 = vld [vmem:[#allocation2 + $0x1e5] sm:$0xff]
      %v480 = vld [vmem:[#allocation2 + $0x1ed] sm:$0xff]
      %v481 = vld [vmem:[#allocation2 + $0x205] sm:$0xff]
      %v482 = vld [vmem:[#allocation2 + $0x20d] sm:$0xff]
      %v483 = vld [vmem:[#allocation2 + $0x225] sm:$0xff]
      %v484 = vld [vmem:[#allocation2 + $0x22d] sm:$0xff]
      %v485 = vld [vmem:[#allocation2 + $0x245] sm:$0xff]
      %v486 = vld [vmem:[#allocation2 + $0x24d] sm:$0xff]
      %v487 = vld [vmem:[#allocation2 + $0x265] sm:$0xff]
      %v488 = vld [vmem:[#allocation2 + $0x26d] sm:$0xff]
      %v489 = vld [vmem:[#allocation2 + $0x285] sm:$0xff]
      %v490 = vld [vmem:[#allocation2 + $0x28d] sm:$0xff]
      %v491 = vld [vmem:[#allocation2 + $0x2a5] sm:$0xff]
      %v492 = vld [vmem:[#allocation2 + $0x2ad] sm:$0xff]
      %493 = vst.msk [vmem:[#allocation3] sm:$0xff] %vm280, %v449
      %494 = vst.msk [vmem:[#allocation3 + $0x8] sm:$0xff] %vm280, %v450
      %495 = vst.msk [vmem:[#allocation3 + $0x10] sm:$0xff] %vm280, %v451
      %496 = vst.msk [vmem:[#allocation3 + $0x18] sm:$0xff] %vm280, %v452
      %497 = vst.msk [vmem:[#allocation3 + $0x20] sm:$0xff] %vm280, %v453
      %498 = vst.msk [vmem:[#allocation3 + $0x28] sm:$0xff] %vm280, %v454
      %499 = vst.msk [vmem:[#allocation3 + $0x30] sm:$0xff] %vm280, %v455
      %500 = vst.msk [vmem:[#allocation3 + $0x38] sm:$0xff] %vm280, %v456
      %501 = vst.msk [vmem:[#allocation3 + $0x40] sm:$0xff] %vm280, %v457
      %502 = vst.msk [vmem:[#allocation3 + $0x48] sm:$0xff] %vm280, %v458
      %503 = vst.msk [vmem:[#allocation3 + $0x50] sm:$0xff] %vm280, %v459
      %504 = vst.msk [vmem:[#allocation3 + $0x58] sm:$0xff] %vm280, %v460
      %505 = vst.msk [vmem:[#allocation3 + $0x60] sm:$0xff] %vm280, %v461
      %506 = vst.msk [vmem:[#allocation3 + $0x68] sm:$0xff] %vm280, %v462
      %507 = vst.msk [vmem:[#allocation3 + $0x70] sm:$0xff] %vm280, %v463
      %508 = vst.msk [vmem:[#allocation3 + $0x78] sm:$0xff] %vm280, %v464
      %509 = vst.msk [vmem:[#allocation3 + $0x80] sm:$0xff] %vm280, %v465
      %510 = vst.msk [vmem:[#allocation3 + $0x88] sm:$0xff] %vm280, %v466
      %511 = vst.msk [vmem:[#allocation3 + $0x90] sm:$0xff] %vm280, %v467
      %512 = vst.msk [vmem:[#allocation3 + $0x98] sm:$0xff] %vm280, %v468
      %513 = vst.msk [vmem:[#allocation3 + $0xa0] sm:$0xff] %vm280, %v469
      %514 = vst.msk [vmem:[#allocation3 + $0xa8] sm:$0xff] %vm280, %v470
      %515 = vst.msk [vmem:[#allocation3 + $0xb0] sm:$0xff] %vm280, %v471
      %516 = vst.msk [vmem:[#allocation3 + $0xb8] sm:$0xff] %vm280, %v472
      %517 = vst.msk [vmem:[#allocation3 + $0xc0] sm:$0xff] %vm280, %v473
      %518 = vst.msk [vmem:[#allocation3 + $0xc8] sm:$0xff] %vm280, %v474
      %519 = vst.msk [vmem:[#allocation3 + $0xd0] sm:$0xff] %vm280, %v475
      %520 = vst.msk [vmem:[#allocation3 + $0xd8] sm:$0xff] %vm280, %v476
      %521 = vst.msk [vmem:[#allocation3 + $0xe0] sm:$0xff] %vm280, %v477
      %522 = vst.msk [vmem:[#allocation3 + $0xe8] sm:$0xff] %vm280, %v478
      %523 = vst.msk [vmem:[#allocation3 + $0xf0] sm:$0xff] %vm280, %v479
      %524 = vst.msk [vmem:[#allocation3 + $0xf8] sm:$0xff] %vm280, %v480
      %525 = vst.msk [vmem:[#allocation3 + $0x100] sm:$0xff] %vm280, %v481
      %526 = vst.msk [vmem:[#allocation3 + $0x108] sm:$0xff] %vm280, %v482
      %527 = vst.msk [vmem:[#allocation3 + $0x110] sm:$0xff] %vm280, %v483
      %528 = vst.msk [vmem:[#allocation3 + $0x118] sm:$0xff] %vm280, %v484
      %529 = vst.msk [vmem:[#allocation3 + $0x120] sm:$0xff] %vm280, %v485
      %530 = vst.msk [vmem:[#allocation3 + $0x128] sm:$0xff] %vm280, %v486
      %531 = vst.msk [vmem:[#allocation3 + $0x130] sm:$0xff] %vm280, %v487
      %532 = vst.msk [vmem:[#allocation3 + $0x138] sm:$0xff] %vm280, %v488
      %533 = vst.msk [vmem:[#allocation3 + $0x140] sm:$0xff] %vm280, %v489
      %534 = vst.msk [vmem:[#allocation3 + $0x148] sm:$0xff] %vm280, %v490
      %535 = vst.msk [vmem:[#allocation3 + $0x150] sm:$0xff] %vm280, %v491
      %536 = vst.msk [vmem:[#allocation3 + $0x158] sm:$0xff] %vm280, %v492
      %v537 = vld [vmem:[#allocation2 + $0x6] sm:$0xff]
      %v538 = vld [vmem:[#allocation2 + $0xe] sm:$0xff]
      %v539 = vld [vmem:[#allocation2 + $0x26] sm:$0xff]
      %v540 = vld [vmem:[#allocation2 + $0x2e] sm:$0xff]
      %v541 = vld [vmem:[#allocation2 + $0x46] sm:$0xff]
      %v542 = vld [vmem:[#allocation2 + $0x4e] sm:$0xff]
      %v543 = vld [vmem:[#allocation2 + $0x66] sm:$0xff]
      %v544 = vld [vmem:[#allocation2 + $0x6e] sm:$0xff]
      %v545 = vld [vmem:[#allocation2 + $0x86] sm:$0xff]
      %v546 = vld [vmem:[#allocation2 + $0x8e] sm:$0xff]
      %v547 = vld [vmem:[#allocation2 + $0xa6] sm:$0xff]
      %v548 = vld [vmem:[#allocation2 + $0xae] sm:$0xff]
      %v549 = vld [vmem:[#allocation2 + $0xc6] sm:$0xff]
      %v550 = vld [vmem:[#allocation2 + $0xce] sm:$0xff]
      %v551 = vld [vmem:[#allocation2 + $0xe6] sm:$0xff]
      %v552 = vld [vmem:[#allocation2 + $0xee] sm:$0xff]
      %v553 = vld [vmem:[#allocation2 + $0x106] sm:$0xff]
      %v554 = vld [vmem:[#allocation2 + $0x10e] sm:$0xff]
      %v555 = vld [vmem:[#allocation2 + $0x126] sm:$0xff]
      %v556 = vld [vmem:[#allocation2 + $0x12e] sm:$0xff]
      %v557 = vld [vmem:[#allocation2 + $0x146] sm:$0xff]
      %v558 = vld [vmem:[#allocation2 + $0x14e] sm:$0xff]
      %v559 = vld [vmem:[#allocation2 + $0x166] sm:$0xff]
      %v560 = vld [vmem:[#allocation2 + $0x16e] sm:$0xff]
      %v561 = vld [vmem:[#allocation2 + $0x186] sm:$0xff]
      %v562 = vld [vmem:[#allocation2 + $0x18e] sm:$0xff]
      %v563 = vld [vmem:[#allocation2 + $0x1a6] sm:$0xff]
      %v564 = vld [vmem:[#allocation2 + $0x1ae] sm:$0xff]
      %v565 = vld [vmem:[#allocation2 + $0x1c6] sm:$0xff]
      %v566 = vld [vmem:[#allocation2 + $0x1ce] sm:$0xff]
      %v567 = vld [vmem:[#allocation2 + $0x1e6] sm:$0xff]
      %v568 = vld [vmem:[#allocation2 + $0x1ee] sm:$0xff]
      %v569 = vld [vmem:[#allocation2 + $0x206] sm:$0xff]
      %v570 = vld [vmem:[#allocation2 + $0x20e] sm:$0xff]
      %v571 = vld [vmem:[#allocation2 + $0x226] sm:$0xff]
      %v572 = vld [vmem:[#allocation2 + $0x22e] sm:$0xff]
      %v573 = vld [vmem:[#allocation2 + $0x246] sm:$0xff]
      %v574 = vld [vmem:[#allocation2 + $0x24e] sm:$0xff]
      %v575 = vld [vmem:[#allocation2 + $0x266] sm:$0xff]
      %v576 = vld [vmem:[#allocation2 + $0x26e] sm:$0xff]
      %v577 = vld [vmem:[#allocation2 + $0x286] sm:$0xff]
      %v578 = vld [vmem:[#allocation2 + $0x28e] sm:$0xff]
      %v579 = vld [vmem:[#allocation2 + $0x2a6] sm:$0xff]
      %v580 = vld [vmem:[#allocation2 + $0x2ae] sm:$0xff]
      %s581 = scalar_lea.vmem [#allocation3], 352
      %582 = vst.msk [vmem:[%s581] sm:$0xff] %vm280, %v537
      %583 = vst.msk [vmem:[%s581 + $0x8] sm:$0xff] %vm280, %v538
      %584 = vst.msk [vmem:[%s581 + $0x10] sm:$0xff] %vm280, %v539
      %585 = vst.msk [vmem:[%s581 + $0x18] sm:$0xff] %vm280, %v540
      %586 = vst.msk [vmem:[%s581 + $0x20] sm:$0xff] %vm280, %v541
      %587 = vst.msk [vmem:[%s581 + $0x28] sm:$0xff] %vm280, %v542
      %588 = vst.msk [vmem:[%s581 + $0x30] sm:$0xff] %vm280, %v543
      %589 = vst.msk [vmem:[%s581 + $0x38] sm:$0xff] %vm280, %v544
      %590 = vst.msk [vmem:[%s581 + $0x40] sm:$0xff] %vm280, %v545
      %591 = vst.msk [vmem:[%s581 + $0x48] sm:$0xff] %vm280, %v546
      %592 = vst.msk [vmem:[%s581 + $0x50] sm:$0xff] %vm280, %v547
      %593 = vst.msk [vmem:[%s581 + $0x58] sm:$0xff] %vm280, %v548
      %594 = vst.msk [vmem:[%s581 + $0x60] sm:$0xff] %vm280, %v549
      %595 = vst.msk [vmem:[%s581 + $0x68] sm:$0xff] %vm280, %v550
      %596 = vst.msk [vmem:[%s581 + $0x70] sm:$0xff] %vm280, %v551
      %597 = vst.msk [vmem:[%s581 + $0x78] sm:$0xff] %vm280, %v552
      %598 = vst.msk [vmem:[%s581 + $0x80] sm:$0xff] %vm280, %v553
      %599 = vst.msk [vmem:[%s581 + $0x88] sm:$0xff] %vm280, %v554
      %600 = vst.msk [vmem:[%s581 + $0x90] sm:$0xff] %vm280, %v555
      %601 = vst.msk [vmem:[%s581 + $0x98] sm:$0xff] %vm280, %v556
      %602 = vst.msk [vmem:[%s581 + $0xa0] sm:$0xff] %vm280, %v557
      %603 = vst.msk [vmem:[%s581 + $0xa8] sm:$0xff] %vm280, %v558
      %604 = vst.msk [vmem:[%s581 + $0xb0] sm:$0xff] %vm280, %v559
      %605 = vst.msk [vmem:[%s581 + $0xb8] sm:$0xff] %vm280, %v560
      %606 = vst.msk [vmem:[%s581 + $0xc0] sm:$0xff] %vm280, %v561
      %607 = vst.msk [vmem:[%s581 + $0xc8] sm:$0xff] %vm280, %v562
      %608 = vst.msk [vmem:[%s581 + $0xd0] sm:$0xff] %vm280, %v563
      %609 = vst.msk [vmem:[%s581 + $0xd8] sm:$0xff] %vm280, %v564
      %610 = vst.msk [vmem:[%s581 + $0xe0] sm:$0xff] %vm280, %v565
      %611 = vst.msk [vmem:[%s581 + $0xe8] sm:$0xff] %vm280, %v566
      %612 = vst.msk [vmem:[%s581 + $0xf0] sm:$0xff] %vm280, %v567
      %613 = vst.msk [vmem:[%s581 + $0xf8] sm:$0xff] %vm280, %v568
      %614 = vst.msk [vmem:[%s581 + $0x100] sm:$0xff] %vm280, %v569
      %615 = vst.msk [vmem:[%s581 + $0x108] sm:$0xff] %vm280, %v570
      %616 = vst.msk [vmem:[%s581 + $0x110] sm:$0xff] %vm280, %v571
      %617 = vst.msk [vmem:[%s581 + $0x118] sm:$0xff] %vm280, %v572
      %618 = vst.msk [vmem:[%s581 + $0x120] sm:$0xff] %vm280, %v573
      %619 = vst.msk [vmem:[%s581 + $0x128] sm:$0xff] %vm280, %v574
      %620 = vst.msk [vmem:[%s581 + $0x130] sm:$0xff] %vm280, %v575
      %621 = vst.msk [vmem:[%s581 + $0x138] sm:$0xff] %vm280, %v576
      %622 = vst.msk [vmem:[%s581 + $0x140] sm:$0xff] %vm280, %v577
      %623 = vst.msk [vmem:[%s581 + $0x148] sm:$0xff] %vm280, %v578
      %624 = vst.msk [vmem:[%s581 + $0x150] sm:$0xff] %vm280, %v579
      %625 = vst.msk [vmem:[%s581 + $0x158] sm:$0xff] %vm280, %v580
      %v626 = vld [vmem:[#allocation2 + $0x7] sm:$0xff]
      %v627 = vld [vmem:[#allocation2 + $0xf] sm:$0xff]
      %v628 = vld [vmem:[#allocation2 + $0x27] sm:$0xff]
      %v629 = vld [vmem:[#allocation2 + $0x2f] sm:$0xff]
      %v630 = vld [vmem:[#allocation2 + $0x47] sm:$0xff]
      %v631 = vld [vmem:[#allocation2 + $0x4f] sm:$0xff]
      %v632 = vld [vmem:[#allocation2 + $0x67] sm:$0xff]
      %v633 = vld [vmem:[#allocation2 + $0x6f] sm:$0xff]
      %v634 = vld [vmem:[#allocation2 + $0x87] sm:$0xff]
      %v635 = vld [vmem:[#allocation2 + $0x8f] sm:$0xff]
      %v636 = vld [vmem:[#allocation2 + $0xa7] sm:$0xff]
      %v637 = vld [vmem:[#allocation2 + $0xaf] sm:$0xff]
      %v638 = vld [vmem:[#allocation2 + $0xc7] sm:$0xff]
      %v639 = vld [vmem:[#allocation2 + $0xcf] sm:$0xff]
      %v640 = vld [vmem:[#allocation2 + $0xe7] sm:$0xff]
      %v641 = vld [vmem:[#allocation2 + $0xef] sm:$0xff]
      %v642 = vld [vmem:[#allocation2 + $0x107] sm:$0xff]
      %v643 = vld [vmem:[#allocation2 + $0x10f] sm:$0xff]
      %v644 = vld [vmem:[#allocation2 + $0x127] sm:$0xff]
      %v645 = vld [vmem:[#allocation2 + $0x12f] sm:$0xff]
      %v646 = vld [vmem:[#allocation2 + $0x147] sm:$0xff]
      %v647 = vld [vmem:[#allocation2 + $0x14f] sm:$0xff]
      %v648 = vld [vmem:[#allocation2 + $0x167] sm:$0xff]
      %v649 = vld [vmem:[#allocation2 + $0x16f] sm:$0xff]
      %v650 = vld [vmem:[#allocation2 + $0x187] sm:$0xff]
      %v651 = vld [vmem:[#allocation2 + $0x18f] sm:$0xff]
      %v652 = vld [vmem:[#allocation2 + $0x1a7] sm:$0xff]
      %v653 = vld [vmem:[#allocation2 + $0x1af] sm:$0xff]
      %v654 = vld [vmem:[#allocation2 + $0x1c7] sm:$0xff]
      %v655 = vld [vmem:[#allocation2 + $0x1cf] sm:$0xff]
      %v656 = vld [vmem:[#allocation2 + $0x1e7] sm:$0xff]
      %v657 = vld [vmem:[#allocation2 + $0x1ef] sm:$0xff]
      %v658 = vld [vmem:[#allocation2 + $0x207] sm:$0xff]
      %v659 = vld [vmem:[#allocation2 + $0x20f] sm:$0xff]
      %v660 = vld [vmem:[#allocation2 + $0x227] sm:$0xff]
      %v661 = vld [vmem:[#allocation2 + $0x22f] sm:$0xff]
      %v662 = vld [vmem:[#allocation2 + $0x247] sm:$0xff]
      %v663 = vld [vmem:[#allocation2 + $0x24f] sm:$0xff]
      %v664 = vld [vmem:[#allocation2 + $0x267] sm:$0xff]
      %v665 = vld [vmem:[#allocation2 + $0x26f] sm:$0xff]
      %v666 = vld [vmem:[#allocation2 + $0x287] sm:$0xff]
      %v667 = vld [vmem:[#allocation2 + $0x28f] sm:$0xff]
      %v668 = vld [vmem:[#allocation2 + $0x2a7] sm:$0xff]
      %v669 = vld [vmem:[#allocation2 + $0x2af] sm:$0xff]
      %s670 = scalar_lea.vmem [#allocation3], 704
      %671 = vst.msk [vmem:[%s670] sm:$0xff] %vm280, %v626
      %672 = vst.msk [vmem:[%s670 + $0x8] sm:$0xff] %vm280, %v627
      %673 = vst.msk [vmem:[%s670 + $0x10] sm:$0xff] %vm280, %v628
      %674 = vst.msk [vmem:[%s670 + $0x18] sm:$0xff] %vm280, %v629
      %675 = vst.msk [vmem:[%s670 + $0x20] sm:$0xff] %vm280, %v630
      %676 = vst.msk [vmem:[%s670 + $0x28] sm:$0xff] %vm280, %v631
      %677 = vst.msk [vmem:[%s670 + $0x30] sm:$0xff] %vm280, %v632
      %678 = vst.msk [vmem:[%s670 + $0x38] sm:$0xff] %vm280, %v633
      %679 = vst.msk [vmem:[%s670 + $0x40] sm:$0xff] %vm280, %v634
      %680 = vst.msk [vmem:[%s670 + $0x48] sm:$0xff] %vm280, %v635
      %681 = vst.msk [vmem:[%s670 + $0x50] sm:$0xff] %vm280, %v636
      %682 = vst.msk [vmem:[%s670 + $0x58] sm:$0xff] %vm280, %v637
      %683 = vst.msk [vmem:[%s670 + $0x60] sm:$0xff] %vm280, %v638
      %684 = vst.msk [vmem:[%s670 + $0x68] sm:$0xff] %vm280, %v639
      %685 = vst.msk [vmem:[%s670 + $0x70] sm:$0xff] %vm280, %v640
      %686 = vst.msk [vmem:[%s670 + $0x78] sm:$0xff] %vm280, %v641
      %687 = vst.msk [vmem:[%s670 + $0x80] sm:$0xff] %vm280, %v642
      %688 = vst.msk [vmem:[%s670 + $0x88] sm:$0xff] %vm280, %v643
      %689 = vst.msk [vmem:[%s670 + $0x90] sm:$0xff] %vm280, %v644
      %690 = vst.msk [vmem:[%s670 + $0x98] sm:$0xff] %vm280, %v645
      %691 = vst.msk [vmem:[%s670 + $0xa0] sm:$0xff] %vm280, %v646
      %692 = vst.msk [vmem:[%s670 + $0xa8] sm:$0xff] %vm280, %v647
      %693 = vst.msk [vmem:[%s670 + $0xb0] sm:$0xff] %vm280, %v648
      %694 = vst.msk [vmem:[%s670 + $0xb8] sm:$0xff] %vm280, %v649
      %695 = vst.msk [vmem:[%s670 + $0xc0] sm:$0xff] %vm280, %v650
      %696 = vst.msk [vmem:[%s670 + $0xc8] sm:$0xff] %vm280, %v651
      %697 = vst.msk [vmem:[%s670 + $0xd0] sm:$0xff] %vm280, %v652
      %698 = vst.msk [vmem:[%s670 + $0xd8] sm:$0xff] %vm280, %v653
      %699 = vst.msk [vmem:[%s670 + $0xe0] sm:$0xff] %vm280, %v654
      %700 = vst.msk [vmem:[%s670 + $0xe8] sm:$0xff] %vm280, %v655
      %701 = vst.msk [vmem:[%s670 + $0xf0] sm:$0xff] %vm280, %v656
      %702 = vst.msk [vmem:[%s670 + $0xf8] sm:$0xff] %vm280, %v657
      %703 = vst.msk [vmem:[%s670 + $0x100] sm:$0xff] %vm280, %v658
      %704 = vst.msk [vmem:[%s670 + $0x108] sm:$0xff] %vm280, %v659
      %705 = vst.msk [vmem:[%s670 + $0x110] sm:$0xff] %vm280, %v660
      %706 = vst.msk [vmem:[%s670 + $0x118] sm:$0xff] %vm280, %v661
      %707 = vst.msk [vmem:[%s670 + $0x120] sm:$0xff] %vm280, %v662
      %708 = vst.msk [vmem:[%s670 + $0x128] sm:$0xff] %vm280, %v663
      %709 = vst.msk [vmem:[%s670 + $0x130] sm:$0xff] %vm280, %v664
      %710 = vst.msk [vmem:[%s670 + $0x138] sm:$0xff] %vm280, %v665
      %711 = vst.msk [vmem:[%s670 + $0x140] sm:$0xff] %vm280, %v666
      %712 = vst.msk [vmem:[%s670 + $0x148] sm:$0xff] %vm280, %v667
      %713 = vst.msk [vmem:[%s670 + $0x150] sm:$0xff] %vm280, %v668
      %714 = vst.msk [vmem:[%s670 + $0x158] sm:$0xff] %vm280, %v669
      %v715 = vld [vmem:[#allocation2 + $0x8] sm:$0xff]
      %v716 = vld [vmem:[#allocation2 + $0x10] sm:$0xff]
      %v717 = vld [vmem:[#allocation2 + $0x28] sm:$0xff]
      %v718 = vld [vmem:[#allocation2 + $0x30] sm:$0xff]
      %v719 = vld [vmem:[#allocation2 + $0x48] sm:$0xff]
      %v720 = vld [vmem:[#allocation2 + $0x50] sm:$0xff]
      %v721 = vld [vmem:[#allocation2 + $0x68] sm:$0xff]
      %v722 = vld [vmem:[#allocation2 + $0x70] sm:$0xff]
      %v723 = vld [vmem:[#allocation2 + $0x88] sm:$0xff]
      %v724 = vld [vmem:[#allocation2 + $0x90] sm:$0xff]
      %v725 = vld [vmem:[#allocation2 + $0xa8] sm:$0xff]
      %v726 = vld [vmem:[#allocation2 + $0xb0] sm:$0xff]
      %v727 = vld [vmem:[#allocation2 + $0xc8] sm:$0xff]
      %v728 = vld [vmem:[#allocation2 + $0xd0] sm:$0xff]
      %v729 = vld [vmem:[#allocation2 + $0xe8] sm:$0xff]
      %v730 = vld [vmem:[#allocation2 + $0xf0] sm:$0xff]
      %v731 = vld [vmem:[#allocation2 + $0x108] sm:$0xff]
      %v732 = vld [vmem:[#allocation2 + $0x110] sm:$0xff]
      %v733 = vld [vmem:[#allocation2 + $0x128] sm:$0xff]
      %v734 = vld [vmem:[#allocation2 + $0x130] sm:$0xff]
      %v735 = vld [vmem:[#allocation2 + $0x148] sm:$0xff]
      %v736 = vld [vmem:[#allocation2 + $0x150] sm:$0xff]
      %v737 = vld [vmem:[#allocation2 + $0x168] sm:$0xff]
      %v738 = vld [vmem:[#allocation2 + $0x170] sm:$0xff]
      %v739 = vld [vmem:[#allocation2 + $0x188] sm:$0xff]
      %v740 = vld [vmem:[#allocation2 + $0x190] sm:$0xff]
      %v741 = vld [vmem:[#allocation2 + $0x1a8] sm:$0xff]
      %v742 = vld [vmem:[#allocation2 + $0x1b0] sm:$0xff]
      %v743 = vld [vmem:[#allocation2 + $0x1c8] sm:$0xff]
      %v744 = vld [vmem:[#allocation2 + $0x1d0] sm:$0xff]
      %v745 = vld [vmem:[#allocation2 + $0x1e8] sm:$0xff]
      %v746 = vld [vmem:[#allocation2 + $0x1f0] sm:$0xff]
      %v747 = vld [vmem:[#allocation2 + $0x208] sm:$0xff]
      %v748 = vld [vmem:[#allocation2 + $0x210] sm:$0xff]
      %v749 = vld [vmem:[#allocation2 + $0x228] sm:$0xff]
      %v750 = vld [vmem:[#allocation2 + $0x230] sm:$0xff]
      %v751 = vld [vmem:[#allocation2 + $0x248] sm:$0xff]
      %v752 = vld [vmem:[#allocation2 + $0x250] sm:$0xff]
      %v753 = vld [vmem:[#allocation2 + $0x268] sm:$0xff]
      %v754 = vld [vmem:[#allocation2 + $0x270] sm:$0xff]
      %v755 = vld [vmem:[#allocation2 + $0x288] sm:$0xff]
      %v756 = vld [vmem:[#allocation2 + $0x290] sm:$0xff]
      %v757 = vld [vmem:[#allocation2 + $0x2a8] sm:$0xff]
      %v758 = vld [vmem:[#allocation2 + $0x2b0] sm:$0xff]
      %s759 = scalar_lea.vmem [#allocation3], 1056
      %760 = vst.msk [vmem:[%s759] sm:$0xff] %vm280, %v715
      %761 = vst.msk [vmem:[%s759 + $0x8] sm:$0xff] %vm280, %v716
      %762 = vst.msk [vmem:[%s759 + $0x10] sm:$0xff] %vm280, %v717
      %763 = vst.msk [vmem:[%s759 + $0x18] sm:$0xff] %vm280, %v718
      %764 = vst.msk [vmem:[%s759 + $0x20] sm:$0xff] %vm280, %v719
      %765 = vst.msk [vmem:[%s759 + $0x28] sm:$0xff] %vm280, %v720
      %766 = vst.msk [vmem:[%s759 + $0x30] sm:$0xff] %vm280, %v721
      %767 = vst.msk [vmem:[%s759 + $0x38] sm:$0xff] %vm280, %v722
      %768 = vst.msk [vmem:[%s759 + $0x40] sm:$0xff] %vm280, %v723
      %769 = vst.msk [vmem:[%s759 + $0x48] sm:$0xff] %vm280, %v724
      %770 = vst.msk [vmem:[%s759 + $0x50] sm:$0xff] %vm280, %v725
      %771 = vst.msk [vmem:[%s759 + $0x58] sm:$0xff] %vm280, %v726
      %772 = vst.msk [vmem:[%s759 + $0x60] sm:$0xff] %vm280, %v727
      %773 = vst.msk [vmem:[%s759 + $0x68] sm:$0xff] %vm280, %v728
      %774 = vst.msk [vmem:[%s759 + $0x70] sm:$0xff] %vm280, %v729
      %775 = vst.msk [vmem:[%s759 + $0x78] sm:$0xff] %vm280, %v730
      %776 = vst.msk [vmem:[%s759 + $0x80] sm:$0xff] %vm280, %v731
      %777 = vst.msk [vmem:[%s759 + $0x88] sm:$0xff] %vm280, %v732
      %778 = vst.msk [vmem:[%s759 + $0x90] sm:$0xff] %vm280, %v733
      %779 = vst.msk [vmem:[%s759 + $0x98] sm:$0xff] %vm280, %v734
      %780 = vst.msk [vmem:[%s759 + $0xa0] sm:$0xff] %vm280, %v735
      %781 = vst.msk [vmem:[%s759 + $0xa8] sm:$0xff] %vm280, %v736
      %782 = vst.msk [vmem:[%s759 + $0xb0] sm:$0xff] %vm280, %v737
      %783 = vst.msk [vmem:[%s759 + $0xb8] sm:$0xff] %vm280, %v738
      %784 = vst.msk [vmem:[%s759 + $0xc0] sm:$0xff] %vm280, %v739
      %785 = vst.msk [vmem:[%s759 + $0xc8] sm:$0xff] %vm280, %v740
      %786 = vst.msk [vmem:[%s759 + $0xd0] sm:$0xff] %vm280, %v741
      %787 = vst.msk [vmem:[%s759 + $0xd8] sm:$0xff] %vm280, %v742
      %788 = vst.msk [vmem:[%s759 + $0xe0] sm:$0xff] %vm280, %v743
      %789 = vst.msk [vmem:[%s759 + $0xe8] sm:$0xff] %vm280, %v744
      %790 = vst.msk [vmem:[%s759 + $0xf0] sm:$0xff] %vm280, %v745
      %791 = vst.msk [vmem:[%s759 + $0xf8] sm:$0xff] %vm280, %v746
      %792 = vst.msk [vmem:[%s759 + $0x100] sm:$0xff] %vm280, %v747
      %793 = vst.msk [vmem:[%s759 + $0x108] sm:$0xff] %vm280, %v748
      %794 = vst.msk [vmem:[%s759 + $0x110] sm:$0xff] %vm280, %v749
      %795 = vst.msk [vmem:[%s759 + $0x118] sm:$0xff] %vm280, %v750
      %796 = vst.msk [vmem:[%s759 + $0x120] sm:$0xff] %vm280, %v751
      %797 = vst.msk [vmem:[%s759 + $0x128] sm:$0xff] %vm280, %v752
      %798 = vst.msk [vmem:[%s759 + $0x130] sm:$0xff] %vm280, %v753
      %799 = vst.msk [vmem:[%s759 + $0x138] sm:$0xff] %vm280, %v754
      %800 = vst.msk [vmem:[%s759 + $0x140] sm:$0xff] %vm280, %v755
      %801 = vst.msk [vmem:[%s759 + $0x148] sm:$0xff] %vm280, %v756
      %802 = vst.msk [vmem:[%s759 + $0x150] sm:$0xff] %vm280, %v757
      %803 = vst.msk [vmem:[%s759 + $0x158] sm:$0xff] %vm280, %v758
      %v804 = vld [vmem:[#allocation2 + $0x9] sm:$0xff]
      %v805 = vld [vmem:[#allocation2 + $0x11] sm:$0xff]
      %v806 = vld [vmem:[#allocation2 + $0x29] sm:$0xff]
      %v807 = vld [vmem:[#allocation2 + $0x31] sm:$0xff]
      %v808 = vld [vmem:[#allocation2 + $0x49] sm:$0xff]
      %v809 = vld [vmem:[#allocation2 + $0x51] sm:$0xff]
      %v810 = vld [vmem:[#allocation2 + $0x69] sm:$0xff]
      %v811 = vld [vmem:[#allocation2 + $0x71] sm:$0xff]
      %v812 = vld [vmem:[#allocation2 + $0x89] sm:$0xff]
      %v813 = vld [vmem:[#allocation2 + $0x91] sm:$0xff]
      %v814 = vld [vmem:[#allocation2 + $0xa9] sm:$0xff]
      %v815 = vld [vmem:[#allocation2 + $0xb1] sm:$0xff]
      %v816 = vld [vmem:[#allocation2 + $0xc9] sm:$0xff]
      %v817 = vld [vmem:[#allocation2 + $0xd1] sm:$0xff]
      %v818 = vld [vmem:[#allocation2 + $0xe9] sm:$0xff]
      %v819 = vld [vmem:[#allocation2 + $0xf1] sm:$0xff]
      %v820 = vld [vmem:[#allocation2 + $0x109] sm:$0xff]
      %v821 = vld [vmem:[#allocation2 + $0x111] sm:$0xff]
      %v822 = vld [vmem:[#allocation2 + $0x129] sm:$0xff]
      %v823 = vld [vmem:[#allocation2 + $0x131] sm:$0xff]
      %v824 = vld [vmem:[#allocation2 + $0x149] sm:$0xff]
      %v825 = vld [vmem:[#allocation2 + $0x151] sm:$0xff]
      %v826 = vld [vmem:[#allocation2 + $0x169] sm:$0xff]
      %v827 = vld [vmem:[#allocation2 + $0x171] sm:$0xff]
      %v828 = vld [vmem:[#allocation2 + $0x189] sm:$0xff]
      %v829 = vld [vmem:[#allocation2 + $0x191] sm:$0xff]
      %v830 = vld [vmem:[#allocation2 + $0x1a9] sm:$0xff]
      %v831 = vld [vmem:[#allocation2 + $0x1b1] sm:$0xff]
      %v832 = vld [vmem:[#allocation2 + $0x1c9] sm:$0xff]
      %v833 = vld [vmem:[#allocation2 + $0x1d1] sm:$0xff]
      %v834 = vld [vmem:[#allocation2 + $0x1e9] sm:$0xff]
      %v835 = vld [vmem:[#allocation2 + $0x1f1] sm:$0xff]
      %v836 = vld [vmem:[#allocation2 + $0x209] sm:$0xff]
      %v837 = vld [vmem:[#allocation2 + $0x211] sm:$0xff]
      %v838 = vld [vmem:[#allocation2 + $0x229] sm:$0xff]
      %v839 = vld [vmem:[#allocation2 + $0x231] sm:$0xff]
      %v840 = vld [vmem:[#allocation2 + $0x249] sm:$0xff]
      %v841 = vld [vmem:[#allocation2 + $0x251] sm:$0xff]
      %v842 = vld [vmem:[#allocation2 + $0x269] sm:$0xff]
      %v843 = vld [vmem:[#allocation2 + $0x271] sm:$0xff]
      %v844 = vld [vmem:[#allocation2 + $0x289] sm:$0xff]
      %v845 = vld [vmem:[#allocation2 + $0x291] sm:$0xff]
      %v846 = vld [vmem:[#allocation2 + $0x2a9] sm:$0xff]
      %v847 = vld [vmem:[#allocation2 + $0x2b1] sm:$0xff]
      %s848 = scalar_lea.vmem [#allocation3], 1408
      %849 = vst.msk [vmem:[%s848] sm:$0xff] %vm280, %v804
      %850 = vst.msk [vmem:[%s848 + $0x8] sm:$0xff] %vm280, %v805
      %851 = vst.msk [vmem:[%s848 + $0x10] sm:$0xff] %vm280, %v806
      %852 = vst.msk [vmem:[%s848 + $0x18] sm:$0xff] %vm280, %v807
      %853 = vst.msk [vmem:[%s848 + $0x20] sm:$0xff] %vm280, %v808
      %854 = vst.msk [vmem:[%s848 + $0x28] sm:$0xff] %vm280, %v809
      %855 = vst.msk [vmem:[%s848 + $0x30] sm:$0xff] %vm280, %v810
      %856 = vst.msk [vmem:[%s848 + $0x38] sm:$0xff] %vm280, %v811
      %857 = vst.msk [vmem:[%s848 + $0x40] sm:$0xff] %vm280, %v812
      %858 = vst.msk [vmem:[%s848 + $0x48] sm:$0xff] %vm280, %v813
      %859 = vst.msk [vmem:[%s848 + $0x50] sm:$0xff] %vm280, %v814
      %860 = vst.msk [vmem:[%s848 + $0x58] sm:$0xff] %vm280, %v815
      %861 = vst.msk [vmem:[%s848 + $0x60] sm:$0xff] %vm280, %v816
      %862 = vst.msk [vmem:[%s848 + $0x68] sm:$0xff] %vm280, %v817
      %863 = vst.msk [vmem:[%s848 + $0x70] sm:$0xff] %vm280, %v818
      %864 = vst.msk [vmem:[%s848 + $0x78] sm:$0xff] %vm280, %v819
      %865 = vst.msk [vmem:[%s848 + $0x80] sm:$0xff] %vm280, %v820
      %866 = vst.msk [vmem:[%s848 + $0x88] sm:$0xff] %vm280, %v821
      %867 = vst.msk [vmem:[%s848 + $0x90] sm:$0xff] %vm280, %v822
      %868 = vst.msk [vmem:[%s848 + $0x98] sm:$0xff] %vm280, %v823
      %869 = vst.msk [vmem:[%s848 + $0xa0] sm:$0xff] %vm280, %v824
      %870 = vst.msk [vmem:[%s848 + $0xa8] sm:$0xff] %vm280, %v825
      %871 = vst.msk [vmem:[%s848 + $0xb0] sm:$0xff] %vm280, %v826
      %872 = vst.msk [vmem:[%s848 + $0xb8] sm:$0xff] %vm280, %v827
      %873 = vst.msk [vmem:[%s848 + $0xc0] sm:$0xff] %vm280, %v828
      %874 = vst.msk [vmem:[%s848 + $0xc8] sm:$0xff] %vm280, %v829
      %875 = vst.msk [vmem:[%s848 + $0xd0] sm:$0xff] %vm280, %v830
      %876 = vst.msk [vmem:[%s848 + $0xd8] sm:$0xff] %vm280, %v831
      %877 = vst.msk [vmem:[%s848 + $0xe0] sm:$0xff] %vm280, %v832
      %878 = vst.msk [vmem:[%s848 + $0xe8] sm:$0xff] %vm280, %v833
      %879 = vst.msk [vmem:[%s848 + $0xf0] sm:$0xff] %vm280, %v834
      %880 = vst.msk [vmem:[%s848 + $0xf8] sm:$0xff] %vm280, %v835
      %881 = vst.msk [vmem:[%s848 + $0x100] sm:$0xff] %vm280, %v836
      %882 = vst.msk [vmem:[%s848 + $0x108] sm:$0xff] %vm280, %v837
      %883 = vst.msk [vmem:[%s848 + $0x110] sm:$0xff] %vm280, %v838
      %884 = vst.msk [vmem:[%s848 + $0x118] sm:$0xff] %vm280, %v839
      %885 = vst.msk [vmem:[%s848 + $0x120] sm:$0xff] %vm280, %v840
      %886 = vst.msk [vmem:[%s848 + $0x128] sm:$0xff] %vm280, %v841
      %887 = vst.msk [vmem:[%s848 + $0x130] sm:$0xff] %vm280, %v842
      %888 = vst.msk [vmem:[%s848 + $0x138] sm:$0xff] %vm280, %v843
      %889 = vst.msk [vmem:[%s848 + $0x140] sm:$0xff] %vm280, %v844
      %890 = vst.msk [vmem:[%s848 + $0x148] sm:$0xff] %vm280, %v845
      %891 = vst.msk [vmem:[%s848 + $0x150] sm:$0xff] %vm280, %v846
      %892 = vst.msk [vmem:[%s848 + $0x158] sm:$0xff] %vm280, %v847
      %v893 = vld [vmem:[#allocation2 + $0xa] sm:$0xff]
      %v894 = vld [vmem:[#allocation2 + $0x12] sm:$0xff]
      %v895 = vld [vmem:[#allocation2 + $0x2a] sm:$0xff]
      %v896 = vld [vmem:[#allocation2 + $0x32] sm:$0xff]
      %v897 = vld [vmem:[#allocation2 + $0x4a] sm:$0xff]
      %v898 = vld [vmem:[#allocation2 + $0x52] sm:$0xff]
      %v899 = vld [vmem:[#allocation2 + $0x6a] sm:$0xff]
      %v900 = vld [vmem:[#allocation2 + $0x72] sm:$0xff]
      %v901 = vld [vmem:[#allocation2 + $0x8a] sm:$0xff]
      %v902 = vld [vmem:[#allocation2 + $0x92] sm:$0xff]
      %v903 = vld [vmem:[#allocation2 + $0xaa] sm:$0xff]
      %v904 = vld [vmem:[#allocation2 + $0xb2] sm:$0xff]
      %v905 = vld [vmem:[#allocation2 + $0xca] sm:$0xff]
      %v906 = vld [vmem:[#allocation2 + $0xd2] sm:$0xff]
      %v907 = vld [vmem:[#allocation2 + $0xea] sm:$0xff]
      %v908 = vld [vmem:[#allocation2 + $0xf2] sm:$0xff]
      %v909 = vld [vmem:[#allocation2 + $0x10a] sm:$0xff]
      %v910 = vld [vmem:[#allocation2 + $0x112] sm:$0xff]
      %v911 = vld [vmem:[#allocation2 + $0x12a] sm:$0xff]
      %v912 = vld [vmem:[#allocation2 + $0x132] sm:$0xff]
      %v913 = vld [vmem:[#allocation2 + $0x14a] sm:$0xff]
      %v914 = vld [vmem:[#allocation2 + $0x152] sm:$0xff]
      %v915 = vld [vmem:[#allocation2 + $0x16a] sm:$0xff]
      %v916 = vld [vmem:[#allocation2 + $0x172] sm:$0xff]
      %v917 = vld [vmem:[#allocation2 + $0x18a] sm:$0xff]
      %v918 = vld [vmem:[#allocation2 + $0x192] sm:$0xff]
      %v919 = vld [vmem:[#allocation2 + $0x1aa] sm:$0xff]
      %v920 = vld [vmem:[#allocation2 + $0x1b2] sm:$0xff]
      %v921 = vld [vmem:[#allocation2 + $0x1ca] sm:$0xff]
      %v922 = vld [vmem:[#allocation2 + $0x1d2] sm:$0xff]
      %v923 = vld [vmem:[#allocation2 + $0x1ea] sm:$0xff]
      %v924 = vld [vmem:[#allocation2 + $0x1f2] sm:$0xff]
      %v925 = vld [vmem:[#allocation2 + $0x20a] sm:$0xff]
      %v926 = vld [vmem:[#allocation2 + $0x212] sm:$0xff]
      %v927 = vld [vmem:[#allocation2 + $0x22a] sm:$0xff]
      %v928 = vld [vmem:[#allocation2 + $0x232] sm:$0xff]
      %v929 = vld [vmem:[#allocation2 + $0x24a] sm:$0xff]
      %v930 = vld [vmem:[#allocation2 + $0x252] sm:$0xff]
      %v931 = vld [vmem:[#allocation2 + $0x26a] sm:$0xff]
      %v932 = vld [vmem:[#allocation2 + $0x272] sm:$0xff]
      %v933 = vld [vmem:[#allocation2 + $0x28a] sm:$0xff]
      %v934 = vld [vmem:[#allocation2 + $0x292] sm:$0xff]
      %v935 = vld [vmem:[#allocation2 + $0x2aa] sm:$0xff]
      %v936 = vld [vmem:[#allocation2 + $0x2b2] sm:$0xff]
      %s937 = scalar_lea.vmem [#allocation3], 1760
      %938 = vst.msk [vmem:[%s937] sm:$0xff] %vm280, %v893
      %939 = vst.msk [vmem:[%s937 + $0x8] sm:$0xff] %vm280, %v894
      %940 = vst.msk [vmem:[%s937 + $0x10] sm:$0xff] %vm280, %v895
      %941 = vst.msk [vmem:[%s937 + $0x18] sm:$0xff] %vm280, %v896
      %942 = vst.msk [vmem:[%s937 + $0x20] sm:$0xff] %vm280, %v897
      %943 = vst.msk [vmem:[%s937 + $0x28] sm:$0xff] %vm280, %v898
      %944 = vst.msk [vmem:[%s937 + $0x30] sm:$0xff] %vm280, %v899
      %945 = vst.msk [vmem:[%s937 + $0x38] sm:$0xff] %vm280, %v900
      %946 = vst.msk [vmem:[%s937 + $0x40] sm:$0xff] %vm280, %v901
      %947 = vst.msk [vmem:[%s937 + $0x48] sm:$0xff] %vm280, %v902
      %948 = vst.msk [vmem:[%s937 + $0x50] sm:$0xff] %vm280, %v903
      %949 = vst.msk [vmem:[%s937 + $0x58] sm:$0xff] %vm280, %v904
      %950 = vst.msk [vmem:[%s937 + $0x60] sm:$0xff] %vm280, %v905
      %951 = vst.msk [vmem:[%s937 + $0x68] sm:$0xff] %vm280, %v906
      %952 = vst.msk [vmem:[%s937 + $0x70] sm:$0xff] %vm280, %v907
      %953 = vst.msk [vmem:[%s937 + $0x78] sm:$0xff] %vm280, %v908
      %954 = vst.msk [vmem:[%s937 + $0x80] sm:$0xff] %vm280, %v909
      %955 = vst.msk [vmem:[%s937 + $0x88] sm:$0xff] %vm280, %v910
      %956 = vst.msk [vmem:[%s937 + $0x90] sm:$0xff] %vm280, %v911
      %957 = vst.msk [vmem:[%s937 + $0x98] sm:$0xff] %vm280, %v912
      %958 = vst.msk [vmem:[%s937 + $0xa0] sm:$0xff] %vm280, %v913
      %959 = vst.msk [vmem:[%s937 + $0xa8] sm:$0xff] %vm280, %v914
      %960 = vst.msk [vmem:[%s937 + $0xb0] sm:$0xff] %vm280, %v915
      %961 = vst.msk [vmem:[%s937 + $0xb8] sm:$0xff] %vm280, %v916
      %962 = vst.msk [vmem:[%s937 + $0xc0] sm:$0xff] %vm280, %v917
      %963 = vst.msk [vmem:[%s937 + $0xc8] sm:$0xff] %vm280, %v918
      %964 = vst.msk [vmem:[%s937 + $0xd0] sm:$0xff] %vm280, %v919
      %965 = vst.msk [vmem:[%s937 + $0xd8] sm:$0xff] %vm280, %v920
      %966 = vst.msk [vmem:[%s937 + $0xe0] sm:$0xff] %vm280, %v921
      %967 = vst.msk [vmem:[%s937 + $0xe8] sm:$0xff] %vm280, %v922
      %968 = vst.msk [vmem:[%s937 + $0xf0] sm:$0xff] %vm280, %v923
      %969 = vst.msk [vmem:[%s937 + $0xf8] sm:$0xff] %vm280, %v924
      %970 = vst.msk [vmem:[%s937 + $0x100] sm:$0xff] %vm280, %v925
      %971 = vst.msk [vmem:[%s937 + $0x108] sm:$0xff] %vm280, %v926
      %972 = vst.msk [vmem:[%s937 + $0x110] sm:$0xff] %vm280, %v927
      %973 = vst.msk [vmem:[%s937 + $0x118] sm:$0xff] %vm280, %v928
      %974 = vst.msk [vmem:[%s937 + $0x120] sm:$0xff] %vm280, %v929
      %975 = vst.msk [vmem:[%s937 + $0x128] sm:$0xff] %vm280, %v930
      %976 = vst.msk [vmem:[%s937 + $0x130] sm:$0xff] %vm280, %v931
      %977 = vst.msk [vmem:[%s937 + $0x138] sm:$0xff] %vm280, %v932
      %978 = vst.msk [vmem:[%s937 + $0x140] sm:$0xff] %vm280, %v933
      %979 = vst.msk [vmem:[%s937 + $0x148] sm:$0xff] %vm280, %v934
      %980 = vst.msk [vmem:[%s937 + $0x150] sm:$0xff] %vm280, %v935
      %981 = vst.msk [vmem:[%s937 + $0x158] sm:$0xff] %vm280, %v936
      %v982 = vld [vmem:[#allocation2 + $0xb] sm:$0xff]
      %v983 = vld [vmem:[#allocation2 + $0x13] sm:$0xff]
      %v984 = vld [vmem:[#allocation2 + $0x2b] sm:$0xff]
      %v985 = vld [vmem:[#allocation2 + $0x33] sm:$0xff]
      %v986 = vld [vmem:[#allocation2 + $0x4b] sm:$0xff]
      %v987 = vld [vmem:[#allocation2 + $0x53] sm:$0xff]
      %v988 = vld [vmem:[#allocation2 + $0x6b] sm:$0xff]
      %v989 = vld [vmem:[#allocation2 + $0x73] sm:$0xff]
      %v990 = vld [vmem:[#allocation2 + $0x8b] sm:$0xff]
      %v991 = vld [vmem:[#allocation2 + $0x93] sm:$0xff]
      %v992 = vld [vmem:[#allocation2 + $0xab] sm:$0xff]
      %v993 = vld [vmem:[#allocation2 + $0xb3] sm:$0xff]
      %v994 = vld [vmem:[#allocation2 + $0xcb] sm:$0xff]
      %v995 = vld [vmem:[#allocation2 + $0xd3] sm:$0xff]
      %v996 = vld [vmem:[#allocation2 + $0xeb] sm:$0xff]
      %v997 = vld [vmem:[#allocation2 + $0xf3] sm:$0xff]
      %v998 = vld [vmem:[#allocation2 + $0x10b] sm:$0xff]
      %v999 = vld [vmem:[#allocation2 + $0x113] sm:$0xff]
      %v1000 = vld [vmem:[#allocation2 + $0x12b] sm:$0xff]
      %v1001 = vld [vmem:[#allocation2 + $0x133] sm:$0xff]
      %v1002 = vld [vmem:[#allocation2 + $0x14b] sm:$0xff]
      %v1003 = vld [vmem:[#allocation2 + $0x153] sm:$0xff]
      %v1004 = vld [vmem:[#allocation2 + $0x16b] sm:$0xff]
      %v1005 = vld [vmem:[#allocation2 + $0x173] sm:$0xff]
      %v1006 = vld [vmem:[#allocation2 + $0x18b] sm:$0xff]
      %v1007 = vld [vmem:[#allocation2 + $0x193] sm:$0xff]
      %v1008 = vld [vmem:[#allocation2 + $0x1ab] sm:$0xff]
      %v1009 = vld [vmem:[#allocation2 + $0x1b3] sm:$0xff]
      %v1010 = vld [vmem:[#allocation2 + $0x1cb] sm:$0xff]
      %v1011 = vld [vmem:[#allocation2 + $0x1d3] sm:$0xff]
      %v1012 = vld [vmem:[#allocation2 + $0x1eb] sm:$0xff]
      %v1013 = vld [vmem:[#allocation2 + $0x1f3] sm:$0xff]
      %v1014 = vld [vmem:[#allocation2 + $0x20b] sm:$0xff]
      %v1015 = vld [vmem:[#allocation2 + $0x213] sm:$0xff]
      %v1016 = vld [vmem:[#allocation2 + $0x22b] sm:$0xff]
      %v1017 = vld [vmem:[#allocation2 + $0x233] sm:$0xff]
      %v1018 = vld [vmem:[#allocation2 + $0x24b] sm:$0xff]
      %v1019 = vld [vmem:[#allocation2 + $0x253] sm:$0xff]
      %v1020 = vld [vmem:[#allocation2 + $0x26b] sm:$0xff]
      %v1021 = vld [vmem:[#allocation2 + $0x273] sm:$0xff]
      %v1022 = vld [vmem:[#allocation2 + $0x28b] sm:$0xff]
      %v1023 = vld [vmem:[#allocation2 + $0x293] sm:$0xff]
      %v1024 = vld [vmem:[#allocation2 + $0x2ab] sm:$0xff]
      %v1025 = vld [vmem:[#allocation2 + $0x2b3] sm:$0xff]
      %s1026 = scalar_lea.vmem [#allocation3], 2112
      %1027 = vst.msk [vmem:[%s1026] sm:$0xff] %vm280, %v982
      %1028 = vst.msk [vmem:[%s1026 + $0x8] sm:$0xff] %vm280, %v983
      %1029 = vst.msk [vmem:[%s1026 + $0x10] sm:$0xff] %vm280, %v984
      %1030 = vst.msk [vmem:[%s1026 + $0x18] sm:$0xff] %vm280, %v985
      %1031 = vst.msk [vmem:[%s1026 + $0x20] sm:$0xff] %vm280, %v986
      %1032 = vst.msk [vmem:[%s1026 + $0x28] sm:$0xff] %vm280, %v987
      %1033 = vst.msk [vmem:[%s1026 + $0x30] sm:$0xff] %vm280, %v988
      %1034 = vst.msk [vmem:[%s1026 + $0x38] sm:$0xff] %vm280, %v989
      %1035 = vst.msk [vmem:[%s1026 + $0x40] sm:$0xff] %vm280, %v990
      %1036 = vst.msk [vmem:[%s1026 + $0x48] sm:$0xff] %vm280, %v991
      %1037 = vst.msk [vmem:[%s1026 + $0x50] sm:$0xff] %vm280, %v992
      %1038 = vst.msk [vmem:[%s1026 + $0x58] sm:$0xff] %vm280, %v993
      %1039 = vst.msk [vmem:[%s1026 + $0x60] sm:$0xff] %vm280, %v994
      %1040 = vst.msk [vmem:[%s1026 + $0x68] sm:$0xff] %vm280, %v995
      %1041 = vst.msk [vmem:[%s1026 + $0x70] sm:$0xff] %vm280, %v996
      %1042 = vst.msk [vmem:[%s1026 + $0x78] sm:$0xff] %vm280, %v997
      %1043 = vst.msk [vmem:[%s1026 + $0x80] sm:$0xff] %vm280, %v998
      %1044 = vst.msk [vmem:[%s1026 + $0x88] sm:$0xff] %vm280, %v999
      %1045 = vst.msk [vmem:[%s1026 + $0x90] sm:$0xff] %vm280, %v1000
      %1046 = vst.msk [vmem:[%s1026 + $0x98] sm:$0xff] %vm280, %v1001
      %1047 = vst.msk [vmem:[%s1026 + $0xa0] sm:$0xff] %vm280, %v1002
      %1048 = vst.msk [vmem:[%s1026 + $0xa8] sm:$0xff] %vm280, %v1003
      %1049 = vst.msk [vmem:[%s1026 + $0xb0] sm:$0xff] %vm280, %v1004
      %1050 = vst.msk [vmem:[%s1026 + $0xb8] sm:$0xff] %vm280, %v1005
      %1051 = vst.msk [vmem:[%s1026 + $0xc0] sm:$0xff] %vm280, %v1006
      %1052 = vst.msk [vmem:[%s1026 + $0xc8] sm:$0xff] %vm280, %v1007
      %1053 = vst.msk [vmem:[%s1026 + $0xd0] sm:$0xff] %vm280, %v1008
      %1054 = vst.msk [vmem:[%s1026 + $0xd8] sm:$0xff] %vm280, %v1009
      %1055 = vst.msk [vmem:[%s1026 + $0xe0] sm:$0xff] %vm280, %v1010
      %1056 = vst.msk [vmem:[%s1026 + $0xe8] sm:$0xff] %vm280, %v1011
      %1057 = vst.msk [vmem:[%s1026 + $0xf0] sm:$0xff] %vm280, %v1012
      %1058 = vst.msk [vmem:[%s1026 + $0xf8] sm:$0xff] %vm280, %v1013
      %1059 = vst.msk [vmem:[%s1026 + $0x100] sm:$0xff] %vm280, %v1014
      %1060 = vst.msk [vmem:[%s1026 + $0x108] sm:$0xff] %vm280, %v1015
      %1061 = vst.msk [vmem:[%s1026 + $0x110] sm:$0xff] %vm280, %v1016
      %1062 = vst.msk [vmem:[%s1026 + $0x118] sm:$0xff] %vm280, %v1017
      %1063 = vst.msk [vmem:[%s1026 + $0x120] sm:$0xff] %vm280, %v1018
      %1064 = vst.msk [vmem:[%s1026 + $0x128] sm:$0xff] %vm280, %v1019
      %1065 = vst.msk [vmem:[%s1026 + $0x130] sm:$0xff] %vm280, %v1020
      %1066 = vst.msk [vmem:[%s1026 + $0x138] sm:$0xff] %vm280, %v1021
      %1067 = vst.msk [vmem:[%s1026 + $0x140] sm:$0xff] %vm280, %v1022
      %1068 = vst.msk [vmem:[%s1026 + $0x148] sm:$0xff] %vm280, %v1023
      %1069 = vst.msk [vmem:[%s1026 + $0x150] sm:$0xff] %vm280, %v1024
      %1070 = vst.msk [vmem:[%s1026 + $0x158] sm:$0xff] %vm280, %v1025
      %v1071 = vld [vmem:[#allocation3] sm:$0xff]
      %v1072 = vld [vmem:[#allocation3 + $0x8] sm:$0xff]
      %v1073 = vld [vmem:[#allocation3 + $0x10] sm:$0xff]
      %v1074 = vld [vmem:[#allocation3 + $0x18] sm:$0xff]
      %v1075 = vld [vmem:[#allocation3 + $0x20] sm:$0xff]
      %v1076 = vld [vmem:[#allocation3 + $0x28] sm:$0xff]
      %v1077 = vld [vmem:[#allocation3 + $0x30] sm:$0xff]
      %v1078 = vld [vmem:[#allocation3 + $0x38] sm:$0xff]
      %v1079 = vld [vmem:[#allocation3 + $0x40] sm:$0xff]
      %v1080 = vld [vmem:[#allocation3 + $0x48] sm:$0xff]
      %v1081 = vld [vmem:[#allocation3 + $0x50] sm:$0xff]
      %v1082 = vld [vmem:[#allocation3 + $0x58] sm:$0xff]
      %v1083 = vld [vmem:[#allocation3 + $0x60] sm:$0xff]
      %v1084 = vld [vmem:[#allocation3 + $0x68] sm:$0xff]
      %v1085 = vld [vmem:[#allocation3 + $0x70] sm:$0xff]
      %v1086 = vld [vmem:[#allocation3 + $0x78] sm:$0xff]
      %v1087 = vld [vmem:[#allocation3 + $0x80] sm:$0xff]
      %v1088 = vld [vmem:[#allocation3 + $0x88] sm:$0xff]
      %v1089 = vld [vmem:[#allocation3 + $0x90] sm:$0xff]
      %v1090 = vld [vmem:[#allocation3 + $0x98] sm:$0xff]
      %v1091 = vld [vmem:[#allocation3 + $0xa0] sm:$0xff]
      %v1092 = vld [vmem:[#allocation3 + $0xa8] sm:$0xff]
      %v1093 = vld [vmem:[#allocation3 + $0xb0] sm:$0xff]
      %v1094 = vld [vmem:[#allocation3 + $0xb8] sm:$0xff]
      %v1095 = vld [vmem:[#allocation3 + $0xc0] sm:$0xff]
      %v1096 = vld [vmem:[#allocation3 + $0xc8] sm:$0xff]
      %v1097 = vld [vmem:[#allocation3 + $0xd0] sm:$0xff]
      %v1098 = vld [vmem:[#allocation3 + $0xd8] sm:$0xff]
      %v1099 = vld [vmem:[#allocation3 + $0xe0] sm:$0xff]
      %v1100 = vld [vmem:[#allocation3 + $0xe8] sm:$0xff]
      %v1101 = vld [vmem:[#allocation3 + $0xf0] sm:$0xff]
      %v1102 = vld [vmem:[#allocation3 + $0xf8] sm:$0xff]
      %v1103 = vld [vmem:[%s1] sm:$0x1]
      %v1104 = vlaneseq
      %v1105 = vshrl.u32 %v1104, 7
      %v1106 = vsub.s32 0, %v1105
      %v1107 = vrot.slane %v1103, %v1106
      %v1108 = vmul.f32 %v1071, %v1107
      %v1109 = vmul.f32 %v1072, %v1107
      %v1110 = vmul.f32 %v1073, %v1107
      %v1111 = vmul.f32 %v1074, %v1107
      %v1112 = vmul.f32 %v1075, %v1107
      %v1113 = vmul.f32 %v1076, %v1107
      %v1114 = vmul.f32 %v1077, %v1107
      %v1115 = vmul.f32 %v1078, %v1107
      %v1116 = vmul.f32 %v1079, %v1107
      %v1117 = vmul.f32 %v1080, %v1107
      %v1118 = vmul.f32 %v1081, %v1107
      %v1119 = vmul.f32 %v1082, %v1107
      %v1120 = vmul.f32 %v1083, %v1107
      %v1121 = vmul.f32 %v1084, %v1107
      %v1122 = vmul.f32 %v1085, %v1107
      %v1123 = vmul.f32 %v1086, %v1107
      %v1124 = vmul.f32 %v1087, %v1107
      %v1125 = vmul.f32 %v1088, %v1107
      %v1126 = vmul.f32 %v1089, %v1107
      %v1127 = vmul.f32 %v1090, %v1107
      %v1128 = vmul.f32 %v1091, %v1107
      %v1129 = vmul.f32 %v1092, %v1107
      %v1130 = vmul.f32 %v1093, %v1107
      %v1131 = vmul.f32 %v1094, %v1107
      %v1132 = vmul.f32 %v1095, %v1107
      %v1133 = vmul.f32 %v1096, %v1107
      %v1134 = vmul.f32 %v1097, %v1107
      %v1135 = vmul.f32 %v1098, %v1107
      %v1136 = vmul.f32 %v1099, %v1107
      %v1137 = vmul.f32 %v1100, %v1107
      %v1138 = vmul.f32 %v1101, %v1107
      %v1139 = vmul.f32 %v1102, %v1107
      %v1140 = vadd.f32 %v1108, 0.0
      %v1141 = vadd.f32 %v1109, 0.0
      %v1142 = vadd.f32 %v1110, 0.0
      %v1143 = vadd.f32 %v1111, 0.0
      %v1144 = vadd.f32 %v1112, 0.0
      %v1145 = vadd.f32 %v1113, 0.0
      %v1146 = vadd.f32 %v1114, 0.0
      %v1147 = vadd.f32 %v1115, 0.0
      %v1148 = vadd.f32 %v1116, 0.0
      %v1149 = vadd.f32 %v1117, 0.0
      %v1150 = vadd.f32 %v1118, 0.0
      %v1151 = vadd.f32 %v1119, 0.0
      %v1152 = vadd.f32 %v1120, 0.0
      %v1153 = vadd.f32 %v1121, 0.0
      %v1154 = vadd.f32 %v1122, 0.0
      %v1155 = vadd.f32 %v1123, 0.0
      %v1156 = vadd.f32 %v1124, 0.0
      %v1157 = vadd.f32 %v1125, 0.0
      %v1158 = vadd.f32 %v1126, 0.0
      %v1159 = vadd.f32 %v1127, 0.0
      %v1160 = vadd.f32 %v1128, 0.0
      %v1161 = vadd.f32 %v1129, 0.0
      %v1162 = vadd.f32 %v1130, 0.0
      %v1163 = vadd.f32 %v1131, 0.0
      %v1164 = vadd.f32 %v1132, 0.0
      %v1165 = vadd.f32 %v1133, 0.0
      %v1166 = vadd.f32 %v1134, 0.0
      %v1167 = vadd.f32 %v1135, 0.0
      %v1168 = vadd.f32 %v1136, 0.0
      %v1169 = vadd.f32 %v1137, 0.0
      %v1170 = vadd.f32 %v1138, 0.0
      %v1171 = vadd.f32 %v1139, 0.0
      %v1172 = vld [vmem:[%s581] sm:$0xff]
      %v1173 = vld [vmem:[%s581 + $0x8] sm:$0xff]
      %v1174 = vld [vmem:[%s581 + $0x10] sm:$0xff]
      %v1175 = vld [vmem:[%s581 + $0x18] sm:$0xff]
      %v1176 = vld [vmem:[%s581 + $0x20] sm:$0xff]
      %v1177 = vld [vmem:[%s581 + $0x28] sm:$0xff]
      %v1178 = vld [vmem:[%s581 + $0x30] sm:$0xff]
      %v1179 = vld [vmem:[%s581 + $0x38] sm:$0xff]
      %v1180 = vld [vmem:[%s581 + $0x40] sm:$0xff]
      %v1181 = vld [vmem:[%s581 + $0x48] sm:$0xff]
      %v1182 = vld [vmem:[%s581 + $0x50] sm:$0xff]
      %v1183 = vld [vmem:[%s581 + $0x58] sm:$0xff]
      %v1184 = vld [vmem:[%s581 + $0x60] sm:$0xff]
      %v1185 = vld [vmem:[%s581 + $0x68] sm:$0xff]
      %v1186 = vld [vmem:[%s581 + $0x70] sm:$0xff]
      %v1187 = vld [vmem:[%s581 + $0x78] sm:$0xff]
      %v1188 = vld [vmem:[%s581 + $0x80] sm:$0xff]
      %v1189 = vld [vmem:[%s581 + $0x88] sm:$0xff]
      %v1190 = vld [vmem:[%s581 + $0x90] sm:$0xff]
      %v1191 = vld [vmem:[%s581 + $0x98] sm:$0xff]
      %v1192 = vld [vmem:[%s581 + $0xa0] sm:$0xff]
      %v1193 = vld [vmem:[%s581 + $0xa8] sm:$0xff]
      %v1194 = vld [vmem:[%s581 + $0xb0] sm:$0xff]
      %v1195 = vld [vmem:[%s581 + $0xb8] sm:$0xff]
      %v1196 = vld [vmem:[%s581 + $0xc0] sm:$0xff]
      %v1197 = vld [vmem:[%s581 + $0xc8] sm:$0xff]
      %v1198 = vld [vmem:[%s581 + $0xd0] sm:$0xff]
      %v1199 = vld [vmem:[%s581 + $0xd8] sm:$0xff]
      %v1200 = vld [vmem:[%s581 + $0xe0] sm:$0xff]
      %v1201 = vld [vmem:[%s581 + $0xe8] sm:$0xff]
      %v1202 = vld [vmem:[%s581 + $0xf0] sm:$0xff]
      %v1203 = vld [vmem:[%s581 + $0xf8] sm:$0xff]
      %v1204 = vld [vmem:[%s1 + $0x1] sm:$0x1]
      %v1205 = vlaneseq
      %v1206 = vshrl.u32 %v1205, 7
      %v1207 = vsub.s32 0, %v1206
      %v1208 = vrot.slane %v1204, %v1207
      %v1209 = vmul.f32 %v1172, %v1208
      %v1210 = vmul.f32 %v1173, %v1208
      %v1211 = vmul.f32 %v1174, %v1208
      %v1212 = vmul.f32 %v1175, %v1208
      %v1213 = vmul.f32 %v1176, %v1208
      %v1214 = vmul.f32 %v1177, %v1208
      %v1215 = vmul.f32 %v1178, %v1208
      %v1216 = vmul.f32 %v1179, %v1208
      %v1217 = vmul.f32 %v1180, %v1208
      %v1218 = vmul.f32 %v1181, %v1208
      %v1219 = vmul.f32 %v1182, %v1208
      %v1220 = vmul.f32 %v1183, %v1208
      %v1221 = vmul.f32 %v1184, %v1208
      %v1222 = vmul.f32 %v1185, %v1208
      %v1223 = vmul.f32 %v1186, %v1208
      %v1224 = vmul.f32 %v1187, %v1208
      %v1225 = vmul.f32 %v1188, %v1208
      %v1226 = vmul.f32 %v1189, %v1208
      %v1227 = vmul.f32 %v1190, %v1208
      %v1228 = vmul.f32 %v1191, %v1208
      %v1229 = vmul.f32 %v1192, %v1208
      %v1230 = vmul.f32 %v1193, %v1208
      %v1231 = vmul.f32 %v1194, %v1208
      %v1232 = vmul.f32 %v1195, %v1208
      %v1233 = vmul.f32 %v1196, %v1208
      %v1234 = vmul.f32 %v1197, %v1208
      %v1235 = vmul.f32 %v1198, %v1208
      %v1236 = vmul.f32 %v1199, %v1208
      %v1237 = vmul.f32 %v1200, %v1208
      %v1238 = vmul.f32 %v1201, %v1208
      %v1239 = vmul.f32 %v1202, %v1208
      %v1240 = vmul.f32 %v1203, %v1208
      %v1241 = vadd.f32 %v1140, %v1209
      %v1242 = vadd.f32 %v1141, %v1210
      %v1243 = vadd.f32 %v1142, %v1211
      %v1244 = vadd.f32 %v1143, %v1212
      %v1245 = vadd.f32 %v1144, %v1213
      %v1246 = vadd.f32 %v1145, %v1214
      %v1247 = vadd.f32 %v1146, %v1215
      %v1248 = vadd.f32 %v1147, %v1216
      %v1249 = vadd.f32 %v1148, %v1217
      %v1250 = vadd.f32 %v1149, %v1218
      %v1251 = vadd.f32 %v1150, %v1219
      %v1252 = vadd.f32 %v1151, %v1220
      %v1253 = vadd.f32 %v1152, %v1221
      %v1254 = vadd.f32 %v1153, %v1222
      %v1255 = vadd.f32 %v1154, %v1223
      %v1256 = vadd.f32 %v1155, %v1224
      %v1257 = vadd.f32 %v1156, %v1225
      %v1258 = vadd.f32 %v1157, %v1226
      %v1259 = vadd.f32 %v1158, %v1227
      %v1260 = vadd.f32 %v1159, %v1228
      %v1261 = vadd.f32 %v1160, %v1229
      %v1262 = vadd.f32 %v1161, %v1230
      %v1263 = vadd.f32 %v1162, %v1231
      %v1264 = vadd.f32 %v1163, %v1232
      %v1265 = vadd.f32 %v1164, %v1233
      %v1266 = vadd.f32 %v1165, %v1234
      %v1267 = vadd.f32 %v1166, %v1235
      %v1268 = vadd.f32 %v1167, %v1236
      %v1269 = vadd.f32 %v1168, %v1237
      %v1270 = vadd.f32 %v1169, %v1238
      %v1271 = vadd.f32 %v1170, %v1239
      %v1272 = vadd.f32 %v1171, %v1240
      %v1273 = vld [vmem:[%s670] sm:$0xff]
      %v1274 = vld [vmem:[%s670 + $0x8] sm:$0xff]
      %v1275 = vld [vmem:[%s670 + $0x10] sm:$0xff]
      %v1276 = vld [vmem:[%s670 + $0x18] sm:$0xff]
      %v1277 = vld [vmem:[%s670 + $0x20] sm:$0xff]
      %v1278 = vld [vmem:[%s670 + $0x28] sm:$0xff]
      %v1279 = vld [vmem:[%s670 + $0x30] sm:$0xff]
      %v1280 = vld [vmem:[%s670 + $0x38] sm:$0xff]
      %v1281 = vld [vmem:[%s670 + $0x40] sm:$0xff]
      %v1282 = vld [vmem:[%s670 + $0x48] sm:$0xff]
      %v1283 = vld [vmem:[%s670 + $0x50] sm:$0xff]
      %v1284 = vld [vmem:[%s670 + $0x58] sm:$0xff]
      %v1285 = vld [vmem:[%s670 + $0x60] sm:$0xff]
      %v1286 = vld [vmem:[%s670 + $0x68] sm:$0xff]
      %v1287 = vld [vmem:[%s670 + $0x70] sm:$0xff]
      %v1288 = vld [vmem:[%s670 + $0x78] sm:$0xff]
      %v1289 = vld [vmem:[%s670 + $0x80] sm:$0xff]
      %v1290 = vld [vmem:[%s670 + $0x88] sm:$0xff]
      %v1291 = vld [vmem:[%s670 + $0x90] sm:$0xff]
      %v1292 = vld [vmem:[%s670 + $0x98] sm:$0xff]
      %v1293 = vld [vmem:[%s670 + $0xa0] sm:$0xff]
      %v1294 = vld [vmem:[%s670 + $0xa8] sm:$0xff]
      %v1295 = vld [vmem:[%s670 + $0xb0] sm:$0xff]
      %v1296 = vld [vmem:[%s670 + $0xb8] sm:$0xff]
      %v1297 = vld [vmem:[%s670 + $0xc0] sm:$0xff]
      %v1298 = vld [vmem:[%s670 + $0xc8] sm:$0xff]
      %v1299 = vld [vmem:[%s670 + $0xd0] sm:$0xff]
      %v1300 = vld [vmem:[%s670 + $0xd8] sm:$0xff]
      %v1301 = vld [vmem:[%s670 + $0xe0] sm:$0xff]
      %v1302 = vld [vmem:[%s670 + $0xe8] sm:$0xff]
      %v1303 = vld [vmem:[%s670 + $0xf0] sm:$0xff]
      %v1304 = vld [vmem:[%s670 + $0xf8] sm:$0xff]
      %v1305 = vld [vmem:[%s1 + $0x2] sm:$0x1]
      %v1306 = vlaneseq
      %v1307 = vshrl.u32 %v1306, 7
      %v1308 = vsub.s32 0, %v1307
      %v1309 = vrot.slane %v1305, %v1308
      %v1310 = vmul.f32 %v1273, %v1309
      %v1311 = vmul.f32 %v1274, %v1309
      %v1312 = vmul.f32 %v1275, %v1309
      %v1313 = vmul.f32 %v1276, %v1309
      %v1314 = vmul.f32 %v1277, %v1309
      %v1315 = vmul.f32 %v1278, %v1309
      %v1316 = vmul.f32 %v1279, %v1309
      %v1317 = vmul.f32 %v1280, %v1309
      %v1318 = vmul.f32 %v1281, %v1309
      %v1319 = vmul.f32 %v1282, %v1309
      %v1320 = vmul.f32 %v1283, %v1309
      %v1321 = vmul.f32 %v1284, %v1309
      %v1322 = vmul.f32 %v1285, %v1309
      %v1323 = vmul.f32 %v1286, %v1309
      %v1324 = vmul.f32 %v1287, %v1309
      %v1325 = vmul.f32 %v1288, %v1309
      %v1326 = vmul.f32 %v1289, %v1309
      %v1327 = vmul.f32 %v1290, %v1309
      %v1328 = vmul.f32 %v1291, %v1309
      %v1329 = vmul.f32 %v1292, %v1309
      %v1330 = vmul.f32 %v1293, %v1309
      %v1331 = vmul.f32 %v1294, %v1309
      %v1332 = vmul.f32 %v1295, %v1309
      %v1333 = vmul.f32 %v1296, %v1309
      %v1334 = vmul.f32 %v1297, %v1309
      %v1335 = vmul.f32 %v1298, %v1309
      %v1336 = vmul.f32 %v1299, %v1309
      %v1337 = vmul.f32 %v1300, %v1309
      %v1338 = vmul.f32 %v1301, %v1309
      %v1339 = vmul.f32 %v1302, %v1309
      %v1340 = vmul.f32 %v1303, %v1309
      %v1341 = vmul.f32 %v1304, %v1309
      %v1342 = vadd.f32 %v1241, %v1310
      %v1343 = vadd.f32 %v1242, %v1311
      %v1344 = vadd.f32 %v1243, %v1312
      %v1345 = vadd.f32 %v1244, %v1313
      %v1346 = vadd.f32 %v1245, %v1314
      %v1347 = vadd.f32 %v1246, %v1315
      %v1348 = vadd.f32 %v1247, %v1316
      %v1349 = vadd.f32 %v1248, %v1317
      %v1350 = vadd.f32 %v1249, %v1318
      %v1351 = vadd.f32 %v1250, %v1319
      %v1352 = vadd.f32 %v1251, %v1320
      %v1353 = vadd.f32 %v1252, %v1321
      %v1354 = vadd.f32 %v1253, %v1322
      %v1355 = vadd.f32 %v1254, %v1323
      %v1356 = vadd.f32 %v1255, %v1324
      %v1357 = vadd.f32 %v1256, %v1325
      %v1358 = vadd.f32 %v1257, %v1326
      %v1359 = vadd.f32 %v1258, %v1327
      %v1360 = vadd.f32 %v1259, %v1328
      %v1361 = vadd.f32 %v1260, %v1329
      %v1362 = vadd.f32 %v1261, %v1330
      %v1363 = vadd.f32 %v1262, %v1331
      %v1364 = vadd.f32 %v1263, %v1332
      %v1365 = vadd.f32 %v1264, %v1333
      %v1366 = vadd.f32 %v1265, %v1334
      %v1367 = vadd.f32 %v1266, %v1335
      %v1368 = vadd.f32 %v1267, %v1336
      %v1369 = vadd.f32 %v1268, %v1337
      %v1370 = vadd.f32 %v1269, %v1338
      %v1371 = vadd.f32 %v1270, %v1339
      %v1372 = vadd.f32 %v1271, %v1340
      %v1373 = vadd.f32 %v1272, %v1341
      %v1374 = vld [vmem:[%s759] sm:$0xff]
      %v1375 = vld [vmem:[%s759 + $0x8] sm:$0xff]
      %v1376 = vld [vmem:[%s759 + $0x10] sm:$0xff]
      %v1377 = vld [vmem:[%s759 + $0x18] sm:$0xff]
      %v1378 = vld [vmem:[%s759 + $0x20] sm:$0xff]
      %v1379 = vld [vmem:[%s759 + $0x28] sm:$0xff]
      %v1380 = vld [vmem:[%s759 + $0x30] sm:$0xff]
      %v1381 = vld [vmem:[%s759 + $0x38] sm:$0xff]
      %v1382 = vld [vmem:[%s759 + $0x40] sm:$0xff]
      %v1383 = vld [vmem:[%s759 + $0x48] sm:$0xff]
      %v1384 = vld [vmem:[%s759 + $0x50] sm:$0xff]
      %v1385 = vld [vmem:[%s759 + $0x58] sm:$0xff]
      %v1386 = vld [vmem:[%s759 + $0x60] sm:$0xff]
      %v1387 = vld [vmem:[%s759 + $0x68] sm:$0xff]
      %v1388 = vld [vmem:[%s759 + $0x70] sm:$0xff]
      %v1389 = vld [vmem:[%s759 + $0x78] sm:$0xff]
      %v1390 = vld [vmem:[%s759 + $0x80] sm:$0xff]
      %v1391 = vld [vmem:[%s759 + $0x88] sm:$0xff]
      %v1392 = vld [vmem:[%s759 + $0x90] sm:$0xff]
      %v1393 = vld [vmem:[%s759 + $0x98] sm:$0xff]
      %v1394 = vld [vmem:[%s759 + $0xa0] sm:$0xff]
      %v1395 = vld [vmem:[%s759 + $0xa8] sm:$0xff]
      %v1396 = vld [vmem:[%s759 + $0xb0] sm:$0xff]
      %v1397 = vld [vmem:[%s759 + $0xb8] sm:$0xff]
      %v1398 = vld [vmem:[%s759 + $0xc0] sm:$0xff]
      %v1399 = vld [vmem:[%s759 + $0xc8] sm:$0xff]
      %v1400 = vld [vmem:[%s759 + $0xd0] sm:$0xff]
      %v1401 = vld [vmem:[%s759 + $0xd8] sm:$0xff]
      %v1402 = vld [vmem:[%s759 + $0xe0] sm:$0xff]
      %v1403 = vld [vmem:[%s759 + $0xe8] sm:$0xff]
      %v1404 = vld [vmem:[%s759 + $0xf0] sm:$0xff]
      %v1405 = vld [vmem:[%s759 + $0xf8] sm:$0xff]
      %v1406 = vld [vmem:[%s1 + $0x3] sm:$0x1]
      %v1407 = vlaneseq
      %v1408 = vshrl.u32 %v1407, 7
      %v1409 = vsub.s32 0, %v1408
      %v1410 = vrot.slane %v1406, %v1409
      %v1411 = vmul.f32 %v1374, %v1410
      %v1412 = vmul.f32 %v1375, %v1410
      %v1413 = vmul.f32 %v1376, %v1410
      %v1414 = vmul.f32 %v1377, %v1410
      %v1415 = vmul.f32 %v1378, %v1410
      %v1416 = vmul.f32 %v1379, %v1410
      %v1417 = vmul.f32 %v1380, %v1410
      %v1418 = vmul.f32 %v1381, %v1410
      %v1419 = vmul.f32 %v1382, %v1410
      %v1420 = vmul.f32 %v1383, %v1410
      %v1421 = vmul.f32 %v1384, %v1410
      %v1422 = vmul.f32 %v1385, %v1410
      %v1423 = vmul.f32 %v1386, %v1410
      %v1424 = vmul.f32 %v1387, %v1410
      %v1425 = vmul.f32 %v1388, %v1410
      %v1426 = vmul.f32 %v1389, %v1410
      %v1427 = vmul.f32 %v1390, %v1410
      %v1428 = vmul.f32 %v1391, %v1410
      %v1429 = vmul.f32 %v1392, %v1410
      %v1430 = vmul.f32 %v1393, %v1410
      %v1431 = vmul.f32 %v1394, %v1410
      %v1432 = vmul.f32 %v1395, %v1410
      %v1433 = vmul.f32 %v1396, %v1410
      %v1434 = vmul.f32 %v1397, %v1410
      %v1435 = vmul.f32 %v1398, %v1410
      %v1436 = vmul.f32 %v1399, %v1410
      %v1437 = vmul.f32 %v1400, %v1410
      %v1438 = vmul.f32 %v1401, %v1410
      %v1439 = vmul.f32 %v1402, %v1410
      %v1440 = vmul.f32 %v1403, %v1410
      %v1441 = vmul.f32 %v1404, %v1410
      %v1442 = vmul.f32 %v1405, %v1410
      %v1443 = vadd.f32 %v1342, %v1411
      %v1444 = vadd.f32 %v1343, %v1412
      %v1445 = vadd.f32 %v1344, %v1413
      %v1446 = vadd.f32 %v1345, %v1414
      %v1447 = vadd.f32 %v1346, %v1415
      %v1448 = vadd.f32 %v1347, %v1416
      %v1449 = vadd.f32 %v1348, %v1417
      %v1450 = vadd.f32 %v1349, %v1418
      %v1451 = vadd.f32 %v1350, %v1419
      %v1452 = vadd.f32 %v1351, %v1420
      %v1453 = vadd.f32 %v1352, %v1421
      %v1454 = vadd.f32 %v1353, %v1422
      %v1455 = vadd.f32 %v1354, %v1423
      %v1456 = vadd.f32 %v1355, %v1424
      %v1457 = vadd.f32 %v1356, %v1425
      %v1458 = vadd.f32 %v1357, %v1426
      %v1459 = vadd.f32 %v1358, %v1427
      %v1460 = vadd.f32 %v1359, %v1428
      %v1461 = vadd.f32 %v1360, %v1429
      %v1462 = vadd.f32 %v1361, %v1430
      %v1463 = vadd.f32 %v1362, %v1431
      %v1464 = vadd.f32 %v1363, %v1432
      %v1465 = vadd.f32 %v1364, %v1433
      %v1466 = vadd.f32 %v1365, %v1434
      %v1467 = vadd.f32 %v1366, %v1435
      %v1468 = vadd.f32 %v1367, %v1436
      %v1469 = vadd.f32 %v1368, %v1437
      %v1470 = vadd.f32 %v1369, %v1438
      %v1471 = vadd.f32 %v1370, %v1439
      %v1472 = vadd.f32 %v1371, %v1440
      %v1473 = vadd.f32 %v1372, %v1441
      %v1474 = vadd.f32 %v1373, %v1442
      %v1475 = vld [vmem:[%s848] sm:$0xff]
      %v1476 = vld [vmem:[%s848 + $0x8] sm:$0xff]
      %v1477 = vld [vmem:[%s848 + $0x10] sm:$0xff]
      %v1478 = vld [vmem:[%s848 + $0x18] sm:$0xff]
      %v1479 = vld [vmem:[%s848 + $0x20] sm:$0xff]
      %v1480 = vld [vmem:[%s848 + $0x28] sm:$0xff]
      %v1481 = vld [vmem:[%s848 + $0x30] sm:$0xff]
      %v1482 = vld [vmem:[%s848 + $0x38] sm:$0xff]
      %v1483 = vld [vmem:[%s848 + $0x40] sm:$0xff]
      %v1484 = vld [vmem:[%s848 + $0x48] sm:$0xff]
      %v1485 = vld [vmem:[%s848 + $0x50] sm:$0xff]
      %v1486 = vld [vmem:[%s848 + $0x58] sm:$0xff]
      %v1487 = vld [vmem:[%s848 + $0x60] sm:$0xff]
      %v1488 = vld [vmem:[%s848 + $0x68] sm:$0xff]
      %v1489 = vld [vmem:[%s848 + $0x70] sm:$0xff]
      %v1490 = vld [vmem:[%s848 + $0x78] sm:$0xff]
      %v1491 = vld [vmem:[%s848 + $0x80] sm:$0xff]
      %v1492 = vld [vmem:[%s848 + $0x88] sm:$0xff]
      %v1493 = vld [vmem:[%s848 + $0x90] sm:$0xff]
      %v1494 = vld [vmem:[%s848 + $0x98] sm:$0xff]
      %v1495 = vld [vmem:[%s848 + $0xa0] sm:$0xff]
      %v1496 = vld [vmem:[%s848 + $0xa8] sm:$0xff]
      %v1497 = vld [vmem:[%s848 + $0xb0] sm:$0xff]
      %v1498 = vld [vmem:[%s848 + $0xb8] sm:$0xff]
      %v1499 = vld [vmem:[%s848 + $0xc0] sm:$0xff]
      %v1500 = vld [vmem:[%s848 + $0xc8] sm:$0xff]
      %v1501 = vld [vmem:[%s848 + $0xd0] sm:$0xff]
      %v1502 = vld [vmem:[%s848 + $0xd8] sm:$0xff]
      %v1503 = vld [vmem:[%s848 + $0xe0] sm:$0xff]
      %v1504 = vld [vmem:[%s848 + $0xe8] sm:$0xff]
      %v1505 = vld [vmem:[%s848 + $0xf0] sm:$0xff]
      %v1506 = vld [vmem:[%s848 + $0xf8] sm:$0xff]
      %v1507 = vld [vmem:[%s1 + $0x4] sm:$0x1]
      %v1508 = vlaneseq
      %v1509 = vshrl.u32 %v1508, 7
      %v1510 = vsub.s32 0, %v1509
      %v1511 = vrot.slane %v1507, %v1510
      %v1512 = vmul.f32 %v1475, %v1511
      %v1513 = vmul.f32 %v1476, %v1511
      %v1514 = vmul.f32 %v1477, %v1511
      %v1515 = vmul.f32 %v1478, %v1511
      %v1516 = vmul.f32 %v1479, %v1511
      %v1517 = vmul.f32 %v1480, %v1511
      %v1518 = vmul.f32 %v1481, %v1511
      %v1519 = vmul.f32 %v1482, %v1511
      %v1520 = vmul.f32 %v1483, %v1511
      %v1521 = vmul.f32 %v1484, %v1511
      %v1522 = vmul.f32 %v1485, %v1511
      %v1523 = vmul.f32 %v1486, %v1511
      %v1524 = vmul.f32 %v1487, %v1511
      %v1525 = vmul.f32 %v1488, %v1511
      %v1526 = vmul.f32 %v1489, %v1511
      %v1527 = vmul.f32 %v1490, %v1511
      %v1528 = vmul.f32 %v1491, %v1511
      %v1529 = vmul.f32 %v1492, %v1511
      %v1530 = vmul.f32 %v1493, %v1511
      %v1531 = vmul.f32 %v1494, %v1511
      %v1532 = vmul.f32 %v1495, %v1511
      %v1533 = vmul.f32 %v1496, %v1511
      %v1534 = vmul.f32 %v1497, %v1511
      %v1535 = vmul.f32 %v1498, %v1511
      %v1536 = vmul.f32 %v1499, %v1511
      %v1537 = vmul.f32 %v1500, %v1511
      %v1538 = vmul.f32 %v1501, %v1511
      %v1539 = vmul.f32 %v1502, %v1511
      %v1540 = vmul.f32 %v1503, %v1511
      %v1541 = vmul.f32 %v1504, %v1511
      %v1542 = vmul.f32 %v1505, %v1511
      %v1543 = vmul.f32 %v1506, %v1511
      %v1544 = vadd.f32 %v1443, %v1512
      %v1545 = vadd.f32 %v1444, %v1513
      %v1546 = vadd.f32 %v1445, %v1514
      %v1547 = vadd.f32 %v1446, %v1515
      %v1548 = vadd.f32 %v1447, %v1516
      %v1549 = vadd.f32 %v1448, %v1517
      %v1550 = vadd.f32 %v1449, %v1518
      %v1551 = vadd.f32 %v1450, %v1519
      %v1552 = vadd.f32 %v1451, %v1520
      %v1553 = vadd.f32 %v1452, %v1521
      %v1554 = vadd.f32 %v1453, %v1522
      %v1555 = vadd.f32 %v1454, %v1523
      %v1556 = vadd.f32 %v1455, %v1524
      %v1557 = vadd.f32 %v1456, %v1525
      %v1558 = vadd.f32 %v1457, %v1526
      %v1559 = vadd.f32 %v1458, %v1527
      %v1560 = vadd.f32 %v1459, %v1528
      %v1561 = vadd.f32 %v1460, %v1529
      %v1562 = vadd.f32 %v1461, %v1530
      %v1563 = vadd.f32 %v1462, %v1531
      %v1564 = vadd.f32 %v1463, %v1532
      %v1565 = vadd.f32 %v1464, %v1533
      %v1566 = vadd.f32 %v1465, %v1534
      %v1567 = vadd.f32 %v1466, %v1535
      %v1568 = vadd.f32 %v1467, %v1536
      %v1569 = vadd.f32 %v1468, %v1537
      %v1570 = vadd.f32 %v1469, %v1538
      %v1571 = vadd.f32 %v1470, %v1539
      %v1572 = vadd.f32 %v1471, %v1540
      %v1573 = vadd.f32 %v1472, %v1541
      %v1574 = vadd.f32 %v1473, %v1542
      %v1575 = vadd.f32 %v1474, %v1543
      %v1576 = vld [vmem:[%s937] sm:$0xff]
      %v1577 = vld [vmem:[%s937 + $0x8] sm:$0xff]
      %v1578 = vld [vmem:[%s937 + $0x10] sm:$0xff]
      %v1579 = vld [vmem:[%s937 + $0x18] sm:$0xff]
      %v1580 = vld [vmem:[%s937 + $0x20] sm:$0xff]
      %v1581 = vld [vmem:[%s937 + $0x28] sm:$0xff]
      %v1582 = vld [vmem:[%s937 + $0x30] sm:$0xff]
      %v1583 = vld [vmem:[%s937 + $0x38] sm:$0xff]
      %v1584 = vld [vmem:[%s937 + $0x40] sm:$0xff]
      %v1585 = vld [vmem:[%s937 + $0x48] sm:$0xff]
      %v1586 = vld [vmem:[%s937 + $0x50] sm:$0xff]
      %v1587 = vld [vmem:[%s937 + $0x58] sm:$0xff]
      %v1588 = vld [vmem:[%s937 + $0x60] sm:$0xff]
      %v1589 = vld [vmem:[%s937 + $0x68] sm:$0xff]
      %v1590 = vld [vmem:[%s937 + $0x70] sm:$0xff]
      %v1591 = vld [vmem:[%s937 + $0x78] sm:$0xff]
      %v1592 = vld [vmem:[%s937 + $0x80] sm:$0xff]
      %v1593 = vld [vmem:[%s937 + $0x88] sm:$0xff]
      %v1594 = vld [vmem:[%s937 + $0x90] sm:$0xff]
      %v1595 = vld [vmem:[%s937 + $0x98] sm:$0xff]
      %v1596 = vld [vmem:[%s937 + $0xa0] sm:$0xff]
      %v1597 = vld [vmem:[%s937 + $0xa8] sm:$0xff]
      %v1598 = vld [vmem:[%s937 + $0xb0] sm:$0xff]
      %v1599 = vld [vmem:[%s937 + $0xb8] sm:$0xff]
      %v1600 = vld [vmem:[%s937 + $0xc0] sm:$0xff]
      %v1601 = vld [vmem:[%s937 + $0xc8] sm:$0xff]
      %v1602 = vld [vmem:[%s937 + $0xd0] sm:$0xff]
      %v1603 = vld [vmem:[%s937 + $0xd8] sm:$0xff]
      %v1604 = vld [vmem:[%s937 + $0xe0] sm:$0xff]
      %v1605 = vld [vmem:[%s937 + $0xe8] sm:$0xff]
      %v1606 = vld [vmem:[%s937 + $0xf0] sm:$0xff]
      %v1607 = vld [vmem:[%s937 + $0xf8] sm:$0xff]
      %v1608 = vld [vmem:[%s1 + $0x5] sm:$0x1]
      %v1609 = vlaneseq
      %v1610 = vshrl.u32 %v1609, 7
      %v1611 = vsub.s32 0, %v1610
      %v1612 = vrot.slane %v1608, %v1611
      %v1613 = vmul.f32 %v1576, %v1612
      %v1614 = vmul.f32 %v1577, %v1612
      %v1615 = vmul.f32 %v1578, %v1612
      %v1616 = vmul.f32 %v1579, %v1612
      %v1617 = vmul.f32 %v1580, %v1612
      %v1618 = vmul.f32 %v1581, %v1612
      %v1619 = vmul.f32 %v1582, %v1612
      %v1620 = vmul.f32 %v1583, %v1612
      %v1621 = vmul.f32 %v1584, %v1612
      %v1622 = vmul.f32 %v1585, %v1612
      %v1623 = vmul.f32 %v1586, %v1612
      %v1624 = vmul.f32 %v1587, %v1612
      %v1625 = vmul.f32 %v1588, %v1612
      %v1626 = vmul.f32 %v1589, %v1612
      %v1627 = vmul.f32 %v1590, %v1612
      %v1628 = vmul.f32 %v1591, %v1612
      %v1629 = vmul.f32 %v1592, %v1612
      %v1630 = vmul.f32 %v1593, %v1612
      %v1631 = vmul.f32 %v1594, %v1612
      %v1632 = vmul.f32 %v1595, %v1612
      %v1633 = vmul.f32 %v1596, %v1612
      %v1634 = vmul.f32 %v1597, %v1612
      %v1635 = vmul.f32 %v1598, %v1612
      %v1636 = vmul.f32 %v1599, %v1612
      %v1637 = vmul.f32 %v1600, %v1612
      %v1638 = vmul.f32 %v1601, %v1612
      %v1639 = vmul.f32 %v1602, %v1612
      %v1640 = vmul.f32 %v1603, %v1612
      %v1641 = vmul.f32 %v1604, %v1612
      %v1642 = vmul.f32 %v1605, %v1612
      %v1643 = vmul.f32 %v1606, %v1612
      %v1644 = vmul.f32 %v1607, %v1612
      %v1645 = vadd.f32 %v1544, %v1613
      %v1646 = vadd.f32 %v1545, %v1614
      %v1647 = vadd.f32 %v1546, %v1615
      %v1648 = vadd.f32 %v1547, %v1616
      %v1649 = vadd.f32 %v1548, %v1617
      %v1650 = vadd.f32 %v1549, %v1618
      %v1651 = vadd.f32 %v1550, %v1619
      %v1652 = vadd.f32 %v1551, %v1620
      %v1653 = vadd.f32 %v1552, %v1621
      %v1654 = vadd.f32 %v1553, %v1622
      %v1655 = vadd.f32 %v1554, %v1623
      %v1656 = vadd.f32 %v1555, %v1624
      %v1657 = vadd.f32 %v1556, %v1625
      %v1658 = vadd.f32 %v1557, %v1626
      %v1659 = vadd.f32 %v1558, %v1627
      %v1660 = vadd.f32 %v1559, %v1628
      %v1661 = vadd.f32 %v1560, %v1629
      %v1662 = vadd.f32 %v1561, %v1630
      %v1663 = vadd.f32 %v1562, %v1631
      %v1664 = vadd.f32 %v1563, %v1632
      %v1665 = vadd.f32 %v1564, %v1633
      %v1666 = vadd.f32 %v1565, %v1634
      %v1667 = vadd.f32 %v1566, %v1635
      %v1668 = vadd.f32 %v1567, %v1636
      %v1669 = vadd.f32 %v1568, %v1637
      %v1670 = vadd.f32 %v1569, %v1638
      %v1671 = vadd.f32 %v1570, %v1639
      %v1672 = vadd.f32 %v1571, %v1640
      %v1673 = vadd.f32 %v1572, %v1641
      %v1674 = vadd.f32 %v1573, %v1642
      %v1675 = vadd.f32 %v1574, %v1643
      %v1676 = vadd.f32 %v1575, %v1644
      %v1677 = vld [vmem:[%s1026] sm:$0xff]
      %v1678 = vld [vmem:[%s1026 + $0x8] sm:$0xff]
      %v1679 = vld [vmem:[%s1026 + $0x10] sm:$0xff]
      %v1680 = vld [vmem:[%s1026 + $0x18] sm:$0xff]
      %v1681 = vld [vmem:[%s1026 + $0x20] sm:$0xff]
      %v1682 = vld [vmem:[%s1026 + $0x28] sm:$0xff]
      %v1683 = vld [vmem:[%s1026 + $0x30] sm:$0xff]
      %v1684 = vld [vmem:[%s1026 + $0x38] sm:$0xff]
      %v1685 = vld [vmem:[%s1026 + $0x40] sm:$0xff]
      %v1686 = vld [vmem:[%s1026 + $0x48] sm:$0xff]
      %v1687 = vld [vmem:[%s1026 + $0x50] sm:$0xff]
      %v1688 = vld [vmem:[%s1026 + $0x58] sm:$0xff]
      %v1689 = vld [vmem:[%s1026 + $0x60] sm:$0xff]
      %v1690 = vld [vmem:[%s1026 + $0x68] sm:$0xff]
      %v1691 = vld [vmem:[%s1026 + $0x70] sm:$0xff]
      %v1692 = vld [vmem:[%s1026 + $0x78] sm:$0xff]
      %v1693 = vld [vmem:[%s1026 + $0x80] sm:$0xff]
      %v1694 = vld [vmem:[%s1026 + $0x88] sm:$0xff]
      %v1695 = vld [vmem:[%s1026 + $0x90] sm:$0xff]
      %v1696 = vld [vmem:[%s1026 + $0x98] sm:$0xff]
      %v1697 = vld [vmem:[%s1026 + $0xa0] sm:$0xff]
      %v1698 = vld [vmem:[%s1026 + $0xa8] sm:$0xff]
      %v1699 = vld [vmem:[%s1026 + $0xb0] sm:$0xff]
      %v1700 = vld [vmem:[%s1026 + $0xb8] sm:$0xff]
      %v1701 = vld [vmem:[%s1026 + $0xc0] sm:$0xff]
      %v1702 = vld [vmem:[%s1026 + $0xc8] sm:$0xff]
      %v1703 = vld [vmem:[%s1026 + $0xd0] sm:$0xff]
      %v1704 = vld [vmem:[%s1026 + $0xd8] sm:$0xff]
      %v1705 = vld [vmem:[%s1026 + $0xe0] sm:$0xff]
      %v1706 = vld [vmem:[%s1026 + $0xe8] sm:$0xff]
      %v1707 = vld [vmem:[%s1026 + $0xf0] sm:$0xff]
      %v1708 = vld [vmem:[%s1026 + $0xf8] sm:$0xff]
      %v1709 = vld [vmem:[%s1 + $0x6] sm:$0x1]
      %v1710 = vlaneseq
      %v1711 = vshrl.u32 %v1710, 7
      %v1712 = vsub.s32 0, %v1711
      %v1713 = vrot.slane %v1709, %v1712
      %v1714 = vmul.f32 %v1677, %v1713
      %v1715 = vmul.f32 %v1678, %v1713
      %v1716 = vmul.f32 %v1679, %v1713
      %v1717 = vmul.f32 %v1680, %v1713
      %v1718 = vmul.f32 %v1681, %v1713
      %v1719 = vmul.f32 %v1682, %v1713
      %v1720 = vmul.f32 %v1683, %v1713
      %v1721 = vmul.f32 %v1684, %v1713
      %v1722 = vmul.f32 %v1685, %v1713
      %v1723 = vmul.f32 %v1686, %v1713
      %v1724 = vmul.f32 %v1687, %v1713
      %v1725 = vmul.f32 %v1688, %v1713
      %v1726 = vmul.f32 %v1689, %v1713
      %v1727 = vmul.f32 %v1690, %v1713
      %v1728 = vmul.f32 %v1691, %v1713
      %v1729 = vmul.f32 %v1692, %v1713
      %v1730 = vmul.f32 %v1693, %v1713
      %v1731 = vmul.f32 %v1694, %v1713
      %v1732 = vmul.f32 %v1695, %v1713
      %v1733 = vmul.f32 %v1696, %v1713
      %v1734 = vmul.f32 %v1697, %v1713
      %v1735 = vmul.f32 %v1698, %v1713
      %v1736 = vmul.f32 %v1699, %v1713
      %v1737 = vmul.f32 %v1700, %v1713
      %v1738 = vmul.f32 %v1701, %v1713
      %v1739 = vmul.f32 %v1702, %v1713
      %v1740 = vmul.f32 %v1703, %v1713
      %v1741 = vmul.f32 %v1704, %v1713
      %v1742 = vmul.f32 %v1705, %v1713
      %v1743 = vmul.f32 %v1706, %v1713
      %v1744 = vmul.f32 %v1707, %v1713
      %v1745 = vmul.f32 %v1708, %v1713
      %v1746 = vadd.f32 %v1645, %v1714
      %v1747 = vadd.f32 %v1646, %v1715
      %v1748 = vadd.f32 %v1647, %v1716
      %v1749 = vadd.f32 %v1648, %v1717
      %v1750 = vadd.f32 %v1649, %v1718
      %v1751 = vadd.f32 %v1650, %v1719
      %v1752 = vadd.f32 %v1651, %v1720
      %v1753 = vadd.f32 %v1652, %v1721
      %v1754 = vadd.f32 %v1653, %v1722
      %v1755 = vadd.f32 %v1654, %v1723
      %v1756 = vadd.f32 %v1655, %v1724
      %v1757 = vadd.f32 %v1656, %v1725
      %v1758 = vadd.f32 %v1657, %v1726
      %v1759 = vadd.f32 %v1658, %v1727
      %v1760 = vadd.f32 %v1659, %v1728
      %v1761 = vadd.f32 %v1660, %v1729
      %v1762 = vadd.f32 %v1661, %v1730
      %v1763 = vadd.f32 %v1662, %v1731
      %v1764 = vadd.f32 %v1663, %v1732
      %v1765 = vadd.f32 %v1664, %v1733
      %v1766 = vadd.f32 %v1665, %v1734
      %v1767 = vadd.f32 %v1666, %v1735
      %v1768 = vadd.f32 %v1667, %v1736
      %v1769 = vadd.f32 %v1668, %v1737
      %v1770 = vadd.f32 %v1669, %v1738
      %v1771 = vadd.f32 %v1670, %v1739
      %v1772 = vadd.f32 %v1671, %v1740
      %v1773 = vadd.f32 %v1672, %v1741
      %v1774 = vadd.f32 %v1673, %v1742
      %v1775 = vadd.f32 %v1674, %v1743
      %v1776 = vadd.f32 %v1675, %v1744
      %v1777 = vadd.f32 %v1676, %v1745
      %s1778 = scalar_lea.vmem [#allocation3], 16
      %v1779 = vld [vmem:[%s1778] sm:$0xff]
      %v1780 = vld [vmem:[%s1778 + $0x8] sm:$0xff]
      %v1781 = vld [vmem:[%s1778 + $0x10] sm:$0xff]
      %v1782 = vld [vmem:[%s1778 + $0x18] sm:$0xff]
      %v1783 = vld [vmem:[%s1778 + $0x20] sm:$0xff]
      %v1784 = vld [vmem:[%s1778 + $0x28] sm:$0xff]
      %v1785 = vld [vmem:[%s1778 + $0x30] sm:$0xff]
      %v1786 = vld [vmem:[%s1778 + $0x38] sm:$0xff]
      %v1787 = vld [vmem:[%s1778 + $0x40] sm:$0xff]
      %v1788 = vld [vmem:[%s1778 + $0x48] sm:$0xff]
      %v1789 = vld [vmem:[%s1778 + $0x50] sm:$0xff]
      %v1790 = vld [vmem:[%s1778 + $0x58] sm:$0xff]
      %v1791 = vld [vmem:[%s1778 + $0x60] sm:$0xff]
      %v1792 = vld [vmem:[%s1778 + $0x68] sm:$0xff]
      %v1793 = vld [vmem:[%s1778 + $0x70] sm:$0xff]
      %v1794 = vld [vmem:[%s1778 + $0x78] sm:$0xff]
      %v1795 = vld [vmem:[%s1778 + $0x80] sm:$0xff]
      %v1796 = vld [vmem:[%s1778 + $0x88] sm:$0xff]
      %v1797 = vld [vmem:[%s1778 + $0x90] sm:$0xff]
      %v1798 = vld [vmem:[%s1778 + $0x98] sm:$0xff]
      %v1799 = vld [vmem:[%s1778 + $0xa0] sm:$0xff]
      %v1800 = vld [vmem:[%s1778 + $0xa8] sm:$0xff]
      %v1801 = vld [vmem:[%s1778 + $0xb0] sm:$0xff]
      %v1802 = vld [vmem:[%s1778 + $0xb8] sm:$0xff]
      %v1803 = vld [vmem:[%s1778 + $0xc0] sm:$0xff]
      %v1804 = vld [vmem:[%s1778 + $0xc8] sm:$0xff]
      %v1805 = vld [vmem:[%s1778 + $0xd0] sm:$0xff]
      %v1806 = vld [vmem:[%s1778 + $0xd8] sm:$0xff]
      %v1807 = vld [vmem:[%s1778 + $0xe0] sm:$0xff]
      %v1808 = vld [vmem:[%s1778 + $0xe8] sm:$0xff]
      %v1809 = vld [vmem:[%s1778 + $0xf0] sm:$0xff]
      %v1810 = vld [vmem:[%s1778 + $0xf8] sm:$0xff]
      %s1811 = scalar_lea.vmem %s1, 8
      %v1812 = vld [vmem:[%s1811] sm:$0x1]
      %v1813 = vlaneseq
      %v1814 = vshrl.u32 %v1813, 7
      %v1815 = vsub.s32 0, %v1814
      %v1816 = vrot.slane %v1812, %v1815
      %v1817 = vmul.f32 %v1779, %v1816
      %v1818 = vmul.f32 %v1780, %v1816
      %v1819 = vmul.f32 %v1781, %v1816
      %v1820 = vmul.f32 %v1782, %v1816
      %v1821 = vmul.f32 %v1783, %v1816
      %v1822 = vmul.f32 %v1784, %v1816
      %v1823 = vmul.f32 %v1785, %v1816
      %v1824 = vmul.f32 %v1786, %v1816
      %v1825 = vmul.f32 %v1787, %v1816
      %v1826 = vmul.f32 %v1788, %v1816
      %v1827 = vmul.f32 %v1789, %v1816
      %v1828 = vmul.f32 %v1790, %v1816
      %v1829 = vmul.f32 %v1791, %v1816
      %v1830 = vmul.f32 %v1792, %v1816
      %v1831 = vmul.f32 %v1793, %v1816
      %v1832 = vmul.f32 %v1794, %v1816
      %v1833 = vmul.f32 %v1795, %v1816
      %v1834 = vmul.f32 %v1796, %v1816
      %v1835 = vmul.f32 %v1797, %v1816
      %v1836 = vmul.f32 %v1798, %v1816
      %v1837 = vmul.f32 %v1799, %v1816
      %v1838 = vmul.f32 %v1800, %v1816
      %v1839 = vmul.f32 %v1801, %v1816
      %v1840 = vmul.f32 %v1802, %v1816
      %v1841 = vmul.f32 %v1803, %v1816
      %v1842 = vmul.f32 %v1804, %v1816
      %v1843 = vmul.f32 %v1805, %v1816
      %v1844 = vmul.f32 %v1806, %v1816
      %v1845 = vmul.f32 %v1807, %v1816
      %v1846 = vmul.f32 %v1808, %v1816
      %v1847 = vmul.f32 %v1809, %v1816
      %v1848 = vmul.f32 %v1810, %v1816
      %v1849 = vadd.f32 %v1746, %v1817
      %v1850 = vadd.f32 %v1747, %v1818
      %v1851 = vadd.f32 %v1748, %v1819
      %v1852 = vadd.f32 %v1749, %v1820
      %v1853 = vadd.f32 %v1750, %v1821
      %v1854 = vadd.f32 %v1751, %v1822
      %v1855 = vadd.f32 %v1752, %v1823
      %v1856 = vadd.f32 %v1753, %v1824
      %v1857 = vadd.f32 %v1754, %v1825
      %v1858 = vadd.f32 %v1755, %v1826
      %v1859 = vadd.f32 %v1756, %v1827
      %v1860 = vadd.f32 %v1757, %v1828
      %v1861 = vadd.f32 %v1758, %v1829
      %v1862 = vadd.f32 %v1759, %v1830
      %v1863 = vadd.f32 %v1760, %v1831
      %v1864 = vadd.f32 %v1761, %v1832
      %v1865 = vadd.f32 %v1762, %v1833
      %v1866 = vadd.f32 %v1763, %v1834
      %v1867 = vadd.f32 %v1764, %v1835
      %v1868 = vadd.f32 %v1765, %v1836
      %v1869 = vadd.f32 %v1766, %v1837
      %v1870 = vadd.f32 %v1767, %v1838
      %v1871 = vadd.f32 %v1768, %v1839
      %v1872 = vadd.f32 %v1769, %v1840
      %v1873 = vadd.f32 %v1770, %v1841
      %v1874 = vadd.f32 %v1771, %v1842
      %v1875 = vadd.f32 %v1772, %v1843
      %v1876 = vadd.f32 %v1773, %v1844
      %v1877 = vadd.f32 %v1774, %v1845
      %v1878 = vadd.f32 %v1775, %v1846
      %v1879 = vadd.f32 %v1776, %v1847
      %v1880 = vadd.f32 %v1777, %v1848
      %s1881 = scalar_lea.vmem [#allocation3], 368
      %v1882 = vld [vmem:[%s1881] sm:$0xff]
      %v1883 = vld [vmem:[%s1881 + $0x8] sm:$0xff]
      %v1884 = vld [vmem:[%s1881 + $0x10] sm:$0xff]
      %v1885 = vld [vmem:[%s1881 + $0x18] sm:$0xff]
      %v1886 = vld [vmem:[%s1881 + $0x20] sm:$0xff]
      %v1887 = vld [vmem:[%s1881 + $0x28] sm:$0xff]
      %v1888 = vld [vmem:[%s1881 + $0x30] sm:$0xff]
      %v1889 = vld [vmem:[%s1881 + $0x38] sm:$0xff]
      %v1890 = vld [vmem:[%s1881 + $0x40] sm:$0xff]
      %v1891 = vld [vmem:[%s1881 + $0x48] sm:$0xff]
      %v1892 = vld [vmem:[%s1881 + $0x50] sm:$0xff]
      %v1893 = vld [vmem:[%s1881 + $0x58] sm:$0xff]
      %v1894 = vld [vmem:[%s1881 + $0x60] sm:$0xff]
      %v1895 = vld [vmem:[%s1881 + $0x68] sm:$0xff]
      %v1896 = vld [vmem:[%s1881 + $0x70] sm:$0xff]
      %v1897 = vld [vmem:[%s1881 + $0x78] sm:$0xff]
      %v1898 = vld [vmem:[%s1881 + $0x80] sm:$0xff]
      %v1899 = vld [vmem:[%s1881 + $0x88] sm:$0xff]
      %v1900 = vld [vmem:[%s1881 + $0x90] sm:$0xff]
      %v1901 = vld [vmem:[%s1881 + $0x98] sm:$0xff]
      %v1902 = vld [vmem:[%s1881 + $0xa0] sm:$0xff]
      %v1903 = vld [vmem:[%s1881 + $0xa8] sm:$0xff]
      %v1904 = vld [vmem:[%s1881 + $0xb0] sm:$0xff]
      %v1905 = vld [vmem:[%s1881 + $0xb8] sm:$0xff]
      %v1906 = vld [vmem:[%s1881 + $0xc0] sm:$0xff]
      %v1907 = vld [vmem:[%s1881 + $0xc8] sm:$0xff]
      %v1908 = vld [vmem:[%s1881 + $0xd0] sm:$0xff]
      %v1909 = vld [vmem:[%s1881 + $0xd8] sm:$0xff]
      %v1910 = vld [vmem:[%s1881 + $0xe0] sm:$0xff]
      %v1911 = vld [vmem:[%s1881 + $0xe8] sm:$0xff]
      %v1912 = vld [vmem:[%s1881 + $0xf0] sm:$0xff]
      %v1913 = vld [vmem:[%s1881 + $0xf8] sm:$0xff]
      %v1914 = vld [vmem:[%s1811 + $0x1] sm:$0x1]
      %v1915 = vlaneseq
      %v1916 = vshrl.u32 %v1915, 7
      %v1917 = vsub.s32 0, %v1916
      %v1918 = vrot.slane %v1914, %v1917
      %v1919 = vmul.f32 %v1882, %v1918
      %v1920 = vmul.f32 %v1883, %v1918
      %v1921 = vmul.f32 %v1884, %v1918
      %v1922 = vmul.f32 %v1885, %v1918
      %v1923 = vmul.f32 %v1886, %v1918
      %v1924 = vmul.f32 %v1887, %v1918
      %v1925 = vmul.f32 %v1888, %v1918
      %v1926 = vmul.f32 %v1889, %v1918
      %v1927 = vmul.f32 %v1890, %v1918
      %v1928 = vmul.f32 %v1891, %v1918
      %v1929 = vmul.f32 %v1892, %v1918
      %v1930 = vmul.f32 %v1893, %v1918
      %v1931 = vmul.f32 %v1894, %v1918
      %v1932 = vmul.f32 %v1895, %v1918
      %v1933 = vmul.f32 %v1896, %v1918
      %v1934 = vmul.f32 %v1897, %v1918
      %v1935 = vmul.f32 %v1898, %v1918
      %v1936 = vmul.f32 %v1899, %v1918
      %v1937 = vmul.f32 %v1900, %v1918
      %v1938 = vmul.f32 %v1901, %v1918
      %v1939 = vmul.f32 %v1902, %v1918
      %v1940 = vmul.f32 %v1903, %v1918
      %v1941 = vmul.f32 %v1904, %v1918
      %v1942 = vmul.f32 %v1905, %v1918
      %v1943 = vmul.f32 %v1906, %v1918
      %v1944 = vmul.f32 %v1907, %v1918
      %v1945 = vmul.f32 %v1908, %v1918
      %v1946 = vmul.f32 %v1909, %v1918
      %v1947 = vmul.f32 %v1910, %v1918
      %v1948 = vmul.f32 %v1911, %v1918
      %v1949 = vmul.f32 %v1912, %v1918
      %v1950 = vmul.f32 %v1913, %v1918
      %v1951 = vadd.f32 %v1849, %v1919
      %v1952 = vadd.f32 %v1850, %v1920
      %v1953 = vadd.f32 %v1851, %v1921
      %v1954 = vadd.f32 %v1852, %v1922
      %v1955 = vadd.f32 %v1853, %v1923
      %v1956 = vadd.f32 %v1854, %v1924
      %v1957 = vadd.f32 %v1855, %v1925
      %v1958 = vadd.f32 %v1856, %v1926
      %v1959 = vadd.f32 %v1857, %v1927
      %v1960 = vadd.f32 %v1858, %v1928
      %v1961 = vadd.f32 %v1859, %v1929
      %v1962 = vadd.f32 %v1860, %v1930
      %v1963 = vadd.f32 %v1861, %v1931
      %v1964 = vadd.f32 %v1862, %v1932
      %v1965 = vadd.f32 %v1863, %v1933
      %v1966 = vadd.f32 %v1864, %v1934
      %v1967 = vadd.f32 %v1865, %v1935
      %v1968 = vadd.f32 %v1866, %v1936
      %v1969 = vadd.f32 %v1867, %v1937
      %v1970 = vadd.f32 %v1868, %v1938
      %v1971 = vadd.f32 %v1869, %v1939
      %v1972 = vadd.f32 %v1870, %v1940
      %v1973 = vadd.f32 %v1871, %v1941
      %v1974 = vadd.f32 %v1872, %v1942
      %v1975 = vadd.f32 %v1873, %v1943
      %v1976 = vadd.f32 %v1874, %v1944
      %v1977 = vadd.f32 %v1875, %v1945
      %v1978 = vadd.f32 %v1876, %v1946
      %v1979 = vadd.f32 %v1877, %v1947
      %v1980 = vadd.f32 %v1878, %v1948
      %v1981 = vadd.f32 %v1879, %v1949
      %v1982 = vadd.f32 %v1880, %v1950
      %s1983 = scalar_lea.vmem [#allocation3], 720
      %v1984 = vld [vmem:[%s1983] sm:$0xff]
      %v1985 = vld [vmem:[%s1983 + $0x8] sm:$0xff]
      %v1986 = vld [vmem:[%s1983 + $0x10] sm:$0xff]
      %v1987 = vld [vmem:[%s1983 + $0x18] sm:$0xff]
      %v1988 = vld [vmem:[%s1983 + $0x20] sm:$0xff]
      %v1989 = vld [vmem:[%s1983 + $0x28] sm:$0xff]
      %v1990 = vld [vmem:[%s1983 + $0x30] sm:$0xff]
      %v1991 = vld [vmem:[%s1983 + $0x38] sm:$0xff]
      %v1992 = vld [vmem:[%s1983 + $0x40] sm:$0xff]
      %v1993 = vld [vmem:[%s1983 + $0x48] sm:$0xff]
      %v1994 = vld [vmem:[%s1983 + $0x50] sm:$0xff]
      %v1995 = vld [vmem:[%s1983 + $0x58] sm:$0xff]
      %v1996 = vld [vmem:[%s1983 + $0x60] sm:$0xff]
      %v1997 = vld [vmem:[%s1983 + $0x68] sm:$0xff]
      %v1998 = vld [vmem:[%s1983 + $0x70] sm:$0xff]
      %v1999 = vld [vmem:[%s1983 + $0x78] sm:$0xff]
      %v2000 = vld [vmem:[%s1983 + $0x80] sm:$0xff]
      %v2001 = vld [vmem:[%s1983 + $0x88] sm:$0xff]
      %v2002 = vld [vmem:[%s1983 + $0x90] sm:$0xff]
      %v2003 = vld [vmem:[%s1983 + $0x98] sm:$0xff]
      %v2004 = vld [vmem:[%s1983 + $0xa0] sm:$0xff]
      %v2005 = vld [vmem:[%s1983 + $0xa8] sm:$0xff]
      %v2006 = vld [vmem:[%s1983 + $0xb0] sm:$0xff]
      %v2007 = vld [vmem:[%s1983 + $0xb8] sm:$0xff]
      %v2008 = vld [vmem:[%s1983 + $0xc0] sm:$0xff]
      %v2009 = vld [vmem:[%s1983 + $0xc8] sm:$0xff]
      %v2010 = vld [vmem:[%s1983 + $0xd0] sm:$0xff]
      %v2011 = vld [vmem:[%s1983 + $0xd8] sm:$0xff]
      %v2012 = vld [vmem:[%s1983 + $0xe0] sm:$0xff]
      %v2013 = vld [vmem:[%s1983 + $0xe8] sm:$0xff]
      %v2014 = vld [vmem:[%s1983 + $0xf0] sm:$0xff]
      %v2015 = vld [vmem:[%s1983 + $0xf8] sm:$0xff]
      %v2016 = vld [vmem:[%s1811 + $0x2] sm:$0x1]
      %v2017 = vlaneseq
      %v2018 = vshrl.u32 %v2017, 7
      %v2019 = vsub.s32 0, %v2018
      %v2020 = vrot.slane %v2016, %v2019
      %v2021 = vmul.f32 %v1984, %v2020
      %v2022 = vmul.f32 %v1985, %v2020
      %v2023 = vmul.f32 %v1986, %v2020
      %v2024 = vmul.f32 %v1987, %v2020
      %v2025 = vmul.f32 %v1988, %v2020
      %v2026 = vmul.f32 %v1989, %v2020
      %v2027 = vmul.f32 %v1990, %v2020
      %v2028 = vmul.f32 %v1991, %v2020
      %v2029 = vmul.f32 %v1992, %v2020
      %v2030 = vmul.f32 %v1993, %v2020
      %v2031 = vmul.f32 %v1994, %v2020
      %v2032 = vmul.f32 %v1995, %v2020
      %v2033 = vmul.f32 %v1996, %v2020
      %v2034 = vmul.f32 %v1997, %v2020
      %v2035 = vmul.f32 %v1998, %v2020
      %v2036 = vmul.f32 %v1999, %v2020
      %v2037 = vmul.f32 %v2000, %v2020
      %v2038 = vmul.f32 %v2001, %v2020
      %v2039 = vmul.f32 %v2002, %v2020
      %v2040 = vmul.f32 %v2003, %v2020
      %v2041 = vmul.f32 %v2004, %v2020
      %v2042 = vmul.f32 %v2005, %v2020
      %v2043 = vmul.f32 %v2006, %v2020
      %v2044 = vmul.f32 %v2007, %v2020
      %v2045 = vmul.f32 %v2008, %v2020
      %v2046 = vmul.f32 %v2009, %v2020
      %v2047 = vmul.f32 %v2010, %v2020
      %v2048 = vmul.f32 %v2011, %v2020
      %v2049 = vmul.f32 %v2012, %v2020
      %v2050 = vmul.f32 %v2013, %v2020
      %v2051 = vmul.f32 %v2014, %v2020
      %v2052 = vmul.f32 %v2015, %v2020
      %v2053 = vadd.f32 %v1951, %v2021
      %v2054 = vadd.f32 %v1952, %v2022
      %v2055 = vadd.f32 %v1953, %v2023
      %v2056 = vadd.f32 %v1954, %v2024
      %v2057 = vadd.f32 %v1955, %v2025
      %v2058 = vadd.f32 %v1956, %v2026
      %v2059 = vadd.f32 %v1957, %v2027
      %v2060 = vadd.f32 %v1958, %v2028
      %v2061 = vadd.f32 %v1959, %v2029
      %v2062 = vadd.f32 %v1960, %v2030
      %v2063 = vadd.f32 %v1961, %v2031
      %v2064 = vadd.f32 %v1962, %v2032
      %v2065 = vadd.f32 %v1963, %v2033
      %v2066 = vadd.f32 %v1964, %v2034
      %v2067 = vadd.f32 %v1965, %v2035
      %v2068 = vadd.f32 %v1966, %v2036
      %v2069 = vadd.f32 %v1967, %v2037
      %v2070 = vadd.f32 %v1968, %v2038
      %v2071 = vadd.f32 %v1969, %v2039
      %v2072 = vadd.f32 %v1970, %v2040
      %v2073 = vadd.f32 %v1971, %v2041
      %v2074 = vadd.f32 %v1972, %v2042
      %v2075 = vadd.f32 %v1973, %v2043
      %v2076 = vadd.f32 %v1974, %v2044
      %v2077 = vadd.f32 %v1975, %v2045
      %v2078 = vadd.f32 %v1976, %v2046
      %v2079 = vadd.f32 %v1977, %v2047
      %v2080 = vadd.f32 %v1978, %v2048
      %v2081 = vadd.f32 %v1979, %v2049
      %v2082 = vadd.f32 %v1980, %v2050
      %v2083 = vadd.f32 %v1981, %v2051
      %v2084 = vadd.f32 %v1982, %v2052
      %s2085 = scalar_lea.vmem [#allocation3], 1072
      %v2086 = vld [vmem:[%s2085] sm:$0xff]
      %v2087 = vld [vmem:[%s2085 + $0x8] sm:$0xff]
      %v2088 = vld [vmem:[%s2085 + $0x10] sm:$0xff]
      %v2089 = vld [vmem:[%s2085 + $0x18] sm:$0xff]
      %v2090 = vld [vmem:[%s2085 + $0x20] sm:$0xff]
      %v2091 = vld [vmem:[%s2085 + $0x28] sm:$0xff]
      %v2092 = vld [vmem:[%s2085 + $0x30] sm:$0xff]
      %v2093 = vld [vmem:[%s2085 + $0x38] sm:$0xff]
      %v2094 = vld [vmem:[%s2085 + $0x40] sm:$0xff]
      %v2095 = vld [vmem:[%s2085 + $0x48] sm:$0xff]
      %v2096 = vld [vmem:[%s2085 + $0x50] sm:$0xff]
      %v2097 = vld [vmem:[%s2085 + $0x58] sm:$0xff]
      %v2098 = vld [vmem:[%s2085 + $0x60] sm:$0xff]
      %v2099 = vld [vmem:[%s2085 + $0x68] sm:$0xff]
      %v2100 = vld [vmem:[%s2085 + $0x70] sm:$0xff]
      %v2101 = vld [vmem:[%s2085 + $0x78] sm:$0xff]
      %v2102 = vld [vmem:[%s2085 + $0x80] sm:$0xff]
      %v2103 = vld [vmem:[%s2085 + $0x88] sm:$0xff]
      %v2104 = vld [vmem:[%s2085 + $0x90] sm:$0xff]
      %v2105 = vld [vmem:[%s2085 + $0x98] sm:$0xff]
      %v2106 = vld [vmem:[%s2085 + $0xa0] sm:$0xff]
      %v2107 = vld [vmem:[%s2085 + $0xa8] sm:$0xff]
      %v2108 = vld [vmem:[%s2085 + $0xb0] sm:$0xff]
      %v2109 = vld [vmem:[%s2085 + $0xb8] sm:$0xff]
      %v2110 = vld [vmem:[%s2085 + $0xc0] sm:$0xff]
      %v2111 = vld [vmem:[%s2085 + $0xc8] sm:$0xff]
      %v2112 = vld [vmem:[%s2085 + $0xd0] sm:$0xff]
      %v2113 = vld [vmem:[%s2085 + $0xd8] sm:$0xff]
      %v2114 = vld [vmem:[%s2085 + $0xe0] sm:$0xff]
      %v2115 = vld [vmem:[%s2085 + $0xe8] sm:$0xff]
      %v2116 = vld [vmem:[%s2085 + $0xf0] sm:$0xff]
      %v2117 = vld [vmem:[%s2085 + $0xf8] sm:$0xff]
      %v2118 = vld [vmem:[%s1811 + $0x3] sm:$0x1]
      %v2119 = vlaneseq
      %v2120 = vshrl.u32 %v2119, 7
      %v2121 = vsub.s32 0, %v2120
      %v2122 = vrot.slane %v2118, %v2121
      %v2123 = vmul.f32 %v2086, %v2122
      %v2124 = vmul.f32 %v2087, %v2122
      %v2125 = vmul.f32 %v2088, %v2122
      %v2126 = vmul.f32 %v2089, %v2122
      %v2127 = vmul.f32 %v2090, %v2122
      %v2128 = vmul.f32 %v2091, %v2122
      %v2129 = vmul.f32 %v2092, %v2122
      %v2130 = vmul.f32 %v2093, %v2122
      %v2131 = vmul.f32 %v2094, %v2122
      %v2132 = vmul.f32 %v2095, %v2122
      %v2133 = vmul.f32 %v2096, %v2122
      %v2134 = vmul.f32 %v2097, %v2122
      %v2135 = vmul.f32 %v2098, %v2122
      %v2136 = vmul.f32 %v2099, %v2122
      %v2137 = vmul.f32 %v2100, %v2122
      %v2138 = vmul.f32 %v2101, %v2122
      %v2139 = vmul.f32 %v2102, %v2122
      %v2140 = vmul.f32 %v2103, %v2122
      %v2141 = vmul.f32 %v2104, %v2122
      %v2142 = vmul.f32 %v2105, %v2122
      %v2143 = vmul.f32 %v2106, %v2122
      %v2144 = vmul.f32 %v2107, %v2122
      %v2145 = vmul.f32 %v2108, %v2122
      %v2146 = vmul.f32 %v2109, %v2122
      %v2147 = vmul.f32 %v2110, %v2122
      %v2148 = vmul.f32 %v2111, %v2122
      %v2149 = vmul.f32 %v2112, %v2122
      %v2150 = vmul.f32 %v2113, %v2122
      %v2151 = vmul.f32 %v2114, %v2122
      %v2152 = vmul.f32 %v2115, %v2122
      %v2153 = vmul.f32 %v2116, %v2122
      %v2154 = vmul.f32 %v2117, %v2122
      %v2155 = vadd.f32 %v2053, %v2123
      %v2156 = vadd.f32 %v2054, %v2124
      %v2157 = vadd.f32 %v2055, %v2125
      %v2158 = vadd.f32 %v2056, %v2126
      %v2159 = vadd.f32 %v2057, %v2127
      %v2160 = vadd.f32 %v2058, %v2128
      %v2161 = vadd.f32 %v2059, %v2129
      %v2162 = vadd.f32 %v2060, %v2130
      %v2163 = vadd.f32 %v2061, %v2131
      %v2164 = vadd.f32 %v2062, %v2132
      %v2165 = vadd.f32 %v2063, %v2133
      %v2166 = vadd.f32 %v2064, %v2134
      %v2167 = vadd.f32 %v2065, %v2135
      %v2168 = vadd.f32 %v2066, %v2136
      %v2169 = vadd.f32 %v2067, %v2137
      %v2170 = vadd.f32 %v2068, %v2138
      %v2171 = vadd.f32 %v2069, %v2139
      %v2172 = vadd.f32 %v2070, %v2140
      %v2173 = vadd.f32 %v2071, %v2141
      %v2174 = vadd.f32 %v2072, %v2142
      %v2175 = vadd.f32 %v2073, %v2143
      %v2176 = vadd.f32 %v2074, %v2144
      %v2177 = vadd.f32 %v2075, %v2145
      %v2178 = vadd.f32 %v2076, %v2146
      %v2179 = vadd.f32 %v2077, %v2147
      %v2180 = vadd.f32 %v2078, %v2148
      %v2181 = vadd.f32 %v2079, %v2149
      %v2182 = vadd.f32 %v2080, %v2150
      %v2183 = vadd.f32 %v2081, %v2151
      %v2184 = vadd.f32 %v2082, %v2152
      %v2185 = vadd.f32 %v2083, %v2153
      %v2186 = vadd.f32 %v2084, %v2154
      %s2187 = scalar_lea.vmem [#allocation3], 1424
      %v2188 = vld [vmem:[%s2187] sm:$0xff]
      %v2189 = vld [vmem:[%s2187 + $0x8] sm:$0xff]
      %v2190 = vld [vmem:[%s2187 + $0x10] sm:$0xff]
      %v2191 = vld [vmem:[%s2187 + $0x18] sm:$0xff]
      %v2192 = vld [vmem:[%s2187 + $0x20] sm:$0xff]
      %v2193 = vld [vmem:[%s2187 + $0x28] sm:$0xff]
      %v2194 = vld [vmem:[%s2187 + $0x30] sm:$0xff]
      %v2195 = vld [vmem:[%s2187 + $0x38] sm:$0xff]
      %v2196 = vld [vmem:[%s2187 + $0x40] sm:$0xff]
      %v2197 = vld [vmem:[%s2187 + $0x48] sm:$0xff]
      %v2198 = vld [vmem:[%s2187 + $0x50] sm:$0xff]
      %v2199 = vld [vmem:[%s2187 + $0x58] sm:$0xff]
      %v2200 = vld [vmem:[%s2187 + $0x60] sm:$0xff]
      %v2201 = vld [vmem:[%s2187 + $0x68] sm:$0xff]
      %v2202 = vld [vmem:[%s2187 + $0x70] sm:$0xff]
      %v2203 = vld [vmem:[%s2187 + $0x78] sm:$0xff]
      %v2204 = vld [vmem:[%s2187 + $0x80] sm:$0xff]
      %v2205 = vld [vmem:[%s2187 + $0x88] sm:$0xff]
      %v2206 = vld [vmem:[%s2187 + $0x90] sm:$0xff]
      %v2207 = vld [vmem:[%s2187 + $0x98] sm:$0xff]
      %v2208 = vld [vmem:[%s2187 + $0xa0] sm:$0xff]
      %v2209 = vld [vmem:[%s2187 + $0xa8] sm:$0xff]
      %v2210 = vld [vmem:[%s2187 + $0xb0] sm:$0xff]
      %v2211 = vld [vmem:[%s2187 + $0xb8] sm:$0xff]
      %v2212 = vld [vmem:[%s2187 + $0xc0] sm:$0xff]
      %v2213 = vld [vmem:[%s2187 + $0xc8] sm:$0xff]
      %v2214 = vld [vmem:[%s2187 + $0xd0] sm:$0xff]
      %v2215 = vld [vmem:[%s2187 + $0xd8] sm:$0xff]
      %v2216 = vld [vmem:[%s2187 + $0xe0] sm:$0xff]
      %v2217 = vld [vmem:[%s2187 + $0xe8] sm:$0xff]
      %v2218 = vld [vmem:[%s2187 + $0xf0] sm:$0xff]
      %v2219 = vld [vmem:[%s2187 + $0xf8] sm:$0xff]
      %v2220 = vld [vmem:[%s1811 + $0x4] sm:$0x1]
      %v2221 = vlaneseq
      %v2222 = vshrl.u32 %v2221, 7
      %v2223 = vsub.s32 0, %v2222
      %v2224 = vrot.slane %v2220, %v2223
      %v2225 = vmul.f32 %v2188, %v2224
      %v2226 = vmul.f32 %v2189, %v2224
      %v2227 = vmul.f32 %v2190, %v2224
      %v2228 = vmul.f32 %v2191, %v2224
      %v2229 = vmul.f32 %v2192, %v2224
      %v2230 = vmul.f32 %v2193, %v2224
      %v2231 = vmul.f32 %v2194, %v2224
      %v2232 = vmul.f32 %v2195, %v2224
      %v2233 = vmul.f32 %v2196, %v2224
      %v2234 = vmul.f32 %v2197, %v2224
      %v2235 = vmul.f32 %v2198, %v2224
      %v2236 = vmul.f32 %v2199, %v2224
      %v2237 = vmul.f32 %v2200, %v2224
      %v2238 = vmul.f32 %v2201, %v2224
      %v2239 = vmul.f32 %v2202, %v2224
      %v2240 = vmul.f32 %v2203, %v2224
      %v2241 = vmul.f32 %v2204, %v2224
      %v2242 = vmul.f32 %v2205, %v2224
      %v2243 = vmul.f32 %v2206, %v2224
      %v2244 = vmul.f32 %v2207, %v2224
      %v2245 = vmul.f32 %v2208, %v2224
      %v2246 = vmul.f32 %v2209, %v2224
      %v2247 = vmul.f32 %v2210, %v2224
      %v2248 = vmul.f32 %v2211, %v2224
      %v2249 = vmul.f32 %v2212, %v2224
      %v2250 = vmul.f32 %v2213, %v2224
      %v2251 = vmul.f32 %v2214, %v2224
      %v2252 = vmul.f32 %v2215, %v2224
      %v2253 = vmul.f32 %v2216, %v2224
      %v2254 = vmul.f32 %v2217, %v2224
      %v2255 = vmul.f32 %v2218, %v2224
      %v2256 = vmul.f32 %v2219, %v2224
      %v2257 = vadd.f32 %v2155, %v2225
      %v2258 = vadd.f32 %v2156, %v2226
      %v2259 = vadd.f32 %v2157, %v2227
      %v2260 = vadd.f32 %v2158, %v2228
      %v2261 = vadd.f32 %v2159, %v2229
      %v2262 = vadd.f32 %v2160, %v2230
      %v2263 = vadd.f32 %v2161, %v2231
      %v2264 = vadd.f32 %v2162, %v2232
      %v2265 = vadd.f32 %v2163, %v2233
      %v2266 = vadd.f32 %v2164, %v2234
      %v2267 = vadd.f32 %v2165, %v2235
      %v2268 = vadd.f32 %v2166, %v2236
      %v2269 = vadd.f32 %v2167, %v2237
      %v2270 = vadd.f32 %v2168, %v2238
      %v2271 = vadd.f32 %v2169, %v2239
      %v2272 = vadd.f32 %v2170, %v2240
      %v2273 = vadd.f32 %v2171, %v2241
      %v2274 = vadd.f32 %v2172, %v2242
      %v2275 = vadd.f32 %v2173, %v2243
      %v2276 = vadd.f32 %v2174, %v2244
      %v2277 = vadd.f32 %v2175, %v2245
      %v2278 = vadd.f32 %v2176, %v2246
      %v2279 = vadd.f32 %v2177, %v2247
      %v2280 = vadd.f32 %v2178, %v2248
      %v2281 = vadd.f32 %v2179, %v2249
      %v2282 = vadd.f32 %v2180, %v2250
      %v2283 = vadd.f32 %v2181, %v2251
      %v2284 = vadd.f32 %v2182, %v2252
      %v2285 = vadd.f32 %v2183, %v2253
      %v2286 = vadd.f32 %v2184, %v2254
      %v2287 = vadd.f32 %v2185, %v2255
      %v2288 = vadd.f32 %v2186, %v2256
      %s2289 = scalar_lea.vmem [#allocation3], 1776
      %v2290 = vld [vmem:[%s2289] sm:$0xff]
      %v2291 = vld [vmem:[%s2289 + $0x8] sm:$0xff]
      %v2292 = vld [vmem:[%s2289 + $0x10] sm:$0xff]
      %v2293 = vld [vmem:[%s2289 + $0x18] sm:$0xff]
      %v2294 = vld [vmem:[%s2289 + $0x20] sm:$0xff]
      %v2295 = vld [vmem:[%s2289 + $0x28] sm:$0xff]
      %v2296 = vld [vmem:[%s2289 + $0x30] sm:$0xff]
      %v2297 = vld [vmem:[%s2289 + $0x38] sm:$0xff]
      %v2298 = vld [vmem:[%s2289 + $0x40] sm:$0xff]
      %v2299 = vld [vmem:[%s2289 + $0x48] sm:$0xff]
      %v2300 = vld [vmem:[%s2289 + $0x50] sm:$0xff]
      %v2301 = vld [vmem:[%s2289 + $0x58] sm:$0xff]
      %v2302 = vld [vmem:[%s2289 + $0x60] sm:$0xff]
      %v2303 = vld [vmem:[%s2289 + $0x68] sm:$0xff]
      %v2304 = vld [vmem:[%s2289 + $0x70] sm:$0xff]
      %v2305 = vld [vmem:[%s2289 + $0x78] sm:$0xff]
      %v2306 = vld [vmem:[%s2289 + $0x80] sm:$0xff]
      %v2307 = vld [vmem:[%s2289 + $0x88] sm:$0xff]
      %v2308 = vld [vmem:[%s2289 + $0x90] sm:$0xff]
      %v2309 = vld [vmem:[%s2289 + $0x98] sm:$0xff]
      %v2310 = vld [vmem:[%s2289 + $0xa0] sm:$0xff]
      %v2311 = vld [vmem:[%s2289 + $0xa8] sm:$0xff]
      %v2312 = vld [vmem:[%s2289 + $0xb0] sm:$0xff]
      %v2313 = vld [vmem:[%s2289 + $0xb8] sm:$0xff]
      %v2314 = vld [vmem:[%s2289 + $0xc0] sm:$0xff]
      %v2315 = vld [vmem:[%s2289 + $0xc8] sm:$0xff]
      %v2316 = vld [vmem:[%s2289 + $0xd0] sm:$0xff]
      %v2317 = vld [vmem:[%s2289 + $0xd8] sm:$0xff]
      %v2318 = vld [vmem:[%s2289 + $0xe0] sm:$0xff]
      %v2319 = vld [vmem:[%s2289 + $0xe8] sm:$0xff]
      %v2320 = vld [vmem:[%s2289 + $0xf0] sm:$0xff]
      %v2321 = vld [vmem:[%s2289 + $0xf8] sm:$0xff]
      %v2322 = vld [vmem:[%s1811 + $0x5] sm:$0x1]
      %v2323 = vlaneseq
      %v2324 = vshrl.u32 %v2323, 7
      %v2325 = vsub.s32 0, %v2324
      %v2326 = vrot.slane %v2322, %v2325
      %v2327 = vmul.f32 %v2290, %v2326
      %v2328 = vmul.f32 %v2291, %v2326
      %v2329 = vmul.f32 %v2292, %v2326
      %v2330 = vmul.f32 %v2293, %v2326
      %v2331 = vmul.f32 %v2294, %v2326
      %v2332 = vmul.f32 %v2295, %v2326
      %v2333 = vmul.f32 %v2296, %v2326
      %v2334 = vmul.f32 %v2297, %v2326
      %v2335 = vmul.f32 %v2298, %v2326
      %v2336 = vmul.f32 %v2299, %v2326
      %v2337 = vmul.f32 %v2300, %v2326
      %v2338 = vmul.f32 %v2301, %v2326
      %v2339 = vmul.f32 %v2302, %v2326
      %v2340 = vmul.f32 %v2303, %v2326
      %v2341 = vmul.f32 %v2304, %v2326
      %v2342 = vmul.f32 %v2305, %v2326
      %v2343 = vmul.f32 %v2306, %v2326
      %v2344 = vmul.f32 %v2307, %v2326
      %v2345 = vmul.f32 %v2308, %v2326
      %v2346 = vmul.f32 %v2309, %v2326
      %v2347 = vmul.f32 %v2310, %v2326
      %v2348 = vmul.f32 %v2311, %v2326
      %v2349 = vmul.f32 %v2312, %v2326
      %v2350 = vmul.f32 %v2313, %v2326
      %v2351 = vmul.f32 %v2314, %v2326
      %v2352 = vmul.f32 %v2315, %v2326
      %v2353 = vmul.f32 %v2316, %v2326
      %v2354 = vmul.f32 %v2317, %v2326
      %v2355 = vmul.f32 %v2318, %v2326
      %v2356 = vmul.f32 %v2319, %v2326
      %v2357 = vmul.f32 %v2320, %v2326
      %v2358 = vmul.f32 %v2321, %v2326
      %v2359 = vadd.f32 %v2257, %v2327
      %v2360 = vadd.f32 %v2258, %v2328
      %v2361 = vadd.f32 %v2259, %v2329
      %v2362 = vadd.f32 %v2260, %v2330
      %v2363 = vadd.f32 %v2261, %v2331
      %v2364 = vadd.f32 %v2262, %v2332
      %v2365 = vadd.f32 %v2263, %v2333
      %v2366 = vadd.f32 %v2264, %v2334
      %v2367 = vadd.f32 %v2265, %v2335
      %v2368 = vadd.f32 %v2266, %v2336
      %v2369 = vadd.f32 %v2267, %v2337
      %v2370 = vadd.f32 %v2268, %v2338
      %v2371 = vadd.f32 %v2269, %v2339
      %v2372 = vadd.f32 %v2270, %v2340
      %v2373 = vadd.f32 %v2271, %v2341
      %v2374 = vadd.f32 %v2272, %v2342
      %v2375 = vadd.f32 %v2273, %v2343
      %v2376 = vadd.f32 %v2274, %v2344
      %v2377 = vadd.f32 %v2275, %v2345
      %v2378 = vadd.f32 %v2276, %v2346
      %v2379 = vadd.f32 %v2277, %v2347
      %v2380 = vadd.f32 %v2278, %v2348
      %v2381 = vadd.f32 %v2279, %v2349
      %v2382 = vadd.f32 %v2280, %v2350
      %v2383 = vadd.f32 %v2281, %v2351
      %v2384 = vadd.f32 %v2282, %v2352
      %v2385 = vadd.f32 %v2283, %v2353
      %v2386 = vadd.f32 %v2284, %v2354
      %v2387 = vadd.f32 %v2285, %v2355
      %v2388 = vadd.f32 %v2286, %v2356
      %v2389 = vadd.f32 %v2287, %v2357
      %v2390 = vadd.f32 %v2288, %v2358
      %s2391 = scalar_lea.vmem [#allocation3], 2128
      %v2392 = vld [vmem:[%s2391] sm:$0xff]
      %v2393 = vld [vmem:[%s2391 + $0x8] sm:$0xff]
      %v2394 = vld [vmem:[%s2391 + $0x10] sm:$0xff]
      %v2395 = vld [vmem:[%s2391 + $0x18] sm:$0xff]
      %v2396 = vld [vmem:[%s2391 + $0x20] sm:$0xff]
      %v2397 = vld [vmem:[%s2391 + $0x28] sm:$0xff]
      %v2398 = vld [vmem:[%s2391 + $0x30] sm:$0xff]
      %v2399 = vld [vmem:[%s2391 + $0x38] sm:$0xff]
      %v2400 = vld [vmem:[%s2391 + $0x40] sm:$0xff]
      %v2401 = vld [vmem:[%s2391 + $0x48] sm:$0xff]
      %v2402 = vld [vmem:[%s2391 + $0x50] sm:$0xff]
      %v2403 = vld [vmem:[%s2391 + $0x58] sm:$0xff]
      %v2404 = vld [vmem:[%s2391 + $0x60] sm:$0xff]
      %v2405 = vld [vmem:[%s2391 + $0x68] sm:$0xff]
      %v2406 = vld [vmem:[%s2391 + $0x70] sm:$0xff]
      %v2407 = vld [vmem:[%s2391 + $0x78] sm:$0xff]
      %v2408 = vld [vmem:[%s2391 + $0x80] sm:$0xff]
      %v2409 = vld [vmem:[%s2391 + $0x88] sm:$0xff]
      %v2410 = vld [vmem:[%s2391 + $0x90] sm:$0xff]
      %v2411 = vld [vmem:[%s2391 + $0x98] sm:$0xff]
      %v2412 = vld [vmem:[%s2391 + $0xa0] sm:$0xff]
      %v2413 = vld [vmem:[%s2391 + $0xa8] sm:$0xff]
      %v2414 = vld [vmem:[%s2391 + $0xb0] sm:$0xff]
      %v2415 = vld [vmem:[%s2391 + $0xb8] sm:$0xff]
      %v2416 = vld [vmem:[%s2391 + $0xc0] sm:$0xff]
      %v2417 = vld [vmem:[%s2391 + $0xc8] sm:$0xff]
      %v2418 = vld [vmem:[%s2391 + $0xd0] sm:$0xff]
      %v2419 = vld [vmem:[%s2391 + $0xd8] sm:$0xff]
      %v2420 = vld [vmem:[%s2391 + $0xe0] sm:$0xff]
      %v2421 = vld [vmem:[%s2391 + $0xe8] sm:$0xff]
      %v2422 = vld [vmem:[%s2391 + $0xf0] sm:$0xff]
      %v2423 = vld [vmem:[%s2391 + $0xf8] sm:$0xff]
      %v2424 = vld [vmem:[%s1811 + $0x6] sm:$0x1]
      %v2425 = vlaneseq
      %v2426 = vshrl.u32 %v2425, 7
      %v2427 = vsub.s32 0, %v2426
      %v2428 = vrot.slane %v2424, %v2427
      %v2429 = vmul.f32 %v2392, %v2428
      %v2430 = vmul.f32 %v2393, %v2428
      %v2431 = vmul.f32 %v2394, %v2428
      %v2432 = vmul.f32 %v2395, %v2428
      %v2433 = vmul.f32 %v2396, %v2428
      %v2434 = vmul.f32 %v2397, %v2428
      %v2435 = vmul.f32 %v2398, %v2428
      %v2436 = vmul.f32 %v2399, %v2428
      %v2437 = vmul.f32 %v2400, %v2428
      %v2438 = vmul.f32 %v2401, %v2428
      %v2439 = vmul.f32 %v2402, %v2428
      %v2440 = vmul.f32 %v2403, %v2428
      %v2441 = vmul.f32 %v2404, %v2428
      %v2442 = vmul.f32 %v2405, %v2428
      %v2443 = vmul.f32 %v2406, %v2428
      %v2444 = vmul.f32 %v2407, %v2428
      %v2445 = vmul.f32 %v2408, %v2428
      %v2446 = vmul.f32 %v2409, %v2428
      %v2447 = vmul.f32 %v2410, %v2428
      %v2448 = vmul.f32 %v2411, %v2428
      %v2449 = vmul.f32 %v2412, %v2428
      %v2450 = vmul.f32 %v2413, %v2428
      %v2451 = vmul.f32 %v2414, %v2428
      %v2452 = vmul.f32 %v2415, %v2428
      %v2453 = vmul.f32 %v2416, %v2428
      %v2454 = vmul.f32 %v2417, %v2428
      %v2455 = vmul.f32 %v2418, %v2428
      %v2456 = vmul.f32 %v2419, %v2428
      %v2457 = vmul.f32 %v2420, %v2428
      %v2458 = vmul.f32 %v2421, %v2428
      %v2459 = vmul.f32 %v2422, %v2428
      %v2460 = vmul.f32 %v2423, %v2428
      %v2461 = vadd.f32 %v2359, %v2429
      %v2462 = vadd.f32 %v2360, %v2430
      %v2463 = vadd.f32 %v2361, %v2431
      %v2464 = vadd.f32 %v2362, %v2432
      %v2465 = vadd.f32 %v2363, %v2433
      %v2466 = vadd.f32 %v2364, %v2434
      %v2467 = vadd.f32 %v2365, %v2435
      %v2468 = vadd.f32 %v2366, %v2436
      %v2469 = vadd.f32 %v2367, %v2437
      %v2470 = vadd.f32 %v2368, %v2438
      %v2471 = vadd.f32 %v2369, %v2439
      %v2472 = vadd.f32 %v2370, %v2440
      %v2473 = vadd.f32 %v2371, %v2441
      %v2474 = vadd.f32 %v2372, %v2442
      %v2475 = vadd.f32 %v2373, %v2443
      %v2476 = vadd.f32 %v2374, %v2444
      %v2477 = vadd.f32 %v2375, %v2445
      %v2478 = vadd.f32 %v2376, %v2446
      %v2479 = vadd.f32 %v2377, %v2447
      %v2480 = vadd.f32 %v2378, %v2448
      %v2481 = vadd.f32 %v2379, %v2449
      %v2482 = vadd.f32 %v2380, %v2450
      %v2483 = vadd.f32 %v2381, %v2451
      %v2484 = vadd.f32 %v2382, %v2452
      %v2485 = vadd.f32 %v2383, %v2453
      %v2486 = vadd.f32 %v2384, %v2454
      %v2487 = vadd.f32 %v2385, %v2455
      %v2488 = vadd.f32 %v2386, %v2456
      %v2489 = vadd.f32 %v2387, %v2457
      %v2490 = vadd.f32 %v2388, %v2458
      %v2491 = vadd.f32 %v2389, %v2459
      %v2492 = vadd.f32 %v2390, %v2460
      %s2493 = scalar_lea.vmem [#allocation3], 32
      %v2494 = vld [vmem:[%s2493] sm:$0xff]
      %v2495 = vld [vmem:[%s2493 + $0x8] sm:$0xff]
      %v2496 = vld [vmem:[%s2493 + $0x10] sm:$0xff]
      %v2497 = vld [vmem:[%s2493 + $0x18] sm:$0xff]
      %v2498 = vld [vmem:[%s2493 + $0x20] sm:$0xff]
      %v2499 = vld [vmem:[%s2493 + $0x28] sm:$0xff]
      %v2500 = vld [vmem:[%s2493 + $0x30] sm:$0xff]
      %v2501 = vld [vmem:[%s2493 + $0x38] sm:$0xff]
      %v2502 = vld [vmem:[%s2493 + $0x40] sm:$0xff]
      %v2503 = vld [vmem:[%s2493 + $0x48] sm:$0xff]
      %v2504 = vld [vmem:[%s2493 + $0x50] sm:$0xff]
      %v2505 = vld [vmem:[%s2493 + $0x58] sm:$0xff]
      %v2506 = vld [vmem:[%s2493 + $0x60] sm:$0xff]
      %v2507 = vld [vmem:[%s2493 + $0x68] sm:$0xff]
      %v2508 = vld [vmem:[%s2493 + $0x70] sm:$0xff]
      %v2509 = vld [vmem:[%s2493 + $0x78] sm:$0xff]
      %v2510 = vld [vmem:[%s2493 + $0x80] sm:$0xff]
      %v2511 = vld [vmem:[%s2493 + $0x88] sm:$0xff]
      %v2512 = vld [vmem:[%s2493 + $0x90] sm:$0xff]
      %v2513 = vld [vmem:[%s2493 + $0x98] sm:$0xff]
      %v2514 = vld [vmem:[%s2493 + $0xa0] sm:$0xff]
      %v2515 = vld [vmem:[%s2493 + $0xa8] sm:$0xff]
      %v2516 = vld [vmem:[%s2493 + $0xb0] sm:$0xff]
      %v2517 = vld [vmem:[%s2493 + $0xb8] sm:$0xff]
      %v2518 = vld [vmem:[%s2493 + $0xc0] sm:$0xff]
      %v2519 = vld [vmem:[%s2493 + $0xc8] sm:$0xff]
      %v2520 = vld [vmem:[%s2493 + $0xd0] sm:$0xff]
      %v2521 = vld [vmem:[%s2493 + $0xd8] sm:$0xff]
      %v2522 = vld [vmem:[%s2493 + $0xe0] sm:$0xff]
      %v2523 = vld [vmem:[%s2493 + $0xe8] sm:$0xff]
      %v2524 = vld [vmem:[%s2493 + $0xf0] sm:$0xff]
      %v2525 = vld [vmem:[%s2493 + $0xf8] sm:$0xff]
      %s2526 = scalar_lea.vmem %s1, 16
      %v2527 = vld [vmem:[%s2526] sm:$0x1]
      %v2528 = vlaneseq
      %v2529 = vshrl.u32 %v2528, 7
      %v2530 = vsub.s32 0, %v2529
      %v2531 = vrot.slane %v2527, %v2530
      %v2532 = vmul.f32 %v2494, %v2531
      %v2533 = vmul.f32 %v2495, %v2531
      %v2534 = vmul.f32 %v2496, %v2531
      %v2535 = vmul.f32 %v2497, %v2531
      %v2536 = vmul.f32 %v2498, %v2531
      %v2537 = vmul.f32 %v2499, %v2531
      %v2538 = vmul.f32 %v2500, %v2531
      %v2539 = vmul.f32 %v2501, %v2531
      %v2540 = vmul.f32 %v2502, %v2531
      %v2541 = vmul.f32 %v2503, %v2531
      %v2542 = vmul.f32 %v2504, %v2531
      %v2543 = vmul.f32 %v2505, %v2531
      %v2544 = vmul.f32 %v2506, %v2531
      %v2545 = vmul.f32 %v2507, %v2531
      %v2546 = vmul.f32 %v2508, %v2531
      %v2547 = vmul.f32 %v2509, %v2531
      %v2548 = vmul.f32 %v2510, %v2531
      %v2549 = vmul.f32 %v2511, %v2531
      %v2550 = vmul.f32 %v2512, %v2531
      %v2551 = vmul.f32 %v2513, %v2531
      %v2552 = vmul.f32 %v2514, %v2531
      %v2553 = vmul.f32 %v2515, %v2531
      %v2554 = vmul.f32 %v2516, %v2531
      %v2555 = vmul.f32 %v2517, %v2531
      %v2556 = vmul.f32 %v2518, %v2531
      %v2557 = vmul.f32 %v2519, %v2531
      %v2558 = vmul.f32 %v2520, %v2531
      %v2559 = vmul.f32 %v2521, %v2531
      %v2560 = vmul.f32 %v2522, %v2531
      %v2561 = vmul.f32 %v2523, %v2531
      %v2562 = vmul.f32 %v2524, %v2531
      %v2563 = vmul.f32 %v2525, %v2531
      %v2564 = vadd.f32 %v2461, %v2532
      %v2565 = vadd.f32 %v2462, %v2533
      %v2566 = vadd.f32 %v2463, %v2534
      %v2567 = vadd.f32 %v2464, %v2535
      %v2568 = vadd.f32 %v2465, %v2536
      %v2569 = vadd.f32 %v2466, %v2537
      %v2570 = vadd.f32 %v2467, %v2538
      %v2571 = vadd.f32 %v2468, %v2539
      %v2572 = vadd.f32 %v2469, %v2540
      %v2573 = vadd.f32 %v2470, %v2541
      %v2574 = vadd.f32 %v2471, %v2542
      %v2575 = vadd.f32 %v2472, %v2543
      %v2576 = vadd.f32 %v2473, %v2544
      %v2577 = vadd.f32 %v2474, %v2545
      %v2578 = vadd.f32 %v2475, %v2546
      %v2579 = vadd.f32 %v2476, %v2547
      %v2580 = vadd.f32 %v2477, %v2548
      %v2581 = vadd.f32 %v2478, %v2549
      %v2582 = vadd.f32 %v2479, %v2550
      %v2583 = vadd.f32 %v2480, %v2551
      %v2584 = vadd.f32 %v2481, %v2552
      %v2585 = vadd.f32 %v2482, %v2553
      %v2586 = vadd.f32 %v2483, %v2554
      %v2587 = vadd.f32 %v2484, %v2555
      %v2588 = vadd.f32 %v2485, %v2556
      %v2589 = vadd.f32 %v2486, %v2557
      %v2590 = vadd.f32 %v2487, %v2558
      %v2591 = vadd.f32 %v2488, %v2559
      %v2592 = vadd.f32 %v2489, %v2560
      %v2593 = vadd.f32 %v2490, %v2561
      %v2594 = vadd.f32 %v2491, %v2562
      %v2595 = vadd.f32 %v2492, %v2563
      %s2596 = scalar_lea.vmem [#allocation3], 384
      %v2597 = vld [vmem:[%s2596] sm:$0xff]
      %v2598 = vld [vmem:[%s2596 + $0x8] sm:$0xff]
      %v2599 = vld [vmem:[%s2596 + $0x10] sm:$0xff]
      %v2600 = vld [vmem:[%s2596 + $0x18] sm:$0xff]
      %v2601 = vld [vmem:[%s2596 + $0x20] sm:$0xff]
      %v2602 = vld [vmem:[%s2596 + $0x28] sm:$0xff]
      %v2603 = vld [vmem:[%s2596 + $0x30] sm:$0xff]
      %v2604 = vld [vmem:[%s2596 + $0x38] sm:$0xff]
      %v2605 = vld [vmem:[%s2596 + $0x40] sm:$0xff]
      %v2606 = vld [vmem:[%s2596 + $0x48] sm:$0xff]
      %v2607 = vld [vmem:[%s2596 + $0x50] sm:$0xff]
      %v2608 = vld [vmem:[%s2596 + $0x58] sm:$0xff]
      %v2609 = vld [vmem:[%s2596 + $0x60] sm:$0xff]
      %v2610 = vld [vmem:[%s2596 + $0x68] sm:$0xff]
      %v2611 = vld [vmem:[%s2596 + $0x70] sm:$0xff]
      %v2612 = vld [vmem:[%s2596 + $0x78] sm:$0xff]
      %v2613 = vld [vmem:[%s2596 + $0x80] sm:$0xff]
      %v2614 = vld [vmem:[%s2596 + $0x88] sm:$0xff]
      %v2615 = vld [vmem:[%s2596 + $0x90] sm:$0xff]
      %v2616 = vld [vmem:[%s2596 + $0x98] sm:$0xff]
      %v2617 = vld [vmem:[%s2596 + $0xa0] sm:$0xff]
      %v2618 = vld [vmem:[%s2596 + $0xa8] sm:$0xff]
      %v2619 = vld [vmem:[%s2596 + $0xb0] sm:$0xff]
      %v2620 = vld [vmem:[%s2596 + $0xb8] sm:$0xff]
      %v2621 = vld [vmem:[%s2596 + $0xc0] sm:$0xff]
      %v2622 = vld [vmem:[%s2596 + $0xc8] sm:$0xff]
      %v2623 = vld [vmem:[%s2596 + $0xd0] sm:$0xff]
      %v2624 = vld [vmem:[%s2596 + $0xd8] sm:$0xff]
      %v2625 = vld [vmem:[%s2596 + $0xe0] sm:$0xff]
      %v2626 = vld [vmem:[%s2596 + $0xe8] sm:$0xff]
      %v2627 = vld [vmem:[%s2596 + $0xf0] sm:$0xff]
      %v2628 = vld [vmem:[%s2596 + $0xf8] sm:$0xff]
      %v2629 = vld [vmem:[%s2526 + $0x1] sm:$0x1]
      %v2630 = vlaneseq
      %v2631 = vshrl.u32 %v2630, 7
      %v2632 = vsub.s32 0, %v2631
      %v2633 = vrot.slane %v2629, %v2632
      %v2634 = vmul.f32 %v2597, %v2633
      %v2635 = vmul.f32 %v2598, %v2633
      %v2636 = vmul.f32 %v2599, %v2633
      %v2637 = vmul.f32 %v2600, %v2633
      %v2638 = vmul.f32 %v2601, %v2633
      %v2639 = vmul.f32 %v2602, %v2633
      %v2640 = vmul.f32 %v2603, %v2633
      %v2641 = vmul.f32 %v2604, %v2633
      %v2642 = vmul.f32 %v2605, %v2633
      %v2643 = vmul.f32 %v2606, %v2633
      %v2644 = vmul.f32 %v2607, %v2633
      %v2645 = vmul.f32 %v2608, %v2633
      %v2646 = vmul.f32 %v2609, %v2633
      %v2647 = vmul.f32 %v2610, %v2633
      %v2648 = vmul.f32 %v2611, %v2633
      %v2649 = vmul.f32 %v2612, %v2633
      %v2650 = vmul.f32 %v2613, %v2633
      %v2651 = vmul.f32 %v2614, %v2633
      %v2652 = vmul.f32 %v2615, %v2633
      %v2653 = vmul.f32 %v2616, %v2633
      %v2654 = vmul.f32 %v2617, %v2633
      %v2655 = vmul.f32 %v2618, %v2633
      %v2656 = vmul.f32 %v2619, %v2633
      %v2657 = vmul.f32 %v2620, %v2633
      %v2658 = vmul.f32 %v2621, %v2633
      %v2659 = vmul.f32 %v2622, %v2633
      %v2660 = vmul.f32 %v2623, %v2633
      %v2661 = vmul.f32 %v2624, %v2633
      %v2662 = vmul.f32 %v2625, %v2633
      %v2663 = vmul.f32 %v2626, %v2633
      %v2664 = vmul.f32 %v2627, %v2633
      %v2665 = vmul.f32 %v2628, %v2633
      %v2666 = vadd.f32 %v2564, %v2634
      %v2667 = vadd.f32 %v2565, %v2635
      %v2668 = vadd.f32 %v2566, %v2636
      %v2669 = vadd.f32 %v2567, %v2637
      %v2670 = vadd.f32 %v2568, %v2638
      %v2671 = vadd.f32 %v2569, %v2639
      %v2672 = vadd.f32 %v2570, %v2640
      %v2673 = vadd.f32 %v2571, %v2641
      %v2674 = vadd.f32 %v2572, %v2642
      %v2675 = vadd.f32 %v2573, %v2643
      %v2676 = vadd.f32 %v2574, %v2644
      %v2677 = vadd.f32 %v2575, %v2645
      %v2678 = vadd.f32 %v2576, %v2646
      %v2679 = vadd.f32 %v2577, %v2647
      %v2680 = vadd.f32 %v2578, %v2648
      %v2681 = vadd.f32 %v2579, %v2649
      %v2682 = vadd.f32 %v2580, %v2650
      %v2683 = vadd.f32 %v2581, %v2651
      %v2684 = vadd.f32 %v2582, %v2652
      %v2685 = vadd.f32 %v2583, %v2653
      %v2686 = vadd.f32 %v2584, %v2654
      %v2687 = vadd.f32 %v2585, %v2655
      %v2688 = vadd.f32 %v2586, %v2656
      %v2689 = vadd.f32 %v2587, %v2657
      %v2690 = vadd.f32 %v2588, %v2658
      %v2691 = vadd.f32 %v2589, %v2659
      %v2692 = vadd.f32 %v2590, %v2660
      %v2693 = vadd.f32 %v2591, %v2661
      %v2694 = vadd.f32 %v2592, %v2662
      %v2695 = vadd.f32 %v2593, %v2663
      %v2696 = vadd.f32 %v2594, %v2664
      %v2697 = vadd.f32 %v2595, %v2665
      %s2698 = scalar_lea.vmem [#allocation3], 736
      %v2699 = vld [vmem:[%s2698] sm:$0xff]
      %v2700 = vld [vmem:[%s2698 + $0x8] sm:$0xff]
      %v2701 = vld [vmem:[%s2698 + $0x10] sm:$0xff]
      %v2702 = vld [vmem:[%s2698 + $0x18] sm:$0xff]
      %v2703 = vld [vmem:[%s2698 + $0x20] sm:$0xff]
      %v2704 = vld [vmem:[%s2698 + $0x28] sm:$0xff]
      %v2705 = vld [vmem:[%s2698 + $0x30] sm:$0xff]
      %v2706 = vld [vmem:[%s2698 + $0x38] sm:$0xff]
      %v2707 = vld [vmem:[%s2698 + $0x40] sm:$0xff]
      %v2708 = vld [vmem:[%s2698 + $0x48] sm:$0xff]
      %v2709 = vld [vmem:[%s2698 + $0x50] sm:$0xff]
      %v2710 = vld [vmem:[%s2698 + $0x58] sm:$0xff]
      %v2711 = vld [vmem:[%s2698 + $0x60] sm:$0xff]
      %v2712 = vld [vmem:[%s2698 + $0x68] sm:$0xff]
      %v2713 = vld [vmem:[%s2698 + $0x70] sm:$0xff]
      %v2714 = vld [vmem:[%s2698 + $0x78] sm:$0xff]
      %v2715 = vld [vmem:[%s2698 + $0x80] sm:$0xff]
      %v2716 = vld [vmem:[%s2698 + $0x88] sm:$0xff]
      %v2717 = vld [vmem:[%s2698 + $0x90] sm:$0xff]
      %v2718 = vld [vmem:[%s2698 + $0x98] sm:$0xff]
      %v2719 = vld [vmem:[%s2698 + $0xa0] sm:$0xff]
      %v2720 = vld [vmem:[%s2698 + $0xa8] sm:$0xff]
      %v2721 = vld [vmem:[%s2698 + $0xb0] sm:$0xff]
      %v2722 = vld [vmem:[%s2698 + $0xb8] sm:$0xff]
      %v2723 = vld [vmem:[%s2698 + $0xc0] sm:$0xff]
      %v2724 = vld [vmem:[%s2698 + $0xc8] sm:$0xff]
      %v2725 = vld [vmem:[%s2698 + $0xd0] sm:$0xff]
      %v2726 = vld [vmem:[%s2698 + $0xd8] sm:$0xff]
      %v2727 = vld [vmem:[%s2698 + $0xe0] sm:$0xff]
      %v2728 = vld [vmem:[%s2698 + $0xe8] sm:$0xff]
      %v2729 = vld [vmem:[%s2698 + $0xf0] sm:$0xff]
      %v2730 = vld [vmem:[%s2698 + $0xf8] sm:$0xff]
      %v2731 = vld [vmem:[%s2526 + $0x2] sm:$0x1]
      %v2732 = vlaneseq
      %v2733 = vshrl.u32 %v2732, 7
      %v2734 = vsub.s32 0, %v2733
      %v2735 = vrot.slane %v2731, %v2734
      %v2736 = vmul.f32 %v2699, %v2735
      %v2737 = vmul.f32 %v2700, %v2735
      %v2738 = vmul.f32 %v2701, %v2735
      %v2739 = vmul.f32 %v2702, %v2735
      %v2740 = vmul.f32 %v2703, %v2735
      %v2741 = vmul.f32 %v2704, %v2735
      %v2742 = vmul.f32 %v2705, %v2735
      %v2743 = vmul.f32 %v2706, %v2735
      %v2744 = vmul.f32 %v2707, %v2735
      %v2745 = vmul.f32 %v2708, %v2735
      %v2746 = vmul.f32 %v2709, %v2735
      %v2747 = vmul.f32 %v2710, %v2735
      %v2748 = vmul.f32 %v2711, %v2735
      %v2749 = vmul.f32 %v2712, %v2735
      %v2750 = vmul.f32 %v2713, %v2735
      %v2751 = vmul.f32 %v2714, %v2735
      %v2752 = vmul.f32 %v2715, %v2735
      %v2753 = vmul.f32 %v2716, %v2735
      %v2754 = vmul.f32 %v2717, %v2735
      %v2755 = vmul.f32 %v2718, %v2735
      %v2756 = vmul.f32 %v2719, %v2735
      %v2757 = vmul.f32 %v2720, %v2735
      %v2758 = vmul.f32 %v2721, %v2735
      %v2759 = vmul.f32 %v2722, %v2735
      %v2760 = vmul.f32 %v2723, %v2735
      %v2761 = vmul.f32 %v2724, %v2735
      %v2762 = vmul.f32 %v2725, %v2735
      %v2763 = vmul.f32 %v2726, %v2735
      %v2764 = vmul.f32 %v2727, %v2735
      %v2765 = vmul.f32 %v2728, %v2735
      %v2766 = vmul.f32 %v2729, %v2735
      %v2767 = vmul.f32 %v2730, %v2735
      %v2768 = vadd.f32 %v2666, %v2736
      %v2769 = vadd.f32 %v2667, %v2737
      %v2770 = vadd.f32 %v2668, %v2738
      %v2771 = vadd.f32 %v2669, %v2739
      %v2772 = vadd.f32 %v2670, %v2740
      %v2773 = vadd.f32 %v2671, %v2741
      %v2774 = vadd.f32 %v2672, %v2742
      %v2775 = vadd.f32 %v2673, %v2743
      %v2776 = vadd.f32 %v2674, %v2744
      %v2777 = vadd.f32 %v2675, %v2745
      %v2778 = vadd.f32 %v2676, %v2746
      %v2779 = vadd.f32 %v2677, %v2747
      %v2780 = vadd.f32 %v2678, %v2748
      %v2781 = vadd.f32 %v2679, %v2749
      %v2782 = vadd.f32 %v2680, %v2750
      %v2783 = vadd.f32 %v2681, %v2751
      %v2784 = vadd.f32 %v2682, %v2752
      %v2785 = vadd.f32 %v2683, %v2753
      %v2786 = vadd.f32 %v2684, %v2754
      %v2787 = vadd.f32 %v2685, %v2755
      %v2788 = vadd.f32 %v2686, %v2756
      %v2789 = vadd.f32 %v2687, %v2757
      %v2790 = vadd.f32 %v2688, %v2758
      %v2791 = vadd.f32 %v2689, %v2759
      %v2792 = vadd.f32 %v2690, %v2760
      %v2793 = vadd.f32 %v2691, %v2761
      %v2794 = vadd.f32 %v2692, %v2762
      %v2795 = vadd.f32 %v2693, %v2763
      %v2796 = vadd.f32 %v2694, %v2764
      %v2797 = vadd.f32 %v2695, %v2765
      %v2798 = vadd.f32 %v2696, %v2766
      %v2799 = vadd.f32 %v2697, %v2767
      %s2800 = scalar_lea.vmem [#allocation3], 1088
      %v2801 = vld [vmem:[%s2800] sm:$0xff]
      %v2802 = vld [vmem:[%s2800 + $0x8] sm:$0xff]
      %v2803 = vld [vmem:[%s2800 + $0x10] sm:$0xff]
      %v2804 = vld [vmem:[%s2800 + $0x18] sm:$0xff]
      %v2805 = vld [vmem:[%s2800 + $0x20] sm:$0xff]
      %v2806 = vld [vmem:[%s2800 + $0x28] sm:$0xff]
      %v2807 = vld [vmem:[%s2800 + $0x30] sm:$0xff]
      %v2808 = vld [vmem:[%s2800 + $0x38] sm:$0xff]
      %v2809 = vld [vmem:[%s2800 + $0x40] sm:$0xff]
      %v2810 = vld [vmem:[%s2800 + $0x48] sm:$0xff]
      %v2811 = vld [vmem:[%s2800 + $0x50] sm:$0xff]
      %v2812 = vld [vmem:[%s2800 + $0x58] sm:$0xff]
      %v2813 = vld [vmem:[%s2800 + $0x60] sm:$0xff]
      %v2814 = vld [vmem:[%s2800 + $0x68] sm:$0xff]
      %v2815 = vld [vmem:[%s2800 + $0x70] sm:$0xff]
      %v2816 = vld [vmem:[%s2800 + $0x78] sm:$0xff]
      %v2817 = vld [vmem:[%s2800 + $0x80] sm:$0xff]
      %v2818 = vld [vmem:[%s2800 + $0x88] sm:$0xff]
      %v2819 = vld [vmem:[%s2800 + $0x90] sm:$0xff]
      %v2820 = vld [vmem:[%s2800 + $0x98] sm:$0xff]
      %v2821 = vld [vmem:[%s2800 + $0xa0] sm:$0xff]
      %v2822 = vld [vmem:[%s2800 + $0xa8] sm:$0xff]
      %v2823 = vld [vmem:[%s2800 + $0xb0] sm:$0xff]
      %v2824 = vld [vmem:[%s2800 + $0xb8] sm:$0xff]
      %v2825 = vld [vmem:[%s2800 + $0xc0] sm:$0xff]
      %v2826 = vld [vmem:[%s2800 + $0xc8] sm:$0xff]
      %v2827 = vld [vmem:[%s2800 + $0xd0] sm:$0xff]
      %v2828 = vld [vmem:[%s2800 + $0xd8] sm:$0xff]
      %v2829 = vld [vmem:[%s2800 + $0xe0] sm:$0xff]
      %v2830 = vld [vmem:[%s2800 + $0xe8] sm:$0xff]
      %v2831 = vld [vmem:[%s2800 + $0xf0] sm:$0xff]
      %v2832 = vld [vmem:[%s2800 + $0xf8] sm:$0xff]
      %v2833 = vld [vmem:[%s2526 + $0x3] sm:$0x1]
      %v2834 = vlaneseq
      %v2835 = vshrl.u32 %v2834, 7
      %v2836 = vsub.s32 0, %v2835
      %v2837 = vrot.slane %v2833, %v2836
      %v2838 = vmul.f32 %v2801, %v2837
      %v2839 = vmul.f32 %v2802, %v2837
      %v2840 = vmul.f32 %v2803, %v2837
      %v2841 = vmul.f32 %v2804, %v2837
      %v2842 = vmul.f32 %v2805, %v2837
      %v2843 = vmul.f32 %v2806, %v2837
      %v2844 = vmul.f32 %v2807, %v2837
      %v2845 = vmul.f32 %v2808, %v2837
      %v2846 = vmul.f32 %v2809, %v2837
      %v2847 = vmul.f32 %v2810, %v2837
      %v2848 = vmul.f32 %v2811, %v2837
      %v2849 = vmul.f32 %v2812, %v2837
      %v2850 = vmul.f32 %v2813, %v2837
      %v2851 = vmul.f32 %v2814, %v2837
      %v2852 = vmul.f32 %v2815, %v2837
      %v2853 = vmul.f32 %v2816, %v2837
      %v2854 = vmul.f32 %v2817, %v2837
      %v2855 = vmul.f32 %v2818, %v2837
      %v2856 = vmul.f32 %v2819, %v2837
      %v2857 = vmul.f32 %v2820, %v2837
      %v2858 = vmul.f32 %v2821, %v2837
      %v2859 = vmul.f32 %v2822, %v2837
      %v2860 = vmul.f32 %v2823, %v2837
      %v2861 = vmul.f32 %v2824, %v2837
      %v2862 = vmul.f32 %v2825, %v2837
      %v2863 = vmul.f32 %v2826, %v2837
      %v2864 = vmul.f32 %v2827, %v2837
      %v2865 = vmul.f32 %v2828, %v2837
      %v2866 = vmul.f32 %v2829, %v2837
      %v2867 = vmul.f32 %v2830, %v2837
      %v2868 = vmul.f32 %v2831, %v2837
      %v2869 = vmul.f32 %v2832, %v2837
      %v2870 = vadd.f32 %v2768, %v2838
      %v2871 = vadd.f32 %v2769, %v2839
      %v2872 = vadd.f32 %v2770, %v2840
      %v2873 = vadd.f32 %v2771, %v2841
      %v2874 = vadd.f32 %v2772, %v2842
      %v2875 = vadd.f32 %v2773, %v2843
      %v2876 = vadd.f32 %v2774, %v2844
      %v2877 = vadd.f32 %v2775, %v2845
      %v2878 = vadd.f32 %v2776, %v2846
      %v2879 = vadd.f32 %v2777, %v2847
      %v2880 = vadd.f32 %v2778, %v2848
      %v2881 = vadd.f32 %v2779, %v2849
      %v2882 = vadd.f32 %v2780, %v2850
      %v2883 = vadd.f32 %v2781, %v2851
      %v2884 = vadd.f32 %v2782, %v2852
      %v2885 = vadd.f32 %v2783, %v2853
      %v2886 = vadd.f32 %v2784, %v2854
      %v2887 = vadd.f32 %v2785, %v2855
      %v2888 = vadd.f32 %v2786, %v2856
      %v2889 = vadd.f32 %v2787, %v2857
      %v2890 = vadd.f32 %v2788, %v2858
      %v2891 = vadd.f32 %v2789, %v2859
      %v2892 = vadd.f32 %v2790, %v2860
      %v2893 = vadd.f32 %v2791, %v2861
      %v2894 = vadd.f32 %v2792, %v2862
      %v2895 = vadd.f32 %v2793, %v2863
      %v2896 = vadd.f32 %v2794, %v2864
      %v2897 = vadd.f32 %v2795, %v2865
      %v2898 = vadd.f32 %v2796, %v2866
      %v2899 = vadd.f32 %v2797, %v2867
      %v2900 = vadd.f32 %v2798, %v2868
      %v2901 = vadd.f32 %v2799, %v2869
      %s2902 = scalar_lea.vmem [#allocation3], 1440
      %v2903 = vld [vmem:[%s2902] sm:$0xff]
      %v2904 = vld [vmem:[%s2902 + $0x8] sm:$0xff]
      %v2905 = vld [vmem:[%s2902 + $0x10] sm:$0xff]
      %v2906 = vld [vmem:[%s2902 + $0x18] sm:$0xff]
      %v2907 = vld [vmem:[%s2902 + $0x20] sm:$0xff]
      %v2908 = vld [vmem:[%s2902 + $0x28] sm:$0xff]
      %v2909 = vld [vmem:[%s2902 + $0x30] sm:$0xff]
      %v2910 = vld [vmem:[%s2902 + $0x38] sm:$0xff]
      %v2911 = vld [vmem:[%s2902 + $0x40] sm:$0xff]
      %v2912 = vld [vmem:[%s2902 + $0x48] sm:$0xff]
      %v2913 = vld [vmem:[%s2902 + $0x50] sm:$0xff]
      %v2914 = vld [vmem:[%s2902 + $0x58] sm:$0xff]
      %v2915 = vld [vmem:[%s2902 + $0x60] sm:$0xff]
      %v2916 = vld [vmem:[%s2902 + $0x68] sm:$0xff]
      %v2917 = vld [vmem:[%s2902 + $0x70] sm:$0xff]
      %v2918 = vld [vmem:[%s2902 + $0x78] sm:$0xff]
      %v2919 = vld [vmem:[%s2902 + $0x80] sm:$0xff]
      %v2920 = vld [vmem:[%s2902 + $0x88] sm:$0xff]
      %v2921 = vld [vmem:[%s2902 + $0x90] sm:$0xff]
      %v2922 = vld [vmem:[%s2902 + $0x98] sm:$0xff]
      %v2923 = vld [vmem:[%s2902 + $0xa0] sm:$0xff]
      %v2924 = vld [vmem:[%s2902 + $0xa8] sm:$0xff]
      %v2925 = vld [vmem:[%s2902 + $0xb0] sm:$0xff]
      %v2926 = vld [vmem:[%s2902 + $0xb8] sm:$0xff]
      %v2927 = vld [vmem:[%s2902 + $0xc0] sm:$0xff]
      %v2928 = vld [vmem:[%s2902 + $0xc8] sm:$0xff]
      %v2929 = vld [vmem:[%s2902 + $0xd0] sm:$0xff]
      %v2930 = vld [vmem:[%s2902 + $0xd8] sm:$0xff]
      %v2931 = vld [vmem:[%s2902 + $0xe0] sm:$0xff]
      %v2932 = vld [vmem:[%s2902 + $0xe8] sm:$0xff]
      %v2933 = vld [vmem:[%s2902 + $0xf0] sm:$0xff]
      %v2934 = vld [vmem:[%s2902 + $0xf8] sm:$0xff]
      %v2935 = vld [vmem:[%s2526 + $0x4] sm:$0x1]
      %v2936 = vlaneseq
      %v2937 = vshrl.u32 %v2936, 7
      %v2938 = vsub.s32 0, %v2937
      %v2939 = vrot.slane %v2935, %v2938
      %v2940 = vmul.f32 %v2903, %v2939
      %v2941 = vmul.f32 %v2904, %v2939
      %v2942 = vmul.f32 %v2905, %v2939
      %v2943 = vmul.f32 %v2906, %v2939
      %v2944 = vmul.f32 %v2907, %v2939
      %v2945 = vmul.f32 %v2908, %v2939
      %v2946 = vmul.f32 %v2909, %v2939
      %v2947 = vmul.f32 %v2910, %v2939
      %v2948 = vmul.f32 %v2911, %v2939
      %v2949 = vmul.f32 %v2912, %v2939
      %v2950 = vmul.f32 %v2913, %v2939
      %v2951 = vmul.f32 %v2914, %v2939
      %v2952 = vmul.f32 %v2915, %v2939
      %v2953 = vmul.f32 %v2916, %v2939
      %v2954 = vmul.f32 %v2917, %v2939
      %v2955 = vmul.f32 %v2918, %v2939
      %v2956 = vmul.f32 %v2919, %v2939
      %v2957 = vmul.f32 %v2920, %v2939
      %v2958 = vmul.f32 %v2921, %v2939
      %v2959 = vmul.f32 %v2922, %v2939
      %v2960 = vmul.f32 %v2923, %v2939
      %v2961 = vmul.f32 %v2924, %v2939
      %v2962 = vmul.f32 %v2925, %v2939
      %v2963 = vmul.f32 %v2926, %v2939
      %v2964 = vmul.f32 %v2927, %v2939
      %v2965 = vmul.f32 %v2928, %v2939
      %v2966 = vmul.f32 %v2929, %v2939
      %v2967 = vmul.f32 %v2930, %v2939
      %v2968 = vmul.f32 %v2931, %v2939
      %v2969 = vmul.f32 %v2932, %v2939
      %v2970 = vmul.f32 %v2933, %v2939
      %v2971 = vmul.f32 %v2934, %v2939
      %v2972 = vadd.f32 %v2870, %v2940
      %v2973 = vadd.f32 %v2871, %v2941
      %v2974 = vadd.f32 %v2872, %v2942
      %v2975 = vadd.f32 %v2873, %v2943
      %v2976 = vadd.f32 %v2874, %v2944
      %v2977 = vadd.f32 %v2875, %v2945
      %v2978 = vadd.f32 %v2876, %v2946
      %v2979 = vadd.f32 %v2877, %v2947
      %v2980 = vadd.f32 %v2878, %v2948
      %v2981 = vadd.f32 %v2879, %v2949
      %v2982 = vadd.f32 %v2880, %v2950
      %v2983 = vadd.f32 %v2881, %v2951
      %v2984 = vadd.f32 %v2882, %v2952
      %v2985 = vadd.f32 %v2883, %v2953
      %v2986 = vadd.f32 %v2884, %v2954
      %v2987 = vadd.f32 %v2885, %v2955
      %v2988 = vadd.f32 %v2886, %v2956
      %v2989 = vadd.f32 %v2887, %v2957
      %v2990 = vadd.f32 %v2888, %v2958
      %v2991 = vadd.f32 %v2889, %v2959
      %v2992 = vadd.f32 %v2890, %v2960
      %v2993 = vadd.f32 %v2891, %v2961
      %v2994 = vadd.f32 %v2892, %v2962
      %v2995 = vadd.f32 %v2893, %v2963
      %v2996 = vadd.f32 %v2894, %v2964
      %v2997 = vadd.f32 %v2895, %v2965
      %v2998 = vadd.f32 %v2896, %v2966
      %v2999 = vadd.f32 %v2897, %v2967
      %v3000 = vadd.f32 %v2898, %v2968
      %v3001 = vadd.f32 %v2899, %v2969
      %v3002 = vadd.f32 %v2900, %v2970
      %v3003 = vadd.f32 %v2901, %v2971
      %s3004 = scalar_lea.vmem [#allocation3], 1792
      %v3005 = vld [vmem:[%s3004] sm:$0xff]
      %v3006 = vld [vmem:[%s3004 + $0x8] sm:$0xff]
      %v3007 = vld [vmem:[%s3004 + $0x10] sm:$0xff]
      %v3008 = vld [vmem:[%s3004 + $0x18] sm:$0xff]
      %v3009 = vld [vmem:[%s3004 + $0x20] sm:$0xff]
      %v3010 = vld [vmem:[%s3004 + $0x28] sm:$0xff]
      %v3011 = vld [vmem:[%s3004 + $0x30] sm:$0xff]
      %v3012 = vld [vmem:[%s3004 + $0x38] sm:$0xff]
      %v3013 = vld [vmem:[%s3004 + $0x40] sm:$0xff]
      %v3014 = vld [vmem:[%s3004 + $0x48] sm:$0xff]
      %v3015 = vld [vmem:[%s3004 + $0x50] sm:$0xff]
      %v3016 = vld [vmem:[%s3004 + $0x58] sm:$0xff]
      %v3017 = vld [vmem:[%s3004 + $0x60] sm:$0xff]
      %v3018 = vld [vmem:[%s3004 + $0x68] sm:$0xff]
      %v3019 = vld [vmem:[%s3004 + $0x70] sm:$0xff]
      %v3020 = vld [vmem:[%s3004 + $0x78] sm:$0xff]
      %v3021 = vld [vmem:[%s3004 + $0x80] sm:$0xff]
      %v3022 = vld [vmem:[%s3004 + $0x88] sm:$0xff]
      %v3023 = vld [vmem:[%s3004 + $0x90] sm:$0xff]
      %v3024 = vld [vmem:[%s3004 + $0x98] sm:$0xff]
      %v3025 = vld [vmem:[%s3004 + $0xa0] sm:$0xff]
      %v3026 = vld [vmem:[%s3004 + $0xa8] sm:$0xff]
      %v3027 = vld [vmem:[%s3004 + $0xb0] sm:$0xff]
      %v3028 = vld [vmem:[%s3004 + $0xb8] sm:$0xff]
      %v3029 = vld [vmem:[%s3004 + $0xc0] sm:$0xff]
      %v3030 = vld [vmem:[%s3004 + $0xc8] sm:$0xff]
      %v3031 = vld [vmem:[%s3004 + $0xd0] sm:$0xff]
      %v3032 = vld [vmem:[%s3004 + $0xd8] sm:$0xff]
      %v3033 = vld [vmem:[%s3004 + $0xe0] sm:$0xff]
      %v3034 = vld [vmem:[%s3004 + $0xe8] sm:$0xff]
      %v3035 = vld [vmem:[%s3004 + $0xf0] sm:$0xff]
      %v3036 = vld [vmem:[%s3004 + $0xf8] sm:$0xff]
      %v3037 = vld [vmem:[%s2526 + $0x5] sm:$0x1]
      %v3038 = vlaneseq
      %v3039 = vshrl.u32 %v3038, 7
      %v3040 = vsub.s32 0, %v3039
      %v3041 = vrot.slane %v3037, %v3040
      %v3042 = vmul.f32 %v3005, %v3041
      %v3043 = vmul.f32 %v3006, %v3041
      %v3044 = vmul.f32 %v3007, %v3041
      %v3045 = vmul.f32 %v3008, %v3041
      %v3046 = vmul.f32 %v3009, %v3041
      %v3047 = vmul.f32 %v3010, %v3041
      %v3048 = vmul.f32 %v3011, %v3041
      %v3049 = vmul.f32 %v3012, %v3041
      %v3050 = vmul.f32 %v3013, %v3041
      %v3051 = vmul.f32 %v3014, %v3041
      %v3052 = vmul.f32 %v3015, %v3041
      %v3053 = vmul.f32 %v3016, %v3041
      %v3054 = vmul.f32 %v3017, %v3041
      %v3055 = vmul.f32 %v3018, %v3041
      %v3056 = vmul.f32 %v3019, %v3041
      %v3057 = vmul.f32 %v3020, %v3041
      %v3058 = vmul.f32 %v3021, %v3041
      %v3059 = vmul.f32 %v3022, %v3041
      %v3060 = vmul.f32 %v3023, %v3041
      %v3061 = vmul.f32 %v3024, %v3041
      %v3062 = vmul.f32 %v3025, %v3041
      %v3063 = vmul.f32 %v3026, %v3041
      %v3064 = vmul.f32 %v3027, %v3041
      %v3065 = vmul.f32 %v3028, %v3041
      %v3066 = vmul.f32 %v3029, %v3041
      %v3067 = vmul.f32 %v3030, %v3041
      %v3068 = vmul.f32 %v3031, %v3041
      %v3069 = vmul.f32 %v3032, %v3041
      %v3070 = vmul.f32 %v3033, %v3041
      %v3071 = vmul.f32 %v3034, %v3041
      %v3072 = vmul.f32 %v3035, %v3041
      %v3073 = vmul.f32 %v3036, %v3041
      %v3074 = vadd.f32 %v2972, %v3042
      %v3075 = vadd.f32 %v2973, %v3043
      %v3076 = vadd.f32 %v2974, %v3044
      %v3077 = vadd.f32 %v2975, %v3045
      %v3078 = vadd.f32 %v2976, %v3046
      %v3079 = vadd.f32 %v2977, %v3047
      %v3080 = vadd.f32 %v2978, %v3048
      %v3081 = vadd.f32 %v2979, %v3049
      %v3082 = vadd.f32 %v2980, %v3050
      %v3083 = vadd.f32 %v2981, %v3051
      %v3084 = vadd.f32 %v2982, %v3052
      %v3085 = vadd.f32 %v2983, %v3053
      %v3086 = vadd.f32 %v2984, %v3054
      %v3087 = vadd.f32 %v2985, %v3055
      %v3088 = vadd.f32 %v2986, %v3056
      %v3089 = vadd.f32 %v2987, %v3057
      %v3090 = vadd.f32 %v2988, %v3058
      %v3091 = vadd.f32 %v2989, %v3059
      %v3092 = vadd.f32 %v2990, %v3060
      %v3093 = vadd.f32 %v2991, %v3061
      %v3094 = vadd.f32 %v2992, %v3062
      %v3095 = vadd.f32 %v2993, %v3063
      %v3096 = vadd.f32 %v2994, %v3064
      %v3097 = vadd.f32 %v2995, %v3065
      %v3098 = vadd.f32 %v2996, %v3066
      %v3099 = vadd.f32 %v2997, %v3067
      %v3100 = vadd.f32 %v2998, %v3068
      %v3101 = vadd.f32 %v2999, %v3069
      %v3102 = vadd.f32 %v3000, %v3070
      %v3103 = vadd.f32 %v3001, %v3071
      %v3104 = vadd.f32 %v3002, %v3072
      %v3105 = vadd.f32 %v3003, %v3073
      %s3106 = scalar_lea.vmem [#allocation3], 2144
      %v3107 = vld [vmem:[%s3106] sm:$0xff]
      %v3108 = vld [vmem:[%s3106 + $0x8] sm:$0xff]
      %v3109 = vld [vmem:[%s3106 + $0x10] sm:$0xff]
      %v3110 = vld [vmem:[%s3106 + $0x18] sm:$0xff]
      %v3111 = vld [vmem:[%s3106 + $0x20] sm:$0xff]
      %v3112 = vld [vmem:[%s3106 + $0x28] sm:$0xff]
      %v3113 = vld [vmem:[%s3106 + $0x30] sm:$0xff]
      %v3114 = vld [vmem:[%s3106 + $0x38] sm:$0xff]
      %v3115 = vld [vmem:[%s3106 + $0x40] sm:$0xff]
      %v3116 = vld [vmem:[%s3106 + $0x48] sm:$0xff]
      %v3117 = vld [vmem:[%s3106 + $0x50] sm:$0xff]
      %v3118 = vld [vmem:[%s3106 + $0x58] sm:$0xff]
      %v3119 = vld [vmem:[%s3106 + $0x60] sm:$0xff]
      %v3120 = vld [vmem:[%s3106 + $0x68] sm:$0xff]
      %v3121 = vld [vmem:[%s3106 + $0x70] sm:$0xff]
      %v3122 = vld [vmem:[%s3106 + $0x78] sm:$0xff]
      %v3123 = vld [vmem:[%s3106 + $0x80] sm:$0xff]
      %v3124 = vld [vmem:[%s3106 + $0x88] sm:$0xff]
      %v3125 = vld [vmem:[%s3106 + $0x90] sm:$0xff]
      %v3126 = vld [vmem:[%s3106 + $0x98] sm:$0xff]
      %v3127 = vld [vmem:[%s3106 + $0xa0] sm:$0xff]
      %v3128 = vld [vmem:[%s3106 + $0xa8] sm:$0xff]
      %v3129 = vld [vmem:[%s3106 + $0xb0] sm:$0xff]
      %v3130 = vld [vmem:[%s3106 + $0xb8] sm:$0xff]
      %v3131 = vld [vmem:[%s3106 + $0xc0] sm:$0xff]
      %v3132 = vld [vmem:[%s3106 + $0xc8] sm:$0xff]
      %v3133 = vld [vmem:[%s3106 + $0xd0] sm:$0xff]
      %v3134 = vld [vmem:[%s3106 + $0xd8] sm:$0xff]
      %v3135 = vld [vmem:[%s3106 + $0xe0] sm:$0xff]
      %v3136 = vld [vmem:[%s3106 + $0xe8] sm:$0xff]
      %v3137 = vld [vmem:[%s3106 + $0xf0] sm:$0xff]
      %v3138 = vld [vmem:[%s3106 + $0xf8] sm:$0xff]
      %v3139 = vld [vmem:[%s2526 + $0x6] sm:$0x1]
      %v3140 = vlaneseq
      %v3141 = vshrl.u32 %v3140, 7
      %v3142 = vsub.s32 0, %v3141
      %v3143 = vrot.slane %v3139, %v3142
      %v3144 = vmul.f32 %v3107, %v3143
      %v3145 = vmul.f32 %v3108, %v3143
      %v3146 = vmul.f32 %v3109, %v3143
      %v3147 = vmul.f32 %v3110, %v3143
      %v3148 = vmul.f32 %v3111, %v3143
      %v3149 = vmul.f32 %v3112, %v3143
      %v3150 = vmul.f32 %v3113, %v3143
      %v3151 = vmul.f32 %v3114, %v3143
      %v3152 = vmul.f32 %v3115, %v3143
      %v3153 = vmul.f32 %v3116, %v3143
      %v3154 = vmul.f32 %v3117, %v3143
      %v3155 = vmul.f32 %v3118, %v3143
      %v3156 = vmul.f32 %v3119, %v3143
      %v3157 = vmul.f32 %v3120, %v3143
      %v3158 = vmul.f32 %v3121, %v3143
      %v3159 = vmul.f32 %v3122, %v3143
      %v3160 = vmul.f32 %v3123, %v3143
      %v3161 = vmul.f32 %v3124, %v3143
      %v3162 = vmul.f32 %v3125, %v3143
      %v3163 = vmul.f32 %v3126, %v3143
      %v3164 = vmul.f32 %v3127, %v3143
      %v3165 = vmul.f32 %v3128, %v3143
      %v3166 = vmul.f32 %v3129, %v3143
      %v3167 = vmul.f32 %v3130, %v3143
      %v3168 = vmul.f32 %v3131, %v3143
      %v3169 = vmul.f32 %v3132, %v3143
      %v3170 = vmul.f32 %v3133, %v3143
      %v3171 = vmul.f32 %v3134, %v3143
      %v3172 = vmul.f32 %v3135, %v3143
      %v3173 = vmul.f32 %v3136, %v3143
      %v3174 = vmul.f32 %v3137, %v3143
      %v3175 = vmul.f32 %v3138, %v3143
      %v3176 = vadd.f32 %v3074, %v3144
      %v3177 = vadd.f32 %v3075, %v3145
      %v3178 = vadd.f32 %v3076, %v3146
      %v3179 = vadd.f32 %v3077, %v3147
      %v3180 = vadd.f32 %v3078, %v3148
      %v3181 = vadd.f32 %v3079, %v3149
      %v3182 = vadd.f32 %v3080, %v3150
      %v3183 = vadd.f32 %v3081, %v3151
      %v3184 = vadd.f32 %v3082, %v3152
      %v3185 = vadd.f32 %v3083, %v3153
      %v3186 = vadd.f32 %v3084, %v3154
      %v3187 = vadd.f32 %v3085, %v3155
      %v3188 = vadd.f32 %v3086, %v3156
      %v3189 = vadd.f32 %v3087, %v3157
      %v3190 = vadd.f32 %v3088, %v3158
      %v3191 = vadd.f32 %v3089, %v3159
      %v3192 = vadd.f32 %v3090, %v3160
      %v3193 = vadd.f32 %v3091, %v3161
      %v3194 = vadd.f32 %v3092, %v3162
      %v3195 = vadd.f32 %v3093, %v3163
      %v3196 = vadd.f32 %v3094, %v3164
      %v3197 = vadd.f32 %v3095, %v3165
      %v3198 = vadd.f32 %v3096, %v3166
      %v3199 = vadd.f32 %v3097, %v3167
      %v3200 = vadd.f32 %v3098, %v3168
      %v3201 = vadd.f32 %v3099, %v3169
      %v3202 = vadd.f32 %v3100, %v3170
      %v3203 = vadd.f32 %v3101, %v3171
      %v3204 = vadd.f32 %v3102, %v3172
      %v3205 = vadd.f32 %v3103, %v3173
      %v3206 = vadd.f32 %v3104, %v3174
      %v3207 = vadd.f32 %v3105, %v3175
      %s3208 = scalar_lea.vmem [#allocation3], 48
      %v3209 = vld [vmem:[%s3208] sm:$0xff]
      %v3210 = vld [vmem:[%s3208 + $0x8] sm:$0xff]
      %v3211 = vld [vmem:[%s3208 + $0x10] sm:$0xff]
      %v3212 = vld [vmem:[%s3208 + $0x18] sm:$0xff]
      %v3213 = vld [vmem:[%s3208 + $0x20] sm:$0xff]
      %v3214 = vld [vmem:[%s3208 + $0x28] sm:$0xff]
      %v3215 = vld [vmem:[%s3208 + $0x30] sm:$0xff]
      %v3216 = vld [vmem:[%s3208 + $0x38] sm:$0xff]
      %v3217 = vld [vmem:[%s3208 + $0x40] sm:$0xff]
      %v3218 = vld [vmem:[%s3208 + $0x48] sm:$0xff]
      %v3219 = vld [vmem:[%s3208 + $0x50] sm:$0xff]
      %v3220 = vld [vmem:[%s3208 + $0x58] sm:$0xff]
      %v3221 = vld [vmem:[%s3208 + $0x60] sm:$0xff]
      %v3222 = vld [vmem:[%s3208 + $0x68] sm:$0xff]
      %v3223 = vld [vmem:[%s3208 + $0x70] sm:$0xff]
      %v3224 = vld [vmem:[%s3208 + $0x78] sm:$0xff]
      %v3225 = vld [vmem:[%s3208 + $0x80] sm:$0xff]
      %v3226 = vld [vmem:[%s3208 + $0x88] sm:$0xff]
      %v3227 = vld [vmem:[%s3208 + $0x90] sm:$0xff]
      %v3228 = vld [vmem:[%s3208 + $0x98] sm:$0xff]
      %v3229 = vld [vmem:[%s3208 + $0xa0] sm:$0xff]
      %v3230 = vld [vmem:[%s3208 + $0xa8] sm:$0xff]
      %v3231 = vld [vmem:[%s3208 + $0xb0] sm:$0xff]
      %v3232 = vld [vmem:[%s3208 + $0xb8] sm:$0xff]
      %v3233 = vld [vmem:[%s3208 + $0xc0] sm:$0xff]
      %v3234 = vld [vmem:[%s3208 + $0xc8] sm:$0xff]
      %v3235 = vld [vmem:[%s3208 + $0xd0] sm:$0xff]
      %v3236 = vld [vmem:[%s3208 + $0xd8] sm:$0xff]
      %v3237 = vld [vmem:[%s3208 + $0xe0] sm:$0xff]
      %v3238 = vld [vmem:[%s3208 + $0xe8] sm:$0xff]
      %v3239 = vld [vmem:[%s3208 + $0xf0] sm:$0xff]
      %v3240 = vld [vmem:[%s3208 + $0xf8] sm:$0xff]
      %s3241 = scalar_lea.vmem %s1, 24
      %v3242 = vld [vmem:[%s3241] sm:$0x1]
      %v3243 = vlaneseq
      %v3244 = vshrl.u32 %v3243, 7
      %v3245 = vsub.s32 0, %v3244
      %v3246 = vrot.slane %v3242, %v3245
      %v3247 = vmul.f32 %v3209, %v3246
      %v3248 = vmul.f32 %v3210, %v3246
      %v3249 = vmul.f32 %v3211, %v3246
      %v3250 = vmul.f32 %v3212, %v3246
      %v3251 = vmul.f32 %v3213, %v3246
      %v3252 = vmul.f32 %v3214, %v3246
      %v3253 = vmul.f32 %v3215, %v3246
      %v3254 = vmul.f32 %v3216, %v3246
      %v3255 = vmul.f32 %v3217, %v3246
      %v3256 = vmul.f32 %v3218, %v3246
      %v3257 = vmul.f32 %v3219, %v3246
      %v3258 = vmul.f32 %v3220, %v3246
      %v3259 = vmul.f32 %v3221, %v3246
      %v3260 = vmul.f32 %v3222, %v3246
      %v3261 = vmul.f32 %v3223, %v3246
      %v3262 = vmul.f32 %v3224, %v3246
      %v3263 = vmul.f32 %v3225, %v3246
      %v3264 = vmul.f32 %v3226, %v3246
      %v3265 = vmul.f32 %v3227, %v3246
      %v3266 = vmul.f32 %v3228, %v3246
      %v3267 = vmul.f32 %v3229, %v3246
      %v3268 = vmul.f32 %v3230, %v3246
      %v3269 = vmul.f32 %v3231, %v3246
      %v3270 = vmul.f32 %v3232, %v3246
      %v3271 = vmul.f32 %v3233, %v3246
      %v3272 = vmul.f32 %v3234, %v3246
      %v3273 = vmul.f32 %v3235, %v3246
      %v3274 = vmul.f32 %v3236, %v3246
      %v3275 = vmul.f32 %v3237, %v3246
      %v3276 = vmul.f32 %v3238, %v3246
      %v3277 = vmul.f32 %v3239, %v3246
      %v3278 = vmul.f32 %v3240, %v3246
      %v3279 = vadd.f32 %v3176, %v3247
      %v3280 = vadd.f32 %v3177, %v3248
      %v3281 = vadd.f32 %v3178, %v3249
      %v3282 = vadd.f32 %v3179, %v3250
      %v3283 = vadd.f32 %v3180, %v3251
      %v3284 = vadd.f32 %v3181, %v3252
      %v3285 = vadd.f32 %v3182, %v3253
      %v3286 = vadd.f32 %v3183, %v3254
      %v3287 = vadd.f32 %v3184, %v3255
      %v3288 = vadd.f32 %v3185, %v3256
      %v3289 = vadd.f32 %v3186, %v3257
      %v3290 = vadd.f32 %v3187, %v3258
      %v3291 = vadd.f32 %v3188, %v3259
      %v3292 = vadd.f32 %v3189, %v3260
      %v3293 = vadd.f32 %v3190, %v3261
      %v3294 = vadd.f32 %v3191, %v3262
      %v3295 = vadd.f32 %v3192, %v3263
      %v3296 = vadd.f32 %v3193, %v3264
      %v3297 = vadd.f32 %v3194, %v3265
      %v3298 = vadd.f32 %v3195, %v3266
      %v3299 = vadd.f32 %v3196, %v3267
      %v3300 = vadd.f32 %v3197, %v3268
      %v3301 = vadd.f32 %v3198, %v3269
      %v3302 = vadd.f32 %v3199, %v3270
      %v3303 = vadd.f32 %v3200, %v3271
      %v3304 = vadd.f32 %v3201, %v3272
      %v3305 = vadd.f32 %v3202, %v3273
      %v3306 = vadd.f32 %v3203, %v3274
      %v3307 = vadd.f32 %v3204, %v3275
      %v3308 = vadd.f32 %v3205, %v3276
      %v3309 = vadd.f32 %v3206, %v3277
      %v3310 = vadd.f32 %v3207, %v3278
      %s3311 = scalar_lea.vmem [#allocation3], 400
      %v3312 = vld [vmem:[%s3311] sm:$0xff]
      %v3313 = vld [vmem:[%s3311 + $0x8] sm:$0xff]
      %v3314 = vld [vmem:[%s3311 + $0x10] sm:$0xff]
      %v3315 = vld [vmem:[%s3311 + $0x18] sm:$0xff]
      %v3316 = vld [vmem:[%s3311 + $0x20] sm:$0xff]
      %v3317 = vld [vmem:[%s3311 + $0x28] sm:$0xff]
      %v3318 = vld [vmem:[%s3311 + $0x30] sm:$0xff]
      %v3319 = vld [vmem:[%s3311 + $0x38] sm:$0xff]
      %v3320 = vld [vmem:[%s3311 + $0x40] sm:$0xff]
      %v3321 = vld [vmem:[%s3311 + $0x48] sm:$0xff]
      %v3322 = vld [vmem:[%s3311 + $0x50] sm:$0xff]
      %v3323 = vld [vmem:[%s3311 + $0x58] sm:$0xff]
      %v3324 = vld [vmem:[%s3311 + $0x60] sm:$0xff]
      %v3325 = vld [vmem:[%s3311 + $0x68] sm:$0xff]
      %v3326 = vld [vmem:[%s3311 + $0x70] sm:$0xff]
      %v3327 = vld [vmem:[%s3311 + $0x78] sm:$0xff]
      %v3328 = vld [vmem:[%s3311 + $0x80] sm:$0xff]
      %v3329 = vld [vmem:[%s3311 + $0x88] sm:$0xff]
      %v3330 = vld [vmem:[%s3311 + $0x90] sm:$0xff]
      %v3331 = vld [vmem:[%s3311 + $0x98] sm:$0xff]
      %v3332 = vld [vmem:[%s3311 + $0xa0] sm:$0xff]
      %v3333 = vld [vmem:[%s3311 + $0xa8] sm:$0xff]
      %v3334 = vld [vmem:[%s3311 + $0xb0] sm:$0xff]
      %v3335 = vld [vmem:[%s3311 + $0xb8] sm:$0xff]
      %v3336 = vld [vmem:[%s3311 + $0xc0] sm:$0xff]
      %v3337 = vld [vmem:[%s3311 + $0xc8] sm:$0xff]
      %v3338 = vld [vmem:[%s3311 + $0xd0] sm:$0xff]
      %v3339 = vld [vmem:[%s3311 + $0xd8] sm:$0xff]
      %v3340 = vld [vmem:[%s3311 + $0xe0] sm:$0xff]
      %v3341 = vld [vmem:[%s3311 + $0xe8] sm:$0xff]
      %v3342 = vld [vmem:[%s3311 + $0xf0] sm:$0xff]
      %v3343 = vld [vmem:[%s3311 + $0xf8] sm:$0xff]
      %v3344 = vld [vmem:[%s3241 + $0x1] sm:$0x1]
      %v3345 = vlaneseq
      %v3346 = vshrl.u32 %v3345, 7
      %v3347 = vsub.s32 0, %v3346
      %v3348 = vrot.slane %v3344, %v3347
      %v3349 = vmul.f32 %v3312, %v3348
      %v3350 = vmul.f32 %v3313, %v3348
      %v3351 = vmul.f32 %v3314, %v3348
      %v3352 = vmul.f32 %v3315, %v3348
      %v3353 = vmul.f32 %v3316, %v3348
      %v3354 = vmul.f32 %v3317, %v3348
      %v3355 = vmul.f32 %v3318, %v3348
      %v3356 = vmul.f32 %v3319, %v3348
      %v3357 = vmul.f32 %v3320, %v3348
      %v3358 = vmul.f32 %v3321, %v3348
      %v3359 = vmul.f32 %v3322, %v3348
      %v3360 = vmul.f32 %v3323, %v3348
      %v3361 = vmul.f32 %v3324, %v3348
      %v3362 = vmul.f32 %v3325, %v3348
      %v3363 = vmul.f32 %v3326, %v3348
      %v3364 = vmul.f32 %v3327, %v3348
      %v3365 = vmul.f32 %v3328, %v3348
      %v3366 = vmul.f32 %v3329, %v3348
      %v3367 = vmul.f32 %v3330, %v3348
      %v3368 = vmul.f32 %v3331, %v3348
      %v3369 = vmul.f32 %v3332, %v3348
      %v3370 = vmul.f32 %v3333, %v3348
      %v3371 = vmul.f32 %v3334, %v3348
      %v3372 = vmul.f32 %v3335, %v3348
      %v3373 = vmul.f32 %v3336, %v3348
      %v3374 = vmul.f32 %v3337, %v3348
      %v3375 = vmul.f32 %v3338, %v3348
      %v3376 = vmul.f32 %v3339, %v3348
      %v3377 = vmul.f32 %v3340, %v3348
      %v3378 = vmul.f32 %v3341, %v3348
      %v3379 = vmul.f32 %v3342, %v3348
      %v3380 = vmul.f32 %v3343, %v3348
      %v3381 = vadd.f32 %v3279, %v3349
      %v3382 = vadd.f32 %v3280, %v3350
      %v3383 = vadd.f32 %v3281, %v3351
      %v3384 = vadd.f32 %v3282, %v3352
      %v3385 = vadd.f32 %v3283, %v3353
      %v3386 = vadd.f32 %v3284, %v3354
      %v3387 = vadd.f32 %v3285, %v3355
      %v3388 = vadd.f32 %v3286, %v3356
      %v3389 = vadd.f32 %v3287, %v3357
      %v3390 = vadd.f32 %v3288, %v3358
      %v3391 = vadd.f32 %v3289, %v3359
      %v3392 = vadd.f32 %v3290, %v3360
      %v3393 = vadd.f32 %v3291, %v3361
      %v3394 = vadd.f32 %v3292, %v3362
      %v3395 = vadd.f32 %v3293, %v3363
      %v3396 = vadd.f32 %v3294, %v3364
      %v3397 = vadd.f32 %v3295, %v3365
      %v3398 = vadd.f32 %v3296, %v3366
      %v3399 = vadd.f32 %v3297, %v3367
      %v3400 = vadd.f32 %v3298, %v3368
      %v3401 = vadd.f32 %v3299, %v3369
      %v3402 = vadd.f32 %v3300, %v3370
      %v3403 = vadd.f32 %v3301, %v3371
      %v3404 = vadd.f32 %v3302, %v3372
      %v3405 = vadd.f32 %v3303, %v3373
      %v3406 = vadd.f32 %v3304, %v3374
      %v3407 = vadd.f32 %v3305, %v3375
      %v3408 = vadd.f32 %v3306, %v3376
      %v3409 = vadd.f32 %v3307, %v3377
      %v3410 = vadd.f32 %v3308, %v3378
      %v3411 = vadd.f32 %v3309, %v3379
      %v3412 = vadd.f32 %v3310, %v3380
      %s3413 = scalar_lea.vmem [#allocation3], 752
      %v3414 = vld [vmem:[%s3413] sm:$0xff]
      %v3415 = vld [vmem:[%s3413 + $0x8] sm:$0xff]
      %v3416 = vld [vmem:[%s3413 + $0x10] sm:$0xff]
      %v3417 = vld [vmem:[%s3413 + $0x18] sm:$0xff]
      %v3418 = vld [vmem:[%s3413 + $0x20] sm:$0xff]
      %v3419 = vld [vmem:[%s3413 + $0x28] sm:$0xff]
      %v3420 = vld [vmem:[%s3413 + $0x30] sm:$0xff]
      %v3421 = vld [vmem:[%s3413 + $0x38] sm:$0xff]
      %v3422 = vld [vmem:[%s3413 + $0x40] sm:$0xff]
      %v3423 = vld [vmem:[%s3413 + $0x48] sm:$0xff]
      %v3424 = vld [vmem:[%s3413 + $0x50] sm:$0xff]
      %v3425 = vld [vmem:[%s3413 + $0x58] sm:$0xff]
      %v3426 = vld [vmem:[%s3413 + $0x60] sm:$0xff]
      %v3427 = vld [vmem:[%s3413 + $0x68] sm:$0xff]
      %v3428 = vld [vmem:[%s3413 + $0x70] sm:$0xff]
      %v3429 = vld [vmem:[%s3413 + $0x78] sm:$0xff]
      %v3430 = vld [vmem:[%s3413 + $0x80] sm:$0xff]
      %v3431 = vld [vmem:[%s3413 + $0x88] sm:$0xff]
      %v3432 = vld [vmem:[%s3413 + $0x90] sm:$0xff]
      %v3433 = vld [vmem:[%s3413 + $0x98] sm:$0xff]
      %v3434 = vld [vmem:[%s3413 + $0xa0] sm:$0xff]
      %v3435 = vld [vmem:[%s3413 + $0xa8] sm:$0xff]
      %v3436 = vld [vmem:[%s3413 + $0xb0] sm:$0xff]
      %v3437 = vld [vmem:[%s3413 + $0xb8] sm:$0xff]
      %v3438 = vld [vmem:[%s3413 + $0xc0] sm:$0xff]
      %v3439 = vld [vmem:[%s3413 + $0xc8] sm:$0xff]
      %v3440 = vld [vmem:[%s3413 + $0xd0] sm:$0xff]
      %v3441 = vld [vmem:[%s3413 + $0xd8] sm:$0xff]
      %v3442 = vld [vmem:[%s3413 + $0xe0] sm:$0xff]
      %v3443 = vld [vmem:[%s3413 + $0xe8] sm:$0xff]
      %v3444 = vld [vmem:[%s3413 + $0xf0] sm:$0xff]
      %v3445 = vld [vmem:[%s3413 + $0xf8] sm:$0xff]
      %v3446 = vld [vmem:[%s3241 + $0x2] sm:$0x1]
      %v3447 = vlaneseq
      %v3448 = vshrl.u32 %v3447, 7
      %v3449 = vsub.s32 0, %v3448
      %v3450 = vrot.slane %v3446, %v3449
      %v3451 = vmul.f32 %v3414, %v3450
      %v3452 = vmul.f32 %v3415, %v3450
      %v3453 = vmul.f32 %v3416, %v3450
      %v3454 = vmul.f32 %v3417, %v3450
      %v3455 = vmul.f32 %v3418, %v3450
      %v3456 = vmul.f32 %v3419, %v3450
      %v3457 = vmul.f32 %v3420, %v3450
      %v3458 = vmul.f32 %v3421, %v3450
      %v3459 = vmul.f32 %v3422, %v3450
      %v3460 = vmul.f32 %v3423, %v3450
      %v3461 = vmul.f32 %v3424, %v3450
      %v3462 = vmul.f32 %v3425, %v3450
      %v3463 = vmul.f32 %v3426, %v3450
      %v3464 = vmul.f32 %v3427, %v3450
      %v3465 = vmul.f32 %v3428, %v3450
      %v3466 = vmul.f32 %v3429, %v3450
      %v3467 = vmul.f32 %v3430, %v3450
      %v3468 = vmul.f32 %v3431, %v3450
      %v3469 = vmul.f32 %v3432, %v3450
      %v3470 = vmul.f32 %v3433, %v3450
      %v3471 = vmul.f32 %v3434, %v3450
      %v3472 = vmul.f32 %v3435, %v3450
      %v3473 = vmul.f32 %v3436, %v3450
      %v3474 = vmul.f32 %v3437, %v3450
      %v3475 = vmul.f32 %v3438, %v3450
      %v3476 = vmul.f32 %v3439, %v3450
      %v3477 = vmul.f32 %v3440, %v3450
      %v3478 = vmul.f32 %v3441, %v3450
      %v3479 = vmul.f32 %v3442, %v3450
      %v3480 = vmul.f32 %v3443, %v3450
      %v3481 = vmul.f32 %v3444, %v3450
      %v3482 = vmul.f32 %v3445, %v3450
      %v3483 = vadd.f32 %v3381, %v3451
      %v3484 = vadd.f32 %v3382, %v3452
      %v3485 = vadd.f32 %v3383, %v3453
      %v3486 = vadd.f32 %v3384, %v3454
      %v3487 = vadd.f32 %v3385, %v3455
      %v3488 = vadd.f32 %v3386, %v3456
      %v3489 = vadd.f32 %v3387, %v3457
      %v3490 = vadd.f32 %v3388, %v3458
      %v3491 = vadd.f32 %v3389, %v3459
      %v3492 = vadd.f32 %v3390, %v3460
      %v3493 = vadd.f32 %v3391, %v3461
      %v3494 = vadd.f32 %v3392, %v3462
      %v3495 = vadd.f32 %v3393, %v3463
      %v3496 = vadd.f32 %v3394, %v3464
      %v3497 = vadd.f32 %v3395, %v3465
      %v3498 = vadd.f32 %v3396, %v3466
      %v3499 = vadd.f32 %v3397, %v3467
      %v3500 = vadd.f32 %v3398, %v3468
      %v3501 = vadd.f32 %v3399, %v3469
      %v3502 = vadd.f32 %v3400, %v3470
      %v3503 = vadd.f32 %v3401, %v3471
      %v3504 = vadd.f32 %v3402, %v3472
      %v3505 = vadd.f32 %v3403, %v3473
      %v3506 = vadd.f32 %v3404, %v3474
      %v3507 = vadd.f32 %v3405, %v3475
      %v3508 = vadd.f32 %v3406, %v3476
      %v3509 = vadd.f32 %v3407, %v3477
      %v3510 = vadd.f32 %v3408, %v3478
      %v3511 = vadd.f32 %v3409, %v3479
      %v3512 = vadd.f32 %v3410, %v3480
      %v3513 = vadd.f32 %v3411, %v3481
      %v3514 = vadd.f32 %v3412, %v3482
      %s3515 = scalar_lea.vmem [#allocation3], 1104
      %v3516 = vld [vmem:[%s3515] sm:$0xff]
      %v3517 = vld [vmem:[%s3515 + $0x8] sm:$0xff]
      %v3518 = vld [vmem:[%s3515 + $0x10] sm:$0xff]
      %v3519 = vld [vmem:[%s3515 + $0x18] sm:$0xff]
      %v3520 = vld [vmem:[%s3515 + $0x20] sm:$0xff]
      %v3521 = vld [vmem:[%s3515 + $0x28] sm:$0xff]
      %v3522 = vld [vmem:[%s3515 + $0x30] sm:$0xff]
      %v3523 = vld [vmem:[%s3515 + $0x38] sm:$0xff]
      %v3524 = vld [vmem:[%s3515 + $0x40] sm:$0xff]
      %v3525 = vld [vmem:[%s3515 + $0x48] sm:$0xff]
      %v3526 = vld [vmem:[%s3515 + $0x50] sm:$0xff]
      %v3527 = vld [vmem:[%s3515 + $0x58] sm:$0xff]
      %v3528 = vld [vmem:[%s3515 + $0x60] sm:$0xff]
      %v3529 = vld [vmem:[%s3515 + $0x68] sm:$0xff]
      %v3530 = vld [vmem:[%s3515 + $0x70] sm:$0xff]
      %v3531 = vld [vmem:[%s3515 + $0x78] sm:$0xff]
      %v3532 = vld [vmem:[%s3515 + $0x80] sm:$0xff]
      %v3533 = vld [vmem:[%s3515 + $0x88] sm:$0xff]
      %v3534 = vld [vmem:[%s3515 + $0x90] sm:$0xff]
      %v3535 = vld [vmem:[%s3515 + $0x98] sm:$0xff]
      %v3536 = vld [vmem:[%s3515 + $0xa0] sm:$0xff]
      %v3537 = vld [vmem:[%s3515 + $0xa8] sm:$0xff]
      %v3538 = vld [vmem:[%s3515 + $0xb0] sm:$0xff]
      %v3539 = vld [vmem:[%s3515 + $0xb8] sm:$0xff]
      %v3540 = vld [vmem:[%s3515 + $0xc0] sm:$0xff]
      %v3541 = vld [vmem:[%s3515 + $0xc8] sm:$0xff]
      %v3542 = vld [vmem:[%s3515 + $0xd0] sm:$0xff]
      %v3543 = vld [vmem:[%s3515 + $0xd8] sm:$0xff]
      %v3544 = vld [vmem:[%s3515 + $0xe0] sm:$0xff]
      %v3545 = vld [vmem:[%s3515 + $0xe8] sm:$0xff]
      %v3546 = vld [vmem:[%s3515 + $0xf0] sm:$0xff]
      %v3547 = vld [vmem:[%s3515 + $0xf8] sm:$0xff]
      %v3548 = vld [vmem:[%s3241 + $0x3] sm:$0x1]
      %v3549 = vlaneseq
      %v3550 = vshrl.u32 %v3549, 7
      %v3551 = vsub.s32 0, %v3550
      %v3552 = vrot.slane %v3548, %v3551
      %v3553 = vmul.f32 %v3516, %v3552
      %v3554 = vmul.f32 %v3517, %v3552
      %v3555 = vmul.f32 %v3518, %v3552
      %v3556 = vmul.f32 %v3519, %v3552
      %v3557 = vmul.f32 %v3520, %v3552
      %v3558 = vmul.f32 %v3521, %v3552
      %v3559 = vmul.f32 %v3522, %v3552
      %v3560 = vmul.f32 %v3523, %v3552
      %v3561 = vmul.f32 %v3524, %v3552
      %v3562 = vmul.f32 %v3525, %v3552
      %v3563 = vmul.f32 %v3526, %v3552
      %v3564 = vmul.f32 %v3527, %v3552
      %v3565 = vmul.f32 %v3528, %v3552
      %v3566 = vmul.f32 %v3529, %v3552
      %v3567 = vmul.f32 %v3530, %v3552
      %v3568 = vmul.f32 %v3531, %v3552
      %v3569 = vmul.f32 %v3532, %v3552
      %v3570 = vmul.f32 %v3533, %v3552
      %v3571 = vmul.f32 %v3534, %v3552
      %v3572 = vmul.f32 %v3535, %v3552
      %v3573 = vmul.f32 %v3536, %v3552
      %v3574 = vmul.f32 %v3537, %v3552
      %v3575 = vmul.f32 %v3538, %v3552
      %v3576 = vmul.f32 %v3539, %v3552
      %v3577 = vmul.f32 %v3540, %v3552
      %v3578 = vmul.f32 %v3541, %v3552
      %v3579 = vmul.f32 %v3542, %v3552
      %v3580 = vmul.f32 %v3543, %v3552
      %v3581 = vmul.f32 %v3544, %v3552
      %v3582 = vmul.f32 %v3545, %v3552
      %v3583 = vmul.f32 %v3546, %v3552
      %v3584 = vmul.f32 %v3547, %v3552
      %v3585 = vadd.f32 %v3483, %v3553
      %v3586 = vadd.f32 %v3484, %v3554
      %v3587 = vadd.f32 %v3485, %v3555
      %v3588 = vadd.f32 %v3486, %v3556
      %v3589 = vadd.f32 %v3487, %v3557
      %v3590 = vadd.f32 %v3488, %v3558
      %v3591 = vadd.f32 %v3489, %v3559
      %v3592 = vadd.f32 %v3490, %v3560
      %v3593 = vadd.f32 %v3491, %v3561
      %v3594 = vadd.f32 %v3492, %v3562
      %v3595 = vadd.f32 %v3493, %v3563
      %v3596 = vadd.f32 %v3494, %v3564
      %v3597 = vadd.f32 %v3495, %v3565
      %v3598 = vadd.f32 %v3496, %v3566
      %v3599 = vadd.f32 %v3497, %v3567
      %v3600 = vadd.f32 %v3498, %v3568
      %v3601 = vadd.f32 %v3499, %v3569
      %v3602 = vadd.f32 %v3500, %v3570
      %v3603 = vadd.f32 %v3501, %v3571
      %v3604 = vadd.f32 %v3502, %v3572
      %v3605 = vadd.f32 %v3503, %v3573
      %v3606 = vadd.f32 %v3504, %v3574
      %v3607 = vadd.f32 %v3505, %v3575
      %v3608 = vadd.f32 %v3506, %v3576
      %v3609 = vadd.f32 %v3507, %v3577
      %v3610 = vadd.f32 %v3508, %v3578
      %v3611 = vadd.f32 %v3509, %v3579
      %v3612 = vadd.f32 %v3510, %v3580
      %v3613 = vadd.f32 %v3511, %v3581
      %v3614 = vadd.f32 %v3512, %v3582
      %v3615 = vadd.f32 %v3513, %v3583
      %v3616 = vadd.f32 %v3514, %v3584
      %s3617 = scalar_lea.vmem [#allocation3], 1456
      %v3618 = vld [vmem:[%s3617] sm:$0xff]
      %v3619 = vld [vmem:[%s3617 + $0x8] sm:$0xff]
      %v3620 = vld [vmem:[%s3617 + $0x10] sm:$0xff]
      %v3621 = vld [vmem:[%s3617 + $0x18] sm:$0xff]
      %v3622 = vld [vmem:[%s3617 + $0x20] sm:$0xff]
      %v3623 = vld [vmem:[%s3617 + $0x28] sm:$0xff]
      %v3624 = vld [vmem:[%s3617 + $0x30] sm:$0xff]
      %v3625 = vld [vmem:[%s3617 + $0x38] sm:$0xff]
      %v3626 = vld [vmem:[%s3617 + $0x40] sm:$0xff]
      %v3627 = vld [vmem:[%s3617 + $0x48] sm:$0xff]
      %v3628 = vld [vmem:[%s3617 + $0x50] sm:$0xff]
      %v3629 = vld [vmem:[%s3617 + $0x58] sm:$0xff]
      %v3630 = vld [vmem:[%s3617 + $0x60] sm:$0xff]
      %v3631 = vld [vmem:[%s3617 + $0x68] sm:$0xff]
      %v3632 = vld [vmem:[%s3617 + $0x70] sm:$0xff]
      %v3633 = vld [vmem:[%s3617 + $0x78] sm:$0xff]
      %v3634 = vld [vmem:[%s3617 + $0x80] sm:$0xff]
      %v3635 = vld [vmem:[%s3617 + $0x88] sm:$0xff]
      %v3636 = vld [vmem:[%s3617 + $0x90] sm:$0xff]
      %v3637 = vld [vmem:[%s3617 + $0x98] sm:$0xff]
      %v3638 = vld [vmem:[%s3617 + $0xa0] sm:$0xff]
      %v3639 = vld [vmem:[%s3617 + $0xa8] sm:$0xff]
      %v3640 = vld [vmem:[%s3617 + $0xb0] sm:$0xff]
      %v3641 = vld [vmem:[%s3617 + $0xb8] sm:$0xff]
      %v3642 = vld [vmem:[%s3617 + $0xc0] sm:$0xff]
      %v3643 = vld [vmem:[%s3617 + $0xc8] sm:$0xff]
      %v3644 = vld [vmem:[%s3617 + $0xd0] sm:$0xff]
      %v3645 = vld [vmem:[%s3617 + $0xd8] sm:$0xff]
      %v3646 = vld [vmem:[%s3617 + $0xe0] sm:$0xff]
      %v3647 = vld [vmem:[%s3617 + $0xe8] sm:$0xff]
      %v3648 = vld [vmem:[%s3617 + $0xf0] sm:$0xff]
      %v3649 = vld [vmem:[%s3617 + $0xf8] sm:$0xff]
      %v3650 = vld [vmem:[%s3241 + $0x4] sm:$0x1]
      %v3651 = vlaneseq
      %v3652 = vshrl.u32 %v3651, 7
      %v3653 = vsub.s32 0, %v3652
      %v3654 = vrot.slane %v3650, %v3653
      %v3655 = vmul.f32 %v3618, %v3654
      %v3656 = vmul.f32 %v3619, %v3654
      %v3657 = vmul.f32 %v3620, %v3654
      %v3658 = vmul.f32 %v3621, %v3654
      %v3659 = vmul.f32 %v3622, %v3654
      %v3660 = vmul.f32 %v3623, %v3654
      %v3661 = vmul.f32 %v3624, %v3654
      %v3662 = vmul.f32 %v3625, %v3654
      %v3663 = vmul.f32 %v3626, %v3654
      %v3664 = vmul.f32 %v3627, %v3654
      %v3665 = vmul.f32 %v3628, %v3654
      %v3666 = vmul.f32 %v3629, %v3654
      %v3667 = vmul.f32 %v3630, %v3654
      %v3668 = vmul.f32 %v3631, %v3654
      %v3669 = vmul.f32 %v3632, %v3654
      %v3670 = vmul.f32 %v3633, %v3654
      %v3671 = vmul.f32 %v3634, %v3654
      %v3672 = vmul.f32 %v3635, %v3654
      %v3673 = vmul.f32 %v3636, %v3654
      %v3674 = vmul.f32 %v3637, %v3654
      %v3675 = vmul.f32 %v3638, %v3654
      %v3676 = vmul.f32 %v3639, %v3654
      %v3677 = vmul.f32 %v3640, %v3654
      %v3678 = vmul.f32 %v3641, %v3654
      %v3679 = vmul.f32 %v3642, %v3654
      %v3680 = vmul.f32 %v3643, %v3654
      %v3681 = vmul.f32 %v3644, %v3654
      %v3682 = vmul.f32 %v3645, %v3654
      %v3683 = vmul.f32 %v3646, %v3654
      %v3684 = vmul.f32 %v3647, %v3654
      %v3685 = vmul.f32 %v3648, %v3654
      %v3686 = vmul.f32 %v3649, %v3654
      %v3687 = vadd.f32 %v3585, %v3655
      %v3688 = vadd.f32 %v3586, %v3656
      %v3689 = vadd.f32 %v3587, %v3657
      %v3690 = vadd.f32 %v3588, %v3658
      %v3691 = vadd.f32 %v3589, %v3659
      %v3692 = vadd.f32 %v3590, %v3660
      %v3693 = vadd.f32 %v3591, %v3661
      %v3694 = vadd.f32 %v3592, %v3662
      %v3695 = vadd.f32 %v3593, %v3663
      %v3696 = vadd.f32 %v3594, %v3664
      %v3697 = vadd.f32 %v3595, %v3665
      %v3698 = vadd.f32 %v3596, %v3666
      %v3699 = vadd.f32 %v3597, %v3667
      %v3700 = vadd.f32 %v3598, %v3668
      %v3701 = vadd.f32 %v3599, %v3669
      %v3702 = vadd.f32 %v3600, %v3670
      %v3703 = vadd.f32 %v3601, %v3671
      %v3704 = vadd.f32 %v3602, %v3672
      %v3705 = vadd.f32 %v3603, %v3673
      %v3706 = vadd.f32 %v3604, %v3674
      %v3707 = vadd.f32 %v3605, %v3675
      %v3708 = vadd.f32 %v3606, %v3676
      %v3709 = vadd.f32 %v3607, %v3677
      %v3710 = vadd.f32 %v3608, %v3678
      %v3711 = vadd.f32 %v3609, %v3679
      %v3712 = vadd.f32 %v3610, %v3680
      %v3713 = vadd.f32 %v3611, %v3681
      %v3714 = vadd.f32 %v3612, %v3682
      %v3715 = vadd.f32 %v3613, %v3683
      %v3716 = vadd.f32 %v3614, %v3684
      %v3717 = vadd.f32 %v3615, %v3685
      %v3718 = vadd.f32 %v3616, %v3686
      %s3719 = scalar_lea.vmem [#allocation3], 1808
      %v3720 = vld [vmem:[%s3719] sm:$0xff]
      %v3721 = vld [vmem:[%s3719 + $0x8] sm:$0xff]
      %v3722 = vld [vmem:[%s3719 + $0x10] sm:$0xff]
      %v3723 = vld [vmem:[%s3719 + $0x18] sm:$0xff]
      %v3724 = vld [vmem:[%s3719 + $0x20] sm:$0xff]
      %v3725 = vld [vmem:[%s3719 + $0x28] sm:$0xff]
      %v3726 = vld [vmem:[%s3719 + $0x30] sm:$0xff]
      %v3727 = vld [vmem:[%s3719 + $0x38] sm:$0xff]
      %v3728 = vld [vmem:[%s3719 + $0x40] sm:$0xff]
      %v3729 = vld [vmem:[%s3719 + $0x48] sm:$0xff]
      %v3730 = vld [vmem:[%s3719 + $0x50] sm:$0xff]
      %v3731 = vld [vmem:[%s3719 + $0x58] sm:$0xff]
      %v3732 = vld [vmem:[%s3719 + $0x60] sm:$0xff]
      %v3733 = vld [vmem:[%s3719 + $0x68] sm:$0xff]
      %v3734 = vld [vmem:[%s3719 + $0x70] sm:$0xff]
      %v3735 = vld [vmem:[%s3719 + $0x78] sm:$0xff]
      %v3736 = vld [vmem:[%s3719 + $0x80] sm:$0xff]
      %v3737 = vld [vmem:[%s3719 + $0x88] sm:$0xff]
      %v3738 = vld [vmem:[%s3719 + $0x90] sm:$0xff]
      %v3739 = vld [vmem:[%s3719 + $0x98] sm:$0xff]
      %v3740 = vld [vmem:[%s3719 + $0xa0] sm:$0xff]
      %v3741 = vld [vmem:[%s3719 + $0xa8] sm:$0xff]
      %v3742 = vld [vmem:[%s3719 + $0xb0] sm:$0xff]
      %v3743 = vld [vmem:[%s3719 + $0xb8] sm:$0xff]
      %v3744 = vld [vmem:[%s3719 + $0xc0] sm:$0xff]
      %v3745 = vld [vmem:[%s3719 + $0xc8] sm:$0xff]
      %v3746 = vld [vmem:[%s3719 + $0xd0] sm:$0xff]
      %v3747 = vld [vmem:[%s3719 + $0xd8] sm:$0xff]
      %v3748 = vld [vmem:[%s3719 + $0xe0] sm:$0xff]
      %v3749 = vld [vmem:[%s3719 + $0xe8] sm:$0xff]
      %v3750 = vld [vmem:[%s3719 + $0xf0] sm:$0xff]
      %v3751 = vld [vmem:[%s3719 + $0xf8] sm:$0xff]
      %v3752 = vld [vmem:[%s3241 + $0x5] sm:$0x1]
      %v3753 = vlaneseq
      %v3754 = vshrl.u32 %v3753, 7
      %v3755 = vsub.s32 0, %v3754
      %v3756 = vrot.slane %v3752, %v3755
      %v3757 = vmul.f32 %v3720, %v3756
      %v3758 = vmul.f32 %v3721, %v3756
      %v3759 = vmul.f32 %v3722, %v3756
      %v3760 = vmul.f32 %v3723, %v3756
      %v3761 = vmul.f32 %v3724, %v3756
      %v3762 = vmul.f32 %v3725, %v3756
      %v3763 = vmul.f32 %v3726, %v3756
      %v3764 = vmul.f32 %v3727, %v3756
      %v3765 = vmul.f32 %v3728, %v3756
      %v3766 = vmul.f32 %v3729, %v3756
      %v3767 = vmul.f32 %v3730, %v3756
      %v3768 = vmul.f32 %v3731, %v3756
      %v3769 = vmul.f32 %v3732, %v3756
      %v3770 = vmul.f32 %v3733, %v3756
      %v3771 = vmul.f32 %v3734, %v3756
      %v3772 = vmul.f32 %v3735, %v3756
      %v3773 = vmul.f32 %v3736, %v3756
      %v3774 = vmul.f32 %v3737, %v3756
      %v3775 = vmul.f32 %v3738, %v3756
      %v3776 = vmul.f32 %v3739, %v3756
      %v3777 = vmul.f32 %v3740, %v3756
      %v3778 = vmul.f32 %v3741, %v3756
      %v3779 = vmul.f32 %v3742, %v3756
      %v3780 = vmul.f32 %v3743, %v3756
      %v3781 = vmul.f32 %v3744, %v3756
      %v3782 = vmul.f32 %v3745, %v3756
      %v3783 = vmul.f32 %v3746, %v3756
      %v3784 = vmul.f32 %v3747, %v3756
      %v3785 = vmul.f32 %v3748, %v3756
      %v3786 = vmul.f32 %v3749, %v3756
      %v3787 = vmul.f32 %v3750, %v3756
      %v3788 = vmul.f32 %v3751, %v3756
      %v3789 = vadd.f32 %v3687, %v3757
      %v3790 = vadd.f32 %v3688, %v3758
      %v3791 = vadd.f32 %v3689, %v3759
      %v3792 = vadd.f32 %v3690, %v3760
      %v3793 = vadd.f32 %v3691, %v3761
      %v3794 = vadd.f32 %v3692, %v3762
      %v3795 = vadd.f32 %v3693, %v3763
      %v3796 = vadd.f32 %v3694, %v3764
      %v3797 = vadd.f32 %v3695, %v3765
      %v3798 = vadd.f32 %v3696, %v3766
      %v3799 = vadd.f32 %v3697, %v3767
      %v3800 = vadd.f32 %v3698, %v3768
      %v3801 = vadd.f32 %v3699, %v3769
      %v3802 = vadd.f32 %v3700, %v3770
      %v3803 = vadd.f32 %v3701, %v3771
      %v3804 = vadd.f32 %v3702, %v3772
      %v3805 = vadd.f32 %v3703, %v3773
      %v3806 = vadd.f32 %v3704, %v3774
      %v3807 = vadd.f32 %v3705, %v3775
      %v3808 = vadd.f32 %v3706, %v3776
      %v3809 = vadd.f32 %v3707, %v3777
      %v3810 = vadd.f32 %v3708, %v3778
      %v3811 = vadd.f32 %v3709, %v3779
      %v3812 = vadd.f32 %v3710, %v3780
      %v3813 = vadd.f32 %v3711, %v3781
      %v3814 = vadd.f32 %v3712, %v3782
      %v3815 = vadd.f32 %v3713, %v3783
      %v3816 = vadd.f32 %v3714, %v3784
      %v3817 = vadd.f32 %v3715, %v3785
      %v3818 = vadd.f32 %v3716, %v3786
      %v3819 = vadd.f32 %v3717, %v3787
      %v3820 = vadd.f32 %v3718, %v3788
      %s3821 = scalar_lea.vmem [#allocation3], 2160
      %v3822 = vld [vmem:[%s3821] sm:$0xff]
      %v3823 = vld [vmem:[%s3821 + $0x8] sm:$0xff]
      %v3824 = vld [vmem:[%s3821 + $0x10] sm:$0xff]
      %v3825 = vld [vmem:[%s3821 + $0x18] sm:$0xff]
      %v3826 = vld [vmem:[%s3821 + $0x20] sm:$0xff]
      %v3827 = vld [vmem:[%s3821 + $0x28] sm:$0xff]
      %v3828 = vld [vmem:[%s3821 + $0x30] sm:$0xff]
      %v3829 = vld [vmem:[%s3821 + $0x38] sm:$0xff]
      %v3830 = vld [vmem:[%s3821 + $0x40] sm:$0xff]
      %v3831 = vld [vmem:[%s3821 + $0x48] sm:$0xff]
      %v3832 = vld [vmem:[%s3821 + $0x50] sm:$0xff]
      %v3833 = vld [vmem:[%s3821 + $0x58] sm:$0xff]
      %v3834 = vld [vmem:[%s3821 + $0x60] sm:$0xff]
      %v3835 = vld [vmem:[%s3821 + $0x68] sm:$0xff]
      %v3836 = vld [vmem:[%s3821 + $0x70] sm:$0xff]
      %v3837 = vld [vmem:[%s3821 + $0x78] sm:$0xff]
      %v3838 = vld [vmem:[%s3821 + $0x80] sm:$0xff]
      %v3839 = vld [vmem:[%s3821 + $0x88] sm:$0xff]
      %v3840 = vld [vmem:[%s3821 + $0x90] sm:$0xff]
      %v3841 = vld [vmem:[%s3821 + $0x98] sm:$0xff]
      %v3842 = vld [vmem:[%s3821 + $0xa0] sm:$0xff]
      %v3843 = vld [vmem:[%s3821 + $0xa8] sm:$0xff]
      %v3844 = vld [vmem:[%s3821 + $0xb0] sm:$0xff]
      %v3845 = vld [vmem:[%s3821 + $0xb8] sm:$0xff]
      %v3846 = vld [vmem:[%s3821 + $0xc0] sm:$0xff]
      %v3847 = vld [vmem:[%s3821 + $0xc8] sm:$0xff]
      %v3848 = vld [vmem:[%s3821 + $0xd0] sm:$0xff]
      %v3849 = vld [vmem:[%s3821 + $0xd8] sm:$0xff]
      %v3850 = vld [vmem:[%s3821 + $0xe0] sm:$0xff]
      %v3851 = vld [vmem:[%s3821 + $0xe8] sm:$0xff]
      %v3852 = vld [vmem:[%s3821 + $0xf0] sm:$0xff]
      %v3853 = vld [vmem:[%s3821 + $0xf8] sm:$0xff]
      %v3854 = vld [vmem:[%s3241 + $0x6] sm:$0x1]
      %v3855 = vlaneseq
      %v3856 = vshrl.u32 %v3855, 7
      %v3857 = vsub.s32 0, %v3856
      %v3858 = vrot.slane %v3854, %v3857
      %v3859 = vmul.f32 %v3822, %v3858
      %v3860 = vmul.f32 %v3823, %v3858
      %v3861 = vmul.f32 %v3824, %v3858
      %v3862 = vmul.f32 %v3825, %v3858
      %v3863 = vmul.f32 %v3826, %v3858
      %v3864 = vmul.f32 %v3827, %v3858
      %v3865 = vmul.f32 %v3828, %v3858
      %v3866 = vmul.f32 %v3829, %v3858
      %v3867 = vmul.f32 %v3830, %v3858
      %v3868 = vmul.f32 %v3831, %v3858
      %v3869 = vmul.f32 %v3832, %v3858
      %v3870 = vmul.f32 %v3833, %v3858
      %v3871 = vmul.f32 %v3834, %v3858
      %v3872 = vmul.f32 %v3835, %v3858
      %v3873 = vmul.f32 %v3836, %v3858
      %v3874 = vmul.f32 %v3837, %v3858
      %v3875 = vmul.f32 %v3838, %v3858
      %v3876 = vmul.f32 %v3839, %v3858
      %v3877 = vmul.f32 %v3840, %v3858
      %v3878 = vmul.f32 %v3841, %v3858
      %v3879 = vmul.f32 %v3842, %v3858
      %v3880 = vmul.f32 %v3843, %v3858
      %v3881 = vmul.f32 %v3844, %v3858
      %v3882 = vmul.f32 %v3845, %v3858
      %v3883 = vmul.f32 %v3846, %v3858
      %v3884 = vmul.f32 %v3847, %v3858
      %v3885 = vmul.f32 %v3848, %v3858
      %v3886 = vmul.f32 %v3849, %v3858
      %v3887 = vmul.f32 %v3850, %v3858
      %v3888 = vmul.f32 %v3851, %v3858
      %v3889 = vmul.f32 %v3852, %v3858
      %v3890 = vmul.f32 %v3853, %v3858
      %v3891 = vadd.f32 %v3789, %v3859
      %v3892 = vadd.f32 %v3790, %v3860
      %v3893 = vadd.f32 %v3791, %v3861
      %v3894 = vadd.f32 %v3792, %v3862
      %v3895 = vadd.f32 %v3793, %v3863
      %v3896 = vadd.f32 %v3794, %v3864
      %v3897 = vadd.f32 %v3795, %v3865
      %v3898 = vadd.f32 %v3796, %v3866
      %v3899 = vadd.f32 %v3797, %v3867
      %v3900 = vadd.f32 %v3798, %v3868
      %v3901 = vadd.f32 %v3799, %v3869
      %v3902 = vadd.f32 %v3800, %v3870
      %v3903 = vadd.f32 %v3801, %v3871
      %v3904 = vadd.f32 %v3802, %v3872
      %v3905 = vadd.f32 %v3803, %v3873
      %v3906 = vadd.f32 %v3804, %v3874
      %v3907 = vadd.f32 %v3805, %v3875
      %v3908 = vadd.f32 %v3806, %v3876
      %v3909 = vadd.f32 %v3807, %v3877
      %v3910 = vadd.f32 %v3808, %v3878
      %v3911 = vadd.f32 %v3809, %v3879
      %v3912 = vadd.f32 %v3810, %v3880
      %v3913 = vadd.f32 %v3811, %v3881
      %v3914 = vadd.f32 %v3812, %v3882
      %v3915 = vadd.f32 %v3813, %v3883
      %v3916 = vadd.f32 %v3814, %v3884
      %v3917 = vadd.f32 %v3815, %v3885
      %v3918 = vadd.f32 %v3816, %v3886
      %v3919 = vadd.f32 %v3817, %v3887
      %v3920 = vadd.f32 %v3818, %v3888
      %v3921 = vadd.f32 %v3819, %v3889
      %v3922 = vadd.f32 %v3820, %v3890
      %s3923 = scalar_lea.vmem [#allocation3], 64
      %v3924 = vld [vmem:[%s3923] sm:$0xff]
      %v3925 = vld [vmem:[%s3923 + $0x8] sm:$0xff]
      %v3926 = vld [vmem:[%s3923 + $0x10] sm:$0xff]
      %v3927 = vld [vmem:[%s3923 + $0x18] sm:$0xff]
      %v3928 = vld [vmem:[%s3923 + $0x20] sm:$0xff]
      %v3929 = vld [vmem:[%s3923 + $0x28] sm:$0xff]
      %v3930 = vld [vmem:[%s3923 + $0x30] sm:$0xff]
      %v3931 = vld [vmem:[%s3923 + $0x38] sm:$0xff]
      %v3932 = vld [vmem:[%s3923 + $0x40] sm:$0xff]
      %v3933 = vld [vmem:[%s3923 + $0x48] sm:$0xff]
      %v3934 = vld [vmem:[%s3923 + $0x50] sm:$0xff]
      %v3935 = vld [vmem:[%s3923 + $0x58] sm:$0xff]
      %v3936 = vld [vmem:[%s3923 + $0x60] sm:$0xff]
      %v3937 = vld [vmem:[%s3923 + $0x68] sm:$0xff]
      %v3938 = vld [vmem:[%s3923 + $0x70] sm:$0xff]
      %v3939 = vld [vmem:[%s3923 + $0x78] sm:$0xff]
      %v3940 = vld [vmem:[%s3923 + $0x80] sm:$0xff]
      %v3941 = vld [vmem:[%s3923 + $0x88] sm:$0xff]
      %v3942 = vld [vmem:[%s3923 + $0x90] sm:$0xff]
      %v3943 = vld [vmem:[%s3923 + $0x98] sm:$0xff]
      %v3944 = vld [vmem:[%s3923 + $0xa0] sm:$0xff]
      %v3945 = vld [vmem:[%s3923 + $0xa8] sm:$0xff]
      %v3946 = vld [vmem:[%s3923 + $0xb0] sm:$0xff]
      %v3947 = vld [vmem:[%s3923 + $0xb8] sm:$0xff]
      %v3948 = vld [vmem:[%s3923 + $0xc0] sm:$0xff]
      %v3949 = vld [vmem:[%s3923 + $0xc8] sm:$0xff]
      %v3950 = vld [vmem:[%s3923 + $0xd0] sm:$0xff]
      %v3951 = vld [vmem:[%s3923 + $0xd8] sm:$0xff]
      %v3952 = vld [vmem:[%s3923 + $0xe0] sm:$0xff]
      %v3953 = vld [vmem:[%s3923 + $0xe8] sm:$0xff]
      %v3954 = vld [vmem:[%s3923 + $0xf0] sm:$0xff]
      %v3955 = vld [vmem:[%s3923 + $0xf8] sm:$0xff]
      %s3956 = scalar_lea.vmem %s1, 32
      %v3957 = vld [vmem:[%s3956] sm:$0x1]
      %v3958 = vlaneseq
      %v3959 = vshrl.u32 %v3958, 7
      %v3960 = vsub.s32 0, %v3959
      %v3961 = vrot.slane %v3957, %v3960
      %v3962 = vmul.f32 %v3924, %v3961
      %v3963 = vmul.f32 %v3925, %v3961
      %v3964 = vmul.f32 %v3926, %v3961
      %v3965 = vmul.f32 %v3927, %v3961
      %v3966 = vmul.f32 %v3928, %v3961
      %v3967 = vmul.f32 %v3929, %v3961
      %v3968 = vmul.f32 %v3930, %v3961
      %v3969 = vmul.f32 %v3931, %v3961
      %v3970 = vmul.f32 %v3932, %v3961
      %v3971 = vmul.f32 %v3933, %v3961
      %v3972 = vmul.f32 %v3934, %v3961
      %v3973 = vmul.f32 %v3935, %v3961
      %v3974 = vmul.f32 %v3936, %v3961
      %v3975 = vmul.f32 %v3937, %v3961
      %v3976 = vmul.f32 %v3938, %v3961
      %v3977 = vmul.f32 %v3939, %v3961
      %v3978 = vmul.f32 %v3940, %v3961
      %v3979 = vmul.f32 %v3941, %v3961
      %v3980 = vmul.f32 %v3942, %v3961
      %v3981 = vmul.f32 %v3943, %v3961
      %v3982 = vmul.f32 %v3944, %v3961
      %v3983 = vmul.f32 %v3945, %v3961
      %v3984 = vmul.f32 %v3946, %v3961
      %v3985 = vmul.f32 %v3947, %v3961
      %v3986 = vmul.f32 %v3948, %v3961
      %v3987 = vmul.f32 %v3949, %v3961
      %v3988 = vmul.f32 %v3950, %v3961
      %v3989 = vmul.f32 %v3951, %v3961
      %v3990 = vmul.f32 %v3952, %v3961
      %v3991 = vmul.f32 %v3953, %v3961
      %v3992 = vmul.f32 %v3954, %v3961
      %v3993 = vmul.f32 %v3955, %v3961
      %v3994 = vadd.f32 %v3891, %v3962
      %v3995 = vadd.f32 %v3892, %v3963
      %v3996 = vadd.f32 %v3893, %v3964
      %v3997 = vadd.f32 %v3894, %v3965
      %v3998 = vadd.f32 %v3895, %v3966
      %v3999 = vadd.f32 %v3896, %v3967
      %v4000 = vadd.f32 %v3897, %v3968
      %v4001 = vadd.f32 %v3898, %v3969
      %v4002 = vadd.f32 %v3899, %v3970
      %v4003 = vadd.f32 %v3900, %v3971
      %v4004 = vadd.f32 %v3901, %v3972
      %v4005 = vadd.f32 %v3902, %v3973
      %v4006 = vadd.f32 %v3903, %v3974
      %v4007 = vadd.f32 %v3904, %v3975
      %v4008 = vadd.f32 %v3905, %v3976
      %v4009 = vadd.f32 %v3906, %v3977
      %v4010 = vadd.f32 %v3907, %v3978
      %v4011 = vadd.f32 %v3908, %v3979
      %v4012 = vadd.f32 %v3909, %v3980
      %v4013 = vadd.f32 %v3910, %v3981
      %v4014 = vadd.f32 %v3911, %v3982
      %v4015 = vadd.f32 %v3912, %v3983
      %v4016 = vadd.f32 %v3913, %v3984
      %v4017 = vadd.f32 %v3914, %v3985
      %v4018 = vadd.f32 %v3915, %v3986
      %v4019 = vadd.f32 %v3916, %v3987
      %v4020 = vadd.f32 %v3917, %v3988
      %v4021 = vadd.f32 %v3918, %v3989
      %v4022 = vadd.f32 %v3919, %v3990
      %v4023 = vadd.f32 %v3920, %v3991
      %v4024 = vadd.f32 %v3921, %v3992
      %v4025 = vadd.f32 %v3922, %v3993
      %s4026 = scalar_lea.vmem [#allocation3], 416
      %v4027 = vld [vmem:[%s4026] sm:$0xff]
      %v4028 = vld [vmem:[%s4026 + $0x8] sm:$0xff]
      %v4029 = vld [vmem:[%s4026 + $0x10] sm:$0xff]
      %v4030 = vld [vmem:[%s4026 + $0x18] sm:$0xff]
      %v4031 = vld [vmem:[%s4026 + $0x20] sm:$0xff]
      %v4032 = vld [vmem:[%s4026 + $0x28] sm:$0xff]
      %v4033 = vld [vmem:[%s4026 + $0x30] sm:$0xff]
      %v4034 = vld [vmem:[%s4026 + $0x38] sm:$0xff]
      %v4035 = vld [vmem:[%s4026 + $0x40] sm:$0xff]
      %v4036 = vld [vmem:[%s4026 + $0x48] sm:$0xff]
      %v4037 = vld [vmem:[%s4026 + $0x50] sm:$0xff]
      %v4038 = vld [vmem:[%s4026 + $0x58] sm:$0xff]
      %v4039 = vld [vmem:[%s4026 + $0x60] sm:$0xff]
      %v4040 = vld [vmem:[%s4026 + $0x68] sm:$0xff]
      %v4041 = vld [vmem:[%s4026 + $0x70] sm:$0xff]
      %v4042 = vld [vmem:[%s4026 + $0x78] sm:$0xff]
      %v4043 = vld [vmem:[%s4026 + $0x80] sm:$0xff]
      %v4044 = vld [vmem:[%s4026 + $0x88] sm:$0xff]
      %v4045 = vld [vmem:[%s4026 + $0x90] sm:$0xff]
      %v4046 = vld [vmem:[%s4026 + $0x98] sm:$0xff]
      %v4047 = vld [vmem:[%s4026 + $0xa0] sm:$0xff]
      %v4048 = vld [vmem:[%s4026 + $0xa8] sm:$0xff]
      %v4049 = vld [vmem:[%s4026 + $0xb0] sm:$0xff]
      %v4050 = vld [vmem:[%s4026 + $0xb8] sm:$0xff]
      %v4051 = vld [vmem:[%s4026 + $0xc0] sm:$0xff]
      %v4052 = vld [vmem:[%s4026 + $0xc8] sm:$0xff]
      %v4053 = vld [vmem:[%s4026 + $0xd0] sm:$0xff]
      %v4054 = vld [vmem:[%s4026 + $0xd8] sm:$0xff]
      %v4055 = vld [vmem:[%s4026 + $0xe0] sm:$0xff]
      %v4056 = vld [vmem:[%s4026 + $0xe8] sm:$0xff]
      %v4057 = vld [vmem:[%s4026 + $0xf0] sm:$0xff]
      %v4058 = vld [vmem:[%s4026 + $0xf8] sm:$0xff]
      %v4059 = vld [vmem:[%s3956 + $0x1] sm:$0x1]
      %v4060 = vlaneseq
      %v4061 = vshrl.u32 %v4060, 7
      %v4062 = vsub.s32 0, %v4061
      %v4063 = vrot.slane %v4059, %v4062
      %v4064 = vmul.f32 %v4027, %v4063
      %v4065 = vmul.f32 %v4028, %v4063
      %v4066 = vmul.f32 %v4029, %v4063
      %v4067 = vmul.f32 %v4030, %v4063
      %v4068 = vmul.f32 %v4031, %v4063
      %v4069 = vmul.f32 %v4032, %v4063
      %v4070 = vmul.f32 %v4033, %v4063
      %v4071 = vmul.f32 %v4034, %v4063
      %v4072 = vmul.f32 %v4035, %v4063
      %v4073 = vmul.f32 %v4036, %v4063
      %v4074 = vmul.f32 %v4037, %v4063
      %v4075 = vmul.f32 %v4038, %v4063
      %v4076 = vmul.f32 %v4039, %v4063
      %v4077 = vmul.f32 %v4040, %v4063
      %v4078 = vmul.f32 %v4041, %v4063
      %v4079 = vmul.f32 %v4042, %v4063
      %v4080 = vmul.f32 %v4043, %v4063
      %v4081 = vmul.f32 %v4044, %v4063
      %v4082 = vmul.f32 %v4045, %v4063
      %v4083 = vmul.f32 %v4046, %v4063
      %v4084 = vmul.f32 %v4047, %v4063
      %v4085 = vmul.f32 %v4048, %v4063
      %v4086 = vmul.f32 %v4049, %v4063
      %v4087 = vmul.f32 %v4050, %v4063
      %v4088 = vmul.f32 %v4051, %v4063
      %v4089 = vmul.f32 %v4052, %v4063
      %v4090 = vmul.f32 %v4053, %v4063
      %v4091 = vmul.f32 %v4054, %v4063
      %v4092 = vmul.f32 %v4055, %v4063
      %v4093 = vmul.f32 %v4056, %v4063
      %v4094 = vmul.f32 %v4057, %v4063
      %v4095 = vmul.f32 %v4058, %v4063
      %v4096 = vadd.f32 %v3994, %v4064
      %v4097 = vadd.f32 %v3995, %v4065
      %v4098 = vadd.f32 %v3996, %v4066
      %v4099 = vadd.f32 %v3997, %v4067
      %v4100 = vadd.f32 %v3998, %v4068
      %v4101 = vadd.f32 %v3999, %v4069
      %v4102 = vadd.f32 %v4000, %v4070
      %v4103 = vadd.f32 %v4001, %v4071
      %v4104 = vadd.f32 %v4002, %v4072
      %v4105 = vadd.f32 %v4003, %v4073
      %v4106 = vadd.f32 %v4004, %v4074
      %v4107 = vadd.f32 %v4005, %v4075
      %v4108 = vadd.f32 %v4006, %v4076
      %v4109 = vadd.f32 %v4007, %v4077
      %v4110 = vadd.f32 %v4008, %v4078
      %v4111 = vadd.f32 %v4009, %v4079
      %v4112 = vadd.f32 %v4010, %v4080
      %v4113 = vadd.f32 %v4011, %v4081
      %v4114 = vadd.f32 %v4012, %v4082
      %v4115 = vadd.f32 %v4013, %v4083
      %v4116 = vadd.f32 %v4014, %v4084
      %v4117 = vadd.f32 %v4015, %v4085
      %v4118 = vadd.f32 %v4016, %v4086
      %v4119 = vadd.f32 %v4017, %v4087
      %v4120 = vadd.f32 %v4018, %v4088
      %v4121 = vadd.f32 %v4019, %v4089
      %v4122 = vadd.f32 %v4020, %v4090
      %v4123 = vadd.f32 %v4021, %v4091
      %v4124 = vadd.f32 %v4022, %v4092
      %v4125 = vadd.f32 %v4023, %v4093
      %v4126 = vadd.f32 %v4024, %v4094
      %v4127 = vadd.f32 %v4025, %v4095
      %s4128 = scalar_lea.vmem [#allocation3], 768
      %v4129 = vld [vmem:[%s4128] sm:$0xff]
      %v4130 = vld [vmem:[%s4128 + $0x8] sm:$0xff]
      %v4131 = vld [vmem:[%s4128 + $0x10] sm:$0xff]
      %v4132 = vld [vmem:[%s4128 + $0x18] sm:$0xff]
      %v4133 = vld [vmem:[%s4128 + $0x20] sm:$0xff]
      %v4134 = vld [vmem:[%s4128 + $0x28] sm:$0xff]
      %v4135 = vld [vmem:[%s4128 + $0x30] sm:$0xff]
      %v4136 = vld [vmem:[%s4128 + $0x38] sm:$0xff]
      %v4137 = vld [vmem:[%s4128 + $0x40] sm:$0xff]
      %v4138 = vld [vmem:[%s4128 + $0x48] sm:$0xff]
      %v4139 = vld [vmem:[%s4128 + $0x50] sm:$0xff]
      %v4140 = vld [vmem:[%s4128 + $0x58] sm:$0xff]
      %v4141 = vld [vmem:[%s4128 + $0x60] sm:$0xff]
      %v4142 = vld [vmem:[%s4128 + $0x68] sm:$0xff]
      %v4143 = vld [vmem:[%s4128 + $0x70] sm:$0xff]
      %v4144 = vld [vmem:[%s4128 + $0x78] sm:$0xff]
      %v4145 = vld [vmem:[%s4128 + $0x80] sm:$0xff]
      %v4146 = vld [vmem:[%s4128 + $0x88] sm:$0xff]
      %v4147 = vld [vmem:[%s4128 + $0x90] sm:$0xff]
      %v4148 = vld [vmem:[%s4128 + $0x98] sm:$0xff]
      %v4149 = vld [vmem:[%s4128 + $0xa0] sm:$0xff]
      %v4150 = vld [vmem:[%s4128 + $0xa8] sm:$0xff]
      %v4151 = vld [vmem:[%s4128 + $0xb0] sm:$0xff]
      %v4152 = vld [vmem:[%s4128 + $0xb8] sm:$0xff]
      %v4153 = vld [vmem:[%s4128 + $0xc0] sm:$0xff]
      %v4154 = vld [vmem:[%s4128 + $0xc8] sm:$0xff]
      %v4155 = vld [vmem:[%s4128 + $0xd0] sm:$0xff]
      %v4156 = vld [vmem:[%s4128 + $0xd8] sm:$0xff]
      %v4157 = vld [vmem:[%s4128 + $0xe0] sm:$0xff]
      %v4158 = vld [vmem:[%s4128 + $0xe8] sm:$0xff]
      %v4159 = vld [vmem:[%s4128 + $0xf0] sm:$0xff]
      %v4160 = vld [vmem:[%s4128 + $0xf8] sm:$0xff]
      %v4161 = vld [vmem:[%s3956 + $0x2] sm:$0x1]
      %v4162 = vlaneseq
      %v4163 = vshrl.u32 %v4162, 7
      %v4164 = vsub.s32 0, %v4163
      %v4165 = vrot.slane %v4161, %v4164
      %v4166 = vmul.f32 %v4129, %v4165
      %v4167 = vmul.f32 %v4130, %v4165
      %v4168 = vmul.f32 %v4131, %v4165
      %v4169 = vmul.f32 %v4132, %v4165
      %v4170 = vmul.f32 %v4133, %v4165
      %v4171 = vmul.f32 %v4134, %v4165
      %v4172 = vmul.f32 %v4135, %v4165
      %v4173 = vmul.f32 %v4136, %v4165
      %v4174 = vmul.f32 %v4137, %v4165
      %v4175 = vmul.f32 %v4138, %v4165
      %v4176 = vmul.f32 %v4139, %v4165
      %v4177 = vmul.f32 %v4140, %v4165
      %v4178 = vmul.f32 %v4141, %v4165
      %v4179 = vmul.f32 %v4142, %v4165
      %v4180 = vmul.f32 %v4143, %v4165
      %v4181 = vmul.f32 %v4144, %v4165
      %v4182 = vmul.f32 %v4145, %v4165
      %v4183 = vmul.f32 %v4146, %v4165
      %v4184 = vmul.f32 %v4147, %v4165
      %v4185 = vmul.f32 %v4148, %v4165
      %v4186 = vmul.f32 %v4149, %v4165
      %v4187 = vmul.f32 %v4150, %v4165
      %v4188 = vmul.f32 %v4151, %v4165
      %v4189 = vmul.f32 %v4152, %v4165
      %v4190 = vmul.f32 %v4153, %v4165
      %v4191 = vmul.f32 %v4154, %v4165
      %v4192 = vmul.f32 %v4155, %v4165
      %v4193 = vmul.f32 %v4156, %v4165
      %v4194 = vmul.f32 %v4157, %v4165
      %v4195 = vmul.f32 %v4158, %v4165
      %v4196 = vmul.f32 %v4159, %v4165
      %v4197 = vmul.f32 %v4160, %v4165
      %v4198 = vadd.f32 %v4096, %v4166
      %v4199 = vadd.f32 %v4097, %v4167
      %v4200 = vadd.f32 %v4098, %v4168
      %v4201 = vadd.f32 %v4099, %v4169
      %v4202 = vadd.f32 %v4100, %v4170
      %v4203 = vadd.f32 %v4101, %v4171
      %v4204 = vadd.f32 %v4102, %v4172
      %v4205 = vadd.f32 %v4103, %v4173
      %v4206 = vadd.f32 %v4104, %v4174
      %v4207 = vadd.f32 %v4105, %v4175
      %v4208 = vadd.f32 %v4106, %v4176
      %v4209 = vadd.f32 %v4107, %v4177
      %v4210 = vadd.f32 %v4108, %v4178
      %v4211 = vadd.f32 %v4109, %v4179
      %v4212 = vadd.f32 %v4110, %v4180
      %v4213 = vadd.f32 %v4111, %v4181
      %v4214 = vadd.f32 %v4112, %v4182
      %v4215 = vadd.f32 %v4113, %v4183
      %v4216 = vadd.f32 %v4114, %v4184
      %v4217 = vadd.f32 %v4115, %v4185
      %v4218 = vadd.f32 %v4116, %v4186
      %v4219 = vadd.f32 %v4117, %v4187
      %v4220 = vadd.f32 %v4118, %v4188
      %v4221 = vadd.f32 %v4119, %v4189
      %v4222 = vadd.f32 %v4120, %v4190
      %v4223 = vadd.f32 %v4121, %v4191
      %v4224 = vadd.f32 %v4122, %v4192
      %v4225 = vadd.f32 %v4123, %v4193
      %v4226 = vadd.f32 %v4124, %v4194
      %v4227 = vadd.f32 %v4125, %v4195
      %v4228 = vadd.f32 %v4126, %v4196
      %v4229 = vadd.f32 %v4127, %v4197
      %s4230 = scalar_lea.vmem [#allocation3], 1120
      %v4231 = vld [vmem:[%s4230] sm:$0xff]
      %v4232 = vld [vmem:[%s4230 + $0x8] sm:$0xff]
      %v4233 = vld [vmem:[%s4230 + $0x10] sm:$0xff]
      %v4234 = vld [vmem:[%s4230 + $0x18] sm:$0xff]
      %v4235 = vld [vmem:[%s4230 + $0x20] sm:$0xff]
      %v4236 = vld [vmem:[%s4230 + $0x28] sm:$0xff]
      %v4237 = vld [vmem:[%s4230 + $0x30] sm:$0xff]
      %v4238 = vld [vmem:[%s4230 + $0x38] sm:$0xff]
      %v4239 = vld [vmem:[%s4230 + $0x40] sm:$0xff]
      %v4240 = vld [vmem:[%s4230 + $0x48] sm:$0xff]
      %v4241 = vld [vmem:[%s4230 + $0x50] sm:$0xff]
      %v4242 = vld [vmem:[%s4230 + $0x58] sm:$0xff]
      %v4243 = vld [vmem:[%s4230 + $0x60] sm:$0xff]
      %v4244 = vld [vmem:[%s4230 + $0x68] sm:$0xff]
      %v4245 = vld [vmem:[%s4230 + $0x70] sm:$0xff]
      %v4246 = vld [vmem:[%s4230 + $0x78] sm:$0xff]
      %v4247 = vld [vmem:[%s4230 + $0x80] sm:$0xff]
      %v4248 = vld [vmem:[%s4230 + $0x88] sm:$0xff]
      %v4249 = vld [vmem:[%s4230 + $0x90] sm:$0xff]
      %v4250 = vld [vmem:[%s4230 + $0x98] sm:$0xff]
      %v4251 = vld [vmem:[%s4230 + $0xa0] sm:$0xff]
      %v4252 = vld [vmem:[%s4230 + $0xa8] sm:$0xff]
      %v4253 = vld [vmem:[%s4230 + $0xb0] sm:$0xff]
      %v4254 = vld [vmem:[%s4230 + $0xb8] sm:$0xff]
      %v4255 = vld [vmem:[%s4230 + $0xc0] sm:$0xff]
      %v4256 = vld [vmem:[%s4230 + $0xc8] sm:$0xff]
      %v4257 = vld [vmem:[%s4230 + $0xd0] sm:$0xff]
      %v4258 = vld [vmem:[%s4230 + $0xd8] sm:$0xff]
      %v4259 = vld [vmem:[%s4230 + $0xe0] sm:$0xff]
      %v4260 = vld [vmem:[%s4230 + $0xe8] sm:$0xff]
      %v4261 = vld [vmem:[%s4230 + $0xf0] sm:$0xff]
      %v4262 = vld [vmem:[%s4230 + $0xf8] sm:$0xff]
      %v4263 = vld [vmem:[%s3956 + $0x3] sm:$0x1]
      %v4264 = vlaneseq
      %v4265 = vshrl.u32 %v4264, 7
      %v4266 = vsub.s32 0, %v4265
      %v4267 = vrot.slane %v4263, %v4266
      %v4268 = vmul.f32 %v4231, %v4267
      %v4269 = vmul.f32 %v4232, %v4267
      %v4270 = vmul.f32 %v4233, %v4267
      %v4271 = vmul.f32 %v4234, %v4267
      %v4272 = vmul.f32 %v4235, %v4267
      %v4273 = vmul.f32 %v4236, %v4267
      %v4274 = vmul.f32 %v4237, %v4267
      %v4275 = vmul.f32 %v4238, %v4267
      %v4276 = vmul.f32 %v4239, %v4267
      %v4277 = vmul.f32 %v4240, %v4267
      %v4278 = vmul.f32 %v4241, %v4267
      %v4279 = vmul.f32 %v4242, %v4267
      %v4280 = vmul.f32 %v4243, %v4267
      %v4281 = vmul.f32 %v4244, %v4267
      %v4282 = vmul.f32 %v4245, %v4267
      %v4283 = vmul.f32 %v4246, %v4267
      %v4284 = vmul.f32 %v4247, %v4267
      %v4285 = vmul.f32 %v4248, %v4267
      %v4286 = vmul.f32 %v4249, %v4267
      %v4287 = vmul.f32 %v4250, %v4267
      %v4288 = vmul.f32 %v4251, %v4267
      %v4289 = vmul.f32 %v4252, %v4267
      %v4290 = vmul.f32 %v4253, %v4267
      %v4291 = vmul.f32 %v4254, %v4267
      %v4292 = vmul.f32 %v4255, %v4267
      %v4293 = vmul.f32 %v4256, %v4267
      %v4294 = vmul.f32 %v4257, %v4267
      %v4295 = vmul.f32 %v4258, %v4267
      %v4296 = vmul.f32 %v4259, %v4267
      %v4297 = vmul.f32 %v4260, %v4267
      %v4298 = vmul.f32 %v4261, %v4267
      %v4299 = vmul.f32 %v4262, %v4267
      %v4300 = vadd.f32 %v4198, %v4268
      %v4301 = vadd.f32 %v4199, %v4269
      %v4302 = vadd.f32 %v4200, %v4270
      %v4303 = vadd.f32 %v4201, %v4271
      %v4304 = vadd.f32 %v4202, %v4272
      %v4305 = vadd.f32 %v4203, %v4273
      %v4306 = vadd.f32 %v4204, %v4274
      %v4307 = vadd.f32 %v4205, %v4275
      %v4308 = vadd.f32 %v4206, %v4276
      %v4309 = vadd.f32 %v4207, %v4277
      %v4310 = vadd.f32 %v4208, %v4278
      %v4311 = vadd.f32 %v4209, %v4279
      %v4312 = vadd.f32 %v4210, %v4280
      %v4313 = vadd.f32 %v4211, %v4281
      %v4314 = vadd.f32 %v4212, %v4282
      %v4315 = vadd.f32 %v4213, %v4283
      %v4316 = vadd.f32 %v4214, %v4284
      %v4317 = vadd.f32 %v4215, %v4285
      %v4318 = vadd.f32 %v4216, %v4286
      %v4319 = vadd.f32 %v4217, %v4287
      %v4320 = vadd.f32 %v4218, %v4288
      %v4321 = vadd.f32 %v4219, %v4289
      %v4322 = vadd.f32 %v4220, %v4290
      %v4323 = vadd.f32 %v4221, %v4291
      %v4324 = vadd.f32 %v4222, %v4292
      %v4325 = vadd.f32 %v4223, %v4293
      %v4326 = vadd.f32 %v4224, %v4294
      %v4327 = vadd.f32 %v4225, %v4295
      %v4328 = vadd.f32 %v4226, %v4296
      %v4329 = vadd.f32 %v4227, %v4297
      %v4330 = vadd.f32 %v4228, %v4298
      %v4331 = vadd.f32 %v4229, %v4299
      %s4332 = scalar_lea.vmem [#allocation3], 1472
      %v4333 = vld [vmem:[%s4332] sm:$0xff]
      %v4334 = vld [vmem:[%s4332 + $0x8] sm:$0xff]
      %v4335 = vld [vmem:[%s4332 + $0x10] sm:$0xff]
      %v4336 = vld [vmem:[%s4332 + $0x18] sm:$0xff]
      %v4337 = vld [vmem:[%s4332 + $0x20] sm:$0xff]
      %v4338 = vld [vmem:[%s4332 + $0x28] sm:$0xff]
      %v4339 = vld [vmem:[%s4332 + $0x30] sm:$0xff]
      %v4340 = vld [vmem:[%s4332 + $0x38] sm:$0xff]
      %v4341 = vld [vmem:[%s4332 + $0x40] sm:$0xff]
      %v4342 = vld [vmem:[%s4332 + $0x48] sm:$0xff]
      %v4343 = vld [vmem:[%s4332 + $0x50] sm:$0xff]
      %v4344 = vld [vmem:[%s4332 + $0x58] sm:$0xff]
      %v4345 = vld [vmem:[%s4332 + $0x60] sm:$0xff]
      %v4346 = vld [vmem:[%s4332 + $0x68] sm:$0xff]
      %v4347 = vld [vmem:[%s4332 + $0x70] sm:$0xff]
      %v4348 = vld [vmem:[%s4332 + $0x78] sm:$0xff]
      %v4349 = vld [vmem:[%s4332 + $0x80] sm:$0xff]
      %v4350 = vld [vmem:[%s4332 + $0x88] sm:$0xff]
      %v4351 = vld [vmem:[%s4332 + $0x90] sm:$0xff]
      %v4352 = vld [vmem:[%s4332 + $0x98] sm:$0xff]
      %v4353 = vld [vmem:[%s4332 + $0xa0] sm:$0xff]
      %v4354 = vld [vmem:[%s4332 + $0xa8] sm:$0xff]
      %v4355 = vld [vmem:[%s4332 + $0xb0] sm:$0xff]
      %v4356 = vld [vmem:[%s4332 + $0xb8] sm:$0xff]
      %v4357 = vld [vmem:[%s4332 + $0xc0] sm:$0xff]
      %v4358 = vld [vmem:[%s4332 + $0xc8] sm:$0xff]
      %v4359 = vld [vmem:[%s4332 + $0xd0] sm:$0xff]
      %v4360 = vld [vmem:[%s4332 + $0xd8] sm:$0xff]
      %v4361 = vld [vmem:[%s4332 + $0xe0] sm:$0xff]
      %v4362 = vld [vmem:[%s4332 + $0xe8] sm:$0xff]
      %v4363 = vld [vmem:[%s4332 + $0xf0] sm:$0xff]
      %v4364 = vld [vmem:[%s4332 + $0xf8] sm:$0xff]
      %v4365 = vld [vmem:[%s3956 + $0x4] sm:$0x1]
      %v4366 = vlaneseq
      %v4367 = vshrl.u32 %v4366, 7
      %v4368 = vsub.s32 0, %v4367
      %v4369 = vrot.slane %v4365, %v4368
      %v4370 = vmul.f32 %v4333, %v4369
      %v4371 = vmul.f32 %v4334, %v4369
      %v4372 = vmul.f32 %v4335, %v4369
      %v4373 = vmul.f32 %v4336, %v4369
      %v4374 = vmul.f32 %v4337, %v4369
      %v4375 = vmul.f32 %v4338, %v4369
      %v4376 = vmul.f32 %v4339, %v4369
      %v4377 = vmul.f32 %v4340, %v4369
      %v4378 = vmul.f32 %v4341, %v4369
      %v4379 = vmul.f32 %v4342, %v4369
      %v4380 = vmul.f32 %v4343, %v4369
      %v4381 = vmul.f32 %v4344, %v4369
      %v4382 = vmul.f32 %v4345, %v4369
      %v4383 = vmul.f32 %v4346, %v4369
      %v4384 = vmul.f32 %v4347, %v4369
      %v4385 = vmul.f32 %v4348, %v4369
      %v4386 = vmul.f32 %v4349, %v4369
      %v4387 = vmul.f32 %v4350, %v4369
      %v4388 = vmul.f32 %v4351, %v4369
      %v4389 = vmul.f32 %v4352, %v4369
      %v4390 = vmul.f32 %v4353, %v4369
      %v4391 = vmul.f32 %v4354, %v4369
      %v4392 = vmul.f32 %v4355, %v4369
      %v4393 = vmul.f32 %v4356, %v4369
      %v4394 = vmul.f32 %v4357, %v4369
      %v4395 = vmul.f32 %v4358, %v4369
      %v4396 = vmul.f32 %v4359, %v4369
      %v4397 = vmul.f32 %v4360, %v4369
      %v4398 = vmul.f32 %v4361, %v4369
      %v4399 = vmul.f32 %v4362, %v4369
      %v4400 = vmul.f32 %v4363, %v4369
      %v4401 = vmul.f32 %v4364, %v4369
      %v4402 = vadd.f32 %v4300, %v4370
      %v4403 = vadd.f32 %v4301, %v4371
      %v4404 = vadd.f32 %v4302, %v4372
      %v4405 = vadd.f32 %v4303, %v4373
      %v4406 = vadd.f32 %v4304, %v4374
      %v4407 = vadd.f32 %v4305, %v4375
      %v4408 = vadd.f32 %v4306, %v4376
      %v4409 = vadd.f32 %v4307, %v4377
      %v4410 = vadd.f32 %v4308, %v4378
      %v4411 = vadd.f32 %v4309, %v4379
      %v4412 = vadd.f32 %v4310, %v4380
      %v4413 = vadd.f32 %v4311, %v4381
      %v4414 = vadd.f32 %v4312, %v4382
      %v4415 = vadd.f32 %v4313, %v4383
      %v4416 = vadd.f32 %v4314, %v4384
      %v4417 = vadd.f32 %v4315, %v4385
      %v4418 = vadd.f32 %v4316, %v4386
      %v4419 = vadd.f32 %v4317, %v4387
      %v4420 = vadd.f32 %v4318, %v4388
      %v4421 = vadd.f32 %v4319, %v4389
      %v4422 = vadd.f32 %v4320, %v4390
      %v4423 = vadd.f32 %v4321, %v4391
      %v4424 = vadd.f32 %v4322, %v4392
      %v4425 = vadd.f32 %v4323, %v4393
      %v4426 = vadd.f32 %v4324, %v4394
      %v4427 = vadd.f32 %v4325, %v4395
      %v4428 = vadd.f32 %v4326, %v4396
      %v4429 = vadd.f32 %v4327, %v4397
      %v4430 = vadd.f32 %v4328, %v4398
      %v4431 = vadd.f32 %v4329, %v4399
      %v4432 = vadd.f32 %v4330, %v4400
      %v4433 = vadd.f32 %v4331, %v4401
      %s4434 = scalar_lea.vmem [#allocation3], 1824
      %v4435 = vld [vmem:[%s4434] sm:$0xff]
      %v4436 = vld [vmem:[%s4434 + $0x8] sm:$0xff]
      %v4437 = vld [vmem:[%s4434 + $0x10] sm:$0xff]
      %v4438 = vld [vmem:[%s4434 + $0x18] sm:$0xff]
      %v4439 = vld [vmem:[%s4434 + $0x20] sm:$0xff]
      %v4440 = vld [vmem:[%s4434 + $0x28] sm:$0xff]
      %v4441 = vld [vmem:[%s4434 + $0x30] sm:$0xff]
      %v4442 = vld [vmem:[%s4434 + $0x38] sm:$0xff]
      %v4443 = vld [vmem:[%s4434 + $0x40] sm:$0xff]
      %v4444 = vld [vmem:[%s4434 + $0x48] sm:$0xff]
      %v4445 = vld [vmem:[%s4434 + $0x50] sm:$0xff]
      %v4446 = vld [vmem:[%s4434 + $0x58] sm:$0xff]
      %v4447 = vld [vmem:[%s4434 + $0x60] sm:$0xff]
      %v4448 = vld [vmem:[%s4434 + $0x68] sm:$0xff]
      %v4449 = vld [vmem:[%s4434 + $0x70] sm:$0xff]
      %v4450 = vld [vmem:[%s4434 + $0x78] sm:$0xff]
      %v4451 = vld [vmem:[%s4434 + $0x80] sm:$0xff]
      %v4452 = vld [vmem:[%s4434 + $0x88] sm:$0xff]
      %v4453 = vld [vmem:[%s4434 + $0x90] sm:$0xff]
      %v4454 = vld [vmem:[%s4434 + $0x98] sm:$0xff]
      %v4455 = vld [vmem:[%s4434 + $0xa0] sm:$0xff]
      %v4456 = vld [vmem:[%s4434 + $0xa8] sm:$0xff]
      %v4457 = vld [vmem:[%s4434 + $0xb0] sm:$0xff]
      %v4458 = vld [vmem:[%s4434 + $0xb8] sm:$0xff]
      %v4459 = vld [vmem:[%s4434 + $0xc0] sm:$0xff]
      %v4460 = vld [vmem:[%s4434 + $0xc8] sm:$0xff]
      %v4461 = vld [vmem:[%s4434 + $0xd0] sm:$0xff]
      %v4462 = vld [vmem:[%s4434 + $0xd8] sm:$0xff]
      %v4463 = vld [vmem:[%s4434 + $0xe0] sm:$0xff]
      %v4464 = vld [vmem:[%s4434 + $0xe8] sm:$0xff]
      %v4465 = vld [vmem:[%s4434 + $0xf0] sm:$0xff]
      %v4466 = vld [vmem:[%s4434 + $0xf8] sm:$0xff]
      %v4467 = vld [vmem:[%s3956 + $0x5] sm:$0x1]
      %v4468 = vlaneseq
      %v4469 = vshrl.u32 %v4468, 7
      %v4470 = vsub.s32 0, %v4469
      %v4471 = vrot.slane %v4467, %v4470
      %v4472 = vmul.f32 %v4435, %v4471
      %v4473 = vmul.f32 %v4436, %v4471
      %v4474 = vmul.f32 %v4437, %v4471
      %v4475 = vmul.f32 %v4438, %v4471
      %v4476 = vmul.f32 %v4439, %v4471
      %v4477 = vmul.f32 %v4440, %v4471
      %v4478 = vmul.f32 %v4441, %v4471
      %v4479 = vmul.f32 %v4442, %v4471
      %v4480 = vmul.f32 %v4443, %v4471
      %v4481 = vmul.f32 %v4444, %v4471
      %v4482 = vmul.f32 %v4445, %v4471
      %v4483 = vmul.f32 %v4446, %v4471
      %v4484 = vmul.f32 %v4447, %v4471
      %v4485 = vmul.f32 %v4448, %v4471
      %v4486 = vmul.f32 %v4449, %v4471
      %v4487 = vmul.f32 %v4450, %v4471
      %v4488 = vmul.f32 %v4451, %v4471
      %v4489 = vmul.f32 %v4452, %v4471
      %v4490 = vmul.f32 %v4453, %v4471
      %v4491 = vmul.f32 %v4454, %v4471
      %v4492 = vmul.f32 %v4455, %v4471
      %v4493 = vmul.f32 %v4456, %v4471
      %v4494 = vmul.f32 %v4457, %v4471
      %v4495 = vmul.f32 %v4458, %v4471
      %v4496 = vmul.f32 %v4459, %v4471
      %v4497 = vmul.f32 %v4460, %v4471
      %v4498 = vmul.f32 %v4461, %v4471
      %v4499 = vmul.f32 %v4462, %v4471
      %v4500 = vmul.f32 %v4463, %v4471
      %v4501 = vmul.f32 %v4464, %v4471
      %v4502 = vmul.f32 %v4465, %v4471
      %v4503 = vmul.f32 %v4466, %v4471
      %v4504 = vadd.f32 %v4402, %v4472
      %v4505 = vadd.f32 %v4403, %v4473
      %v4506 = vadd.f32 %v4404, %v4474
      %v4507 = vadd.f32 %v4405, %v4475
      %v4508 = vadd.f32 %v4406, %v4476
      %v4509 = vadd.f32 %v4407, %v4477
      %v4510 = vadd.f32 %v4408, %v4478
      %v4511 = vadd.f32 %v4409, %v4479
      %v4512 = vadd.f32 %v4410, %v4480
      %v4513 = vadd.f32 %v4411, %v4481
      %v4514 = vadd.f32 %v4412, %v4482
      %v4515 = vadd.f32 %v4413, %v4483
      %v4516 = vadd.f32 %v4414, %v4484
      %v4517 = vadd.f32 %v4415, %v4485
      %v4518 = vadd.f32 %v4416, %v4486
      %v4519 = vadd.f32 %v4417, %v4487
      %v4520 = vadd.f32 %v4418, %v4488
      %v4521 = vadd.f32 %v4419, %v4489
      %v4522 = vadd.f32 %v4420, %v4490
      %v4523 = vadd.f32 %v4421, %v4491
      %v4524 = vadd.f32 %v4422, %v4492
      %v4525 = vadd.f32 %v4423, %v4493
      %v4526 = vadd.f32 %v4424, %v4494
      %v4527 = vadd.f32 %v4425, %v4495
      %v4528 = vadd.f32 %v4426, %v4496
      %v4529 = vadd.f32 %v4427, %v4497
      %v4530 = vadd.f32 %v4428, %v4498
      %v4531 = vadd.f32 %v4429, %v4499
      %v4532 = vadd.f32 %v4430, %v4500
      %v4533 = vadd.f32 %v4431, %v4501
      %v4534 = vadd.f32 %v4432, %v4502
      %v4535 = vadd.f32 %v4433, %v4503
      %s4536 = scalar_lea.vmem [#allocation3], 2176
      %v4537 = vld [vmem:[%s4536] sm:$0xff]
      %v4538 = vld [vmem:[%s4536 + $0x8] sm:$0xff]
      %v4539 = vld [vmem:[%s4536 + $0x10] sm:$0xff]
      %v4540 = vld [vmem:[%s4536 + $0x18] sm:$0xff]
      %v4541 = vld [vmem:[%s4536 + $0x20] sm:$0xff]
      %v4542 = vld [vmem:[%s4536 + $0x28] sm:$0xff]
      %v4543 = vld [vmem:[%s4536 + $0x30] sm:$0xff]
      %v4544 = vld [vmem:[%s4536 + $0x38] sm:$0xff]
      %v4545 = vld [vmem:[%s4536 + $0x40] sm:$0xff]
      %v4546 = vld [vmem:[%s4536 + $0x48] sm:$0xff]
      %v4547 = vld [vmem:[%s4536 + $0x50] sm:$0xff]
      %v4548 = vld [vmem:[%s4536 + $0x58] sm:$0xff]
      %v4549 = vld [vmem:[%s4536 + $0x60] sm:$0xff]
      %v4550 = vld [vmem:[%s4536 + $0x68] sm:$0xff]
      %v4551 = vld [vmem:[%s4536 + $0x70] sm:$0xff]
      %v4552 = vld [vmem:[%s4536 + $0x78] sm:$0xff]
      %v4553 = vld [vmem:[%s4536 + $0x80] sm:$0xff]
      %v4554 = vld [vmem:[%s4536 + $0x88] sm:$0xff]
      %v4555 = vld [vmem:[%s4536 + $0x90] sm:$0xff]
      %v4556 = vld [vmem:[%s4536 + $0x98] sm:$0xff]
      %v4557 = vld [vmem:[%s4536 + $0xa0] sm:$0xff]
      %v4558 = vld [vmem:[%s4536 + $0xa8] sm:$0xff]
      %v4559 = vld [vmem:[%s4536 + $0xb0] sm:$0xff]
      %v4560 = vld [vmem:[%s4536 + $0xb8] sm:$0xff]
      %v4561 = vld [vmem:[%s4536 + $0xc0] sm:$0xff]
      %v4562 = vld [vmem:[%s4536 + $0xc8] sm:$0xff]
      %v4563 = vld [vmem:[%s4536 + $0xd0] sm:$0xff]
      %v4564 = vld [vmem:[%s4536 + $0xd8] sm:$0xff]
      %v4565 = vld [vmem:[%s4536 + $0xe0] sm:$0xff]
      %v4566 = vld [vmem:[%s4536 + $0xe8] sm:$0xff]
      %v4567 = vld [vmem:[%s4536 + $0xf0] sm:$0xff]
      %v4568 = vld [vmem:[%s4536 + $0xf8] sm:$0xff]
      %v4569 = vld [vmem:[%s3956 + $0x6] sm:$0x1]
      %v4570 = vlaneseq
      %v4571 = vshrl.u32 %v4570, 7
      %v4572 = vsub.s32 0, %v4571
      %v4573 = vrot.slane %v4569, %v4572
      %v4574 = vmul.f32 %v4537, %v4573
      %v4575 = vmul.f32 %v4538, %v4573
      %v4576 = vmul.f32 %v4539, %v4573
      %v4577 = vmul.f32 %v4540, %v4573
      %v4578 = vmul.f32 %v4541, %v4573
      %v4579 = vmul.f32 %v4542, %v4573
      %v4580 = vmul.f32 %v4543, %v4573
      %v4581 = vmul.f32 %v4544, %v4573
      %v4582 = vmul.f32 %v4545, %v4573
      %v4583 = vmul.f32 %v4546, %v4573
      %v4584 = vmul.f32 %v4547, %v4573
      %v4585 = vmul.f32 %v4548, %v4573
      %v4586 = vmul.f32 %v4549, %v4573
      %v4587 = vmul.f32 %v4550, %v4573
      %v4588 = vmul.f32 %v4551, %v4573
      %v4589 = vmul.f32 %v4552, %v4573
      %v4590 = vmul.f32 %v4553, %v4573
      %v4591 = vmul.f32 %v4554, %v4573
      %v4592 = vmul.f32 %v4555, %v4573
      %v4593 = vmul.f32 %v4556, %v4573
      %v4594 = vmul.f32 %v4557, %v4573
      %v4595 = vmul.f32 %v4558, %v4573
      %v4596 = vmul.f32 %v4559, %v4573
      %v4597 = vmul.f32 %v4560, %v4573
      %v4598 = vmul.f32 %v4561, %v4573
      %v4599 = vmul.f32 %v4562, %v4573
      %v4600 = vmul.f32 %v4563, %v4573
      %v4601 = vmul.f32 %v4564, %v4573
      %v4602 = vmul.f32 %v4565, %v4573
      %v4603 = vmul.f32 %v4566, %v4573
      %v4604 = vmul.f32 %v4567, %v4573
      %v4605 = vmul.f32 %v4568, %v4573
      %v4606 = vadd.f32 %v4504, %v4574
      %v4607 = vadd.f32 %v4505, %v4575
      %v4608 = vadd.f32 %v4506, %v4576
      %v4609 = vadd.f32 %v4507, %v4577
      %v4610 = vadd.f32 %v4508, %v4578
      %v4611 = vadd.f32 %v4509, %v4579
      %v4612 = vadd.f32 %v4510, %v4580
      %v4613 = vadd.f32 %v4511, %v4581
      %v4614 = vadd.f32 %v4512, %v4582
      %v4615 = vadd.f32 %v4513, %v4583
      %v4616 = vadd.f32 %v4514, %v4584
      %v4617 = vadd.f32 %v4515, %v4585
      %v4618 = vadd.f32 %v4516, %v4586
      %v4619 = vadd.f32 %v4517, %v4587
      %v4620 = vadd.f32 %v4518, %v4588
      %v4621 = vadd.f32 %v4519, %v4589
      %v4622 = vadd.f32 %v4520, %v4590
      %v4623 = vadd.f32 %v4521, %v4591
      %v4624 = vadd.f32 %v4522, %v4592
      %v4625 = vadd.f32 %v4523, %v4593
      %v4626 = vadd.f32 %v4524, %v4594
      %v4627 = vadd.f32 %v4525, %v4595
      %v4628 = vadd.f32 %v4526, %v4596
      %v4629 = vadd.f32 %v4527, %v4597
      %v4630 = vadd.f32 %v4528, %v4598
      %v4631 = vadd.f32 %v4529, %v4599
      %v4632 = vadd.f32 %v4530, %v4600
      %v4633 = vadd.f32 %v4531, %v4601
      %v4634 = vadd.f32 %v4532, %v4602
      %v4635 = vadd.f32 %v4533, %v4603
      %v4636 = vadd.f32 %v4534, %v4604
      %v4637 = vadd.f32 %v4535, %v4605
      %s4638 = scalar_lea.vmem [#allocation3], 80
      %v4639 = vld [vmem:[%s4638] sm:$0xff]
      %v4640 = vld [vmem:[%s4638 + $0x8] sm:$0xff]
      %v4641 = vld [vmem:[%s4638 + $0x10] sm:$0xff]
      %v4642 = vld [vmem:[%s4638 + $0x18] sm:$0xff]
      %v4643 = vld [vmem:[%s4638 + $0x20] sm:$0xff]
      %v4644 = vld [vmem:[%s4638 + $0x28] sm:$0xff]
      %v4645 = vld [vmem:[%s4638 + $0x30] sm:$0xff]
      %v4646 = vld [vmem:[%s4638 + $0x38] sm:$0xff]
      %v4647 = vld [vmem:[%s4638 + $0x40] sm:$0xff]
      %v4648 = vld [vmem:[%s4638 + $0x48] sm:$0xff]
      %v4649 = vld [vmem:[%s4638 + $0x50] sm:$0xff]
      %v4650 = vld [vmem:[%s4638 + $0x58] sm:$0xff]
      %v4651 = vld [vmem:[%s4638 + $0x60] sm:$0xff]
      %v4652 = vld [vmem:[%s4638 + $0x68] sm:$0xff]
      %v4653 = vld [vmem:[%s4638 + $0x70] sm:$0xff]
      %v4654 = vld [vmem:[%s4638 + $0x78] sm:$0xff]
      %v4655 = vld [vmem:[%s4638 + $0x80] sm:$0xff]
      %v4656 = vld [vmem:[%s4638 + $0x88] sm:$0xff]
      %v4657 = vld [vmem:[%s4638 + $0x90] sm:$0xff]
      %v4658 = vld [vmem:[%s4638 + $0x98] sm:$0xff]
      %v4659 = vld [vmem:[%s4638 + $0xa0] sm:$0xff]
      %v4660 = vld [vmem:[%s4638 + $0xa8] sm:$0xff]
      %v4661 = vld [vmem:[%s4638 + $0xb0] sm:$0xff]
      %v4662 = vld [vmem:[%s4638 + $0xb8] sm:$0xff]
      %v4663 = vld [vmem:[%s4638 + $0xc0] sm:$0xff]
      %v4664 = vld [vmem:[%s4638 + $0xc8] sm:$0xff]
      %v4665 = vld [vmem:[%s4638 + $0xd0] sm:$0xff]
      %v4666 = vld [vmem:[%s4638 + $0xd8] sm:$0xff]
      %v4667 = vld [vmem:[%s4638 + $0xe0] sm:$0xff]
      %v4668 = vld [vmem:[%s4638 + $0xe8] sm:$0xff]
      %v4669 = vld [vmem:[%s4638 + $0xf0] sm:$0xff]
      %v4670 = vld [vmem:[%s4638 + $0xf8] sm:$0xff]
      %s4671 = scalar_lea.vmem %s1, 40
      %v4672 = vld [vmem:[%s4671] sm:$0x1]
      %v4673 = vlaneseq
      %v4674 = vshrl.u32 %v4673, 7
      %v4675 = vsub.s32 0, %v4674
      %v4676 = vrot.slane %v4672, %v4675
      %v4677 = vmul.f32 %v4639, %v4676
      %v4678 = vmul.f32 %v4640, %v4676
      %v4679 = vmul.f32 %v4641, %v4676
      %v4680 = vmul.f32 %v4642, %v4676
      %v4681 = vmul.f32 %v4643, %v4676
      %v4682 = vmul.f32 %v4644, %v4676
      %v4683 = vmul.f32 %v4645, %v4676
      %v4684 = vmul.f32 %v4646, %v4676
      %v4685 = vmul.f32 %v4647, %v4676
      %v4686 = vmul.f32 %v4648, %v4676
      %v4687 = vmul.f32 %v4649, %v4676
      %v4688 = vmul.f32 %v4650, %v4676
      %v4689 = vmul.f32 %v4651, %v4676
      %v4690 = vmul.f32 %v4652, %v4676
      %v4691 = vmul.f32 %v4653, %v4676
      %v4692 = vmul.f32 %v4654, %v4676
      %v4693 = vmul.f32 %v4655, %v4676
      %v4694 = vmul.f32 %v4656, %v4676
      %v4695 = vmul.f32 %v4657, %v4676
      %v4696 = vmul.f32 %v4658, %v4676
      %v4697 = vmul.f32 %v4659, %v4676
      %v4698 = vmul.f32 %v4660, %v4676
      %v4699 = vmul.f32 %v4661, %v4676
      %v4700 = vmul.f32 %v4662, %v4676
      %v4701 = vmul.f32 %v4663, %v4676
      %v4702 = vmul.f32 %v4664, %v4676
      %v4703 = vmul.f32 %v4665, %v4676
      %v4704 = vmul.f32 %v4666, %v4676
      %v4705 = vmul.f32 %v4667, %v4676
      %v4706 = vmul.f32 %v4668, %v4676
      %v4707 = vmul.f32 %v4669, %v4676
      %v4708 = vmul.f32 %v4670, %v4676
      %v4709 = vadd.f32 %v4606, %v4677
      %v4710 = vadd.f32 %v4607, %v4678
      %v4711 = vadd.f32 %v4608, %v4679
      %v4712 = vadd.f32 %v4609, %v4680
      %v4713 = vadd.f32 %v4610, %v4681
      %v4714 = vadd.f32 %v4611, %v4682
      %v4715 = vadd.f32 %v4612, %v4683
      %v4716 = vadd.f32 %v4613, %v4684
      %v4717 = vadd.f32 %v4614, %v4685
      %v4718 = vadd.f32 %v4615, %v4686
      %v4719 = vadd.f32 %v4616, %v4687
      %v4720 = vadd.f32 %v4617, %v4688
      %v4721 = vadd.f32 %v4618, %v4689
      %v4722 = vadd.f32 %v4619, %v4690
      %v4723 = vadd.f32 %v4620, %v4691
      %v4724 = vadd.f32 %v4621, %v4692
      %v4725 = vadd.f32 %v4622, %v4693
      %v4726 = vadd.f32 %v4623, %v4694
      %v4727 = vadd.f32 %v4624, %v4695
      %v4728 = vadd.f32 %v4625, %v4696
      %v4729 = vadd.f32 %v4626, %v4697
      %v4730 = vadd.f32 %v4627, %v4698
      %v4731 = vadd.f32 %v4628, %v4699
      %v4732 = vadd.f32 %v4629, %v4700
      %v4733 = vadd.f32 %v4630, %v4701
      %v4734 = vadd.f32 %v4631, %v4702
      %v4735 = vadd.f32 %v4632, %v4703
      %v4736 = vadd.f32 %v4633, %v4704
      %v4737 = vadd.f32 %v4634, %v4705
      %v4738 = vadd.f32 %v4635, %v4706
      %v4739 = vadd.f32 %v4636, %v4707
      %v4740 = vadd.f32 %v4637, %v4708
      %s4741 = scalar_lea.vmem [#allocation3], 432
      %v4742 = vld [vmem:[%s4741] sm:$0xff]
      %v4743 = vld [vmem:[%s4741 + $0x8] sm:$0xff]
      %v4744 = vld [vmem:[%s4741 + $0x10] sm:$0xff]
      %v4745 = vld [vmem:[%s4741 + $0x18] sm:$0xff]
      %v4746 = vld [vmem:[%s4741 + $0x20] sm:$0xff]
      %v4747 = vld [vmem:[%s4741 + $0x28] sm:$0xff]
      %v4748 = vld [vmem:[%s4741 + $0x30] sm:$0xff]
      %v4749 = vld [vmem:[%s4741 + $0x38] sm:$0xff]
      %v4750 = vld [vmem:[%s4741 + $0x40] sm:$0xff]
      %v4751 = vld [vmem:[%s4741 + $0x48] sm:$0xff]
      %v4752 = vld [vmem:[%s4741 + $0x50] sm:$0xff]
      %v4753 = vld [vmem:[%s4741 + $0x58] sm:$0xff]
      %v4754 = vld [vmem:[%s4741 + $0x60] sm:$0xff]
      %v4755 = vld [vmem:[%s4741 + $0x68] sm:$0xff]
      %v4756 = vld [vmem:[%s4741 + $0x70] sm:$0xff]
      %v4757 = vld [vmem:[%s4741 + $0x78] sm:$0xff]
      %v4758 = vld [vmem:[%s4741 + $0x80] sm:$0xff]
      %v4759 = vld [vmem:[%s4741 + $0x88] sm:$0xff]
      %v4760 = vld [vmem:[%s4741 + $0x90] sm:$0xff]
      %v4761 = vld [vmem:[%s4741 + $0x98] sm:$0xff]
      %v4762 = vld [vmem:[%s4741 + $0xa0] sm:$0xff]
      %v4763 = vld [vmem:[%s4741 + $0xa8] sm:$0xff]
      %v4764 = vld [vmem:[%s4741 + $0xb0] sm:$0xff]
      %v4765 = vld [vmem:[%s4741 + $0xb8] sm:$0xff]
      %v4766 = vld [vmem:[%s4741 + $0xc0] sm:$0xff]
      %v4767 = vld [vmem:[%s4741 + $0xc8] sm:$0xff]
      %v4768 = vld [vmem:[%s4741 + $0xd0] sm:$0xff]
      %v4769 = vld [vmem:[%s4741 + $0xd8] sm:$0xff]
      %v4770 = vld [vmem:[%s4741 + $0xe0] sm:$0xff]
      %v4771 = vld [vmem:[%s4741 + $0xe8] sm:$0xff]
      %v4772 = vld [vmem:[%s4741 + $0xf0] sm:$0xff]
      %v4773 = vld [vmem:[%s4741 + $0xf8] sm:$0xff]
      %v4774 = vld [vmem:[%s4671 + $0x1] sm:$0x1]
      %v4775 = vlaneseq
      %v4776 = vshrl.u32 %v4775, 7
      %v4777 = vsub.s32 0, %v4776
      %v4778 = vrot.slane %v4774, %v4777
      %v4779 = vmul.f32 %v4742, %v4778
      %v4780 = vmul.f32 %v4743, %v4778
      %v4781 = vmul.f32 %v4744, %v4778
      %v4782 = vmul.f32 %v4745, %v4778
      %v4783 = vmul.f32 %v4746, %v4778
      %v4784 = vmul.f32 %v4747, %v4778
      %v4785 = vmul.f32 %v4748, %v4778
      %v4786 = vmul.f32 %v4749, %v4778
      %v4787 = vmul.f32 %v4750, %v4778
      %v4788 = vmul.f32 %v4751, %v4778
      %v4789 = vmul.f32 %v4752, %v4778
      %v4790 = vmul.f32 %v4753, %v4778
      %v4791 = vmul.f32 %v4754, %v4778
      %v4792 = vmul.f32 %v4755, %v4778
      %v4793 = vmul.f32 %v4756, %v4778
      %v4794 = vmul.f32 %v4757, %v4778
      %v4795 = vmul.f32 %v4758, %v4778
      %v4796 = vmul.f32 %v4759, %v4778
      %v4797 = vmul.f32 %v4760, %v4778
      %v4798 = vmul.f32 %v4761, %v4778
      %v4799 = vmul.f32 %v4762, %v4778
      %v4800 = vmul.f32 %v4763, %v4778
      %v4801 = vmul.f32 %v4764, %v4778
      %v4802 = vmul.f32 %v4765, %v4778
      %v4803 = vmul.f32 %v4766, %v4778
      %v4804 = vmul.f32 %v4767, %v4778
      %v4805 = vmul.f32 %v4768, %v4778
      %v4806 = vmul.f32 %v4769, %v4778
      %v4807 = vmul.f32 %v4770, %v4778
      %v4808 = vmul.f32 %v4771, %v4778
      %v4809 = vmul.f32 %v4772, %v4778
      %v4810 = vmul.f32 %v4773, %v4778
      %v4811 = vadd.f32 %v4709, %v4779
      %v4812 = vadd.f32 %v4710, %v4780
      %v4813 = vadd.f32 %v4711, %v4781
      %v4814 = vadd.f32 %v4712, %v4782
      %v4815 = vadd.f32 %v4713, %v4783
      %v4816 = vadd.f32 %v4714, %v4784
      %v4817 = vadd.f32 %v4715, %v4785
      %v4818 = vadd.f32 %v4716, %v4786
      %v4819 = vadd.f32 %v4717, %v4787
      %v4820 = vadd.f32 %v4718, %v4788
      %v4821 = vadd.f32 %v4719, %v4789
      %v4822 = vadd.f32 %v4720, %v4790
      %v4823 = vadd.f32 %v4721, %v4791
      %v4824 = vadd.f32 %v4722, %v4792
      %v4825 = vadd.f32 %v4723, %v4793
      %v4826 = vadd.f32 %v4724, %v4794
      %v4827 = vadd.f32 %v4725, %v4795
      %v4828 = vadd.f32 %v4726, %v4796
      %v4829 = vadd.f32 %v4727, %v4797
      %v4830 = vadd.f32 %v4728, %v4798
      %v4831 = vadd.f32 %v4729, %v4799
      %v4832 = vadd.f32 %v4730, %v4800
      %v4833 = vadd.f32 %v4731, %v4801
      %v4834 = vadd.f32 %v4732, %v4802
      %v4835 = vadd.f32 %v4733, %v4803
      %v4836 = vadd.f32 %v4734, %v4804
      %v4837 = vadd.f32 %v4735, %v4805
      %v4838 = vadd.f32 %v4736, %v4806
      %v4839 = vadd.f32 %v4737, %v4807
      %v4840 = vadd.f32 %v4738, %v4808
      %v4841 = vadd.f32 %v4739, %v4809
      %v4842 = vadd.f32 %v4740, %v4810
      %s4843 = scalar_lea.vmem [#allocation3], 784
      %v4844 = vld [vmem:[%s4843] sm:$0xff]
      %v4845 = vld [vmem:[%s4843 + $0x8] sm:$0xff]
      %v4846 = vld [vmem:[%s4843 + $0x10] sm:$0xff]
      %v4847 = vld [vmem:[%s4843 + $0x18] sm:$0xff]
      %v4848 = vld [vmem:[%s4843 + $0x20] sm:$0xff]
      %v4849 = vld [vmem:[%s4843 + $0x28] sm:$0xff]
      %v4850 = vld [vmem:[%s4843 + $0x30] sm:$0xff]
      %v4851 = vld [vmem:[%s4843 + $0x38] sm:$0xff]
      %v4852 = vld [vmem:[%s4843 + $0x40] sm:$0xff]
      %v4853 = vld [vmem:[%s4843 + $0x48] sm:$0xff]
      %v4854 = vld [vmem:[%s4843 + $0x50] sm:$0xff]
      %v4855 = vld [vmem:[%s4843 + $0x58] sm:$0xff]
      %v4856 = vld [vmem:[%s4843 + $0x60] sm:$0xff]
      %v4857 = vld [vmem:[%s4843 + $0x68] sm:$0xff]
      %v4858 = vld [vmem:[%s4843 + $0x70] sm:$0xff]
      %v4859 = vld [vmem:[%s4843 + $0x78] sm:$0xff]
      %v4860 = vld [vmem:[%s4843 + $0x80] sm:$0xff]
      %v4861 = vld [vmem:[%s4843 + $0x88] sm:$0xff]
      %v4862 = vld [vmem:[%s4843 + $0x90] sm:$0xff]
      %v4863 = vld [vmem:[%s4843 + $0x98] sm:$0xff]
      %v4864 = vld [vmem:[%s4843 + $0xa0] sm:$0xff]
      %v4865 = vld [vmem:[%s4843 + $0xa8] sm:$0xff]
      %v4866 = vld [vmem:[%s4843 + $0xb0] sm:$0xff]
      %v4867 = vld [vmem:[%s4843 + $0xb8] sm:$0xff]
      %v4868 = vld [vmem:[%s4843 + $0xc0] sm:$0xff]
      %v4869 = vld [vmem:[%s4843 + $0xc8] sm:$0xff]
      %v4870 = vld [vmem:[%s4843 + $0xd0] sm:$0xff]
      %v4871 = vld [vmem:[%s4843 + $0xd8] sm:$0xff]
      %v4872 = vld [vmem:[%s4843 + $0xe0] sm:$0xff]
      %v4873 = vld [vmem:[%s4843 + $0xe8] sm:$0xff]
      %v4874 = vld [vmem:[%s4843 + $0xf0] sm:$0xff]
      %v4875 = vld [vmem:[%s4843 + $0xf8] sm:$0xff]
      %v4876 = vld [vmem:[%s4671 + $0x2] sm:$0x1]
      %v4877 = vlaneseq
      %v4878 = vshrl.u32 %v4877, 7
      %v4879 = vsub.s32 0, %v4878
      %v4880 = vrot.slane %v4876, %v4879
      %v4881 = vmul.f32 %v4844, %v4880
      %v4882 = vmul.f32 %v4845, %v4880
      %v4883 = vmul.f32 %v4846, %v4880
      %v4884 = vmul.f32 %v4847, %v4880
      %v4885 = vmul.f32 %v4848, %v4880
      %v4886 = vmul.f32 %v4849, %v4880
      %v4887 = vmul.f32 %v4850, %v4880
      %v4888 = vmul.f32 %v4851, %v4880
      %v4889 = vmul.f32 %v4852, %v4880
      %v4890 = vmul.f32 %v4853, %v4880
      %v4891 = vmul.f32 %v4854, %v4880
      %v4892 = vmul.f32 %v4855, %v4880
      %v4893 = vmul.f32 %v4856, %v4880
      %v4894 = vmul.f32 %v4857, %v4880
      %v4895 = vmul.f32 %v4858, %v4880
      %v4896 = vmul.f32 %v4859, %v4880
      %v4897 = vmul.f32 %v4860, %v4880
      %v4898 = vmul.f32 %v4861, %v4880
      %v4899 = vmul.f32 %v4862, %v4880
      %v4900 = vmul.f32 %v4863, %v4880
      %v4901 = vmul.f32 %v4864, %v4880
      %v4902 = vmul.f32 %v4865, %v4880
      %v4903 = vmul.f32 %v4866, %v4880
      %v4904 = vmul.f32 %v4867, %v4880
      %v4905 = vmul.f32 %v4868, %v4880
      %v4906 = vmul.f32 %v4869, %v4880
      %v4907 = vmul.f32 %v4870, %v4880
      %v4908 = vmul.f32 %v4871, %v4880
      %v4909 = vmul.f32 %v4872, %v4880
      %v4910 = vmul.f32 %v4873, %v4880
      %v4911 = vmul.f32 %v4874, %v4880
      %v4912 = vmul.f32 %v4875, %v4880
      %v4913 = vadd.f32 %v4811, %v4881
      %v4914 = vadd.f32 %v4812, %v4882
      %v4915 = vadd.f32 %v4813, %v4883
      %v4916 = vadd.f32 %v4814, %v4884
      %v4917 = vadd.f32 %v4815, %v4885
      %v4918 = vadd.f32 %v4816, %v4886
      %v4919 = vadd.f32 %v4817, %v4887
      %v4920 = vadd.f32 %v4818, %v4888
      %v4921 = vadd.f32 %v4819, %v4889
      %v4922 = vadd.f32 %v4820, %v4890
      %v4923 = vadd.f32 %v4821, %v4891
      %v4924 = vadd.f32 %v4822, %v4892
      %v4925 = vadd.f32 %v4823, %v4893
      %v4926 = vadd.f32 %v4824, %v4894
      %v4927 = vadd.f32 %v4825, %v4895
      %v4928 = vadd.f32 %v4826, %v4896
      %v4929 = vadd.f32 %v4827, %v4897
      %v4930 = vadd.f32 %v4828, %v4898
      %v4931 = vadd.f32 %v4829, %v4899
      %v4932 = vadd.f32 %v4830, %v4900
      %v4933 = vadd.f32 %v4831, %v4901
      %v4934 = vadd.f32 %v4832, %v4902
      %v4935 = vadd.f32 %v4833, %v4903
      %v4936 = vadd.f32 %v4834, %v4904
      %v4937 = vadd.f32 %v4835, %v4905
      %v4938 = vadd.f32 %v4836, %v4906
      %v4939 = vadd.f32 %v4837, %v4907
      %v4940 = vadd.f32 %v4838, %v4908
      %v4941 = vadd.f32 %v4839, %v4909
      %v4942 = vadd.f32 %v4840, %v4910
      %v4943 = vadd.f32 %v4841, %v4911
      %v4944 = vadd.f32 %v4842, %v4912
      %s4945 = scalar_lea.vmem [#allocation3], 1136
      %v4946 = vld [vmem:[%s4945] sm:$0xff]
      %v4947 = vld [vmem:[%s4945 + $0x8] sm:$0xff]
      %v4948 = vld [vmem:[%s4945 + $0x10] sm:$0xff]
      %v4949 = vld [vmem:[%s4945 + $0x18] sm:$0xff]
      %v4950 = vld [vmem:[%s4945 + $0x20] sm:$0xff]
      %v4951 = vld [vmem:[%s4945 + $0x28] sm:$0xff]
      %v4952 = vld [vmem:[%s4945 + $0x30] sm:$0xff]
      %v4953 = vld [vmem:[%s4945 + $0x38] sm:$0xff]
      %v4954 = vld [vmem:[%s4945 + $0x40] sm:$0xff]
      %v4955 = vld [vmem:[%s4945 + $0x48] sm:$0xff]
      %v4956 = vld [vmem:[%s4945 + $0x50] sm:$0xff]
      %v4957 = vld [vmem:[%s4945 + $0x58] sm:$0xff]
      %v4958 = vld [vmem:[%s4945 + $0x60] sm:$0xff]
      %v4959 = vld [vmem:[%s4945 + $0x68] sm:$0xff]
      %v4960 = vld [vmem:[%s4945 + $0x70] sm:$0xff]
      %v4961 = vld [vmem:[%s4945 + $0x78] sm:$0xff]
      %v4962 = vld [vmem:[%s4945 + $0x80] sm:$0xff]
      %v4963 = vld [vmem:[%s4945 + $0x88] sm:$0xff]
      %v4964 = vld [vmem:[%s4945 + $0x90] sm:$0xff]
      %v4965 = vld [vmem:[%s4945 + $0x98] sm:$0xff]
      %v4966 = vld [vmem:[%s4945 + $0xa0] sm:$0xff]
      %v4967 = vld [vmem:[%s4945 + $0xa8] sm:$0xff]
      %v4968 = vld [vmem:[%s4945 + $0xb0] sm:$0xff]
      %v4969 = vld [vmem:[%s4945 + $0xb8] sm:$0xff]
      %v4970 = vld [vmem:[%s4945 + $0xc0] sm:$0xff]
      %v4971 = vld [vmem:[%s4945 + $0xc8] sm:$0xff]
      %v4972 = vld [vmem:[%s4945 + $0xd0] sm:$0xff]
      %v4973 = vld [vmem:[%s4945 + $0xd8] sm:$0xff]
      %v4974 = vld [vmem:[%s4945 + $0xe0] sm:$0xff]
      %v4975 = vld [vmem:[%s4945 + $0xe8] sm:$0xff]
      %v4976 = vld [vmem:[%s4945 + $0xf0] sm:$0xff]
      %v4977 = vld [vmem:[%s4945 + $0xf8] sm:$0xff]
      %v4978 = vld [vmem:[%s4671 + $0x3] sm:$0x1]
      %v4979 = vlaneseq
      %v4980 = vshrl.u32 %v4979, 7
      %v4981 = vsub.s32 0, %v4980
      %v4982 = vrot.slane %v4978, %v4981
      %v4983 = vmul.f32 %v4946, %v4982
      %v4984 = vmul.f32 %v4947, %v4982
      %v4985 = vmul.f32 %v4948, %v4982
      %v4986 = vmul.f32 %v4949, %v4982
      %v4987 = vmul.f32 %v4950, %v4982
      %v4988 = vmul.f32 %v4951, %v4982
      %v4989 = vmul.f32 %v4952, %v4982
      %v4990 = vmul.f32 %v4953, %v4982
      %v4991 = vmul.f32 %v4954, %v4982
      %v4992 = vmul.f32 %v4955, %v4982
      %v4993 = vmul.f32 %v4956, %v4982
      %v4994 = vmul.f32 %v4957, %v4982
      %v4995 = vmul.f32 %v4958, %v4982
      %v4996 = vmul.f32 %v4959, %v4982
      %v4997 = vmul.f32 %v4960, %v4982
      %v4998 = vmul.f32 %v4961, %v4982
      %v4999 = vmul.f32 %v4962, %v4982
      %v5000 = vmul.f32 %v4963, %v4982
      %v5001 = vmul.f32 %v4964, %v4982
      %v5002 = vmul.f32 %v4965, %v4982
      %v5003 = vmul.f32 %v4966, %v4982
      %v5004 = vmul.f32 %v4967, %v4982
      %v5005 = vmul.f32 %v4968, %v4982
      %v5006 = vmul.f32 %v4969, %v4982
      %v5007 = vmul.f32 %v4970, %v4982
      %v5008 = vmul.f32 %v4971, %v4982
      %v5009 = vmul.f32 %v4972, %v4982
      %v5010 = vmul.f32 %v4973, %v4982
      %v5011 = vmul.f32 %v4974, %v4982
      %v5012 = vmul.f32 %v4975, %v4982
      %v5013 = vmul.f32 %v4976, %v4982
      %v5014 = vmul.f32 %v4977, %v4982
      %v5015 = vadd.f32 %v4913, %v4983
      %v5016 = vadd.f32 %v4914, %v4984
      %v5017 = vadd.f32 %v4915, %v4985
      %v5018 = vadd.f32 %v4916, %v4986
      %v5019 = vadd.f32 %v4917, %v4987
      %v5020 = vadd.f32 %v4918, %v4988
      %v5021 = vadd.f32 %v4919, %v4989
      %v5022 = vadd.f32 %v4920, %v4990
      %v5023 = vadd.f32 %v4921, %v4991
      %v5024 = vadd.f32 %v4922, %v4992
      %v5025 = vadd.f32 %v4923, %v4993
      %v5026 = vadd.f32 %v4924, %v4994
      %v5027 = vadd.f32 %v4925, %v4995
      %v5028 = vadd.f32 %v4926, %v4996
      %v5029 = vadd.f32 %v4927, %v4997
      %v5030 = vadd.f32 %v4928, %v4998
      %v5031 = vadd.f32 %v4929, %v4999
      %v5032 = vadd.f32 %v4930, %v5000
      %v5033 = vadd.f32 %v4931, %v5001
      %v5034 = vadd.f32 %v4932, %v5002
      %v5035 = vadd.f32 %v4933, %v5003
      %v5036 = vadd.f32 %v4934, %v5004
      %v5037 = vadd.f32 %v4935, %v5005
      %v5038 = vadd.f32 %v4936, %v5006
      %v5039 = vadd.f32 %v4937, %v5007
      %v5040 = vadd.f32 %v4938, %v5008
      %v5041 = vadd.f32 %v4939, %v5009
      %v5042 = vadd.f32 %v4940, %v5010
      %v5043 = vadd.f32 %v4941, %v5011
      %v5044 = vadd.f32 %v4942, %v5012
      %v5045 = vadd.f32 %v4943, %v5013
      %v5046 = vadd.f32 %v4944, %v5014
      %s5047 = scalar_lea.vmem [#allocation3], 1488
      %v5048 = vld [vmem:[%s5047] sm:$0xff]
      %v5049 = vld [vmem:[%s5047 + $0x8] sm:$0xff]
      %v5050 = vld [vmem:[%s5047 + $0x10] sm:$0xff]
      %v5051 = vld [vmem:[%s5047 + $0x18] sm:$0xff]
      %v5052 = vld [vmem:[%s5047 + $0x20] sm:$0xff]
      %v5053 = vld [vmem:[%s5047 + $0x28] sm:$0xff]
      %v5054 = vld [vmem:[%s5047 + $0x30] sm:$0xff]
      %v5055 = vld [vmem:[%s5047 + $0x38] sm:$0xff]
      %v5056 = vld [vmem:[%s5047 + $0x40] sm:$0xff]
      %v5057 = vld [vmem:[%s5047 + $0x48] sm:$0xff]
      %v5058 = vld [vmem:[%s5047 + $0x50] sm:$0xff]
      %v5059 = vld [vmem:[%s5047 + $0x58] sm:$0xff]
      %v5060 = vld [vmem:[%s5047 + $0x60] sm:$0xff]
      %v5061 = vld [vmem:[%s5047 + $0x68] sm:$0xff]
      %v5062 = vld [vmem:[%s5047 + $0x70] sm:$0xff]
      %v5063 = vld [vmem:[%s5047 + $0x78] sm:$0xff]
      %v5064 = vld [vmem:[%s5047 + $0x80] sm:$0xff]
      %v5065 = vld [vmem:[%s5047 + $0x88] sm:$0xff]
      %v5066 = vld [vmem:[%s5047 + $0x90] sm:$0xff]
      %v5067 = vld [vmem:[%s5047 + $0x98] sm:$0xff]
      %v5068 = vld [vmem:[%s5047 + $0xa0] sm:$0xff]
      %v5069 = vld [vmem:[%s5047 + $0xa8] sm:$0xff]
      %v5070 = vld [vmem:[%s5047 + $0xb0] sm:$0xff]
      %v5071 = vld [vmem:[%s5047 + $0xb8] sm:$0xff]
      %v5072 = vld [vmem:[%s5047 + $0xc0] sm:$0xff]
      %v5073 = vld [vmem:[%s5047 + $0xc8] sm:$0xff]
      %v5074 = vld [vmem:[%s5047 + $0xd0] sm:$0xff]
      %v5075 = vld [vmem:[%s5047 + $0xd8] sm:$0xff]
      %v5076 = vld [vmem:[%s5047 + $0xe0] sm:$0xff]
      %v5077 = vld [vmem:[%s5047 + $0xe8] sm:$0xff]
      %v5078 = vld [vmem:[%s5047 + $0xf0] sm:$0xff]
      %v5079 = vld [vmem:[%s5047 + $0xf8] sm:$0xff]
      %v5080 = vld [vmem:[%s4671 + $0x4] sm:$0x1]
      %v5081 = vlaneseq
      %v5082 = vshrl.u32 %v5081, 7
      %v5083 = vsub.s32 0, %v5082
      %v5084 = vrot.slane %v5080, %v5083
      %v5085 = vmul.f32 %v5048, %v5084
      %v5086 = vmul.f32 %v5049, %v5084
      %v5087 = vmul.f32 %v5050, %v5084
      %v5088 = vmul.f32 %v5051, %v5084
      %v5089 = vmul.f32 %v5052, %v5084
      %v5090 = vmul.f32 %v5053, %v5084
      %v5091 = vmul.f32 %v5054, %v5084
      %v5092 = vmul.f32 %v5055, %v5084
      %v5093 = vmul.f32 %v5056, %v5084
      %v5094 = vmul.f32 %v5057, %v5084
      %v5095 = vmul.f32 %v5058, %v5084
      %v5096 = vmul.f32 %v5059, %v5084
      %v5097 = vmul.f32 %v5060, %v5084
      %v5098 = vmul.f32 %v5061, %v5084
      %v5099 = vmul.f32 %v5062, %v5084
      %v5100 = vmul.f32 %v5063, %v5084
      %v5101 = vmul.f32 %v5064, %v5084
      %v5102 = vmul.f32 %v5065, %v5084
      %v5103 = vmul.f32 %v5066, %v5084
      %v5104 = vmul.f32 %v5067, %v5084
      %v5105 = vmul.f32 %v5068, %v5084
      %v5106 = vmul.f32 %v5069, %v5084
      %v5107 = vmul.f32 %v5070, %v5084
      %v5108 = vmul.f32 %v5071, %v5084
      %v5109 = vmul.f32 %v5072, %v5084
      %v5110 = vmul.f32 %v5073, %v5084
      %v5111 = vmul.f32 %v5074, %v5084
      %v5112 = vmul.f32 %v5075, %v5084
      %v5113 = vmul.f32 %v5076, %v5084
      %v5114 = vmul.f32 %v5077, %v5084
      %v5115 = vmul.f32 %v5078, %v5084
      %v5116 = vmul.f32 %v5079, %v5084
      %v5117 = vadd.f32 %v5015, %v5085
      %v5118 = vadd.f32 %v5016, %v5086
      %v5119 = vadd.f32 %v5017, %v5087
      %v5120 = vadd.f32 %v5018, %v5088
      %v5121 = vadd.f32 %v5019, %v5089
      %v5122 = vadd.f32 %v5020, %v5090
      %v5123 = vadd.f32 %v5021, %v5091
      %v5124 = vadd.f32 %v5022, %v5092
      %v5125 = vadd.f32 %v5023, %v5093
      %v5126 = vadd.f32 %v5024, %v5094
      %v5127 = vadd.f32 %v5025, %v5095
      %v5128 = vadd.f32 %v5026, %v5096
      %v5129 = vadd.f32 %v5027, %v5097
      %v5130 = vadd.f32 %v5028, %v5098
      %v5131 = vadd.f32 %v5029, %v5099
      %v5132 = vadd.f32 %v5030, %v5100
      %v5133 = vadd.f32 %v5031, %v5101
      %v5134 = vadd.f32 %v5032, %v5102
      %v5135 = vadd.f32 %v5033, %v5103
      %v5136 = vadd.f32 %v5034, %v5104
      %v5137 = vadd.f32 %v5035, %v5105
      %v5138 = vadd.f32 %v5036, %v5106
      %v5139 = vadd.f32 %v5037, %v5107
      %v5140 = vadd.f32 %v5038, %v5108
      %v5141 = vadd.f32 %v5039, %v5109
      %v5142 = vadd.f32 %v5040, %v5110
      %v5143 = vadd.f32 %v5041, %v5111
      %v5144 = vadd.f32 %v5042, %v5112
      %v5145 = vadd.f32 %v5043, %v5113
      %v5146 = vadd.f32 %v5044, %v5114
      %v5147 = vadd.f32 %v5045, %v5115
      %v5148 = vadd.f32 %v5046, %v5116
      %s5149 = scalar_lea.vmem [#allocation3], 1840
      %v5150 = vld [vmem:[%s5149] sm:$0xff]
      %v5151 = vld [vmem:[%s5149 + $0x8] sm:$0xff]
      %v5152 = vld [vmem:[%s5149 + $0x10] sm:$0xff]
      %v5153 = vld [vmem:[%s5149 + $0x18] sm:$0xff]
      %v5154 = vld [vmem:[%s5149 + $0x20] sm:$0xff]
      %v5155 = vld [vmem:[%s5149 + $0x28] sm:$0xff]
      %v5156 = vld [vmem:[%s5149 + $0x30] sm:$0xff]
      %v5157 = vld [vmem:[%s5149 + $0x38] sm:$0xff]
      %v5158 = vld [vmem:[%s5149 + $0x40] sm:$0xff]
      %v5159 = vld [vmem:[%s5149 + $0x48] sm:$0xff]
      %v5160 = vld [vmem:[%s5149 + $0x50] sm:$0xff]
      %v5161 = vld [vmem:[%s5149 + $0x58] sm:$0xff]
      %v5162 = vld [vmem:[%s5149 + $0x60] sm:$0xff]
      %v5163 = vld [vmem:[%s5149 + $0x68] sm:$0xff]
      %v5164 = vld [vmem:[%s5149 + $0x70] sm:$0xff]
      %v5165 = vld [vmem:[%s5149 + $0x78] sm:$0xff]
      %v5166 = vld [vmem:[%s5149 + $0x80] sm:$0xff]
      %v5167 = vld [vmem:[%s5149 + $0x88] sm:$0xff]
      %v5168 = vld [vmem:[%s5149 + $0x90] sm:$0xff]
      %v5169 = vld [vmem:[%s5149 + $0x98] sm:$0xff]
      %v5170 = vld [vmem:[%s5149 + $0xa0] sm:$0xff]
      %v5171 = vld [vmem:[%s5149 + $0xa8] sm:$0xff]
      %v5172 = vld [vmem:[%s5149 + $0xb0] sm:$0xff]
      %v5173 = vld [vmem:[%s5149 + $0xb8] sm:$0xff]
      %v5174 = vld [vmem:[%s5149 + $0xc0] sm:$0xff]
      %v5175 = vld [vmem:[%s5149 + $0xc8] sm:$0xff]
      %v5176 = vld [vmem:[%s5149 + $0xd0] sm:$0xff]
      %v5177 = vld [vmem:[%s5149 + $0xd8] sm:$0xff]
      %v5178 = vld [vmem:[%s5149 + $0xe0] sm:$0xff]
      %v5179 = vld [vmem:[%s5149 + $0xe8] sm:$0xff]
      %v5180 = vld [vmem:[%s5149 + $0xf0] sm:$0xff]
      %v5181 = vld [vmem:[%s5149 + $0xf8] sm:$0xff]
      %v5182 = vld [vmem:[%s4671 + $0x5] sm:$0x1]
      %v5183 = vlaneseq
      %v5184 = vshrl.u32 %v5183, 7
      %v5185 = vsub.s32 0, %v5184
      %v5186 = vrot.slane %v5182, %v5185
      %v5187 = vmul.f32 %v5150, %v5186
      %v5188 = vmul.f32 %v5151, %v5186
      %v5189 = vmul.f32 %v5152, %v5186
      %v5190 = vmul.f32 %v5153, %v5186
      %v5191 = vmul.f32 %v5154, %v5186
      %v5192 = vmul.f32 %v5155, %v5186
      %v5193 = vmul.f32 %v5156, %v5186
      %v5194 = vmul.f32 %v5157, %v5186
      %v5195 = vmul.f32 %v5158, %v5186
      %v5196 = vmul.f32 %v5159, %v5186
      %v5197 = vmul.f32 %v5160, %v5186
      %v5198 = vmul.f32 %v5161, %v5186
      %v5199 = vmul.f32 %v5162, %v5186
      %v5200 = vmul.f32 %v5163, %v5186
      %v5201 = vmul.f32 %v5164, %v5186
      %v5202 = vmul.f32 %v5165, %v5186
      %v5203 = vmul.f32 %v5166, %v5186
      %v5204 = vmul.f32 %v5167, %v5186
      %v5205 = vmul.f32 %v5168, %v5186
      %v5206 = vmul.f32 %v5169, %v5186
      %v5207 = vmul.f32 %v5170, %v5186
      %v5208 = vmul.f32 %v5171, %v5186
      %v5209 = vmul.f32 %v5172, %v5186
      %v5210 = vmul.f32 %v5173, %v5186
      %v5211 = vmul.f32 %v5174, %v5186
      %v5212 = vmul.f32 %v5175, %v5186
      %v5213 = vmul.f32 %v5176, %v5186
      %v5214 = vmul.f32 %v5177, %v5186
      %v5215 = vmul.f32 %v5178, %v5186
      %v5216 = vmul.f32 %v5179, %v5186
      %v5217 = vmul.f32 %v5180, %v5186
      %v5218 = vmul.f32 %v5181, %v5186
      %v5219 = vadd.f32 %v5117, %v5187
      %v5220 = vadd.f32 %v5118, %v5188
      %v5221 = vadd.f32 %v5119, %v5189
      %v5222 = vadd.f32 %v5120, %v5190
      %v5223 = vadd.f32 %v5121, %v5191
      %v5224 = vadd.f32 %v5122, %v5192
      %v5225 = vadd.f32 %v5123, %v5193
      %v5226 = vadd.f32 %v5124, %v5194
      %v5227 = vadd.f32 %v5125, %v5195
      %v5228 = vadd.f32 %v5126, %v5196
      %v5229 = vadd.f32 %v5127, %v5197
      %v5230 = vadd.f32 %v5128, %v5198
      %v5231 = vadd.f32 %v5129, %v5199
      %v5232 = vadd.f32 %v5130, %v5200
      %v5233 = vadd.f32 %v5131, %v5201
      %v5234 = vadd.f32 %v5132, %v5202
      %v5235 = vadd.f32 %v5133, %v5203
      %v5236 = vadd.f32 %v5134, %v5204
      %v5237 = vadd.f32 %v5135, %v5205
      %v5238 = vadd.f32 %v5136, %v5206
      %v5239 = vadd.f32 %v5137, %v5207
      %v5240 = vadd.f32 %v5138, %v5208
      %v5241 = vadd.f32 %v5139, %v5209
      %v5242 = vadd.f32 %v5140, %v5210
      %v5243 = vadd.f32 %v5141, %v5211
      %v5244 = vadd.f32 %v5142, %v5212
      %v5245 = vadd.f32 %v5143, %v5213
      %v5246 = vadd.f32 %v5144, %v5214
      %v5247 = vadd.f32 %v5145, %v5215
      %v5248 = vadd.f32 %v5146, %v5216
      %v5249 = vadd.f32 %v5147, %v5217
      %v5250 = vadd.f32 %v5148, %v5218
      %s5251 = scalar_lea.vmem [#allocation3], 2192
      %v5252 = vld [vmem:[%s5251] sm:$0xff]
      %v5253 = vld [vmem:[%s5251 + $0x8] sm:$0xff]
      %v5254 = vld [vmem:[%s5251 + $0x10] sm:$0xff]
      %v5255 = vld [vmem:[%s5251 + $0x18] sm:$0xff]
      %v5256 = vld [vmem:[%s5251 + $0x20] sm:$0xff]
      %v5257 = vld [vmem:[%s5251 + $0x28] sm:$0xff]
      %v5258 = vld [vmem:[%s5251 + $0x30] sm:$0xff]
      %v5259 = vld [vmem:[%s5251 + $0x38] sm:$0xff]
      %v5260 = vld [vmem:[%s5251 + $0x40] sm:$0xff]
      %v5261 = vld [vmem:[%s5251 + $0x48] sm:$0xff]
      %v5262 = vld [vmem:[%s5251 + $0x50] sm:$0xff]
      %v5263 = vld [vmem:[%s5251 + $0x58] sm:$0xff]
      %v5264 = vld [vmem:[%s5251 + $0x60] sm:$0xff]
      %v5265 = vld [vmem:[%s5251 + $0x68] sm:$0xff]
      %v5266 = vld [vmem:[%s5251 + $0x70] sm:$0xff]
      %v5267 = vld [vmem:[%s5251 + $0x78] sm:$0xff]
      %v5268 = vld [vmem:[%s5251 + $0x80] sm:$0xff]
      %v5269 = vld [vmem:[%s5251 + $0x88] sm:$0xff]
      %v5270 = vld [vmem:[%s5251 + $0x90] sm:$0xff]
      %v5271 = vld [vmem:[%s5251 + $0x98] sm:$0xff]
      %v5272 = vld [vmem:[%s5251 + $0xa0] sm:$0xff]
      %v5273 = vld [vmem:[%s5251 + $0xa8] sm:$0xff]
      %v5274 = vld [vmem:[%s5251 + $0xb0] sm:$0xff]
      %v5275 = vld [vmem:[%s5251 + $0xb8] sm:$0xff]
      %v5276 = vld [vmem:[%s5251 + $0xc0] sm:$0xff]
      %v5277 = vld [vmem:[%s5251 + $0xc8] sm:$0xff]
      %v5278 = vld [vmem:[%s5251 + $0xd0] sm:$0xff]
      %v5279 = vld [vmem:[%s5251 + $0xd8] sm:$0xff]
      %v5280 = vld [vmem:[%s5251 + $0xe0] sm:$0xff]
      %v5281 = vld [vmem:[%s5251 + $0xe8] sm:$0xff]
      %v5282 = vld [vmem:[%s5251 + $0xf0] sm:$0xff]
      %v5283 = vld [vmem:[%s5251 + $0xf8] sm:$0xff]
      %v5284 = vld [vmem:[%s4671 + $0x6] sm:$0x1]
      %v5285 = vlaneseq
      %v5286 = vshrl.u32 %v5285, 7
      %v5287 = vsub.s32 0, %v5286
      %v5288 = vrot.slane %v5284, %v5287
      %v5289 = vmul.f32 %v5252, %v5288
      %v5290 = vmul.f32 %v5253, %v5288
      %v5291 = vmul.f32 %v5254, %v5288
      %v5292 = vmul.f32 %v5255, %v5288
      %v5293 = vmul.f32 %v5256, %v5288
      %v5294 = vmul.f32 %v5257, %v5288
      %v5295 = vmul.f32 %v5258, %v5288
      %v5296 = vmul.f32 %v5259, %v5288
      %v5297 = vmul.f32 %v5260, %v5288
      %v5298 = vmul.f32 %v5261, %v5288
      %v5299 = vmul.f32 %v5262, %v5288
      %v5300 = vmul.f32 %v5263, %v5288
      %v5301 = vmul.f32 %v5264, %v5288
      %v5302 = vmul.f32 %v5265, %v5288
      %v5303 = vmul.f32 %v5266, %v5288
      %v5304 = vmul.f32 %v5267, %v5288
      %v5305 = vmul.f32 %v5268, %v5288
      %v5306 = vmul.f32 %v5269, %v5288
      %v5307 = vmul.f32 %v5270, %v5288
      %v5308 = vmul.f32 %v5271, %v5288
      %v5309 = vmul.f32 %v5272, %v5288
      %v5310 = vmul.f32 %v5273, %v5288
      %v5311 = vmul.f32 %v5274, %v5288
      %v5312 = vmul.f32 %v5275, %v5288
      %v5313 = vmul.f32 %v5276, %v5288
      %v5314 = vmul.f32 %v5277, %v5288
      %v5315 = vmul.f32 %v5278, %v5288
      %v5316 = vmul.f32 %v5279, %v5288
      %v5317 = vmul.f32 %v5280, %v5288
      %v5318 = vmul.f32 %v5281, %v5288
      %v5319 = vmul.f32 %v5282, %v5288
      %v5320 = vmul.f32 %v5283, %v5288
      %v5321 = vadd.f32 %v5219, %v5289
      %v5322 = vadd.f32 %v5220, %v5290
      %v5323 = vadd.f32 %v5221, %v5291
      %v5324 = vadd.f32 %v5222, %v5292
      %v5325 = vadd.f32 %v5223, %v5293
      %v5326 = vadd.f32 %v5224, %v5294
      %v5327 = vadd.f32 %v5225, %v5295
      %v5328 = vadd.f32 %v5226, %v5296
      %v5329 = vadd.f32 %v5227, %v5297
      %v5330 = vadd.f32 %v5228, %v5298
      %v5331 = vadd.f32 %v5229, %v5299
      %v5332 = vadd.f32 %v5230, %v5300
      %v5333 = vadd.f32 %v5231, %v5301
      %v5334 = vadd.f32 %v5232, %v5302
      %v5335 = vadd.f32 %v5233, %v5303
      %v5336 = vadd.f32 %v5234, %v5304
      %v5337 = vadd.f32 %v5235, %v5305
      %v5338 = vadd.f32 %v5236, %v5306
      %v5339 = vadd.f32 %v5237, %v5307
      %v5340 = vadd.f32 %v5238, %v5308
      %v5341 = vadd.f32 %v5239, %v5309
      %v5342 = vadd.f32 %v5240, %v5310
      %v5343 = vadd.f32 %v5241, %v5311
      %v5344 = vadd.f32 %v5242, %v5312
      %v5345 = vadd.f32 %v5243, %v5313
      %v5346 = vadd.f32 %v5244, %v5314
      %v5347 = vadd.f32 %v5245, %v5315
      %v5348 = vadd.f32 %v5246, %v5316
      %v5349 = vadd.f32 %v5247, %v5317
      %v5350 = vadd.f32 %v5248, %v5318
      %v5351 = vadd.f32 %v5249, %v5319
      %v5352 = vadd.f32 %v5250, %v5320
      %s5353 = scalar_lea.vmem [#allocation3], 96
      %v5354 = vld [vmem:[%s5353] sm:$0xff]
      %v5355 = vld [vmem:[%s5353 + $0x8] sm:$0xff]
      %v5356 = vld [vmem:[%s5353 + $0x10] sm:$0xff]
      %v5357 = vld [vmem:[%s5353 + $0x18] sm:$0xff]
      %v5358 = vld [vmem:[%s5353 + $0x20] sm:$0xff]
      %v5359 = vld [vmem:[%s5353 + $0x28] sm:$0xff]
      %v5360 = vld [vmem:[%s5353 + $0x30] sm:$0xff]
      %v5361 = vld [vmem:[%s5353 + $0x38] sm:$0xff]
      %v5362 = vld [vmem:[%s5353 + $0x40] sm:$0xff]
      %v5363 = vld [vmem:[%s5353 + $0x48] sm:$0xff]
      %v5364 = vld [vmem:[%s5353 + $0x50] sm:$0xff]
      %v5365 = vld [vmem:[%s5353 + $0x58] sm:$0xff]
      %v5366 = vld [vmem:[%s5353 + $0x60] sm:$0xff]
      %v5367 = vld [vmem:[%s5353 + $0x68] sm:$0xff]
      %v5368 = vld [vmem:[%s5353 + $0x70] sm:$0xff]
      %v5369 = vld [vmem:[%s5353 + $0x78] sm:$0xff]
      %v5370 = vld [vmem:[%s5353 + $0x80] sm:$0xff]
      %v5371 = vld [vmem:[%s5353 + $0x88] sm:$0xff]
      %v5372 = vld [vmem:[%s5353 + $0x90] sm:$0xff]
      %v5373 = vld [vmem:[%s5353 + $0x98] sm:$0xff]
      %v5374 = vld [vmem:[%s5353 + $0xa0] sm:$0xff]
      %v5375 = vld [vmem:[%s5353 + $0xa8] sm:$0xff]
      %v5376 = vld [vmem:[%s5353 + $0xb0] sm:$0xff]
      %v5377 = vld [vmem:[%s5353 + $0xb8] sm:$0xff]
      %v5378 = vld [vmem:[%s5353 + $0xc0] sm:$0xff]
      %v5379 = vld [vmem:[%s5353 + $0xc8] sm:$0xff]
      %v5380 = vld [vmem:[%s5353 + $0xd0] sm:$0xff]
      %v5381 = vld [vmem:[%s5353 + $0xd8] sm:$0xff]
      %v5382 = vld [vmem:[%s5353 + $0xe0] sm:$0xff]
      %v5383 = vld [vmem:[%s5353 + $0xe8] sm:$0xff]
      %v5384 = vld [vmem:[%s5353 + $0xf0] sm:$0xff]
      %v5385 = vld [vmem:[%s5353 + $0xf8] sm:$0xff]
      %s5386 = scalar_lea.vmem %s1, 48
      %v5387 = vld [vmem:[%s5386] sm:$0x1]
      %v5388 = vlaneseq
      %v5389 = vshrl.u32 %v5388, 7
      %v5390 = vsub.s32 0, %v5389
      %v5391 = vrot.slane %v5387, %v5390
      %v5392 = vmul.f32 %v5354, %v5391
      %v5393 = vmul.f32 %v5355, %v5391
      %v5394 = vmul.f32 %v5356, %v5391
      %v5395 = vmul.f32 %v5357, %v5391
      %v5396 = vmul.f32 %v5358, %v5391
      %v5397 = vmul.f32 %v5359, %v5391
      %v5398 = vmul.f32 %v5360, %v5391
      %v5399 = vmul.f32 %v5361, %v5391
      %v5400 = vmul.f32 %v5362, %v5391
      %v5401 = vmul.f32 %v5363, %v5391
      %v5402 = vmul.f32 %v5364, %v5391
      %v5403 = vmul.f32 %v5365, %v5391
      %v5404 = vmul.f32 %v5366, %v5391
      %v5405 = vmul.f32 %v5367, %v5391
      %v5406 = vmul.f32 %v5368, %v5391
      %v5407 = vmul.f32 %v5369, %v5391
      %v5408 = vmul.f32 %v5370, %v5391
      %v5409 = vmul.f32 %v5371, %v5391
      %v5410 = vmul.f32 %v5372, %v5391
      %v5411 = vmul.f32 %v5373, %v5391
      %v5412 = vmul.f32 %v5374, %v5391
      %v5413 = vmul.f32 %v5375, %v5391
      %v5414 = vmul.f32 %v5376, %v5391
      %v5415 = vmul.f32 %v5377, %v5391
      %v5416 = vmul.f32 %v5378, %v5391
      %v5417 = vmul.f32 %v5379, %v5391
      %v5418 = vmul.f32 %v5380, %v5391
      %v5419 = vmul.f32 %v5381, %v5391
      %v5420 = vmul.f32 %v5382, %v5391
      %v5421 = vmul.f32 %v5383, %v5391
      %v5422 = vmul.f32 %v5384, %v5391
      %v5423 = vmul.f32 %v5385, %v5391
      %v5424 = vadd.f32 %v5321, %v5392
      %v5425 = vadd.f32 %v5322, %v5393
      %v5426 = vadd.f32 %v5323, %v5394
      %v5427 = vadd.f32 %v5324, %v5395
      %v5428 = vadd.f32 %v5325, %v5396
      %v5429 = vadd.f32 %v5326, %v5397
      %v5430 = vadd.f32 %v5327, %v5398
      %v5431 = vadd.f32 %v5328, %v5399
      %v5432 = vadd.f32 %v5329, %v5400
      %v5433 = vadd.f32 %v5330, %v5401
      %v5434 = vadd.f32 %v5331, %v5402
      %v5435 = vadd.f32 %v5332, %v5403
      %v5436 = vadd.f32 %v5333, %v5404
      %v5437 = vadd.f32 %v5334, %v5405
      %v5438 = vadd.f32 %v5335, %v5406
      %v5439 = vadd.f32 %v5336, %v5407
      %v5440 = vadd.f32 %v5337, %v5408
      %v5441 = vadd.f32 %v5338, %v5409
      %v5442 = vadd.f32 %v5339, %v5410
      %v5443 = vadd.f32 %v5340, %v5411
      %v5444 = vadd.f32 %v5341, %v5412
      %v5445 = vadd.f32 %v5342, %v5413
      %v5446 = vadd.f32 %v5343, %v5414
      %v5447 = vadd.f32 %v5344, %v5415
      %v5448 = vadd.f32 %v5345, %v5416
      %v5449 = vadd.f32 %v5346, %v5417
      %v5450 = vadd.f32 %v5347, %v5418
      %v5451 = vadd.f32 %v5348, %v5419
      %v5452 = vadd.f32 %v5349, %v5420
      %v5453 = vadd.f32 %v5350, %v5421
      %v5454 = vadd.f32 %v5351, %v5422
      %v5455 = vadd.f32 %v5352, %v5423
      %s5456 = scalar_lea.vmem [#allocation3], 448
      %v5457 = vld [vmem:[%s5456] sm:$0xff]
      %v5458 = vld [vmem:[%s5456 + $0x8] sm:$0xff]
      %v5459 = vld [vmem:[%s5456 + $0x10] sm:$0xff]
      %v5460 = vld [vmem:[%s5456 + $0x18] sm:$0xff]
      %v5461 = vld [vmem:[%s5456 + $0x20] sm:$0xff]
      %v5462 = vld [vmem:[%s5456 + $0x28] sm:$0xff]
      %v5463 = vld [vmem:[%s5456 + $0x30] sm:$0xff]
      %v5464 = vld [vmem:[%s5456 + $0x38] sm:$0xff]
      %v5465 = vld [vmem:[%s5456 + $0x40] sm:$0xff]
      %v5466 = vld [vmem:[%s5456 + $0x48] sm:$0xff]
      %v5467 = vld [vmem:[%s5456 + $0x50] sm:$0xff]
      %v5468 = vld [vmem:[%s5456 + $0x58] sm:$0xff]
      %v5469 = vld [vmem:[%s5456 + $0x60] sm:$0xff]
      %v5470 = vld [vmem:[%s5456 + $0x68] sm:$0xff]
      %v5471 = vld [vmem:[%s5456 + $0x70] sm:$0xff]
      %v5472 = vld [vmem:[%s5456 + $0x78] sm:$0xff]
      %v5473 = vld [vmem:[%s5456 + $0x80] sm:$0xff]
      %v5474 = vld [vmem:[%s5456 + $0x88] sm:$0xff]
      %v5475 = vld [vmem:[%s5456 + $0x90] sm:$0xff]
      %v5476 = vld [vmem:[%s5456 + $0x98] sm:$0xff]
      %v5477 = vld [vmem:[%s5456 + $0xa0] sm:$0xff]
      %v5478 = vld [vmem:[%s5456 + $0xa8] sm:$0xff]
      %v5479 = vld [vmem:[%s5456 + $0xb0] sm:$0xff]
      %v5480 = vld [vmem:[%s5456 + $0xb8] sm:$0xff]
      %v5481 = vld [vmem:[%s5456 + $0xc0] sm:$0xff]
      %v5482 = vld [vmem:[%s5456 + $0xc8] sm:$0xff]
      %v5483 = vld [vmem:[%s5456 + $0xd0] sm:$0xff]
      %v5484 = vld [vmem:[%s5456 + $0xd8] sm:$0xff]
      %v5485 = vld [vmem:[%s5456 + $0xe0] sm:$0xff]
      %v5486 = vld [vmem:[%s5456 + $0xe8] sm:$0xff]
      %v5487 = vld [vmem:[%s5456 + $0xf0] sm:$0xff]
      %v5488 = vld [vmem:[%s5456 + $0xf8] sm:$0xff]
      %v5489 = vld [vmem:[%s5386 + $0x1] sm:$0x1]
      %v5490 = vlaneseq
      %v5491 = vshrl.u32 %v5490, 7
      %v5492 = vsub.s32 0, %v5491
      %v5493 = vrot.slane %v5489, %v5492
      %v5494 = vmul.f32 %v5457, %v5493
      %v5495 = vmul.f32 %v5458, %v5493
      %v5496 = vmul.f32 %v5459, %v5493
      %v5497 = vmul.f32 %v5460, %v5493
      %v5498 = vmul.f32 %v5461, %v5493
      %v5499 = vmul.f32 %v5462, %v5493
      %v5500 = vmul.f32 %v5463, %v5493
      %v5501 = vmul.f32 %v5464, %v5493
      %v5502 = vmul.f32 %v5465, %v5493
      %v5503 = vmul.f32 %v5466, %v5493
      %v5504 = vmul.f32 %v5467, %v5493
      %v5505 = vmul.f32 %v5468, %v5493
      %v5506 = vmul.f32 %v5469, %v5493
      %v5507 = vmul.f32 %v5470, %v5493
      %v5508 = vmul.f32 %v5471, %v5493
      %v5509 = vmul.f32 %v5472, %v5493
      %v5510 = vmul.f32 %v5473, %v5493
      %v5511 = vmul.f32 %v5474, %v5493
      %v5512 = vmul.f32 %v5475, %v5493
      %v5513 = vmul.f32 %v5476, %v5493
      %v5514 = vmul.f32 %v5477, %v5493
      %v5515 = vmul.f32 %v5478, %v5493
      %v5516 = vmul.f32 %v5479, %v5493
      %v5517 = vmul.f32 %v5480, %v5493
      %v5518 = vmul.f32 %v5481, %v5493
      %v5519 = vmul.f32 %v5482, %v5493
      %v5520 = vmul.f32 %v5483, %v5493
      %v5521 = vmul.f32 %v5484, %v5493
      %v5522 = vmul.f32 %v5485, %v5493
      %v5523 = vmul.f32 %v5486, %v5493
      %v5524 = vmul.f32 %v5487, %v5493
      %v5525 = vmul.f32 %v5488, %v5493
      %v5526 = vadd.f32 %v5424, %v5494
      %v5527 = vadd.f32 %v5425, %v5495
      %v5528 = vadd.f32 %v5426, %v5496
      %v5529 = vadd.f32 %v5427, %v5497
      %v5530 = vadd.f32 %v5428, %v5498
      %v5531 = vadd.f32 %v5429, %v5499
      %v5532 = vadd.f32 %v5430, %v5500
      %v5533 = vadd.f32 %v5431, %v5501
      %v5534 = vadd.f32 %v5432, %v5502
      %v5535 = vadd.f32 %v5433, %v5503
      %v5536 = vadd.f32 %v5434, %v5504
      %v5537 = vadd.f32 %v5435, %v5505
      %v5538 = vadd.f32 %v5436, %v5506
      %v5539 = vadd.f32 %v5437, %v5507
      %v5540 = vadd.f32 %v5438, %v5508
      %v5541 = vadd.f32 %v5439, %v5509
      %v5542 = vadd.f32 %v5440, %v5510
      %v5543 = vadd.f32 %v5441, %v5511
      %v5544 = vadd.f32 %v5442, %v5512
      %v5545 = vadd.f32 %v5443, %v5513
      %v5546 = vadd.f32 %v5444, %v5514
      %v5547 = vadd.f32 %v5445, %v5515
      %v5548 = vadd.f32 %v5446, %v5516
      %v5549 = vadd.f32 %v5447, %v5517
      %v5550 = vadd.f32 %v5448, %v5518
      %v5551 = vadd.f32 %v5449, %v5519
      %v5552 = vadd.f32 %v5450, %v5520
      %v5553 = vadd.f32 %v5451, %v5521
      %v5554 = vadd.f32 %v5452, %v5522
      %v5555 = vadd.f32 %v5453, %v5523
      %v5556 = vadd.f32 %v5454, %v5524
      %v5557 = vadd.f32 %v5455, %v5525
      %s5558 = scalar_lea.vmem [#allocation3], 800
      %v5559 = vld [vmem:[%s5558] sm:$0xff]
      %v5560 = vld [vmem:[%s5558 + $0x8] sm:$0xff]
      %v5561 = vld [vmem:[%s5558 + $0x10] sm:$0xff]
      %v5562 = vld [vmem:[%s5558 + $0x18] sm:$0xff]
      %v5563 = vld [vmem:[%s5558 + $0x20] sm:$0xff]
      %v5564 = vld [vmem:[%s5558 + $0x28] sm:$0xff]
      %v5565 = vld [vmem:[%s5558 + $0x30] sm:$0xff]
      %v5566 = vld [vmem:[%s5558 + $0x38] sm:$0xff]
      %v5567 = vld [vmem:[%s5558 + $0x40] sm:$0xff]
      %v5568 = vld [vmem:[%s5558 + $0x48] sm:$0xff]
      %v5569 = vld [vmem:[%s5558 + $0x50] sm:$0xff]
      %v5570 = vld [vmem:[%s5558 + $0x58] sm:$0xff]
      %v5571 = vld [vmem:[%s5558 + $0x60] sm:$0xff]
      %v5572 = vld [vmem:[%s5558 + $0x68] sm:$0xff]
      %v5573 = vld [vmem:[%s5558 + $0x70] sm:$0xff]
      %v5574 = vld [vmem:[%s5558 + $0x78] sm:$0xff]
      %v5575 = vld [vmem:[%s5558 + $0x80] sm:$0xff]
      %v5576 = vld [vmem:[%s5558 + $0x88] sm:$0xff]
      %v5577 = vld [vmem:[%s5558 + $0x90] sm:$0xff]
      %v5578 = vld [vmem:[%s5558 + $0x98] sm:$0xff]
      %v5579 = vld [vmem:[%s5558 + $0xa0] sm:$0xff]
      %v5580 = vld [vmem:[%s5558 + $0xa8] sm:$0xff]
      %v5581 = vld [vmem:[%s5558 + $0xb0] sm:$0xff]
      %v5582 = vld [vmem:[%s5558 + $0xb8] sm:$0xff]
      %v5583 = vld [vmem:[%s5558 + $0xc0] sm:$0xff]
      %v5584 = vld [vmem:[%s5558 + $0xc8] sm:$0xff]
      %v5585 = vld [vmem:[%s5558 + $0xd0] sm:$0xff]
      %v5586 = vld [vmem:[%s5558 + $0xd8] sm:$0xff]
      %v5587 = vld [vmem:[%s5558 + $0xe0] sm:$0xff]
      %v5588 = vld [vmem:[%s5558 + $0xe8] sm:$0xff]
      %v5589 = vld [vmem:[%s5558 + $0xf0] sm:$0xff]
      %v5590 = vld [vmem:[%s5558 + $0xf8] sm:$0xff]
      %v5591 = vld [vmem:[%s5386 + $0x2] sm:$0x1]
      %v5592 = vlaneseq
      %v5593 = vshrl.u32 %v5592, 7
      %v5594 = vsub.s32 0, %v5593
      %v5595 = vrot.slane %v5591, %v5594
      %v5596 = vmul.f32 %v5559, %v5595
      %v5597 = vmul.f32 %v5560, %v5595
      %v5598 = vmul.f32 %v5561, %v5595
      %v5599 = vmul.f32 %v5562, %v5595
      %v5600 = vmul.f32 %v5563, %v5595
      %v5601 = vmul.f32 %v5564, %v5595
      %v5602 = vmul.f32 %v5565, %v5595
      %v5603 = vmul.f32 %v5566, %v5595
      %v5604 = vmul.f32 %v5567, %v5595
      %v5605 = vmul.f32 %v5568, %v5595
      %v5606 = vmul.f32 %v5569, %v5595
      %v5607 = vmul.f32 %v5570, %v5595
      %v5608 = vmul.f32 %v5571, %v5595
      %v5609 = vmul.f32 %v5572, %v5595
      %v5610 = vmul.f32 %v5573, %v5595
      %v5611 = vmul.f32 %v5574, %v5595
      %v5612 = vmul.f32 %v5575, %v5595
      %v5613 = vmul.f32 %v5576, %v5595
      %v5614 = vmul.f32 %v5577, %v5595
      %v5615 = vmul.f32 %v5578, %v5595
      %v5616 = vmul.f32 %v5579, %v5595
      %v5617 = vmul.f32 %v5580, %v5595
      %v5618 = vmul.f32 %v5581, %v5595
      %v5619 = vmul.f32 %v5582, %v5595
      %v5620 = vmul.f32 %v5583, %v5595
      %v5621 = vmul.f32 %v5584, %v5595
      %v5622 = vmul.f32 %v5585, %v5595
      %v5623 = vmul.f32 %v5586, %v5595
      %v5624 = vmul.f32 %v5587, %v5595
      %v5625 = vmul.f32 %v5588, %v5595
      %v5626 = vmul.f32 %v5589, %v5595
      %v5627 = vmul.f32 %v5590, %v5595
      %v5628 = vadd.f32 %v5526, %v5596
      %v5629 = vadd.f32 %v5527, %v5597
      %v5630 = vadd.f32 %v5528, %v5598
      %v5631 = vadd.f32 %v5529, %v5599
      %v5632 = vadd.f32 %v5530, %v5600
      %v5633 = vadd.f32 %v5531, %v5601
      %v5634 = vadd.f32 %v5532, %v5602
      %v5635 = vadd.f32 %v5533, %v5603
      %v5636 = vadd.f32 %v5534, %v5604
      %v5637 = vadd.f32 %v5535, %v5605
      %v5638 = vadd.f32 %v5536, %v5606
      %v5639 = vadd.f32 %v5537, %v5607
      %v5640 = vadd.f32 %v5538, %v5608
      %v5641 = vadd.f32 %v5539, %v5609
      %v5642 = vadd.f32 %v5540, %v5610
      %v5643 = vadd.f32 %v5541, %v5611
      %v5644 = vadd.f32 %v5542, %v5612
      %v5645 = vadd.f32 %v5543, %v5613
      %v5646 = vadd.f32 %v5544, %v5614
      %v5647 = vadd.f32 %v5545, %v5615
      %v5648 = vadd.f32 %v5546, %v5616
      %v5649 = vadd.f32 %v5547, %v5617
      %v5650 = vadd.f32 %v5548, %v5618
      %v5651 = vadd.f32 %v5549, %v5619
      %v5652 = vadd.f32 %v5550, %v5620
      %v5653 = vadd.f32 %v5551, %v5621
      %v5654 = vadd.f32 %v5552, %v5622
      %v5655 = vadd.f32 %v5553, %v5623
      %v5656 = vadd.f32 %v5554, %v5624
      %v5657 = vadd.f32 %v5555, %v5625
      %v5658 = vadd.f32 %v5556, %v5626
      %v5659 = vadd.f32 %v5557, %v5627
      %s5660 = scalar_lea.vmem [#allocation3], 1152
      %v5661 = vld [vmem:[%s5660] sm:$0xff]
      %v5662 = vld [vmem:[%s5660 + $0x8] sm:$0xff]
      %v5663 = vld [vmem:[%s5660 + $0x10] sm:$0xff]
      %v5664 = vld [vmem:[%s5660 + $0x18] sm:$0xff]
      %v5665 = vld [vmem:[%s5660 + $0x20] sm:$0xff]
      %v5666 = vld [vmem:[%s5660 + $0x28] sm:$0xff]
      %v5667 = vld [vmem:[%s5660 + $0x30] sm:$0xff]
      %v5668 = vld [vmem:[%s5660 + $0x38] sm:$0xff]
      %v5669 = vld [vmem:[%s5660 + $0x40] sm:$0xff]
      %v5670 = vld [vmem:[%s5660 + $0x48] sm:$0xff]
      %v5671 = vld [vmem:[%s5660 + $0x50] sm:$0xff]
      %v5672 = vld [vmem:[%s5660 + $0x58] sm:$0xff]
      %v5673 = vld [vmem:[%s5660 + $0x60] sm:$0xff]
      %v5674 = vld [vmem:[%s5660 + $0x68] sm:$0xff]
      %v5675 = vld [vmem:[%s5660 + $0x70] sm:$0xff]
      %v5676 = vld [vmem:[%s5660 + $0x78] sm:$0xff]
      %v5677 = vld [vmem:[%s5660 + $0x80] sm:$0xff]
      %v5678 = vld [vmem:[%s5660 + $0x88] sm:$0xff]
      %v5679 = vld [vmem:[%s5660 + $0x90] sm:$0xff]
      %v5680 = vld [vmem:[%s5660 + $0x98] sm:$0xff]
      %v5681 = vld [vmem:[%s5660 + $0xa0] sm:$0xff]
      %v5682 = vld [vmem:[%s5660 + $0xa8] sm:$0xff]
      %v5683 = vld [vmem:[%s5660 + $0xb0] sm:$0xff]
      %v5684 = vld [vmem:[%s5660 + $0xb8] sm:$0xff]
      %v5685 = vld [vmem:[%s5660 + $0xc0] sm:$0xff]
      %v5686 = vld [vmem:[%s5660 + $0xc8] sm:$0xff]
      %v5687 = vld [vmem:[%s5660 + $0xd0] sm:$0xff]
      %v5688 = vld [vmem:[%s5660 + $0xd8] sm:$0xff]
      %v5689 = vld [vmem:[%s5660 + $0xe0] sm:$0xff]
      %v5690 = vld [vmem:[%s5660 + $0xe8] sm:$0xff]
      %v5691 = vld [vmem:[%s5660 + $0xf0] sm:$0xff]
      %v5692 = vld [vmem:[%s5660 + $0xf8] sm:$0xff]
      %v5693 = vld [vmem:[%s5386 + $0x3] sm:$0x1]
      %v5694 = vlaneseq
      %v5695 = vshrl.u32 %v5694, 7
      %v5696 = vsub.s32 0, %v5695
      %v5697 = vrot.slane %v5693, %v5696
      %v5698 = vmul.f32 %v5661, %v5697
      %v5699 = vmul.f32 %v5662, %v5697
      %v5700 = vmul.f32 %v5663, %v5697
      %v5701 = vmul.f32 %v5664, %v5697
      %v5702 = vmul.f32 %v5665, %v5697
      %v5703 = vmul.f32 %v5666, %v5697
      %v5704 = vmul.f32 %v5667, %v5697
      %v5705 = vmul.f32 %v5668, %v5697
      %v5706 = vmul.f32 %v5669, %v5697
      %v5707 = vmul.f32 %v5670, %v5697
      %v5708 = vmul.f32 %v5671, %v5697
      %v5709 = vmul.f32 %v5672, %v5697
      %v5710 = vmul.f32 %v5673, %v5697
      %v5711 = vmul.f32 %v5674, %v5697
      %v5712 = vmul.f32 %v5675, %v5697
      %v5713 = vmul.f32 %v5676, %v5697
      %v5714 = vmul.f32 %v5677, %v5697
      %v5715 = vmul.f32 %v5678, %v5697
      %v5716 = vmul.f32 %v5679, %v5697
      %v5717 = vmul.f32 %v5680, %v5697
      %v5718 = vmul.f32 %v5681, %v5697
      %v5719 = vmul.f32 %v5682, %v5697
      %v5720 = vmul.f32 %v5683, %v5697
      %v5721 = vmul.f32 %v5684, %v5697
      %v5722 = vmul.f32 %v5685, %v5697
      %v5723 = vmul.f32 %v5686, %v5697
      %v5724 = vmul.f32 %v5687, %v5697
      %v5725 = vmul.f32 %v5688, %v5697
      %v5726 = vmul.f32 %v5689, %v5697
      %v5727 = vmul.f32 %v5690, %v5697
      %v5728 = vmul.f32 %v5691, %v5697
      %v5729 = vmul.f32 %v5692, %v5697
      %v5730 = vadd.f32 %v5628, %v5698
      %v5731 = vadd.f32 %v5629, %v5699
      %v5732 = vadd.f32 %v5630, %v5700
      %v5733 = vadd.f32 %v5631, %v5701
      %v5734 = vadd.f32 %v5632, %v5702
      %v5735 = vadd.f32 %v5633, %v5703
      %v5736 = vadd.f32 %v5634, %v5704
      %v5737 = vadd.f32 %v5635, %v5705
      %v5738 = vadd.f32 %v5636, %v5706
      %v5739 = vadd.f32 %v5637, %v5707
      %v5740 = vadd.f32 %v5638, %v5708
      %v5741 = vadd.f32 %v5639, %v5709
      %v5742 = vadd.f32 %v5640, %v5710
      %v5743 = vadd.f32 %v5641, %v5711
      %v5744 = vadd.f32 %v5642, %v5712
      %v5745 = vadd.f32 %v5643, %v5713
      %v5746 = vadd.f32 %v5644, %v5714
      %v5747 = vadd.f32 %v5645, %v5715
      %v5748 = vadd.f32 %v5646, %v5716
      %v5749 = vadd.f32 %v5647, %v5717
      %v5750 = vadd.f32 %v5648, %v5718
      %v5751 = vadd.f32 %v5649, %v5719
      %v5752 = vadd.f32 %v5650, %v5720
      %v5753 = vadd.f32 %v5651, %v5721
      %v5754 = vadd.f32 %v5652, %v5722
      %v5755 = vadd.f32 %v5653, %v5723
      %v5756 = vadd.f32 %v5654, %v5724
      %v5757 = vadd.f32 %v5655, %v5725
      %v5758 = vadd.f32 %v5656, %v5726
      %v5759 = vadd.f32 %v5657, %v5727
      %v5760 = vadd.f32 %v5658, %v5728
      %v5761 = vadd.f32 %v5659, %v5729
      %s5762 = scalar_lea.vmem [#allocation3], 1504
      %v5763 = vld [vmem:[%s5762] sm:$0xff]
      %v5764 = vld [vmem:[%s5762 + $0x8] sm:$0xff]
      %v5765 = vld [vmem:[%s5762 + $0x10] sm:$0xff]
      %v5766 = vld [vmem:[%s5762 + $0x18] sm:$0xff]
      %v5767 = vld [vmem:[%s5762 + $0x20] sm:$0xff]
      %v5768 = vld [vmem:[%s5762 + $0x28] sm:$0xff]
      %v5769 = vld [vmem:[%s5762 + $0x30] sm:$0xff]
      %v5770 = vld [vmem:[%s5762 + $0x38] sm:$0xff]
      %v5771 = vld [vmem:[%s5762 + $0x40] sm:$0xff]
      %v5772 = vld [vmem:[%s5762 + $0x48] sm:$0xff]
      %v5773 = vld [vmem:[%s5762 + $0x50] sm:$0xff]
      %v5774 = vld [vmem:[%s5762 + $0x58] sm:$0xff]
      %v5775 = vld [vmem:[%s5762 + $0x60] sm:$0xff]
      %v5776 = vld [vmem:[%s5762 + $0x68] sm:$0xff]
      %v5777 = vld [vmem:[%s5762 + $0x70] sm:$0xff]
      %v5778 = vld [vmem:[%s5762 + $0x78] sm:$0xff]
      %v5779 = vld [vmem:[%s5762 + $0x80] sm:$0xff]
      %v5780 = vld [vmem:[%s5762 + $0x88] sm:$0xff]
      %v5781 = vld [vmem:[%s5762 + $0x90] sm:$0xff]
      %v5782 = vld [vmem:[%s5762 + $0x98] sm:$0xff]
      %v5783 = vld [vmem:[%s5762 + $0xa0] sm:$0xff]
      %v5784 = vld [vmem:[%s5762 + $0xa8] sm:$0xff]
      %v5785 = vld [vmem:[%s5762 + $0xb0] sm:$0xff]
      %v5786 = vld [vmem:[%s5762 + $0xb8] sm:$0xff]
      %v5787 = vld [vmem:[%s5762 + $0xc0] sm:$0xff]
      %v5788 = vld [vmem:[%s5762 + $0xc8] sm:$0xff]
      %v5789 = vld [vmem:[%s5762 + $0xd0] sm:$0xff]
      %v5790 = vld [vmem:[%s5762 + $0xd8] sm:$0xff]
      %v5791 = vld [vmem:[%s5762 + $0xe0] sm:$0xff]
      %v5792 = vld [vmem:[%s5762 + $0xe8] sm:$0xff]
      %v5793 = vld [vmem:[%s5762 + $0xf0] sm:$0xff]
      %v5794 = vld [vmem:[%s5762 + $0xf8] sm:$0xff]
      %v5795 = vld [vmem:[%s5386 + $0x4] sm:$0x1]
      %v5796 = vlaneseq
      %v5797 = vshrl.u32 %v5796, 7
      %v5798 = vsub.s32 0, %v5797
      %v5799 = vrot.slane %v5795, %v5798
      %v5800 = vmul.f32 %v5763, %v5799
      %v5801 = vmul.f32 %v5764, %v5799
      %v5802 = vmul.f32 %v5765, %v5799
      %v5803 = vmul.f32 %v5766, %v5799
      %v5804 = vmul.f32 %v5767, %v5799
      %v5805 = vmul.f32 %v5768, %v5799
      %v5806 = vmul.f32 %v5769, %v5799
      %v5807 = vmul.f32 %v5770, %v5799
      %v5808 = vmul.f32 %v5771, %v5799
      %v5809 = vmul.f32 %v5772, %v5799
      %v5810 = vmul.f32 %v5773, %v5799
      %v5811 = vmul.f32 %v5774, %v5799
      %v5812 = vmul.f32 %v5775, %v5799
      %v5813 = vmul.f32 %v5776, %v5799
      %v5814 = vmul.f32 %v5777, %v5799
      %v5815 = vmul.f32 %v5778, %v5799
      %v5816 = vmul.f32 %v5779, %v5799
      %v5817 = vmul.f32 %v5780, %v5799
      %v5818 = vmul.f32 %v5781, %v5799
      %v5819 = vmul.f32 %v5782, %v5799
      %v5820 = vmul.f32 %v5783, %v5799
      %v5821 = vmul.f32 %v5784, %v5799
      %v5822 = vmul.f32 %v5785, %v5799
      %v5823 = vmul.f32 %v5786, %v5799
      %v5824 = vmul.f32 %v5787, %v5799
      %v5825 = vmul.f32 %v5788, %v5799
      %v5826 = vmul.f32 %v5789, %v5799
      %v5827 = vmul.f32 %v5790, %v5799
      %v5828 = vmul.f32 %v5791, %v5799
      %v5829 = vmul.f32 %v5792, %v5799
      %v5830 = vmul.f32 %v5793, %v5799
      %v5831 = vmul.f32 %v5794, %v5799
      %v5832 = vadd.f32 %v5730, %v5800
      %v5833 = vadd.f32 %v5731, %v5801
      %v5834 = vadd.f32 %v5732, %v5802
      %v5835 = vadd.f32 %v5733, %v5803
      %v5836 = vadd.f32 %v5734, %v5804
      %v5837 = vadd.f32 %v5735, %v5805
      %v5838 = vadd.f32 %v5736, %v5806
      %v5839 = vadd.f32 %v5737, %v5807
      %v5840 = vadd.f32 %v5738, %v5808
      %v5841 = vadd.f32 %v5739, %v5809
      %v5842 = vadd.f32 %v5740, %v5810
      %v5843 = vadd.f32 %v5741, %v5811
      %v5844 = vadd.f32 %v5742, %v5812
      %v5845 = vadd.f32 %v5743, %v5813
      %v5846 = vadd.f32 %v5744, %v5814
      %v5847 = vadd.f32 %v5745, %v5815
      %v5848 = vadd.f32 %v5746, %v5816
      %v5849 = vadd.f32 %v5747, %v5817
      %v5850 = vadd.f32 %v5748, %v5818
      %v5851 = vadd.f32 %v5749, %v5819
      %v5852 = vadd.f32 %v5750, %v5820
      %v5853 = vadd.f32 %v5751, %v5821
      %v5854 = vadd.f32 %v5752, %v5822
      %v5855 = vadd.f32 %v5753, %v5823
      %v5856 = vadd.f32 %v5754, %v5824
      %v5857 = vadd.f32 %v5755, %v5825
      %v5858 = vadd.f32 %v5756, %v5826
      %v5859 = vadd.f32 %v5757, %v5827
      %v5860 = vadd.f32 %v5758, %v5828
      %v5861 = vadd.f32 %v5759, %v5829
      %v5862 = vadd.f32 %v5760, %v5830
      %v5863 = vadd.f32 %v5761, %v5831
      %s5864 = scalar_lea.vmem [#allocation3], 1856
      %v5865 = vld [vmem:[%s5864] sm:$0xff]
      %v5866 = vld [vmem:[%s5864 + $0x8] sm:$0xff]
      %v5867 = vld [vmem:[%s5864 + $0x10] sm:$0xff]
      %v5868 = vld [vmem:[%s5864 + $0x18] sm:$0xff]
      %v5869 = vld [vmem:[%s5864 + $0x20] sm:$0xff]
      %v5870 = vld [vmem:[%s5864 + $0x28] sm:$0xff]
      %v5871 = vld [vmem:[%s5864 + $0x30] sm:$0xff]
      %v5872 = vld [vmem:[%s5864 + $0x38] sm:$0xff]
      %v5873 = vld [vmem:[%s5864 + $0x40] sm:$0xff]
      %v5874 = vld [vmem:[%s5864 + $0x48] sm:$0xff]
      %v5875 = vld [vmem:[%s5864 + $0x50] sm:$0xff]
      %v5876 = vld [vmem:[%s5864 + $0x58] sm:$0xff]
      %v5877 = vld [vmem:[%s5864 + $0x60] sm:$0xff]
      %v5878 = vld [vmem:[%s5864 + $0x68] sm:$0xff]
      %v5879 = vld [vmem:[%s5864 + $0x70] sm:$0xff]
      %v5880 = vld [vmem:[%s5864 + $0x78] sm:$0xff]
      %v5881 = vld [vmem:[%s5864 + $0x80] sm:$0xff]
      %v5882 = vld [vmem:[%s5864 + $0x88] sm:$0xff]
      %v5883 = vld [vmem:[%s5864 + $0x90] sm:$0xff]
      %v5884 = vld [vmem:[%s5864 + $0x98] sm:$0xff]
      %v5885 = vld [vmem:[%s5864 + $0xa0] sm:$0xff]
      %v5886 = vld [vmem:[%s5864 + $0xa8] sm:$0xff]
      %v5887 = vld [vmem:[%s5864 + $0xb0] sm:$0xff]
      %v5888 = vld [vmem:[%s5864 + $0xb8] sm:$0xff]
      %v5889 = vld [vmem:[%s5864 + $0xc0] sm:$0xff]
      %v5890 = vld [vmem:[%s5864 + $0xc8] sm:$0xff]
      %v5891 = vld [vmem:[%s5864 + $0xd0] sm:$0xff]
      %v5892 = vld [vmem:[%s5864 + $0xd8] sm:$0xff]
      %v5893 = vld [vmem:[%s5864 + $0xe0] sm:$0xff]
      %v5894 = vld [vmem:[%s5864 + $0xe8] sm:$0xff]
      %v5895 = vld [vmem:[%s5864 + $0xf0] sm:$0xff]
      %v5896 = vld [vmem:[%s5864 + $0xf8] sm:$0xff]
      %v5897 = vld [vmem:[%s5386 + $0x5] sm:$0x1]
      %v5898 = vlaneseq
      %v5899 = vshrl.u32 %v5898, 7
      %v5900 = vsub.s32 0, %v5899
      %v5901 = vrot.slane %v5897, %v5900
      %v5902 = vmul.f32 %v5865, %v5901
      %v5903 = vmul.f32 %v5866, %v5901
      %v5904 = vmul.f32 %v5867, %v5901
      %v5905 = vmul.f32 %v5868, %v5901
      %v5906 = vmul.f32 %v5869, %v5901
      %v5907 = vmul.f32 %v5870, %v5901
      %v5908 = vmul.f32 %v5871, %v5901
      %v5909 = vmul.f32 %v5872, %v5901
      %v5910 = vmul.f32 %v5873, %v5901
      %v5911 = vmul.f32 %v5874, %v5901
      %v5912 = vmul.f32 %v5875, %v5901
      %v5913 = vmul.f32 %v5876, %v5901
      %v5914 = vmul.f32 %v5877, %v5901
      %v5915 = vmul.f32 %v5878, %v5901
      %v5916 = vmul.f32 %v5879, %v5901
      %v5917 = vmul.f32 %v5880, %v5901
      %v5918 = vmul.f32 %v5881, %v5901
      %v5919 = vmul.f32 %v5882, %v5901
      %v5920 = vmul.f32 %v5883, %v5901
      %v5921 = vmul.f32 %v5884, %v5901
      %v5922 = vmul.f32 %v5885, %v5901
      %v5923 = vmul.f32 %v5886, %v5901
      %v5924 = vmul.f32 %v5887, %v5901
      %v5925 = vmul.f32 %v5888, %v5901
      %v5926 = vmul.f32 %v5889, %v5901
      %v5927 = vmul.f32 %v5890, %v5901
      %v5928 = vmul.f32 %v5891, %v5901
      %v5929 = vmul.f32 %v5892, %v5901
      %v5930 = vmul.f32 %v5893, %v5901
      %v5931 = vmul.f32 %v5894, %v5901
      %v5932 = vmul.f32 %v5895, %v5901
      %v5933 = vmul.f32 %v5896, %v5901
      %v5934 = vadd.f32 %v5832, %v5902
      %v5935 = vadd.f32 %v5833, %v5903
      %v5936 = vadd.f32 %v5834, %v5904
      %v5937 = vadd.f32 %v5835, %v5905
      %v5938 = vadd.f32 %v5836, %v5906
      %v5939 = vadd.f32 %v5837, %v5907
      %v5940 = vadd.f32 %v5838, %v5908
      %v5941 = vadd.f32 %v5839, %v5909
      %v5942 = vadd.f32 %v5840, %v5910
      %v5943 = vadd.f32 %v5841, %v5911
      %v5944 = vadd.f32 %v5842, %v5912
      %v5945 = vadd.f32 %v5843, %v5913
      %v5946 = vadd.f32 %v5844, %v5914
      %v5947 = vadd.f32 %v5845, %v5915
      %v5948 = vadd.f32 %v5846, %v5916
      %v5949 = vadd.f32 %v5847, %v5917
      %v5950 = vadd.f32 %v5848, %v5918
      %v5951 = vadd.f32 %v5849, %v5919
      %v5952 = vadd.f32 %v5850, %v5920
      %v5953 = vadd.f32 %v5851, %v5921
      %v5954 = vadd.f32 %v5852, %v5922
      %v5955 = vadd.f32 %v5853, %v5923
      %v5956 = vadd.f32 %v5854, %v5924
      %v5957 = vadd.f32 %v5855, %v5925
      %v5958 = vadd.f32 %v5856, %v5926
      %v5959 = vadd.f32 %v5857, %v5927
      %v5960 = vadd.f32 %v5858, %v5928
      %v5961 = vadd.f32 %v5859, %v5929
      %v5962 = vadd.f32 %v5860, %v5930
      %v5963 = vadd.f32 %v5861, %v5931
      %v5964 = vadd.f32 %v5862, %v5932
      %v5965 = vadd.f32 %v5863, %v5933
      %s5966 = scalar_lea.vmem [#allocation3], 2208
      %v5967 = vld [vmem:[%s5966] sm:$0xff]
      %v5968 = vld [vmem:[%s5966 + $0x8] sm:$0xff]
      %v5969 = vld [vmem:[%s5966 + $0x10] sm:$0xff]
      %v5970 = vld [vmem:[%s5966 + $0x18] sm:$0xff]
      %v5971 = vld [vmem:[%s5966 + $0x20] sm:$0xff]
      %v5972 = vld [vmem:[%s5966 + $0x28] sm:$0xff]
      %v5973 = vld [vmem:[%s5966 + $0x30] sm:$0xff]
      %v5974 = vld [vmem:[%s5966 + $0x38] sm:$0xff]
      %v5975 = vld [vmem:[%s5966 + $0x40] sm:$0xff]
      %v5976 = vld [vmem:[%s5966 + $0x48] sm:$0xff]
      %v5977 = vld [vmem:[%s5966 + $0x50] sm:$0xff]
      %v5978 = vld [vmem:[%s5966 + $0x58] sm:$0xff]
      %v5979 = vld [vmem:[%s5966 + $0x60] sm:$0xff]
      %v5980 = vld [vmem:[%s5966 + $0x68] sm:$0xff]
      %v5981 = vld [vmem:[%s5966 + $0x70] sm:$0xff]
      %v5982 = vld [vmem:[%s5966 + $0x78] sm:$0xff]
      %v5983 = vld [vmem:[%s5966 + $0x80] sm:$0xff]
      %v5984 = vld [vmem:[%s5966 + $0x88] sm:$0xff]
      %v5985 = vld [vmem:[%s5966 + $0x90] sm:$0xff]
      %v5986 = vld [vmem:[%s5966 + $0x98] sm:$0xff]
      %v5987 = vld [vmem:[%s5966 + $0xa0] sm:$0xff]
      %v5988 = vld [vmem:[%s5966 + $0xa8] sm:$0xff]
      %v5989 = vld [vmem:[%s5966 + $0xb0] sm:$0xff]
      %v5990 = vld [vmem:[%s5966 + $0xb8] sm:$0xff]
      %v5991 = vld [vmem:[%s5966 + $0xc0] sm:$0xff]
      %v5992 = vld [vmem:[%s5966 + $0xc8] sm:$0xff]
      %v5993 = vld [vmem:[%s5966 + $0xd0] sm:$0xff]
      %v5994 = vld [vmem:[%s5966 + $0xd8] sm:$0xff]
      %v5995 = vld [vmem:[%s5966 + $0xe0] sm:$0xff]
      %v5996 = vld [vmem:[%s5966 + $0xe8] sm:$0xff]
      %v5997 = vld [vmem:[%s5966 + $0xf0] sm:$0xff]
      %v5998 = vld [vmem:[%s5966 + $0xf8] sm:$0xff]
      %v5999 = vld [vmem:[%s5386 + $0x6] sm:$0x1]
      %v6000 = vlaneseq
      %v6001 = vshrl.u32 %v6000, 7
      %v6002 = vsub.s32 0, %v6001
      %v6003 = vrot.slane %v5999, %v6002
      %v6004 = vmul.f32 %v5967, %v6003
      %v6005 = vmul.f32 %v5968, %v6003
      %v6006 = vmul.f32 %v5969, %v6003
      %v6007 = vmul.f32 %v5970, %v6003
      %v6008 = vmul.f32 %v5971, %v6003
      %v6009 = vmul.f32 %v5972, %v6003
      %v6010 = vmul.f32 %v5973, %v6003
      %v6011 = vmul.f32 %v5974, %v6003
      %v6012 = vmul.f32 %v5975, %v6003
      %v6013 = vmul.f32 %v5976, %v6003
      %v6014 = vmul.f32 %v5977, %v6003
      %v6015 = vmul.f32 %v5978, %v6003
      %v6016 = vmul.f32 %v5979, %v6003
      %v6017 = vmul.f32 %v5980, %v6003
      %v6018 = vmul.f32 %v5981, %v6003
      %v6019 = vmul.f32 %v5982, %v6003
      %v6020 = vmul.f32 %v5983, %v6003
      %v6021 = vmul.f32 %v5984, %v6003
      %v6022 = vmul.f32 %v5985, %v6003
      %v6023 = vmul.f32 %v5986, %v6003
      %v6024 = vmul.f32 %v5987, %v6003
      %v6025 = vmul.f32 %v5988, %v6003
      %v6026 = vmul.f32 %v5989, %v6003
      %v6027 = vmul.f32 %v5990, %v6003
      %v6028 = vmul.f32 %v5991, %v6003
      %v6029 = vmul.f32 %v5992, %v6003
      %v6030 = vmul.f32 %v5993, %v6003
      %v6031 = vmul.f32 %v5994, %v6003
      %v6032 = vmul.f32 %v5995, %v6003
      %v6033 = vmul.f32 %v5996, %v6003
      %v6034 = vmul.f32 %v5997, %v6003
      %v6035 = vmul.f32 %v5998, %v6003
      %v6036 = vadd.f32 %v5934, %v6004
      %v6037 = vadd.f32 %v5935, %v6005
      %v6038 = vadd.f32 %v5936, %v6006
      %v6039 = vadd.f32 %v5937, %v6007
      %v6040 = vadd.f32 %v5938, %v6008
      %v6041 = vadd.f32 %v5939, %v6009
      %v6042 = vadd.f32 %v5940, %v6010
      %v6043 = vadd.f32 %v5941, %v6011
      %v6044 = vadd.f32 %v5942, %v6012
      %v6045 = vadd.f32 %v5943, %v6013
      %v6046 = vadd.f32 %v5944, %v6014
      %v6047 = vadd.f32 %v5945, %v6015
      %v6048 = vadd.f32 %v5946, %v6016
      %v6049 = vadd.f32 %v5947, %v6017
      %v6050 = vadd.f32 %v5948, %v6018
      %v6051 = vadd.f32 %v5949, %v6019
      %v6052 = vadd.f32 %v5950, %v6020
      %v6053 = vadd.f32 %v5951, %v6021
      %v6054 = vadd.f32 %v5952, %v6022
      %v6055 = vadd.f32 %v5953, %v6023
      %v6056 = vadd.f32 %v5954, %v6024
      %v6057 = vadd.f32 %v5955, %v6025
      %v6058 = vadd.f32 %v5956, %v6026
      %v6059 = vadd.f32 %v5957, %v6027
      %v6060 = vadd.f32 %v5958, %v6028
      %v6061 = vadd.f32 %v5959, %v6029
      %v6062 = vadd.f32 %v5960, %v6030
      %v6063 = vadd.f32 %v5961, %v6031
      %v6064 = vadd.f32 %v5962, %v6032
      %v6065 = vadd.f32 %v5963, %v6033
      %v6066 = vadd.f32 %v5964, %v6034
      %v6067 = vadd.f32 %v5965, %v6035
      %v6068 = vld [vmem:[%s2] sm:$0x1]
      %v6070 = vlaneseq
      %v6071 = vshrl.u32 %v6070, 7
      %v6072 = vsub.s32 0, %v6071
      %v6073 = vrot.slane %v6068, %v6072
      %v6075 = vadd.f32 %v6036, %v6073
      %v6076 = vadd.f32 %v6037, %v6073
      %v6077 = vadd.f32 %v6038, %v6073
      %v6078 = vadd.f32 %v6039, %v6073
      %v6079 = vadd.f32 %v6040, %v6073
      %v6080 = vadd.f32 %v6041, %v6073
      %v6081 = vadd.f32 %v6042, %v6073
      %v6082 = vadd.f32 %v6043, %v6073
      %v6083 = vadd.f32 %v6044, %v6073
      %v6084 = vadd.f32 %v6045, %v6073
      %v6085 = vadd.f32 %v6046, %v6073
      %v6086 = vadd.f32 %v6047, %v6073
      %v6087 = vadd.f32 %v6048, %v6073
      %v6088 = vadd.f32 %v6049, %v6073
      %v6089 = vadd.f32 %v6050, %v6073
      %v6090 = vadd.f32 %v6051, %v6073
      %v6091 = vadd.f32 %v6052, %v6073
      %v6092 = vadd.f32 %v6053, %v6073
      %v6093 = vadd.f32 %v6054, %v6073
      %v6094 = vadd.f32 %v6055, %v6073
      %v6095 = vadd.f32 %v6056, %v6073
      %v6096 = vadd.f32 %v6057, %v6073
      %v6097 = vadd.f32 %v6058, %v6073
      %v6098 = vadd.f32 %v6059, %v6073
      %v6099 = vadd.f32 %v6060, %v6073
      %v6100 = vadd.f32 %v6061, %v6073
      %v6101 = vadd.f32 %v6062, %v6073
      %v6102 = vadd.f32 %v6063, %v6073
      %v6103 = vadd.f32 %v6064, %v6073
      %v6104 = vadd.f32 %v6065, %v6073
      %v6105 = vadd.f32 %v6066, %v6073
      %v6106 = vadd.f32 %v6067, %v6073
      %6107 = vst.msk [vmem:[#allocation4] sm:$0xff] %vm280, %v6075
      %6108 = vst.msk [vmem:[#allocation4 + $0x8] sm:$0xff] %vm280, %v6076
      %6109 = vst.msk [vmem:[#allocation4 + $0x10] sm:$0xff] %vm280, %v6077
      %6110 = vst.msk [vmem:[#allocation4 + $0x18] sm:$0xff] %vm280, %v6078
      %6111 = vst.msk [vmem:[#allocation4 + $0x20] sm:$0xff] %vm280, %v6079
      %6112 = vst.msk [vmem:[#allocation4 + $0x28] sm:$0xff] %vm280, %v6080
      %6113 = vst.msk [vmem:[#allocation4 + $0x30] sm:$0xff] %vm280, %v6081
      %6114 = vst.msk [vmem:[#allocation4 + $0x38] sm:$0xff] %vm280, %v6082
      %6115 = vst.msk [vmem:[#allocation4 + $0x40] sm:$0xff] %vm280, %v6083
      %6116 = vst.msk [vmem:[#allocation4 + $0x48] sm:$0xff] %vm280, %v6084
      %6117 = vst.msk [vmem:[#allocation4 + $0x50] sm:$0xff] %vm280, %v6085
      %6118 = vst.msk [vmem:[#allocation4 + $0x58] sm:$0xff] %vm280, %v6086
      %6119 = vst.msk [vmem:[#allocation4 + $0x60] sm:$0xff] %vm280, %v6087
      %6120 = vst.msk [vmem:[#allocation4 + $0x68] sm:$0xff] %vm280, %v6088
      %6121 = vst.msk [vmem:[#allocation4 + $0x70] sm:$0xff] %vm280, %v6089
      %6122 = vst.msk [vmem:[#allocation4 + $0x78] sm:$0xff] %vm280, %v6090
      %6123 = vst.msk [vmem:[#allocation4 + $0x80] sm:$0xff] %vm280, %v6091
      %6124 = vst.msk [vmem:[#allocation4 + $0x88] sm:$0xff] %vm280, %v6092
      %6125 = vst.msk [vmem:[#allocation4 + $0x90] sm:$0xff] %vm280, %v6093
      %6126 = vst.msk [vmem:[#allocation4 + $0x98] sm:$0xff] %vm280, %v6094
      %6127 = vst.msk [vmem:[#allocation4 + $0xa0] sm:$0xff] %vm280, %v6095
      %6128 = vst.msk [vmem:[#allocation4 + $0xa8] sm:$0xff] %vm280, %v6096
      %6129 = vst.msk [vmem:[#allocation4 + $0xb0] sm:$0xff] %vm280, %v6097
      %6130 = vst.msk [vmem:[#allocation4 + $0xb8] sm:$0xff] %vm280, %v6098
      %6131 = vst.msk [vmem:[#allocation4 + $0xc0] sm:$0xff] %vm280, %v6099
      %6132 = vst.msk [vmem:[#allocation4 + $0xc8] sm:$0xff] %vm280, %v6100
      %6133 = vst.msk [vmem:[#allocation4 + $0xd0] sm:$0xff] %vm280, %v6101
      %6134 = vst.msk [vmem:[#allocation4 + $0xd8] sm:$0xff] %vm280, %v6102
      %6135 = vst.msk [vmem:[#allocation4 + $0xe0] sm:$0xff] %vm280, %v6103
      %6136 = vst.msk [vmem:[#allocation4 + $0xe8] sm:$0xff] %vm280, %v6104
      %6137 = vst.msk [vmem:[#allocation4 + $0xf0] sm:$0xff] %vm280, %v6105
      %6138 = vst.msk [vmem:[#allocation4 + $0xf8] sm:$0xff] %vm280, %v6106
      %v6139 = vld [vmem:[#allocation4] sm:$0xff]
      %v6140 = vld [vmem:[#allocation4 + $0x8] sm:$0xff]
      %v6141 = vld [vmem:[#allocation4 + $0x10] sm:$0xff]
      %v6142 = vld [vmem:[#allocation4 + $0x18] sm:$0xff]
      %v6143 = vld [vmem:[#allocation4 + $0x20] sm:$0xff]
      %v6144 = vld [vmem:[#allocation4 + $0x28] sm:$0xff]
      %v6145 = vld [vmem:[#allocation4 + $0x30] sm:$0xff]
      %v6146 = vld [vmem:[#allocation4 + $0x38] sm:$0xff]
      %v6147 = vld [vmem:[#allocation4 + $0x40] sm:$0xff]
      %v6148 = vld [vmem:[#allocation4 + $0x48] sm:$0xff]
      %v6149 = vld [vmem:[#allocation4 + $0x50] sm:$0xff]
      %v6150 = vld [vmem:[#allocation4 + $0x58] sm:$0xff]
      %v6151 = vld [vmem:[#allocation4 + $0x60] sm:$0xff]
      %v6152 = vld [vmem:[#allocation4 + $0x68] sm:$0xff]
      %v6153 = vld [vmem:[#allocation4 + $0x70] sm:$0xff]
      %v6154 = vld [vmem:[#allocation4 + $0x78] sm:$0xff]
      %v6155 = vld [vmem:[#allocation4 + $0x80] sm:$0xff]
      %v6156 = vld [vmem:[#allocation4 + $0x88] sm:$0xff]
      %v6157 = vld [vmem:[#allocation4 + $0x90] sm:$0xff]
      %v6158 = vld [vmem:[#allocation4 + $0x98] sm:$0xff]
      %v6159 = vld [vmem:[#allocation4 + $0xa0] sm:$0xff]
      %v6160 = vld [vmem:[#allocation4 + $0xa8] sm:$0xff]
      %v6161 = vld [vmem:[#allocation4 + $0xb0] sm:$0xff]
      %v6162 = vld [vmem:[#allocation4 + $0xb8] sm:$0xff]
      %v6163 = vld [vmem:[#allocation4 + $0xc0] sm:$0xff]
      %v6164 = vld [vmem:[#allocation4 + $0xc8] sm:$0xff]
      %v6165 = vld [vmem:[#allocation4 + $0xd0] sm:$0xff]
      %v6166 = vld [vmem:[#allocation4 + $0xd8] sm:$0xff]
      %v6167 = vld [vmem:[#allocation4 + $0xe0] sm:$0xff]
      %v6168 = vld [vmem:[#allocation4 + $0xe8] sm:$0xff]
      %v6169 = vld [vmem:[#allocation4 + $0xf0] sm:$0xff]
      %v6170 = vld [vmem:[#allocation4 + $0xf8] sm:$0xff]
      %v6171 = vsel %vm280, %v6139, 0.0
      %6172 = vadd.xlane.f32.xlu0 %v6171
      %v6173 = vpop.xlane.xlu0 %6172
      %v6174 = vsel %vm280, %v6140, 0.0
      %6175 = vadd.xlane.f32.xlu0 %v6174
      %v6176 = vpop.xlane.xlu0 %6175
      %v6177 = vsel %vm280, %v6141, 0.0
      %6178 = vadd.xlane.f32.xlu0 %v6177
      %v6179 = vpop.xlane.xlu0 %6178
      %v6180 = vsel %vm280, %v6142, 0.0
      %6181 = vadd.xlane.f32.xlu0 %v6180
      %v6182 = vpop.xlane.xlu0 %6181
      %v6183 = vsel %vm280, %v6143, 0.0
      %6184 = vadd.xlane.f32.xlu0 %v6183
      %v6185 = vpop.xlane.xlu0 %6184
      %v6186 = vsel %vm280, %v6144, 0.0
      %6187 = vadd.xlane.f32.xlu0 %v6186
      %v6188 = vpop.xlane.xlu0 %6187
      %v6189 = vsel %vm280, %v6145, 0.0
      %6190 = vadd.xlane.f32.xlu0 %v6189
      %v6191 = vpop.xlane.xlu0 %6190
      %v6192 = vsel %vm280, %v6146, 0.0
      %6193 = vadd.xlane.f32.xlu0 %v6192
      %v6194 = vpop.xlane.xlu0 %6193
      %v6195 = vsel %vm280, %v6147, 0.0
      %6196 = vadd.xlane.f32.xlu0 %v6195
      %v6197 = vpop.xlane.xlu0 %6196
      %v6198 = vsel %vm280, %v6148, 0.0
      %6199 = vadd.xlane.f32.xlu0 %v6198
      %v6200 = vpop.xlane.xlu0 %6199
      %v6201 = vsel %vm280, %v6149, 0.0
      %6202 = vadd.xlane.f32.xlu0 %v6201
      %v6203 = vpop.xlane.xlu0 %6202
      %v6204 = vsel %vm280, %v6150, 0.0
      %6205 = vadd.xlane.f32.xlu0 %v6204
      %v6206 = vpop.xlane.xlu0 %6205
      %v6207 = vsel %vm280, %v6151, 0.0
      %6208 = vadd.xlane.f32.xlu0 %v6207
      %v6209 = vpop.xlane.xlu0 %6208
      %v6210 = vsel %vm280, %v6152, 0.0
      %6211 = vadd.xlane.f32.xlu0 %v6210
      %v6212 = vpop.xlane.xlu0 %6211
      %v6213 = vsel %vm280, %v6153, 0.0
      %6214 = vadd.xlane.f32.xlu0 %v6213
      %v6215 = vpop.xlane.xlu0 %6214
      %v6216 = vsel %vm280, %v6154, 0.0
      %6217 = vadd.xlane.f32.xlu0 %v6216
      %v6218 = vpop.xlane.xlu0 %6217
      %v6219 = vsel %vm280, %v6155, 0.0
      %6220 = vadd.xlane.f32.xlu0 %v6219
      %v6221 = vpop.xlane.xlu0 %6220
      %v6222 = vsel %vm280, %v6156, 0.0
      %6223 = vadd.xlane.f32.xlu0 %v6222
      %v6224 = vpop.xlane.xlu0 %6223
      %v6225 = vsel %vm280, %v6157, 0.0
      %6226 = vadd.xlane.f32.xlu0 %v6225
      %v6227 = vpop.xlane.xlu0 %6226
      %v6228 = vsel %vm280, %v6158, 0.0
      %6229 = vadd.xlane.f32.xlu0 %v6228
      %v6230 = vpop.xlane.xlu0 %6229
      %v6231 = vsel %vm280, %v6159, 0.0
      %6232 = vadd.xlane.f32.xlu0 %v6231
      %v6233 = vpop.xlane.xlu0 %6232
      %v6234 = vsel %vm280, %v6160, 0.0
      %6235 = vadd.xlane.f32.xlu0 %v6234
      %v6236 = vpop.xlane.xlu0 %6235
      %v6237 = vsel %vm280, %v6161, 0.0
      %6238 = vadd.xlane.f32.xlu0 %v6237
      %v6239 = vpop.xlane.xlu0 %6238
      %v6240 = vsel %vm280, %v6162, 0.0
      %6241 = vadd.xlane.f32.xlu0 %v6240
      %v6242 = vpop.xlane.xlu0 %6241
      %v6243 = vsel %vm280, %v6163, 0.0
      %6244 = vadd.xlane.f32.xlu0 %v6243
      %v6245 = vpop.xlane.xlu0 %6244
      %v6246 = vsel %vm280, %v6164, 0.0
      %6247 = vadd.xlane.f32.xlu0 %v6246
      %v6248 = vpop.xlane.xlu0 %6247
      %v6249 = vsel %vm280, %v6165, 0.0
      %6250 = vadd.xlane.f32.xlu0 %v6249
      %v6251 = vpop.xlane.xlu0 %6250
      %v6252 = vsel %vm280, %v6166, 0.0
      %6253 = vadd.xlane.f32.xlu0 %v6252
      %v6254 = vpop.xlane.xlu0 %6253
      %v6255 = vsel %vm280, %v6167, 0.0
      %6256 = vadd.xlane.f32.xlu0 %v6255
      %v6257 = vpop.xlane.xlu0 %6256
      %v6258 = vsel %vm280, %v6168, 0.0
      %6259 = vadd.xlane.f32.xlu0 %v6258
      %v6260 = vpop.xlane.xlu0 %6259
      %v6261 = vsel %vm280, %v6169, 0.0
      %6262 = vadd.xlane.f32.xlu0 %v6261
      %v6263 = vpop.xlane.xlu0 %6262
      %v6264 = vsel %vm280, %v6170, 0.0
      %6265 = vadd.xlane.f32.xlu0 %v6264
      %v6266 = vpop.xlane.xlu0 %6265
      %v6267 = vrcp.pop 32.0
      %v6268 = vmul.f32 %v6173, %v6267
      %v6269 = vmul.f32 %v6176, %v6267
      %v6270 = vmul.f32 %v6179, %v6267
      %v6271 = vmul.f32 %v6182, %v6267
      %v6272 = vmul.f32 %v6185, %v6267
      %v6273 = vmul.f32 %v6188, %v6267
      %v6274 = vmul.f32 %v6191, %v6267
      %v6275 = vmul.f32 %v6194, %v6267
      %v6276 = vmul.f32 %v6197, %v6267
      %v6277 = vmul.f32 %v6200, %v6267
      %v6278 = vmul.f32 %v6203, %v6267
      %v6279 = vmul.f32 %v6206, %v6267
      %v6280 = vmul.f32 %v6209, %v6267
      %v6281 = vmul.f32 %v6212, %v6267
      %v6282 = vmul.f32 %v6215, %v6267
      %v6283 = vmul.f32 %v6218, %v6267
      %v6284 = vmul.f32 %v6221, %v6267
      %v6285 = vmul.f32 %v6224, %v6267
      %v6286 = vmul.f32 %v6227, %v6267
      %v6287 = vmul.f32 %v6230, %v6267
      %v6288 = vmul.f32 %v6233, %v6267
      %v6289 = vmul.f32 %v6236, %v6267
      %v6290 = vmul.f32 %v6239, %v6267
      %v6291 = vmul.f32 %v6242, %v6267
      %v6292 = vmul.f32 %v6245, %v6267
      %v6293 = vmul.f32 %v6248, %v6267
      %v6294 = vmul.f32 %v6251, %v6267
      %v6295 = vmul.f32 %v6254, %v6267
      %v6296 = vmul.f32 %v6257, %v6267
      %v6297 = vmul.f32 %v6260, %v6267
      %v6298 = vmul.f32 %v6263, %v6267
      %v6299 = vmul.f32 %v6266, %v6267
      %v6300 = vsub.f32 %v6139, %v6268
      %v6301 = vsub.f32 %v6140, %v6269
      %v6302 = vsub.f32 %v6141, %v6270
      %v6303 = vsub.f32 %v6142, %v6271
      %v6304 = vsub.f32 %v6143, %v6272
      %v6305 = vsub.f32 %v6144, %v6273
      %v6306 = vsub.f32 %v6145, %v6274
      %v6307 = vsub.f32 %v6146, %v6275
      %v6308 = vsub.f32 %v6147, %v6276
      %v6309 = vsub.f32 %v6148, %v6277
      %v6310 = vsub.f32 %v6149, %v6278
      %v6311 = vsub.f32 %v6150, %v6279
      %v6312 = vsub.f32 %v6151, %v6280
      %v6313 = vsub.f32 %v6152, %v6281
      %v6314 = vsub.f32 %v6153, %v6282
      %v6315 = vsub.f32 %v6154, %v6283
      %v6316 = vsub.f32 %v6155, %v6284
      %v6317 = vsub.f32 %v6156, %v6285
      %v6318 = vsub.f32 %v6157, %v6286
      %v6319 = vsub.f32 %v6158, %v6287
      %v6320 = vsub.f32 %v6159, %v6288
      %v6321 = vsub.f32 %v6160, %v6289
      %v6322 = vsub.f32 %v6161, %v6290
      %v6323 = vsub.f32 %v6162, %v6291
      %v6324 = vsub.f32 %v6163, %v6292
      %v6325 = vsub.f32 %v6164, %v6293
      %v6326 = vsub.f32 %v6165, %v6294
      %v6327 = vsub.f32 %v6166, %v6295
      %v6328 = vsub.f32 %v6167, %v6296
      %v6329 = vsub.f32 %v6168, %v6297
      %v6330 = vsub.f32 %v6169, %v6298
      %v6331 = vsub.f32 %v6170, %v6299
      %v6332 = vmul.f32 %v6300, %v6300
      %v6333 = vmul.f32 %v6301, %v6301
      %v6334 = vmul.f32 %v6302, %v6302
      %v6335 = vmul.f32 %v6303, %v6303
      %v6336 = vmul.f32 %v6304, %v6304
      %v6337 = vmul.f32 %v6305, %v6305
      %v6338 = vmul.f32 %v6306, %v6306
      %v6339 = vmul.f32 %v6307, %v6307
      %v6340 = vmul.f32 %v6308, %v6308
      %v6341 = vmul.f32 %v6309, %v6309
      %v6342 = vmul.f32 %v6310, %v6310
      %v6343 = vmul.f32 %v6311, %v6311
      %v6344 = vmul.f32 %v6312, %v6312
      %v6345 = vmul.f32 %v6313, %v6313
      %v6346 = vmul.f32 %v6314, %v6314
      %v6347 = vmul.f32 %v6315, %v6315
      %v6348 = vmul.f32 %v6316, %v6316
      %v6349 = vmul.f32 %v6317, %v6317
      %v6350 = vmul.f32 %v6318, %v6318
      %v6351 = vmul.f32 %v6319, %v6319
      %v6352 = vmul.f32 %v6320, %v6320
      %v6353 = vmul.f32 %v6321, %v6321
      %v6354 = vmul.f32 %v6322, %v6322
      %v6355 = vmul.f32 %v6323, %v6323
      %v6356 = vmul.f32 %v6324, %v6324
      %v6357 = vmul.f32 %v6325, %v6325
      %v6358 = vmul.f32 %v6326, %v6326
      %v6359 = vmul.f32 %v6327, %v6327
      %v6360 = vmul.f32 %v6328, %v6328
      %v6361 = vmul.f32 %v6329, %v6329
      %v6362 = vmul.f32 %v6330, %v6330
      %v6363 = vmul.f32 %v6331, %v6331
      %v6364 = vsel %vm280, %v6332, 0.0
      %6365 = vadd.xlane.f32.xlu0 %v6364
      %v6366 = vpop.xlane.xlu0 %6365
      %v6367 = vsel %vm280, %v6333, 0.0
      %6368 = vadd.xlane.f32.xlu0 %v6367
      %v6369 = vpop.xlane.xlu0 %6368
      %v6370 = vsel %vm280, %v6334, 0.0
      %6371 = vadd.xlane.f32.xlu0 %v6370
      %v6372 = vpop.xlane.xlu0 %6371
      %v6373 = vsel %vm280, %v6335, 0.0
      %6374 = vadd.xlane.f32.xlu0 %v6373
      %v6375 = vpop.xlane.xlu0 %6374
      %v6376 = vsel %vm280, %v6336, 0.0
      %6377 = vadd.xlane.f32.xlu0 %v6376
      %v6378 = vpop.xlane.xlu0 %6377
      %v6379 = vsel %vm280, %v6337, 0.0
      %6380 = vadd.xlane.f32.xlu0 %v6379
      %v6381 = vpop.xlane.xlu0 %6380
      %v6382 = vsel %vm280, %v6338, 0.0
      %6383 = vadd.xlane.f32.xlu0 %v6382
      %v6384 = vpop.xlane.xlu0 %6383
      %v6385 = vsel %vm280, %v6339, 0.0
      %6386 = vadd.xlane.f32.xlu0 %v6385
      %v6387 = vpop.xlane.xlu0 %6386
      %v6388 = vsel %vm280, %v6340, 0.0
      %6389 = vadd.xlane.f32.xlu0 %v6388
      %v6390 = vpop.xlane.xlu0 %6389
      %v6391 = vsel %vm280, %v6341, 0.0
      %6392 = vadd.xlane.f32.xlu0 %v6391
      %v6393 = vpop.xlane.xlu0 %6392
      %v6394 = vsel %vm280, %v6342, 0.0
      %6395 = vadd.xlane.f32.xlu0 %v6394
      %v6396 = vpop.xlane.xlu0 %6395
      %v6397 = vsel %vm280, %v6343, 0.0
      %6398 = vadd.xlane.f32.xlu0 %v6397
      %v6399 = vpop.xlane.xlu0 %6398
      %v6400 = vsel %vm280, %v6344, 0.0
      %6401 = vadd.xlane.f32.xlu0 %v6400
      %v6402 = vpop.xlane.xlu0 %6401
      %v6403 = vsel %vm280, %v6345, 0.0
      %6404 = vadd.xlane.f32.xlu0 %v6403
      %v6405 = vpop.xlane.xlu0 %6404
      %v6406 = vsel %vm280, %v6346, 0.0
      %6407 = vadd.xlane.f32.xlu0 %v6406
      %v6408 = vpop.xlane.xlu0 %6407
      %v6409 = vsel %vm280, %v6347, 0.0
      %6410 = vadd.xlane.f32.xlu0 %v6409
      %v6411 = vpop.xlane.xlu0 %6410
      %v6412 = vsel %vm280, %v6348, 0.0
      %6413 = vadd.xlane.f32.xlu0 %v6412
      %v6414 = vpop.xlane.xlu0 %6413
      %v6415 = vsel %vm280, %v6349, 0.0
      %6416 = vadd.xlane.f32.xlu0 %v6415
      %v6417 = vpop.xlane.xlu0 %6416
      %v6418 = vsel %vm280, %v6350, 0.0
      %6419 = vadd.xlane.f32.xlu0 %v6418
      %v6420 = vpop.xlane.xlu0 %6419
      %v6421 = vsel %vm280, %v6351, 0.0
      %6422 = vadd.xlane.f32.xlu0 %v6421
      %v6423 = vpop.xlane.xlu0 %6422
      %v6424 = vsel %vm280, %v6352, 0.0
      %6425 = vadd.xlane.f32.xlu0 %v6424
      %v6426 = vpop.xlane.xlu0 %6425
      %v6427 = vsel %vm280, %v6353, 0.0
      %6428 = vadd.xlane.f32.xlu0 %v6427
      %v6429 = vpop.xlane.xlu0 %6428
      %v6430 = vsel %vm280, %v6354, 0.0
      %6431 = vadd.xlane.f32.xlu0 %v6430
      %v6432 = vpop.xlane.xlu0 %6431
      %v6433 = vsel %vm280, %v6355, 0.0
      %6434 = vadd.xlane.f32.xlu0 %v6433
      %v6435 = vpop.xlane.xlu0 %6434
      %v6436 = vsel %vm280, %v6356, 0.0
      %6437 = vadd.xlane.f32.xlu0 %v6436
      %v6438 = vpop.xlane.xlu0 %6437
      %v6439 = vsel %vm280, %v6357, 0.0
      %6440 = vadd.xlane.f32.xlu0 %v6439
      %v6441 = vpop.xlane.xlu0 %6440
      %v6442 = vsel %vm280, %v6358, 0.0
      %6443 = vadd.xlane.f32.xlu0 %v6442
      %v6444 = vpop.xlane.xlu0 %6443
      %v6445 = vsel %vm280, %v6359, 0.0
      %6446 = vadd.xlane.f32.xlu0 %v6445
      %v6447 = vpop.xlane.xlu0 %6446
      %v6448 = vsel %vm280, %v6360, 0.0
      %6449 = vadd.xlane.f32.xlu0 %v6448
      %v6450 = vpop.xlane.xlu0 %6449
      %v6451 = vsel %vm280, %v6361, 0.0
      %6452 = vadd.xlane.f32.xlu0 %v6451
      %v6453 = vpop.xlane.xlu0 %6452
      %v6454 = vsel %vm280, %v6362, 0.0
      %6455 = vadd.xlane.f32.xlu0 %v6454
      %v6456 = vpop.xlane.xlu0 %6455
      %v6457 = vsel %vm280, %v6363, 0.0
      %6458 = vadd.xlane.f32.xlu0 %v6457
      %v6459 = vpop.xlane.xlu0 %6458
      %v6460 = vmul.f32 %v6366, %v6267
      %v6461 = vmul.f32 %v6369, %v6267
      %v6462 = vmul.f32 %v6372, %v6267
      %v6463 = vmul.f32 %v6375, %v6267
      %v6464 = vmul.f32 %v6378, %v6267
      %v6465 = vmul.f32 %v6381, %v6267
      %v6466 = vmul.f32 %v6384, %v6267
      %v6467 = vmul.f32 %v6387, %v6267
      %v6468 = vmul.f32 %v6390, %v6267
      %v6469 = vmul.f32 %v6393, %v6267
      %v6470 = vmul.f32 %v6396, %v6267
      %v6471 = vmul.f32 %v6399, %v6267
      %v6472 = vmul.f32 %v6402, %v6267
      %v6473 = vmul.f32 %v6405, %v6267
      %v6474 = vmul.f32 %v6408, %v6267
      %v6475 = vmul.f32 %v6411, %v6267
      %v6476 = vmul.f32 %v6414, %v6267
      %v6477 = vmul.f32 %v6417, %v6267
      %v6478 = vmul.f32 %v6420, %v6267
      %v6479 = vmul.f32 %v6423, %v6267
      %v6480 = vmul.f32 %v6426, %v6267
      %v6481 = vmul.f32 %v6429, %v6267
      %v6482 = vmul.f32 %v6432, %v6267
      %v6483 = vmul.f32 %v6435, %v6267
      %v6484 = vmul.f32 %v6438, %v6267
      %v6485 = vmul.f32 %v6441, %v6267
      %v6486 = vmul.f32 %v6444, %v6267
      %v6487 = vmul.f32 %v6447, %v6267
      %v6488 = vmul.f32 %v6450, %v6267
      %v6489 = vmul.f32 %v6453, %v6267
      %v6490 = vmul.f32 %v6456, %v6267
      %v6491 = vmul.f32 %v6459, %v6267
      %v6492 = vadd.f32 %v6460, 1e-06
      %v6493 = vadd.f32 %v6461, 1e-06
      %v6494 = vadd.f32 %v6462, 1e-06
      %v6495 = vadd.f32 %v6463, 1e-06
      %v6496 = vadd.f32 %v6464, 1e-06
      %v6497 = vadd.f32 %v6465, 1e-06
      %v6498 = vadd.f32 %v6466, 1e-06
      %v6499 = vadd.f32 %v6467, 1e-06
      %v6500 = vadd.f32 %v6468, 1e-06
      %v6501 = vadd.f32 %v6469, 1e-06
      %v6502 = vadd.f32 %v6470, 1e-06
      %v6503 = vadd.f32 %v6471, 1e-06
      %v6504 = vadd.f32 %v6472, 1e-06
      %v6505 = vadd.f32 %v6473, 1e-06
      %v6506 = vadd.f32 %v6474, 1e-06
      %v6507 = vadd.f32 %v6475, 1e-06
      %v6508 = vadd.f32 %v6476, 1e-06
      %v6509 = vadd.f32 %v6477, 1e-06
      %v6510 = vadd.f32 %v6478, 1e-06
      %v6511 = vadd.f32 %v6479, 1e-06
      %v6512 = vadd.f32 %v6480, 1e-06
      %v6513 = vadd.f32 %v6481, 1e-06
      %v6514 = vadd.f32 %v6482, 1e-06
      %v6515 = vadd.f32 %v6483, 1e-06
      %v6516 = vadd.f32 %v6484, 1e-06
      %v6517 = vadd.f32 %v6485, 1e-06
      %v6518 = vadd.f32 %v6486, 1e-06
      %v6519 = vadd.f32 %v6487, 1e-06
      %v6520 = vadd.f32 %v6488, 1e-06
      %v6521 = vadd.f32 %v6489, 1e-06
      %v6522 = vadd.f32 %v6490, 1e-06
      %v6523 = vadd.f32 %v6491, 1e-06
      %v6524 = vrsqrt.pop %v6492
      %v6525 = vrsqrt.pop %v6493
      %v6526 = vrsqrt.pop %v6494
      %v6527 = vrsqrt.pop %v6495
      %v6528 = vrsqrt.pop %v6496
      %v6529 = vrsqrt.pop %v6497
      %v6530 = vrsqrt.pop %v6498
      %v6531 = vrsqrt.pop %v6499
      %v6532 = vrsqrt.pop %v6500
      %v6533 = vrsqrt.pop %v6501
      %v6534 = vrsqrt.pop %v6502
      %v6535 = vrsqrt.pop %v6503
      %v6536 = vrsqrt.pop %v6504
      %v6537 = vrsqrt.pop %v6505
      %v6538 = vrsqrt.pop %v6506
      %v6539 = vrsqrt.pop %v6507
      %v6540 = vrsqrt.pop %v6508
      %v6541 = vrsqrt.pop %v6509
      %v6542 = vrsqrt.pop %v6510
      %v6543 = vrsqrt.pop %v6511
      %v6544 = vrsqrt.pop %v6512
      %v6545 = vrsqrt.pop %v6513
      %v6546 = vrsqrt.pop %v6514
      %v6547 = vrsqrt.pop %v6515
      %v6548 = vrsqrt.pop %v6516
      %v6549 = vrsqrt.pop %v6517
      %v6550 = vrsqrt.pop %v6518
      %v6551 = vrsqrt.pop %v6519
      %v6552 = vrsqrt.pop %v6520
      %v6553 = vrsqrt.pop %v6521
      %v6554 = vrsqrt.pop %v6522
      %v6555 = vrsqrt.pop %v6523
      %v6556 = vmul.f32 %v6300, %v6524
      %v6557 = vmul.f32 %v6301, %v6525
      %v6558 = vmul.f32 %v6302, %v6526
      %v6559 = vmul.f32 %v6303, %v6527
      %v6560 = vmul.f32 %v6304, %v6528
      %v6561 = vmul.f32 %v6305, %v6529
      %v6562 = vmul.f32 %v6306, %v6530
      %v6563 = vmul.f32 %v6307, %v6531
      %v6564 = vmul.f32 %v6308, %v6532
      %v6565 = vmul.f32 %v6309, %v6533
      %v6566 = vmul.f32 %v6310, %v6534
      %v6567 = vmul.f32 %v6311, %v6535
      %v6568 = vmul.f32 %v6312, %v6536
      %v6569 = vmul.f32 %v6313, %v6537
      %v6570 = vmul.f32 %v6314, %v6538
      %v6571 = vmul.f32 %v6315, %v6539
      %v6572 = vmul.f32 %v6316, %v6540
      %v6573 = vmul.f32 %v6317, %v6541
      %v6574 = vmul.f32 %v6318, %v6542
      %v6575 = vmul.f32 %v6319, %v6543
      %v6576 = vmul.f32 %v6320, %v6544
      %v6577 = vmul.f32 %v6321, %v6545
      %v6578 = vmul.f32 %v6322, %v6546
      %v6579 = vmul.f32 %v6323, %v6547
      %v6580 = vmul.f32 %v6324, %v6548
      %v6581 = vmul.f32 %v6325, %v6549
      %v6582 = vmul.f32 %v6326, %v6550
      %v6583 = vmul.f32 %v6327, %v6551
      %v6584 = vmul.f32 %v6328, %v6552
      %v6585 = vmul.f32 %v6329, %v6553
      %v6586 = vmul.f32 %v6330, %v6554
      %v6587 = vmul.f32 %v6331, %v6555
      %v6588 = vpack.c.bf16 %v6557, %v6556
      %v6589 = vpack.c.bf16 %v6559, %v6558
      %v6590 = vpack.c.bf16 %v6561, %v6560
      %v6591 = vpack.c.bf16 %v6563, %v6562
      %v6592 = vpack.c.bf16 %v6565, %v6564
      %v6593 = vpack.c.bf16 %v6567, %v6566
      %v6594 = vpack.c.bf16 %v6569, %v6568
      %v6595 = vpack.c.bf16 %v6571, %v6570
      %v6596 = vpack.c.bf16 %v6573, %v6572
      %v6597 = vpack.c.bf16 %v6575, %v6574
      %v6598 = vpack.c.bf16 %v6577, %v6576
      %v6599 = vpack.c.bf16 %v6579, %v6578
      %v6600 = vpack.c.bf16 %v6581, %v6580
      %v6601 = vpack.c.bf16 %v6583, %v6582
      %v6602 = vpack.c.bf16 %v6585, %v6584
      %v6603 = vpack.c.bf16 %v6587, %v6586
      %v6604 = vld [vmem:[%s3] sm:$0xf]
      %v6605 = vld [vmem:[%s3 + $0x4] sm:$0xf]
      %v6606 = vld [vmem:[%s3 + $0x8] sm:$0xf]
      %v6607 = vld [vmem:[%s3 + $0xc] sm:$0xf]
      %v6608 = vld [vmem:[%s4] sm:$0x1]
      %v6610 = vlaneseq
      %v6611 = vshrl.u32 %v6610, 7
      %v6612 = vsub.s32 0, %v6611
      %v6613 = vrot.slane %v6608, %v6612
      %v6619 = vunpack.c.l.b16 %v6604
      %v6620 = vunpack.c.l.b16 %v6605
      %v6621 = vunpack.c.l.b16 %v6606
      %v6622 = vunpack.c.l.b16 %v6607
      %v6623 = vpack.c.b16 %v6620, %v6619
      %v6624 = vpack.c.b16 %v6622, %v6621
      %v6628 = vsel %vm280, %v6588, 0
      %v6631 = vsel %vm280, %v6589, 0
      %v6634 = vsel %vm280, %v6590, 0
      %v6637 = vsel %vm280, %v6591, 0
      %v6640 = vsel %vm280, %v6592, 0
      %v6643 = vsel %vm280, %v6593, 0
      %v6646 = vsel %vm280, %v6594, 0
      %v6649 = vsel %vm280, %v6595, 0
      %v6652 = vsel %vm280, %v6596, 0
      %v6655 = vsel %vm280, %v6597, 0
      %v6658 = vsel %vm280, %v6598, 0
      %v6661 = vsel %vm280, %v6599, 0
      %v6664 = vsel %vm280, %v6600, 0
      %v6667 = vsel %vm280, %v6601, 0
      %v6670 = vsel %vm280, %v6602, 0
      %v6673 = vsel %vm280, %v6603, 0
      %6675 = vmatprep.subr.bf16.mxu0 0
      %6676 = vmatpush1.bf16.msra.mxu0 %v6623
      %6677 = vmatprep.subr.bf16.mxu0 0
      %6678 = vmatpush1.bf16.msra.mxu0 %v6624
      %6679 = vmatprep.subr.bf16.mxu0 0
      %6680 = vmatpush1.bf16.msra.mxu0 0
      %6681 = vmatprep.subr.bf16.mxu0 0
      %6682 = vmatpush1.bf16.msra.mxu0 0
      %6683 = vmatprep.subr.bf16.mxu0 0
      %6684 = vmatpush1.bf16.msra.mxu0 0
      %6685 = vmatprep.subr.bf16.mxu0 0
      %6686 = vmatpush1.bf16.msra.mxu0 0
      %6687 = vmatprep.subr.bf16.mxu0 0
      %6688 = vmatpush1.bf16.msra.mxu0 0
      %6689 = vmatprep.subr.bf16.mxu0 0
      %6690 = vmatpush1.bf16.msra.mxu0 0
      %6691 = vmatprep.subr.bf16.mxu0 0
      %6692 = vmatpush1.bf16.msra.mxu0 0
      %6693 = vmatprep.subr.bf16.mxu0 0
      %6694 = vmatpush1.bf16.msra.mxu0 0
      %6695 = vmatprep.subr.bf16.mxu0 0
      %6696 = vmatpush1.bf16.msra.mxu0 0
      %6697 = vmatprep.subr.bf16.mxu0 0
      %6698 = vmatpush1.bf16.msra.mxu0 0
      %6699 = vmatprep.subr.bf16.mxu0 0
      %6700 = vmatpush1.bf16.msra.mxu0 0
      %6701 = vmatprep.subr.bf16.mxu0 0
      %6702 = vmatpush1.bf16.msra.mxu0 0
      %6703 = vmatprep.subr.bf16.mxu0 0
      %6704 = vmatpush1.bf16.msra.mxu0 0
      %6705 = vmatprep.subr.bf16.mxu0 0
      %6706 = vmatpush1.bf16.msra.mxu0 0
      %6707 = vmatprep.mubr.bf16.mxu0 0
      %6708 = vmatmul.mubr.bf16.gmra.mrb[0].mxu0 %v6628
      %v6709 = vpop.f32.mrb[0].mxu0
      %v6710 = vadd.f32 %v6613, %v6709
      %v6711 = vpop.f32.mrb[0].mxu0
      %v6712 = vpop.f32.mrb[0].mxu0
      %v6713 = vadd.f32 %v6613, %v6712
      %v6714 = vpop.f32.mrb[0].mxu0
      %6715 = vmatprep.mubr.bf16.mxu0 0
      %6716 = vmatmul.mubr.bf16.gmra.mrb[0].mxu0 %v6631
      %v6717 = vpop.f32.mrb[0].mxu0
      %v6718 = vadd.f32 %v6613, %v6717
      %v6719 = vpop.f32.mrb[0].mxu0
      %v6720 = vpop.f32.mrb[0].mxu0
      %v6721 = vadd.f32 %v6613, %v6720
      %v6722 = vpop.f32.mrb[0].mxu0
      %6723 = vmatprep.mubr.bf16.mxu0 0
      %6724 = vmatmul.mubr.bf16.gmra.mrb[0].mxu0 %v6634
      %v6725 = vpop.f32.mrb[0].mxu0
      %v6726 = vadd.f32 %v6613, %v6725
      %v6727 = vpop.f32.mrb[0].mxu0
      %v6728 = vpop.f32.mrb[0].mxu0
      %v6729 = vadd.f32 %v6613, %v6728
      %v6730 = vpop.f32.mrb[0].mxu0
      %6731 = vmatprep.mubr.bf16.mxu0 0
      %6732 = vmatmul.mubr.bf16.gmra.mrb[0].mxu0 %v6637
      %v6733 = vpop.f32.mrb[0].mxu0
      %v6734 = vadd.f32 %v6613, %v6733
      %v6735 = vpop.f32.mrb[0].mxu0
      %v6736 = vpop.f32.mrb[0].mxu0
      %v6737 = vadd.f32 %v6613, %v6736
      %v6738 = vpop.f32.mrb[0].mxu0
      %6739 = vmatprep.mubr.bf16.mxu0 0
      %6740 = vmatmul.mubr.bf16.gmra.mrb[0].mxu0 %v6640
      %v6741 = vpop.f32.mrb[0].mxu0
      %v6742 = vadd.f32 %v6613, %v6741
      %v6743 = vpop.f32.mrb[0].mxu0
      %v6744 = vpop.f32.mrb[0].mxu0
      %v6745 = vadd.f32 %v6613, %v6744
      %v6746 = vpop.f32.mrb[0].mxu0
      %6747 = vmatprep.mubr.bf16.mxu0 0
      %6748 = vmatmul.mubr.bf16.gmra.mrb[0].mxu0 %v6643
      %v6749 = vpop.f32.mrb[0].mxu0
      %v6750 = vadd.f32 %v6613, %v6749
      %v6751 = vpop.f32.mrb[0].mxu0
      %v6752 = vpop.f32.mrb[0].mxu0
      %v6753 = vadd.f32 %v6613, %v6752
      %v6754 = vpop.f32.mrb[0].mxu0
      %6755 = vmatprep.mubr.bf16.mxu0 0
      %6756 = vmatmul.mubr.bf16.gmra.mrb[0].mxu0 %v6646
      %v6757 = vpop.f32.mrb[0].mxu0
      %v6758 = vadd.f32 %v6613, %v6757
      %v6759 = vpop.f32.mrb[0].mxu0
      %v6760 = vpop.f32.mrb[0].mxu0
      %v6761 = vadd.f32 %v6613, %v6760
      %v6762 = vpop.f32.mrb[0].mxu0
      %6763 = vmatprep.mubr.bf16.mxu0 0
      %6764 = vmatmul.mubr.bf16.gmra.mrb[0].mxu0 %v6649
      %v6765 = vpop.f32.mrb[0].mxu0
      %v6766 = vadd.f32 %v6613, %v6765
      %v6767 = vpop.f32.mrb[0].mxu0
      %v6768 = vpop.f32.mrb[0].mxu0
      %v6769 = vadd.f32 %v6613, %v6768
      %v6770 = vpop.f32.mrb[0].mxu0
      %6771 = vmatprep.mubr.bf16.mxu0 0
      %6772 = vmatmul.mubr.bf16.gmra.mrb[0].mxu0 %v6652
      %v6773 = vpop.f32.mrb[0].mxu0
      %v6774 = vadd.f32 %v6613, %v6773
      %v6775 = vpop.f32.mrb[0].mxu0
      %v6776 = vpop.f32.mrb[0].mxu0
      %v6777 = vadd.f32 %v6613, %v6776
      %v6778 = vpop.f32.mrb[0].mxu0
      %6779 = vmatprep.mubr.bf16.mxu0 0
      %6780 = vmatmul.mubr.bf16.gmra.mrb[0].mxu0 %v6655
      %v6781 = vpop.f32.mrb[0].mxu0
      %v6782 = vadd.f32 %v6613, %v6781
      %v6783 = vpop.f32.mrb[0].mxu0
      %v6784 = vpop.f32.mrb[0].mxu0
      %v6785 = vadd.f32 %v6613, %v6784
      %v6786 = vpop.f32.mrb[0].mxu0
      %6787 = vmatprep.mubr.bf16.mxu0 0
      %6788 = vmatmul.mubr.bf16.gmra.mrb[0].mxu0 %v6658
      %v6789 = vpop.f32.mrb[0].mxu0
      %v6790 = vadd.f32 %v6613, %v6789
      %v6791 = vpop.f32.mrb[0].mxu0
      %v6792 = vpop.f32.mrb[0].mxu0
      %v6793 = vadd.f32 %v6613, %v6792
      %v6794 = vpop.f32.mrb[0].mxu0
      %6795 = vmatprep.mubr.bf16.mxu0 0
      %6796 = vmatmul.mubr.bf16.gmra.mrb[0].mxu0 %v6661
      %v6797 = vpop.f32.mrb[0].mxu0
      %v6798 = vadd.f32 %v6613, %v6797
      %v6799 = vpop.f32.mrb[0].mxu0
      %v6800 = vpop.f32.mrb[0].mxu0
      %v6801 = vadd.f32 %v6613, %v6800
      %v6802 = vpop.f32.mrb[0].mxu0
      %6803 = vmatprep.mubr.bf16.mxu0 0
      %6804 = vmatmul.mubr.bf16.gmra.mrb[0].mxu0 %v6664
      %v6805 = vpop.f32.mrb[0].mxu0
      %v6806 = vadd.f32 %v6613, %v6805
      %v6807 = vpop.f32.mrb[0].mxu0
      %v6808 = vpop.f32.mrb[0].mxu0
      %v6809 = vadd.f32 %v6613, %v6808
      %v6810 = vpop.f32.mrb[0].mxu0
      %6811 = vmatprep.mubr.bf16.mxu0 0
      %6812 = vmatmul.mubr.bf16.gmra.mrb[0].mxu0 %v6667
      %v6813 = vpop.f32.mrb[0].mxu0
      %v6814 = vadd.f32 %v6613, %v6813
      %v6815 = vpop.f32.mrb[0].mxu0
      %v6816 = vpop.f32.mrb[0].mxu0
      %v6817 = vadd.f32 %v6613, %v6816
      %v6818 = vpop.f32.mrb[0].mxu0
      %6819 = vmatprep.mubr.bf16.mxu0 0
      %6820 = vmatmul.mubr.bf16.gmra.mrb[0].mxu0 %v6670
      %v6821 = vpop.f32.mrb[0].mxu0
      %v6822 = vadd.f32 %v6613, %v6821
      %v6823 = vpop.f32.mrb[0].mxu0
      %v6824 = vpop.f32.mrb[0].mxu0
      %v6825 = vadd.f32 %v6613, %v6824
      %v6826 = vpop.f32.mrb[0].mxu0
      %6827 = vmatprep.mubr.bf16.mxu0 0
      %6828 = vmatmul.mubr.bf16.gmra.mrb[0].mxu0 %v6673
      %v6829 = vpop.f32.mrb[0].mxu0
      %v6830 = vadd.f32 %v6613, %v6829
      %v6831 = vpop.f32.mrb[0].mxu0
      %v6832 = vpop.f32.mrb[0].mxu0
      %v6833 = vadd.f32 %v6613, %v6832
      %v6834 = vpop.f32.mrb[0].mxu0
      %6835 = vdwg.mxu0
      %v6836 = vmul.f32 %v6710, 0.5
      %v6837 = vmul.f32 %v6713, 0.5
      %v6838 = vmul.f32 %v6718, 0.5
      %v6839 = vmul.f32 %v6721, 0.5
      %v6840 = vmul.f32 %v6726, 0.5
      %v6841 = vmul.f32 %v6729, 0.5
      %v6842 = vmul.f32 %v6734, 0.5
      %v6843 = vmul.f32 %v6737, 0.5
      %v6844 = vmul.f32 %v6742, 0.5
      %v6845 = vmul.f32 %v6745, 0.5
      %v6846 = vmul.f32 %v6750, 0.5
      %v6847 = vmul.f32 %v6753, 0.5
      %v6848 = vmul.f32 %v6758, 0.5
      %v6849 = vmul.f32 %v6761, 0.5
      %v6850 = vmul.f32 %v6766, 0.5
      %v6851 = vmul.f32 %v6769, 0.5
      %v6852 = vmul.f32 %v6774, 0.5
      %v6853 = vmul.f32 %v6777, 0.5
      %v6854 = vmul.f32 %v6782, 0.5
      %v6855 = vmul.f32 %v6785, 0.5
      %v6856 = vmul.f32 %v6790, 0.5
      %v6857 = vmul.f32 %v6793, 0.5
      %v6858 = vmul.f32 %v6798, 0.5
      %v6859 = vmul.f32 %v6801, 0.5
      %v6860 = vmul.f32 %v6806, 0.5
      %v6861 = vmul.f32 %v6809, 0.5
      %v6862 = vmul.f32 %v6814, 0.5
      %v6863 = vmul.f32 %v6817, 0.5
      %v6864 = vmul.f32 %v6822, 0.5
      %v6865 = vmul.f32 %v6825, 0.5
      %v6866 = vmul.f32 %v6830, 0.5
      %v6867 = vmul.f32 %v6833, 0.5
      %v6868 = vmul.f32 %v6710, 0.70710677
      %v6869 = vmul.f32 %v6713, 0.70710677
      %v6870 = vmul.f32 %v6718, 0.70710677
      %v6871 = vmul.f32 %v6721, 0.70710677
      %v6872 = vmul.f32 %v6726, 0.70710677
      %v6873 = vmul.f32 %v6729, 0.70710677
      %v6874 = vmul.f32 %v6734, 0.70710677
      %v6875 = vmul.f32 %v6737, 0.70710677
      %v6876 = vmul.f32 %v6742, 0.70710677
      %v6877 = vmul.f32 %v6745, 0.70710677
      %v6878 = vmul.f32 %v6750, 0.70710677
      %v6879 = vmul.f32 %v6753, 0.70710677
      %v6880 = vmul.f32 %v6758, 0.70710677
      %v6881 = vmul.f32 %v6761, 0.70710677
      %v6882 = vmul.f32 %v6766, 0.70710677
      %v6883 = vmul.f32 %v6769, 0.70710677
      %v6884 = vmul.f32 %v6774, 0.70710677
      %v6885 = vmul.f32 %v6777, 0.70710677
      %v6886 = vmul.f32 %v6782, 0.70710677
      %v6887 = vmul.f32 %v6785, 0.70710677
      %v6888 = vmul.f32 %v6790, 0.70710677
      %v6889 = vmul.f32 %v6793, 0.70710677
      %v6890 = vmul.f32 %v6798, 0.70710677
      %v6891 = vmul.f32 %v6801, 0.70710677
      %v6892 = vmul.f32 %v6806, 0.70710677
      %v6893 = vmul.f32 %v6809, 0.70710677
      %v6894 = vmul.f32 %v6814, 0.70710677
      %v6895 = vmul.f32 %v6817, 0.70710677
      %v6896 = vmul.f32 %v6822, 0.70710677
      %v6897 = vmul.f32 %v6825, 0.70710677
      %v6898 = vmul.f32 %v6830, 0.70710677
      %v6899 = vmul.f32 %v6833, 0.70710677
      %v6900 = verf.f32.pop %v6868
      %v6901 = verf.f32.pop %v6869
      %v6902 = verf.f32.pop %v6870
      %v6903 = verf.f32.pop %v6871
      %v6904 = verf.f32.pop %v6872
      %v6905 = verf.f32.pop %v6873
      %v6906 = verf.f32.pop %v6874
      %v6907 = verf.f32.pop %v6875
      %v6908 = verf.f32.pop %v6876
      %v6909 = verf.f32.pop %v6877
      %v6910 = verf.f32.pop %v6878
      %v6911 = verf.f32.pop %v6879
      %v6912 = verf.f32.pop %v6880
      %v6913 = verf.f32.pop %v6881
      %v6914 = verf.f32.pop %v6882
      %v6915 = verf.f32.pop %v6883
      %v6916 = verf.f32.pop %v6884
      %v6917 = verf.f32.pop %v6885
      %v6918 = verf.f32.pop %v6886
      %v6919 = verf.f32.pop %v6887
      %v6920 = verf.f32.pop %v6888
      %v6921 = verf.f32.pop %v6889
      %v6922 = verf.f32.pop %v6890
      %v6923 = verf.f32.pop %v6891
      %v6924 = verf.f32.pop %v6892
      %v6925 = verf.f32.pop %v6893
      %v6926 = verf.f32.pop %v6894
      %v6927 = verf.f32.pop %v6895
      %v6928 = verf.f32.pop %v6896
      %v6929 = verf.f32.pop %v6897
      %v6930 = verf.f32.pop %v6898
      %v6931 = verf.f32.pop %v6899
      %v6932 = vadd.f32 %v6900, 1.0
      %v6933 = vadd.f32 %v6901, 1.0
      %v6934 = vadd.f32 %v6902, 1.0
      %v6935 = vadd.f32 %v6903, 1.0
      %v6936 = vadd.f32 %v6904, 1.0
      %v6937 = vadd.f32 %v6905, 1.0
      %v6938 = vadd.f32 %v6906, 1.0
      %v6939 = vadd.f32 %v6907, 1.0
      %v6940 = vadd.f32 %v6908, 1.0
      %v6941 = vadd.f32 %v6909, 1.0
      %v6942 = vadd.f32 %v6910, 1.0
      %v6943 = vadd.f32 %v6911, 1.0
      %v6944 = vadd.f32 %v6912, 1.0
      %v6945 = vadd.f32 %v6913, 1.0
      %v6946 = vadd.f32 %v6914, 1.0
      %v6947 = vadd.f32 %v6915, 1.0
      %v6948 = vadd.f32 %v6916, 1.0
      %v6949 = vadd.f32 %v6917, 1.0
      %v6950 = vadd.f32 %v6918, 1.0
      %v6951 = vadd.f32 %v6919, 1.0
      %v6952 = vadd.f32 %v6920, 1.0
      %v6953 = vadd.f32 %v6921, 1.0
      %v6954 = vadd.f32 %v6922, 1.0
      %v6955 = vadd.f32 %v6923, 1.0
      %v6956 = vadd.f32 %v6924, 1.0
      %v6957 = vadd.f32 %v6925, 1.0
      %v6958 = vadd.f32 %v6926, 1.0
      %v6959 = vadd.f32 %v6927, 1.0
      %v6960 = vadd.f32 %v6928, 1.0
      %v6961 = vadd.f32 %v6929, 1.0
      %v6962 = vadd.f32 %v6930, 1.0
      %v6963 = vadd.f32 %v6931, 1.0
      %v6964 = vmul.f32 %v6836, %v6932
      %v6965 = vmul.f32 %v6837, %v6933
      %v6966 = vmul.f32 %v6838, %v6934
      %v6967 = vmul.f32 %v6839, %v6935
      %v6968 = vmul.f32 %v6840, %v6936
      %v6969 = vmul.f32 %v6841, %v6937
      %v6970 = vmul.f32 %v6842, %v6938
      %v6971 = vmul.f32 %v6843, %v6939
      %v6972 = vmul.f32 %v6844, %v6940
      %v6973 = vmul.f32 %v6845, %v6941
      %v6974 = vmul.f32 %v6846, %v6942
      %v6975 = vmul.f32 %v6847, %v6943
      %v6976 = vmul.f32 %v6848, %v6944
      %v6977 = vmul.f32 %v6849, %v6945
      %v6978 = vmul.f32 %v6850, %v6946
      %v6979 = vmul.f32 %v6851, %v6947
      %v6980 = vmul.f32 %v6852, %v6948
      %v6981 = vmul.f32 %v6853, %v6949
      %v6982 = vmul.f32 %v6854, %v6950
      %v6983 = vmul.f32 %v6855, %v6951
      %v6984 = vmul.f32 %v6856, %v6952
      %v6985 = vmul.f32 %v6857, %v6953
      %v6986 = vmul.f32 %v6858, %v6954
      %v6987 = vmul.f32 %v6859, %v6955
      %v6988 = vmul.f32 %v6860, %v6956
      %v6989 = vmul.f32 %v6861, %v6957
      %v6990 = vmul.f32 %v6862, %v6958
      %v6991 = vmul.f32 %v6863, %v6959
      %v6992 = vmul.f32 %v6864, %v6960
      %v6993 = vmul.f32 %v6865, %v6961
      %v6994 = vmul.f32 %v6866, %v6962
      %v6995 = vmul.f32 %v6867, %v6963
      %v6996 = vpack.c.bf16 %v6965, %v6964
      %v6997 = vpack.c.bf16 %v6967, %v6966
      %v6998 = vpack.c.bf16 %v6969, %v6968
      %v6999 = vpack.c.bf16 %v6971, %v6970
      %v7000 = vpack.c.bf16 %v6973, %v6972
      %v7001 = vpack.c.bf16 %v6975, %v6974
      %v7002 = vpack.c.bf16 %v6977, %v6976
      %v7003 = vpack.c.bf16 %v6979, %v6978
      %v7004 = vpack.c.bf16 %v6981, %v6980
      %v7005 = vpack.c.bf16 %v6983, %v6982
      %v7006 = vpack.c.bf16 %v6985, %v6984
      %v7007 = vpack.c.bf16 %v6987, %v6986
      %v7008 = vpack.c.bf16 %v6989, %v6988
      %v7009 = vpack.c.bf16 %v6991, %v6990
      %v7010 = vpack.c.bf16 %v6993, %v6992
      %v7011 = vpack.c.bf16 %v6995, %v6994
      %v7012 = vld [vmem:[%s5] sm:$0xf]
      %v7013 = vld [vmem:[%s5 + $0x4] sm:$0xf]
      %v7014 = vld [vmem:[%s5 + $0x8] sm:$0xf]
      %v7015 = vld [vmem:[%s5 + $0xc] sm:$0xf]
      %v7016 = vld [vmem:[%s5 + $0x10] sm:$0xf]
      %v7017 = vld [vmem:[%s5 + $0x14] sm:$0xf]
      %v7018 = vld [vmem:[%s5 + $0x18] sm:$0xf]
      %v7019 = vld [vmem:[%s5 + $0x1c] sm:$0xf]
      %v7020 = vld [vmem:[%s5 + $0x20] sm:$0xf]
      %v7021 = vld [vmem:[%s5 + $0x24] sm:$0xf]
      %v7022 = vld [vmem:[%s5 + $0x28] sm:$0xf]
      %v7023 = vld [vmem:[%s5 + $0x2c] sm:$0xf]
      %v7024 = vld [vmem:[%s5 + $0x30] sm:$0xf]
      %v7025 = vld [vmem:[%s5 + $0x34] sm:$0xf]
      %v7026 = vld [vmem:[%s5 + $0x38] sm:$0xf]
      %v7027 = vld [vmem:[%s5 + $0x3c] sm:$0xf]
      %v7028 = vld [vmem:[%s6] sm:$0x1]
      %v7030 = vlaneseq
      %v7031 = vshrl.u32 %v7030, 7
      %v7032 = vsub.s32 0, %v7031
      %v7033 = vrot.slane %v7028, %v7032
      %v7051 = vunpack.c.l.b16 %v7012
      %v7052 = vunpack.c.l.b16 %v7013
      %v7053 = vunpack.c.l.b16 %v7014
      %v7054 = vunpack.c.l.b16 %v7015
      %v7055 = vunpack.c.l.b16 %v7016
      %v7056 = vunpack.c.l.b16 %v7017
      %v7057 = vunpack.c.l.b16 %v7018
      %v7058 = vunpack.c.l.b16 %v7019
      %v7059 = vunpack.c.l.b16 %v7020
      %v7060 = vunpack.c.l.b16 %v7021
      %v7061 = vunpack.c.l.b16 %v7022
      %v7062 = vunpack.c.l.b16 %v7023
      %v7063 = vunpack.c.l.b16 %v7024
      %v7064 = vunpack.c.l.b16 %v7025
      %v7065 = vunpack.c.l.b16 %v7026
      %v7066 = vunpack.c.l.b16 %v7027
      %v7067 = vpack.c.b16 %v7052, %v7051
      %v7068 = vpack.c.b16 %v7054, %v7053
      %v7069 = vpack.c.b16 %v7056, %v7055
      %v7070 = vpack.c.b16 %v7058, %v7057
      %v7071 = vpack.c.b16 %v7060, %v7059
      %v7072 = vpack.c.b16 %v7062, %v7061
      %v7073 = vpack.c.b16 %v7064, %v7063
      %v7074 = vpack.c.b16 %v7066, %v7065
      %7083 = vmatprep.subr.bf16.mxu0 0
      %7084 = vmatpush1.bf16.msra.mxu0 %v7067
      %7085 = vmatprep.subr.bf16.mxu0 0
      %7086 = vmatpush1.bf16.msra.mxu0 %v7068
      %7087 = vmatprep.subr.bf16.mxu0 0
      %7088 = vmatpush1.bf16.msra.mxu0 %v7069
      %7089 = vmatprep.subr.bf16.mxu0 0
      %7090 = vmatpush1.bf16.msra.mxu0 %v7070
      %7091 = vmatprep.subr.bf16.mxu0 0
      %7092 = vmatpush1.bf16.msra.mxu0 %v7071
      %7093 = vmatprep.subr.bf16.mxu0 0
      %7094 = vmatpush1.bf16.msra.mxu0 %v7072
      %7095 = vmatprep.subr.bf16.mxu0 0
      %7096 = vmatpush1.bf16.msra.mxu0 %v7073
      %7097 = vmatprep.subr.bf16.mxu0 0
      %7098 = vmatpush1.bf16.msra.mxu0 %v7074
      %7099 = vmatprep.subr.bf16.mxu0 0
      %7100 = vmatpush1.bf16.msra.mxu0 0
      %7101 = vmatprep.subr.bf16.mxu0 0
      %7102 = vmatpush1.bf16.msra.mxu0 0
      %7103 = vmatprep.subr.bf16.mxu0 0
      %7104 = vmatpush1.bf16.msra.mxu0 0
      %7105 = vmatprep.subr.bf16.mxu0 0
      %7106 = vmatpush1.bf16.msra.mxu0 0
      %7107 = vmatprep.subr.bf16.mxu0 0
      %7108 = vmatpush1.bf16.msra.mxu0 0
      %7109 = vmatprep.subr.bf16.mxu0 0
      %7110 = vmatpush1.bf16.msra.mxu0 0
      %7111 = vmatprep.subr.bf16.mxu0 0
      %7112 = vmatpush1.bf16.msra.mxu0 0
      %7113 = vmatprep.subr.bf16.mxu0 0
      %7114 = vmatpush1.bf16.msra.mxu0 0
      %7115 = vmatprep.mubr.bf16.mxu0 0
      %7116 = vmatmul.mubr.bf16.gmra.mrb[0].mxu0 %v6996
      %v7117 = vpop.f32.mrb[0].mxu0
      %v7118 = vadd.f32 %v7033, %v7117
      %v7119 = vpop.f32.mrb[0].mxu0
      %v7120 = vpop.f32.mrb[0].mxu0
      %v7121 = vadd.f32 %v7033, %v7120
      %v7122 = vpop.f32.mrb[0].mxu0
      %7123 = vmatprep.mubr.bf16.mxu0 0
      %7124 = vmatmul.mubr.bf16.gmra.mrb[0].mxu0 %v6997
      %v7125 = vpop.f32.mrb[0].mxu0
      %v7126 = vadd.f32 %v7033, %v7125
      %v7127 = vpop.f32.mrb[0].mxu0
      %v7128 = vpop.f32.mrb[0].mxu0
      %v7129 = vadd.f32 %v7033, %v7128
      %v7130 = vpop.f32.mrb[0].mxu0
      %7131 = vmatprep.mubr.bf16.mxu0 0
      %7132 = vmatmul.mubr.bf16.gmra.mrb[0].mxu0 %v6998
      %v7133 = vpop.f32.mrb[0].mxu0
      %v7134 = vadd.f32 %v7033, %v7133
      %v7135 = vpop.f32.mrb[0].mxu0
      %v7136 = vpop.f32.mrb[0].mxu0
      %v7137 = vadd.f32 %v7033, %v7136
      %v7138 = vpop.f32.mrb[0].mxu0
      %7139 = vmatprep.mubr.bf16.mxu0 0
      %7140 = vmatmul.mubr.bf16.gmra.mrb[0].mxu0 %v6999
      %v7141 = vpop.f32.mrb[0].mxu0
      %v7142 = vadd.f32 %v7033, %v7141
      %v7143 = vpop.f32.mrb[0].mxu0
      %v7144 = vpop.f32.mrb[0].mxu0
      %v7145 = vadd.f32 %v7033, %v7144
      %v7146 = vpop.f32.mrb[0].mxu0
      %7147 = vmatprep.mubr.bf16.mxu0 0
      %7148 = vmatmul.mubr.bf16.gmra.mrb[0].mxu0 %v7000
      %v7149 = vpop.f32.mrb[0].mxu0
      %v7150 = vadd.f32 %v7033, %v7149
      %v7151 = vpop.f32.mrb[0].mxu0
      %v7152 = vpop.f32.mrb[0].mxu0
      %v7153 = vadd.f32 %v7033, %v7152
      %v7154 = vpop.f32.mrb[0].mxu0
      %7155 = vmatprep.mubr.bf16.mxu0 0
      %7156 = vmatmul.mubr.bf16.gmra.mrb[0].mxu0 %v7001
      %v7157 = vpop.f32.mrb[0].mxu0
      %v7158 = vadd.f32 %v7033, %v7157
      %v7159 = vpop.f32.mrb[0].mxu0
      %v7160 = vpop.f32.mrb[0].mxu0
      %v7161 = vadd.f32 %v7033, %v7160
      %v7162 = vpop.f32.mrb[0].mxu0
      %7163 = vmatprep.mubr.bf16.mxu0 0
      %7164 = vmatmul.mubr.bf16.gmra.mrb[0].mxu0 %v7002
      %v7165 = vpop.f32.mrb[0].mxu0
      %v7166 = vadd.f32 %v7033, %v7165
      %v7167 = vpop.f32.mrb[0].mxu0
      %v7168 = vpop.f32.mrb[0].mxu0
      %v7169 = vadd.f32 %v7033, %v7168
      %v7170 = vpop.f32.mrb[0].mxu0
      %7171 = vmatprep.mubr.bf16.mxu0 0
      %7172 = vmatmul.mubr.bf16.gmra.mrb[0].mxu0 %v7003
      %v7173 = vpop.f32.mrb[0].mxu0
      %v7174 = vadd.f32 %v7033, %v7173
      %v7175 = vpop.f32.mrb[0].mxu0
      %v7176 = vpop.f32.mrb[0].mxu0
      %v7177 = vadd.f32 %v7033, %v7176
      %v7178 = vpop.f32.mrb[0].mxu0
      %7179 = vmatprep.mubr.bf16.mxu0 0
      %7180 = vmatmul.mubr.bf16.gmra.mrb[0].mxu0 %v7004
      %v7181 = vpop.f32.mrb[0].mxu0
      %v7182 = vadd.f32 %v7033, %v7181
      %v7183 = vpop.f32.mrb[0].mxu0
      %v7184 = vpop.f32.mrb[0].mxu0
      %v7185 = vadd.f32 %v7033, %v7184
      %v7186 = vpop.f32.mrb[0].mxu0
      %7187 = vmatprep.mubr.bf16.mxu0 0
      %7188 = vmatmul.mubr.bf16.gmra.mrb[0].mxu0 %v7005
      %v7189 = vpop.f32.mrb[0].mxu0
      %v7190 = vadd.f32 %v7033, %v7189
      %v7191 = vpop.f32.mrb[0].mxu0
      %v7192 = vpop.f32.mrb[0].mxu0
      %v7193 = vadd.f32 %v7033, %v7192
      %v7194 = vpop.f32.mrb[0].mxu0
      %7195 = vmatprep.mubr.bf16.mxu0 0
      %7196 = vmatmul.mubr.bf16.gmra.mrb[0].mxu0 %v7006
      %v7197 = vpop.f32.mrb[0].mxu0
      %v7198 = vadd.f32 %v7033, %v7197
      %v7199 = vpop.f32.mrb[0].mxu0
      %v7200 = vpop.f32.mrb[0].mxu0
      %v7201 = vadd.f32 %v7033, %v7200
      %v7202 = vpop.f32.mrb[0].mxu0
      %7203 = vmatprep.mubr.bf16.mxu0 0
      %7204 = vmatmul.mubr.bf16.gmra.mrb[0].mxu0 %v7007
      %v7205 = vpop.f32.mrb[0].mxu0
      %v7206 = vadd.f32 %v7033, %v7205
      %v7207 = vpop.f32.mrb[0].mxu0
      %v7208 = vpop.f32.mrb[0].mxu0
      %v7209 = vadd.f32 %v7033, %v7208
      %v7210 = vpop.f32.mrb[0].mxu0
      %7211 = vmatprep.mubr.bf16.mxu0 0
      %7212 = vmatmul.mubr.bf16.gmra.mrb[0].mxu0 %v7008
      %v7213 = vpop.f32.mrb[0].mxu0
      %v7214 = vadd.f32 %v7033, %v7213
      %v7215 = vpop.f32.mrb[0].mxu0
      %v7216 = vpop.f32.mrb[0].mxu0
      %v7217 = vadd.f32 %v7033, %v7216
      %v7218 = vpop.f32.mrb[0].mxu0
      %7219 = vmatprep.mubr.bf16.mxu0 0
      %7220 = vmatmul.mubr.bf16.gmra.mrb[0].mxu0 %v7009
      %v7221 = vpop.f32.mrb[0].mxu0
      %v7222 = vadd.f32 %v7033, %v7221
      %v7223 = vpop.f32.mrb[0].mxu0
      %v7224 = vpop.f32.mrb[0].mxu0
      %v7225 = vadd.f32 %v7033, %v7224
      %v7226 = vpop.f32.mrb[0].mxu0
      %7227 = vmatprep.mubr.bf16.mxu0 0
      %7228 = vmatmul.mubr.bf16.gmra.mrb[0].mxu0 %v7010
      %v7229 = vpop.f32.mrb[0].mxu0
      %v7230 = vadd.f32 %v7033, %v7229
      %v7231 = vpop.f32.mrb[0].mxu0
      %v7232 = vpop.f32.mrb[0].mxu0
      %v7233 = vadd.f32 %v7033, %v7232
      %v7234 = vpop.f32.mrb[0].mxu0
      %7235 = vmatprep.mubr.bf16.mxu0 0
      %7236 = vmatmul.mubr.bf16.gmra.mrb[0].mxu0 %v7011
      %v7237 = vpop.f32.mrb[0].mxu0
      %v7238 = vadd.f32 %v7033, %v7237
      %v7239 = vpop.f32.mrb[0].mxu0
      %v7240 = vpop.f32.mrb[0].mxu0
      %v7241 = vadd.f32 %v7033, %v7240
      %v7242 = vpop.f32.mrb[0].mxu0
      %7243 = vdwg.mxu0
      %v7244 = vld [vmem:[%s273] sm:$0xff]
      %v7245 = vld [vmem:[%s273 + $0x8] sm:$0xff]
      %v7246 = vld [vmem:[%s273 + $0x10] sm:$0xff]
      %v7247 = vld [vmem:[%s273 + $0x18] sm:$0xff]
      %v7248 = vld [vmem:[%s273 + $0x20] sm:$0xff]
      %v7249 = vld [vmem:[%s273 + $0x28] sm:$0xff]
      %v7250 = vld [vmem:[%s273 + $0x30] sm:$0xff]
      %v7251 = vld [vmem:[%s273 + $0x38] sm:$0xff]
      %v7252 = vld [vmem:[%s273 + $0x40] sm:$0xff]
      %v7253 = vld [vmem:[%s273 + $0x48] sm:$0xff]
      %v7254 = vld [vmem:[%s273 + $0x50] sm:$0xff]
      %v7255 = vld [vmem:[%s273 + $0x58] sm:$0xff]
      %v7256 = vld [vmem:[%s273 + $0x60] sm:$0xff]
      %v7257 = vld [vmem:[%s273 + $0x68] sm:$0xff]
      %v7258 = vld [vmem:[%s273 + $0x70] sm:$0xff]
      %v7259 = vld [vmem:[%s273 + $0x78] sm:$0xff]
      %v7260 = vld [vmem:[%s273 + $0x80] sm:$0xff]
      %v7261 = vld [vmem:[%s273 + $0x88] sm:$0xff]
      %v7262 = vld [vmem:[%s273 + $0x90] sm:$0xff]
      %v7263 = vld [vmem:[%s273 + $0x98] sm:$0xff]
      %v7264 = vld [vmem:[%s273 + $0xa0] sm:$0xff]
      %v7265 = vld [vmem:[%s273 + $0xa8] sm:$0xff]
      %v7266 = vld [vmem:[%s273 + $0xb0] sm:$0xff]
      %v7267 = vld [vmem:[%s273 + $0xb8] sm:$0xff]
      %v7268 = vld [vmem:[%s273 + $0xc0] sm:$0xff]
      %v7269 = vld [vmem:[%s273 + $0xc8] sm:$0xff]
      %v7270 = vld [vmem:[%s273 + $0xd0] sm:$0xff]
      %v7271 = vld [vmem:[%s273 + $0xd8] sm:$0xff]
      %v7272 = vld [vmem:[%s273 + $0xe0] sm:$0xff]
      %v7273 = vld [vmem:[%s273 + $0xe8] sm:$0xff]
      %v7274 = vld [vmem:[%s273 + $0xf0] sm:$0xff]
      %v7275 = vld [vmem:[%s273 + $0xf8] sm:$0xff]
      %v7276 = vadd.f32 %v7244, %v7118
      %v7277 = vadd.f32 %v7245, %v7121
      %v7278 = vadd.f32 %v7246, %v7126
      %v7279 = vadd.f32 %v7247, %v7129
      %v7280 = vadd.f32 %v7248, %v7134
      %v7281 = vadd.f32 %v7249, %v7137
      %v7282 = vadd.f32 %v7250, %v7142
      %v7283 = vadd.f32 %v7251, %v7145
      %v7284 = vadd.f32 %v7252, %v7150
      %v7285 = vadd.f32 %v7253, %v7153
      %v7286 = vadd.f32 %v7254, %v7158
      %v7287 = vadd.f32 %v7255, %v7161
      %v7288 = vadd.f32 %v7256, %v7166
      %v7289 = vadd.f32 %v7257, %v7169
      %v7290 = vadd.f32 %v7258, %v7174
      %v7291 = vadd.f32 %v7259, %v7177
      %v7292 = vadd.f32 %v7260, %v7182
      %v7293 = vadd.f32 %v7261, %v7185
      %v7294 = vadd.f32 %v7262, %v7190
      %v7295 = vadd.f32 %v7263, %v7193
      %v7296 = vadd.f32 %v7264, %v7198
      %v7297 = vadd.f32 %v7265, %v7201
      %v7298 = vadd.f32 %v7266, %v7206
      %v7299 = vadd.f32 %v7267, %v7209
      %v7300 = vadd.f32 %v7268, %v7214
      %v7301 = vadd.f32 %v7269, %v7217
      %v7302 = vadd.f32 %v7270, %v7222
      %v7303 = vadd.f32 %v7271, %v7225
      %v7304 = vadd.f32 %v7272, %v7230
      %v7305 = vadd.f32 %v7273, %v7233
      %v7306 = vadd.f32 %v7274, %v7238
      %v7307 = vadd.f32 %v7275, %v7241
      %7308 = vst.msk [vmem:[%s278] sm:$0xff] %vm280, %v7276
      %7309 = vst.msk [vmem:[%s278 + $0x8] sm:$0xff] %vm280, %v7277
      %7310 = vst.msk [vmem:[%s278 + $0x10] sm:$0xff] %vm280, %v7278
      %7311 = vst.msk [vmem:[%s278 + $0x18] sm:$0xff] %vm280, %v7279
      %7312 = vst.msk [vmem:[%s278 + $0x20] sm:$0xff] %vm280, %v7280
      %7313 = vst.msk [vmem:[%s278 + $0x28] sm:$0xff] %vm280, %v7281
      %7314 = vst.msk [vmem:[%s278 + $0x30] sm:$0xff] %vm280, %v7282
      %7315 = vst.msk [vmem:[%s278 + $0x38] sm:$0xff] %vm280, %v7283
      %7316 = vst.msk [vmem:[%s278 + $0x40] sm:$0xff] %vm280, %v7284
      %7317 = vst.msk [vmem:[%s278 + $0x48] sm:$0xff] %vm280, %v7285
      %7318 = vst.msk [vmem:[%s278 + $0x50] sm:$0xff] %vm280, %v7286
      %7319 = vst.msk [vmem:[%s278 + $0x58] sm:$0xff] %vm280, %v7287
      %7320 = vst.msk [vmem:[%s278 + $0x60] sm:$0xff] %vm280, %v7288
      %7321 = vst.msk [vmem:[%s278 + $0x68] sm:$0xff] %vm280, %v7289
      %7322 = vst.msk [vmem:[%s278 + $0x70] sm:$0xff] %vm280, %v7290
      %7323 = vst.msk [vmem:[%s278 + $0x78] sm:$0xff] %vm280, %v7291
      %7324 = vst.msk [vmem:[%s278 + $0x80] sm:$0xff] %vm280, %v7292
      %7325 = vst.msk [vmem:[%s278 + $0x88] sm:$0xff] %vm280, %v7293
      %7326 = vst.msk [vmem:[%s278 + $0x90] sm:$0xff] %vm280, %v7294
      %7327 = vst.msk [vmem:[%s278 + $0x98] sm:$0xff] %vm280, %v7295
      %7328 = vst.msk [vmem:[%s278 + $0xa0] sm:$0xff] %vm280, %v7296
      %7329 = vst.msk [vmem:[%s278 + $0xa8] sm:$0xff] %vm280, %v7297
      %7330 = vst.msk [vmem:[%s278 + $0xb0] sm:$0xff] %vm280, %v7298
      %7331 = vst.msk [vmem:[%s278 + $0xb8] sm:$0xff] %vm280, %v7299
      %7332 = vst.msk [vmem:[%s278 + $0xc0] sm:$0xff] %vm280, %v7300
      %7333 = vst.msk [vmem:[%s278 + $0xc8] sm:$0xff] %vm280, %v7301
      %7334 = vst.msk [vmem:[%s278 + $0xd0] sm:$0xff] %vm280, %v7302
      %7335 = vst.msk [vmem:[%s278 + $0xd8] sm:$0xff] %vm280, %v7303
      %7336 = vst.msk [vmem:[%s278 + $0xe0] sm:$0xff] %vm280, %v7304
      %7337 = vst.msk [vmem:[%s278 + $0xe8] sm:$0xff] %vm280, %v7305
      %7338 = vst.msk [vmem:[%s278 + $0xf0] sm:$0xff] %vm280, %v7306
      %7339 = vst.msk [vmem:[%s278 + $0xf8] sm:$0xff] %vm280, %v7307
      %p7340 = scmp.lt.s32.totalorder %s18, 1
      %s7341 = scalar_select %p7340, %s18, 1
      %s7342 = smul.addr %s7341, 32
      %s7343 = smul.addr %s7342, 8
      %s7344 = scalar_lea.vmem %s7, %s7343
      // Predicated region
      $region49: #{tpu_custom_call.1} parent=47 // pred_check
        %p7345 = pneg %p188
      $region50: #{tpu_custom_call.1} parent=47 // pred_check_branch
        %7347 = sbr.rel (%p7345) target = $region52
      $region51: #{tpu_custom_call.1} parent=47 // pred_region
        _
      $region52: #{tpu_custom_call.1} parent=47 // pred_fallthru
        _
    $region48: #{tpu_custom_call.1} parent=5 // pred_fallthru
      _
    %p7348 = scmp.le.s32.totalorder 2, %s13
    // Predicated region
    $region53: #{tpu_custom_call.1} parent=5 // pred_check
      %p7349 = pneg %p7348
    $region54: #{tpu_custom_call.1} parent=5 // pred_check_branch
      %7351 = sbr.rel (%p7349) target = $region56
    $region55: #{tpu_custom_call.1} parent=5 // pred_region
      %s7352 = ssub.s32 %s13, 2
      // Predicated region
      $region57: #{tpu_custom_call.1} parent=55 // pred_check
        %p7353 = pneg %p194
      $region58: #{tpu_custom_call.1} parent=55 // pred_check_branch
        %7355 = sbr.rel (%p7353) target = $region60
      $region59: #{tpu_custom_call.1} parent=55 // pred_region
        %p7356 = scmp.lt.s32.totalorder %s19, 1
        %s7357 = scalar_select %p7356, %s19, 1
        %s7358 = smul.addr %s7357, 32
        %s7359 = smul.addr %s7358, 8
        %s7360 = scalar_lea.vmem %s7, %s7359
      $region60: #{tpu_custom_call.1} parent=55 // pred_fallthru
        _
    $region56: #{tpu_custom_call.1} parent=5 // pred_fallthru
      _
  $region6: #{tpu_custom_call.1} parent=0 // loop_footer
    %s17 = sadd.s32 1, %s13
  $region7: #{tpu_custom_call.1} parent=0 // loop_footer_branch
    %12 = sbr.rel target = $region3
  $region8: #{tpu_custom_call.1} parent=0 // loop_exit
    _

</llo_original>
